<compile_context>
chip_gen: v7x
topology: tpu7x:2x2x1
jax: 0.10.0
libtpu: 0.0.40
codegen_flags: <defaults>
</compile_context>

<pallas_src>
import functools

import jax
import jax.numpy as jnp
from jax.experimental import pallas as pl
from jax.experimental.pallas import tpu as pltpu


VMEM_LIMIT_BYTES = 32 * 1024 * 1024


def _round_up(x, m):
    return (x + m - 1) // m * m


# ---------------------------------------------------------------------------
# Fused matmul + bias (+ ReLU) kernel: y = x @ w + b
# ---------------------------------------------------------------------------

def _matmul_bias_act_kernel(x_ref, w_ref, b_ref, o_ref, *, apply_relu):
    """One (m, n, k) grid step; the (tm, tn) output block is resident across k."""
    k = pl.program_id(2)

    @pl.when(k == 0)
    def _():
        o_ref[...] = jnp.zeros_like(o_ref)

    # bf16 x bf16 -> f32 accumulation directly into the output block.
    o_ref[...] += jnp.dot(x_ref[...], w_ref[...],
                          preferred_element_type=jnp.float32)

    @pl.when(k == pl.num_programs(2) - 1)
    def _():
        out = o_ref[...] + b_ref[...]
        if apply_relu:
            out = jnp.maximum(out, 0.0)
        o_ref[...] = out


def matmul_bias_act(x, w, b, *, apply_relu, cap_m=512, cap_k=1024, cap_n=256):
    """y = x @ w + b (optionally ReLU). x:(M,K) bf16, w:(K,N) bf16, b:(1,N) f32."""
    M, K = x.shape
    K2, N = w.shape
    assert K == K2 and b.shape == (1, N)

    # Capped tiles; awkward sizes are handled by zero padding, never by a
    # full-dimension VMEM-blowing fallback.  cap_m % 8 == 0, cap_{k,n} % 128 == 0.
    tm = M if M <= cap_m else cap_m
    tk = K if K <= cap_k else cap_k
    tn = N if N <= cap_n else cap_n
    Mp, Kp, Np = _round_up(M, tm), _round_up(K, tk), _round_up(N, tn)

    if (Mp, Kp) != (M, K):
        x = jnp.pad(x, ((0, Mp - M), (0, Kp - K)))
    if (Kp, Np) != (K, N):
        w = jnp.pad(w, ((0, Kp - K), (0, Np - N)))
    if Np != N:
        b = jnp.pad(b, ((0, 0), (0, Np - N)))

    grid = (Mp // tm, Np // tn, Kp // tk)
    kernel = functools.partial(_matmul_bias_act_kernel, apply_relu=apply_relu)
    out = pl.pallas_call(
        kernel,
        out_shape=jax.ShapeDtypeStruct((Mp, Np), jnp.float32),
        grid_spec=pltpu.PrefetchScalarGridSpec(
            num_scalar_prefetch=0,
            grid=grid,
            in_specs=[
                pl.BlockSpec((tm, tk), lambda i, j, k: (i, k)),
                pl.BlockSpec((tk, tn), lambda i, j, k: (k, j)),
                pl.BlockSpec((1, tn), lambda i, j, k: (0, j)),
            ],
            out_specs=pl.BlockSpec((tm, tn), lambda i, j, k: (i, j)),
        ),
        compiler_params=pltpu.CompilerParams(
            dimension_semantics=("parallel", "parallel", "arbitrary"),
            vmem_limit_bytes=VMEM_LIMIT_BYTES),
    )(x, w, b)

    if (Mp, Np) != (M, N):
        out = out[:M, :N]
    return out


# ---------------------------------------------------------------------------
# 2x2 / stride-2 max-pool kernel on conv GEMM output rows
# ---------------------------------------------------------------------------

def _maxpool2x2_kernel(x_ref, o_ref):
    """x block: (ho, 2, wo, 2C) f32 -> out block: (ho, wo, C) bf16.

    Axis 1 holds the two image rows of each pooling window; the last axis holds
    the two W-adjacent pixels side by side (lane slices), so the whole 2x2
    reduction is elementwise maxes — no strided HBM views, no in-kernel reshape.
    """
    c = o_ref.shape[-1]
    x = x_ref[...]
    hmax = jnp.maximum(x[:, 0], x[:, 1])                    # (ho, wo, 2C)
    o_ref[...] = jnp.maximum(hmax[..., :c], hmax[..., c:]).astype(o_ref.dtype)


def maxpool_2x2_from_rows(y, *, n, h, w, c):
    """Pool the conv output stored as (n*h*w, c) rows -> (n, h//2, w//2, c) bf16."""
    assert h % 2 == 0 and w % 2 == 0
    ho, wo = h // 2, w // 2
    # Free row-major reinterpretation: [(n, ho), 2(h-parity), wo, 2*c(w-pair)].
    x4 = y.reshape(n * ho, 2, wo, 2 * c)
    out = pl.pallas_call(
        _maxpool2x2_kernel,
        out_shape=jax.ShapeDtypeStruct((n * ho, wo, c), jnp.bfloat16),
        grid_spec=pltpu.PrefetchScalarGridSpec(
            num_scalar_prefetch=0,
            grid=(n,),
            in_specs=[pl.BlockSpec((ho, 2, wo, 2 * c), lambda i: (i, 0, 0, 0))],
            out_specs=pl.BlockSpec((ho, wo, c), lambda i: (i, 0, 0)),
        ),
        compiler_params=pltpu.CompilerParams(
            dimension_semantics=("parallel",),
            vmem_limit_bytes=VMEM_LIMIT_BYTES),
    )(x4)
    return out.reshape(n, ho, wo, c)


# ---------------------------------------------------------------------------
# Conv block: im2col (XLA glue) + Pallas GEMM(+bias+ReLU) + Pallas pool
# ---------------------------------------------------------------------------

def _im2col_3x3_pad1(x_nhwc):
    """(N,H,W,C) -> (N*H*W, 9*C) patches for a 3x3 / stride-1 / pad-1 conv."""
    N, H, W, C = x_nhwc.shape
    xp = jnp.pad(x_nhwc, ((0, 0), (1, 1), (1, 1), (0, 0)))
    cols = [xp[:, ky:ky + H, kx:kx + W, :]
            for ky in range(3) for kx in range(3)]
    patches = jnp.concatenate(cols, axis=-1)            # (N, H, W, 9*C)
    return patches.reshape(N * H * W, 9 * C)


def conv3x3_relu_pool(x_nhwc, w_mat, bias):
    """3x3 conv (stride 1, pad 1) + bias + ReLU + 2x2/2 max pool.

    w_mat is the pre-laid-out (9*Cin, Cout) bf16 GEMM matrix from prepare_params.
    """
    n, h, w, cin = x_nhwc.shape
    cout = w_mat.shape[1]
    patches = _im2col_3x3_pad1(x_nhwc)                             # (n*h*w, 9*cin) bf16
    y = matmul_bias_act(patches, w_mat, bias, apply_relu=True)     # (n*h*w, cout) f32
    return maxpool_2x2_from_rows(y, n=n, h=h, w=w, c=cout)         # (n, h/2, w/2, cout) bf16


# ---------------------------------------------------------------------------
# Parameters (PyTorch-shaped init + one-time layout preparation) and forward
# ---------------------------------------------------------------------------

def init_params(key):
    def uniform(k, shape, fan_in):
        bound = 1.0 / jnp.sqrt(jnp.float32(fan_in))
        return jax.random.uniform(k, shape, jnp.float32, -bound, bound)

    ks = jax.random.split(key, 10)
    return {
        "conv1_w": uniform(ks[0], (32, 1, 3, 3), 1 * 9),
        "conv1_b": uniform(ks[1], (32,), 1 * 9),
        "conv2_w": uniform(ks[2], (64, 32, 3, 3), 32 * 9),
        "conv2_b": uniform(ks[3], (64,), 32 * 9),
        "conv3_w": uniform(ks[4], (128, 64, 3, 3), 64 * 9),
        "conv3_b": uniform(ks[5], (128,), 64 * 9),
        "fc1_w": uniform(ks[6], (512, 128 * 8 * 8), 128 * 8 * 8),
        "fc1_b": uniform(ks[7], (512,), 128 * 8 * 8),
        "fc2_w": uniform(ks[8], (3, 512), 512),
        "fc2_b": uniform(ks[9], (3,), 512),
    }


def prepare_params(p):
    """One-time weight layout preparation (hoisted out of the jitted forward).

    - conv weights (O, I, 3, 3) -> (9*I, O) GEMM matrices, bf16
    - fc1 weight rows re-permuted from (c, h, w) to (h, w, c) order and
      transposed to (8192, 512), bf16 -> fc1 consumes the NHWC flatten directly
    - fc2 weight transposed to (512, 3), bf16; biases kept as f32 row vectors
    """
    def conv_mat(w):
        return jnp.transpose(w, (2, 3, 1, 0)).reshape(-1, w.shape[0]).astype(jnp.bfloat16)

    def row_bias(b):
        return b.reshape(1, -1).astype(jnp.float32)

    fc1_w = p["fc1_w"].reshape(512, 128, 8, 8)                       # (out, c, h, w)
    fc1_w = jnp.transpose(fc1_w, (2, 3, 1, 0)).reshape(8 * 8 * 128, 512)

    return {
        "conv1_w": conv_mat(p["conv1_w"]), "conv1_b": row_bias(p["conv1_b"]),
        "conv2_w": conv_mat(p["conv2_w"]), "conv2_b": row_bias(p["conv2_b"]),
        "conv3_w": conv_mat(p["conv3_w"]), "conv3_b": row_bias(p["conv3_b"]),
        "fc1_w": fc1_w.astype(jnp.bfloat16), "fc1_b": row_bias(p["fc1_b"]),
        "fc2_w": p["fc2_w"].T.astype(jnp.bfloat16), "fc2_b": row_bias(p["fc2_b"]),
    }


def simple_cnn_forward(params, x_nchw):
    """Forward pass; `params` must come from prepare_params()."""
    n = x_nchw.shape[0]
    x = jnp.transpose(x_nchw, (0, 2, 3, 1)).astype(jnp.bfloat16)      # (n, 64, 64, 1)
    x = conv3x3_relu_pool(x, params["conv1_w"], params["conv1_b"])    # (n, 32, 32, 32)
    x = conv3x3_relu_pool(x, params["conv2_w"], params["conv2_b"])    # (n, 16, 16, 64)
    x = conv3x3_relu_pool(x, params["conv3_w"], params["conv3_b"])    # (n, 8, 8, 128)
    # NHWC flatten; fc1_w's rows were pre-permuted to (h, w, c), so this matches
    # PyTorch's (c, h, w) flatten without a per-call activation transpose.
    x = x.reshape(n, 8 * 8 * 128)                                     # (n, 8192) bf16
    x = matmul_bias_act(x, params["fc1_w"], params["fc1_b"],
                        apply_relu=True)                              # (n, 512) f32
    x = matmul_bias_act(x.astype(jnp.bfloat16), params["fc2_w"], params["fc2_b"],
                        apply_relu=False)                             # (n, 3) f32
    return x


if __name__ == "__main__":
    key = jax.random.PRNGKey(0)
    pkey, xkey = jax.random.split(key)
    raw_params = init_params(pkey)
    params = prepare_params(raw_params)   # one-time layout/cast, outside the forward
    # fc1 expects 128*8*8 features => 64x64 spatial input after three /2 pools.
    x = jax.random.normal(xkey, (2, 1, 64, 64), dtype=jnp.float32)

    fwd = jax.jit(simple_cnn_forward)
    out = fwd(params, x)
    jax.block_until_ready(out)
    assert out.shape == (2, 3) and out.dtype == jnp.float32
    print("KERNEL_OK")
</pallas_src>

<mosaic_0001>
module attributes {stable_mosaic.version = 11 : i64} {
  func.func @_matmul_bias_act_kernel(%arg0: i32, %arg1: i32, %arg2: i32, %arg3: memref<512x9xbf16, #tpu.memory_space<vmem>>, %arg4: memref<9x32xbf16, #tpu.memory_space<vmem>>, %arg5: memref<1x32xf32, #tpu.memory_space<vmem>>, %arg6: memref<512x32xf32, #tpu.memory_space<vmem>>) attributes {dimension_semantics = [#tpu.dimension_semantics<parallel>, #tpu.dimension_semantics<parallel>, #tpu.dimension_semantics<arbitrary>], iteration_bounds = array<i64: 16, 1, 1>, scalar_prefetch = 0 : i64, scratch_operands = 0 : i64, tpu.core_type = #tpu.core_type<tc>, window_params = [{transform_indices = @transform_0, window_bounds = array<i64: 512, 9>}, {transform_indices = @transform_1, window_bounds = array<i64: 9, 32>}, {transform_indices = @transform_2, window_bounds = array<i64: 1, 32>}, {transform_indices = @transform_3, window_bounds = array<i64: 512, 32>}]} {
    %c0_i32 = arith.constant 0 : i32
    %0 = arith.cmpi eq, %arg2, %c0_i32 : i32
    %1 = arith.extui %0 : i1 to i32
    %c0_i32_0 = arith.constant 0 : i32
    %2 = arith.cmpi ne, %1, %c0_i32_0 : i32
    scf.if %2 {
      %cst_10 = arith.constant 0.000000e+00 : f32
      %12 = vector.broadcast %cst_10 : f32 to vector<512x32xf32>
      %c0_11 = arith.constant 0 : index
      %c0_12 = arith.constant 0 : index
      %13 = vector.load %arg6[%c0_11, %c0_12] : memref<512x32xf32, #tpu.memory_space<vmem>>, vector<512x32xf32>
      tpu.vector_store %arg6[%c0_11, %c0_12], %12 {strides = array<i32>} : memref<512x32xf32, #tpu.memory_space<vmem>>, vector<512x32xf32>,
    } else {
    }
    %c0 = arith.constant 0 : index
    %c0_1 = arith.constant 0 : index
    %3 = vector.load %arg6[%c0, %c0_1] : memref<512x32xf32, #tpu.memory_space<vmem>>, vector<512x32xf32>
    %c0_2 = arith.constant 0 : index
    %c0_3 = arith.constant 0 : index
    %4 = vector.load %arg3[%c0_2, %c0_3] : memref<512x9xbf16, #tpu.memory_space<vmem>>, vector<512x9xbf16>
    %c0_4 = arith.constant 0 : index
    %c0_5 = arith.constant 0 : index
    %5 = vector.load %arg4[%c0_4, %c0_5] : memref<9x32xbf16, #tpu.memory_space<vmem>>, vector<9x32xbf16>
    %cst = arith.constant dense<0.000000e+00> : vector<512x32xf32>
    %6 = tpu.matmul %4, %5, %cst {dimension_numbers = #tpu.dot_dimension_numbers<[1], [0], [0], [1], [0, 0, 1, 1], [], []>} : vector<512x9xbf16>, vector<9x32xbf16>, vector<512x32xf32> -> vector<512x32xf32>
    %7 = arith.addf %3, %6 : vector<512x32xf32>
    %c0_6 = arith.constant 0 : index
    %c0_7 = arith.constant 0 : index
    %8 = vector.load %arg6[%c0_6, %c0_7] : memref<512x32xf32, #tpu.memory_space<vmem>>, vector<512x32xf32>
    tpu.vector_store %arg6[%c0_6, %c0_7], %7 {strides = array<i32>} : memref<512x32xf32, #tpu.memory_space<vmem>>, vector<512x32xf32>,
    %c0_i32_8 = arith.constant 0 : i32
    %9 = arith.cmpi eq, %arg2, %c0_i32_8 : i32
    %10 = arith.extui %9 : i1 to i32
    %c0_i32_9 = arith.constant 0 : i32
    %11 = arith.cmpi ne, %10, %c0_i32_9 : i32
    scf.if %11 {
      %c0_10 = arith.constant 0 : index
      %c0_11 = arith.constant 0 : index
      %12 = vector.load %arg6[%c0_10, %c0_11] : memref<512x32xf32, #tpu.memory_space<vmem>>, vector<512x32xf32>
      %c0_12 = arith.constant 0 : index
      %c0_13 = arith.constant 0 : index
      %13 = vector.load %arg5[%c0_12, %c0_13] : memref<1x32xf32, #tpu.memory_space<vmem>>, vector<1x32xf32>
      %14 = vector.broadcast %13 : vector<1x32xf32> to vector<512x32xf32>
      %15 = arith.addf %12, %14 : vector<512x32xf32>
      %cst_14 = arith.constant 0.000000e+00 : f32
      %16 = vector.broadcast %cst_14 : f32 to vector<512x32xf32>
      %17 = arith.maximumf %15, %16 : vector<512x32xf32>
      %c0_15 = arith.constant 0 : index
      %c0_16 = arith.constant 0 : index
      %18 = vector.load %arg6[%c0_15, %c0_16] : memref<512x32xf32, #tpu.memory_space<vmem>>, vector<512x32xf32>
      tpu.vector_store %arg6[%c0_15, %c0_16], %17 {strides = array<i32>} : memref<512x32xf32, #tpu.memory_space<vmem>>, vector<512x32xf32>,
    } else {
    }
    return
  }
  func.func @transform_0(%arg0: i32, %arg1: i32, %arg2: i32) -> (i32, i32) {
    %c0_i32 = arith.constant 0 : i32
    return %arg0, %arg2 : i32, i32
  }
  func.func @transform_1(%arg0: i32, %arg1: i32, %arg2: i32) -> (i32, i32) {
    %c0_i32 = arith.constant 0 : i32
    return %arg2, %arg1 : i32, i32
  }
  func.func @transform_2(%arg0: i32, %arg1: i32, %arg2: i32) -> (i32, i32) {
    %c0_i32 = arith.constant 0 : i32
    %c0_i32_0 = arith.constant 0 : i32
    return %c0_i32, %arg1 : i32, i32
  }
  func.func @transform_3(%arg0: i32, %arg1: i32, %arg2: i32) -> (i32, i32) {
    %c0_i32 = arith.constant 0 : i32
    return %arg0, %arg1 : i32, i32
  }
}

module attributes {stable_mosaic.version = 11 : i64} {
  func.func @_maxpool2x2_kernel(%arg0: i32, %arg1: memref<32x2x32x64xf32, #tpu.memory_space<vmem>>, %arg2: memref<32x32x32xbf16, #tpu.memory_space<vmem>>) attributes {dimension_semantics = [#tpu.dimension_semantics<parallel>], iteration_bounds = array<i64: 2>, scalar_prefetch = 0 : i64, scratch_operands = 0 : i64, tpu.core_type = #tpu.core_type<tc>, window_params = [{transform_indices = @transform_0, window_bounds = array<i64: 32, 2, 32, 64>}, {transform_indices = @transform_1, window_bounds = array<i64: 32, 32, 32>}]} {
    %c0 = arith.constant 0 : index
    %c0_0 = arith.constant 0 : index
    %c0_1 = arith.constant 0 : index
    %c0_2 = arith.constant 0 : index
    %0 = vector.load %arg1[%c0, %c0_0, %c0_1, %c0_2] : memref<32x2x32x64xf32, #tpu.memory_space<vmem>>, vector<32x2x32x64xf32>
    %1 = vector.extract_strided_slice %0 {offsets = [0, 0, 0, 0], sizes = [32, 1, 32, 64], strides = [1, 1, 1, 1]} : vector<32x2x32x64xf32> to vector<32x1x32x64xf32>
    %2 = vector.shape_cast %1 : vector<32x1x32x64xf32> to vector<32x32x64xf32>
    %3 = vector.extract_strided_slice %0 {offsets = [0, 1, 0, 0], sizes = [32, 1, 32, 64], strides = [1, 1, 1, 1]} : vector<32x2x32x64xf32> to vector<32x1x32x64xf32>
    %4 = vector.shape_cast %3 : vector<32x1x32x64xf32> to vector<32x32x64xf32>
    %5 = arith.maximumf %2, %4 : vector<32x32x64xf32>
    %6 = vector.extract_strided_slice %5 {offsets = [0, 0, 0], sizes = [32, 32, 32], strides = [1, 1, 1]} : vector<32x32x64xf32> to vector<32x32x32xf32>
    %7 = vector.extract_strided_slice %5 {offsets = [0, 0, 32], sizes = [32, 32, 32], strides = [1, 1, 1]} : vector<32x32x64xf32> to vector<32x32x32xf32>
    %8 = arith.maximumf %6, %7 : vector<32x32x32xf32>
    %9 = arith.truncf %8 : vector<32x32x32xf32> to vector<32x32x32xbf16>
    %c0_3 = arith.constant 0 : index
    %c0_4 = arith.constant 0 : index
    %c0_5 = arith.constant 0 : index
    %10 = vector.load %arg2[%c0_3, %c0_4, %c0_5] : memref<32x32x32xbf16, #tpu.memory_space<vmem>>, vector<32x32x32xbf16>
    tpu.vector_store %arg2[%c0_3, %c0_4, %c0_5], %9 {strides = array<i32>} : memref<32x32x32xbf16, #tpu.memory_space<vmem>>, vector<32x32x32xbf16>,
    return
  }
  func.func @transform_0(%arg0: i32) -> (i32, i32, i32, i32) {
    %c0_i32 = arith.constant 0 : i32
    %c0_i32_0 = arith.constant 0 : i32
    %c0_i32_1 = arith.constant 0 : i32
    %c0_i32_2 = arith.constant 0 : i32
    return %arg0, %c0_i32, %c0_i32_0, %c0_i32_1 : i32, i32, i32, i32
  }
  func.func @transform_1(%arg0: i32) -> (i32, i32, i32) {
    %c0_i32 = arith.constant 0 : i32
    %c0_i32_0 = arith.constant 0 : i32
    %c0_i32_1 = arith.constant 0 : i32
    return %arg0, %c0_i32, %c0_i32_0 : i32, i32, i32
  }
}

module attributes {stable_mosaic.version = 11 : i64} {
  func.func @_matmul_bias_act_kernel(%arg0: i32, %arg1: i32, %arg2: i32, %arg3: memref<512x288xbf16, #tpu.memory_space<vmem>>, %arg4: memref<288x64xbf16, #tpu.memory_space<vmem>>, %arg5: memref<1x64xf32, #tpu.memory_space<vmem>>, %arg6: memref<512x64xf32, #tpu.memory_space<vmem>>) attributes {dimension_semantics = [#tpu.dimension_semantics<parallel>, #tpu.dimension_semantics<parallel>, #tpu.dimension_semantics<arbitrary>], iteration_bounds = array<i64: 4, 1, 1>, scalar_prefetch = 0 : i64, scratch_operands = 0 : i64, tpu.core_type = #tpu.core_type<tc>, window_params = [{transform_indices = @transform_0, window_bounds = array<i64: 512, 288>}, {transform_indices = @transform_1, window_bounds = array<i64: 288, 64>}, {transform_indices = @transform_2, window_bounds = array<i64: 1, 64>}, {transform_indices = @transform_3, window_bounds = array<i64: 512, 64>}]} {
    %c0_i32 = arith.constant 0 : i32
    %0 = arith.cmpi eq, %arg2, %c0_i32 : i32
    %1 = arith.extui %0 : i1 to i32
    %c0_i32_0 = arith.constant 0 : i32
    %2 = arith.cmpi ne, %1, %c0_i32_0 : i32
    scf.if %2 {
      %cst_10 = arith.constant 0.000000e+00 : f32
      %12 = vector.broadcast %cst_10 : f32 to vector<512x64xf32>
      %c0_11 = arith.constant 0 : index
      %c0_12 = arith.constant 0 : index
      %13 = vector.load %arg6[%c0_11, %c0_12] : memref<512x64xf32, #tpu.memory_space<vmem>>, vector<512x64xf32>
      tpu.vector_store %arg6[%c0_11, %c0_12], %12 {strides = array<i32>} : memref<512x64xf32, #tpu.memory_space<vmem>>, vector<512x64xf32>,
    } else {
    }
    %c0 = arith.constant 0 : index
    %c0_1 = arith.constant 0 : index
    %3 = vector.load %arg6[%c0, %c0_1] : memref<512x64xf32, #tpu.memory_space<vmem>>, vector<512x64xf32>
    %c0_2 = arith.constant 0 : index
    %c0_3 = arith.constant 0 : index
    %4 = vector.load %arg3[%c0_2, %c0_3] : memref<512x288xbf16, #tpu.memory_space<vmem>>, vector<512x288xbf16>
    %c0_4 = arith.constant 0 : index
    %c0_5 = arith.constant 0 : index
    %5 = vector.load %arg4[%c0_4, %c0_5] : memref<288x64xbf16, #tpu.memory_space<vmem>>, vector<288x64xbf16>
    %cst = arith.constant dense<0.000000e+00> : vector<512x64xf32>
    %6 = tpu.matmul %4, %5, %cst {dimension_numbers = #tpu.dot_dimension_numbers<[1], [0], [0], [1], [0, 0, 1, 1], [], []>} : vector<512x288xbf16>, vector<288x64xbf16>, vector<512x64xf32> -> vector<512x64xf32>
    %7 = arith.addf %3, %6 : vector<512x64xf32>
    %c0_6 = arith.constant 0 : index
    %c0_7 = arith.constant 0 : index
    %8 = vector.load %arg6[%c0_6, %c0_7] : memref<512x64xf32, #tpu.memory_space<vmem>>, vector<512x64xf32>
    tpu.vector_store %arg6[%c0_6, %c0_7], %7 {strides = array<i32>} : memref<512x64xf32, #tpu.memory_space<vmem>>, vector<512x64xf32>,
    %c0_i32_8 = arith.constant 0 : i32
    %9 = arith.cmpi eq, %arg2, %c0_i32_8 : i32
    %10 = arith.extui %9 : i1 to i32
    %c0_i32_9 = arith.constant 0 : i32
    %11 = arith.cmpi ne, %10, %c0_i32_9 : i32
    scf.if %11 {
      %c0_10 = arith.constant 0 : index
      %c0_11 = arith.constant 0 : index
      %12 = vector.load %arg6[%c0_10, %c0_11] : memref<512x64xf32, #tpu.memory_space<vmem>>, vector<512x64xf32>
      %c0_12 = arith.constant 0 : index
      %c0_13 = arith.constant 0 : index
      %13 = vector.load %arg5[%c0_12, %c0_13] : memref<1x64xf32, #tpu.memory_space<vmem>>, vector<1x64xf32>
      %14 = vector.broadcast %13 : vector<1x64xf32> to vector<512x64xf32>
      %15 = arith.addf %12, %14 : vector<512x64xf32>
      %cst_14 = arith.constant 0.000000e+00 : f32
      %16 = vector.broadcast %cst_14 : f32 to vector<512x64xf32>
      %17 = arith.maximumf %15, %16 : vector<512x64xf32>
      %c0_15 = arith.constant 0 : index
      %c0_16 = arith.constant 0 : index
      %18 = vector.load %arg6[%c0_15, %c0_16] : memref<512x64xf32, #tpu.memory_space<vmem>>, vector<512x64xf32>
      tpu.vector_store %arg6[%c0_15, %c0_16], %17 {strides = array<i32>} : memref<512x64xf32, #tpu.memory_space<vmem>>, vector<512x64xf32>,
    } else {
    }
    return
  }
  func.func @transform_0(%arg0: i32, %arg1: i32, %arg2: i32) -> (i32, i32) {
    %c0_i32 = arith.constant 0 : i32
    return %arg0, %arg2 : i32, i32
  }
  func.func @transform_1(%arg0: i32, %arg1: i32, %arg2: i32) -> (i32, i32) {
    %c0_i32 = arith.constant 0 : i32
    return %arg2, %arg1 : i32, i32
  }
  func.func @transform_2(%arg0: i32, %arg1: i32, %arg2: i32) -> (i32, i32) {
    %c0_i32 = arith.constant 0 : i32
    %c0_i32_0 = arith.constant 0 : i32
    return %c0_i32, %arg1 : i32, i32
  }
  func.func @transform_3(%arg0: i32, %arg1: i32, %arg2: i32) -> (i32, i32) {
    %c0_i32 = arith.constant 0 : i32
    return %arg0, %arg1 : i32, i32
  }
}

module attributes {stable_mosaic.version = 11 : i64} {
  func.func @_maxpool2x2_kernel(%arg0: i32, %arg1: memref<16x2x16x128xf32, #tpu.memory_space<vmem>>, %arg2: memref<16x16x64xbf16, #tpu.memory_space<vmem>>) attributes {dimension_semantics = [#tpu.dimension_semantics<parallel>], iteration_bounds = array<i64: 2>, scalar_prefetch = 0 : i64, scratch_operands = 0 : i64, tpu.core_type = #tpu.core_type<tc>, window_params = [{transform_indices = @transform_0, window_bounds = array<i64: 16, 2, 16, 128>}, {transform_indices = @transform_1, window_bounds = array<i64: 16, 16, 64>}]} {
    %c0 = arith.constant 0 : index
    %c0_0 = arith.constant 0 : index
    %c0_1 = arith.constant 0 : index
    %c0_2 = arith.constant 0 : index
    %0 = vector.load %arg1[%c0, %c0_0, %c0_1, %c0_2] : memref<16x2x16x128xf32, #tpu.memory_space<vmem>>, vector<16x2x16x128xf32>
    %1 = vector.extract_strided_slice %0 {offsets = [0, 0, 0, 0], sizes = [16, 1, 16, 128], strides = [1, 1, 1, 1]} : vector<16x2x16x128xf32> to vector<16x1x16x128xf32>
    %2 = vector.shape_cast %1 : vector<16x1x16x128xf32> to vector<16x16x128xf32>
    %3 = vector.extract_strided_slice %0 {offsets = [0, 1, 0, 0], sizes = [16, 1, 16, 128], strides = [1, 1, 1, 1]} : vector<16x2x16x128xf32> to vector<16x1x16x128xf32>
    %4 = vector.shape_cast %3 : vector<16x1x16x128xf32> to vector<16x16x128xf32>
    %5 = arith.maximumf %2, %4 : vector<16x16x128xf32>
    %6 = vector.extract_strided_slice %5 {offsets = [0, 0, 0], sizes = [16, 16, 64], strides = [1, 1, 1]} : vector<16x16x128xf32> to vector<16x16x64xf32>
    %7 = vector.extract_strided_slice %5 {offsets = [0, 0, 64], sizes = [16, 16, 64], strides = [1, 1, 1]} : vector<16x16x128xf32> to vector<16x16x64xf32>
    %8 = arith.maximumf %6, %7 : vector<16x16x64xf32>
    %9 = arith.truncf %8 : vector<16x16x64xf32> to vector<16x16x64xbf16>
    %c0_3 = arith.constant 0 : index
    %c0_4 = arith.constant 0 : index
    %c0_5 = arith.constant 0 : index
    %10 = vector.load %arg2[%c0_3, %c0_4, %c0_5] : memref<16x16x64xbf16, #tpu.memory_space<vmem>>, vector<16x16x64xbf16>
    tpu.vector_store %arg2[%c0_3, %c0_4, %c0_5], %9 {strides = array<i32>} : memref<16x16x64xbf16, #tpu.memory_space<vmem>>, vector<16x16x64xbf16>,
    return
  }
  func.func @transform_0(%arg0: i32) -> (i32, i32, i32, i32) {
    %c0_i32 = arith.constant 0 : i32
    %c0_i32_0 = arith.constant 0 : i32
    %c0_i32_1 = arith.constant 0 : i32
    %c0_i32_2 = arith.constant 0 : i32
    return %arg0, %c0_i32, %c0_i32_0, %c0_i32_1 : i32, i32, i32, i32
  }
  func.func @transform_1(%arg0: i32) -> (i32, i32, i32) {
    %c0_i32 = arith.constant 0 : i32
    %c0_i32_0 = arith.constant 0 : i32
    %c0_i32_1 = arith.constant 0 : i32
    return %arg0, %c0_i32, %c0_i32_0 : i32, i32, i32
  }
}

module attributes {stable_mosaic.version = 11 : i64} {
  func.func @_matmul_bias_act_kernel(%arg0: i32, %arg1: i32, %arg2: i32, %arg3: memref<512x576xbf16, #tpu.memory_space<vmem>>, %arg4: memref<576x128xbf16, #tpu.memory_space<vmem>>, %arg5: memref<1x128xf32, #tpu.memory_space<vmem>>, %arg6: memref<512x128xf32, #tpu.memory_space<vmem>>) attributes {dimension_semantics = [#tpu.dimension_semantics<parallel>, #tpu.dimension_semantics<parallel>, #tpu.dimension_semantics<arbitrary>], iteration_bounds = array<i64: 1, 1, 1>, scalar_prefetch = 0 : i64, scratch_operands = 0 : i64, tpu.core_type = #tpu.core_type<tc>, window_params = [{transform_indices = @transform_0, window_bounds = array<i64: 512, 576>}, {transform_indices = @transform_1, window_bounds = array<i64: 576, 128>}, {transform_indices = @transform_2, window_bounds = array<i64: 1, 128>}, {transform_indices = @transform_3, window_bounds = array<i64: 512, 128>}]} {
    %c0_i32 = arith.constant 0 : i32
    %0 = arith.cmpi eq, %arg2, %c0_i32 : i32
    %1 = arith.extui %0 : i1 to i32
    %c0_i32_0 = arith.constant 0 : i32
    %2 = arith.cmpi ne, %1, %c0_i32_0 : i32
    scf.if %2 {
      %cst_10 = arith.constant 0.000000e+00 : f32
      %12 = vector.broadcast %cst_10 : f32 to vector<512x128xf32>
      %c0_11 = arith.constant 0 : index
      %c0_12 = arith.constant 0 : index
      %13 = vector.load %arg6[%c0_11, %c0_12] : memref<512x128xf32, #tpu.memory_space<vmem>>, vector<512x128xf32>
      tpu.vector_store %arg6[%c0_11, %c0_12], %12 {strides = array<i32>} : memref<512x128xf32, #tpu.memory_space<vmem>>, vector<512x128xf32>,
    } else {
    }
    %c0 = arith.constant 0 : index
    %c0_1 = arith.constant 0 : index
    %3 = vector.load %arg6[%c0, %c0_1] : memref<512x128xf32, #tpu.memory_space<vmem>>, vector<512x128xf32>
    %c0_2 = arith.constant 0 : index
    %c0_3 = arith.constant 0 : index
    %4 = vector.load %arg3[%c0_2, %c0_3] : memref<512x576xbf16, #tpu.memory_space<vmem>>, vector<512x576xbf16>
    %c0_4 = arith.constant 0 : index
    %c0_5 = arith.constant 0 : index
    %5 = vector.load %arg4[%c0_4, %c0_5] : memref<576x128xbf16, #tpu.memory_space<vmem>>, vector<576x128xbf16>
    %cst = arith.constant dense<0.000000e+00> : vector<512x128xf32>
    %6 = tpu.matmul %4, %5, %cst {dimension_numbers = #tpu.dot_dimension_numbers<[1], [0], [0], [1], [0, 0, 1, 1], [], []>} : vector<512x576xbf16>, vector<576x128xbf16>, vector<512x128xf32> -> vector<512x128xf32>
    %7 = arith.addf %3, %6 : vector<512x128xf32>
    %c0_6 = arith.constant 0 : index
    %c0_7 = arith.constant 0 : index
    %8 = vector.load %arg6[%c0_6, %c0_7] : memref<512x128xf32, #tpu.memory_space<vmem>>, vector<512x128xf32>
    tpu.vector_store %arg6[%c0_6, %c0_7], %7 {strides = array<i32>} : memref<512x128xf32, #tpu.memory_space<vmem>>, vector<512x128xf32>,
    %c0_i32_8 = arith.constant 0 : i32
    %9 = arith.cmpi eq, %arg2, %c0_i32_8 : i32
    %10 = arith.extui %9 : i1 to i32
    %c0_i32_9 = arith.constant 0 : i32
    %11 = arith.cmpi ne, %10, %c0_i32_9 : i32
    scf.if %11 {
      %c0_10 = arith.constant 0 : index
      %c0_11 = arith.constant 0 : index
      %12 = vector.load %arg6[%c0_10, %c0_11] : memref<512x128xf32, #tpu.memory_space<vmem>>, vector<512x128xf32>
      %c0_12 = arith.constant 0 : index
      %c0_13 = arith.constant 0 : index
      %13 = vector.load %arg5[%c0_12, %c0_13] : memref<1x128xf32, #tpu.memory_space<vmem>>, vector<1x128xf32>
      %14 = vector.broadcast %13 : vector<1x128xf32> to vector<512x128xf32>
      %15 = arith.addf %12, %14 : vector<512x128xf32>
      %cst_14 = arith.constant 0.000000e+00 : f32
      %16 = vector.broadcast %cst_14 : f32 to vector<512x128xf32>
      %17 = arith.maximumf %15, %16 : vector<512x128xf32>
      %c0_15 = arith.constant 0 : index
      %c0_16 = arith.constant 0 : index
      %18 = vector.load %arg6[%c0_15, %c0_16] : memref<512x128xf32, #tpu.memory_space<vmem>>, vector<512x128xf32>
      tpu.vector_store %arg6[%c0_15, %c0_16], %17 {strides = array<i32>} : memref<512x128xf32, #tpu.memory_space<vmem>>, vector<512x128xf32>,
    } else {
    }
    return
  }
  func.func @transform_0(%arg0: i32, %arg1: i32, %arg2: i32) -> (i32, i32) {
    %c0_i32 = arith.constant 0 : i32
    return %arg0, %arg2 : i32, i32
  }
  func.func @transform_1(%arg0: i32, %arg1: i32, %arg2: i32) -> (i32, i32) {
    %c0_i32 = arith.constant 0 : i32
    return %arg2, %arg1 : i32, i32
  }
  func.func @transform_2(%arg0: i32, %arg1: i32, %arg2: i32) -> (i32, i32) {
    %c0_i32 = arith.constant 0 : i32
    %c0_i32_0 = arith.constant 0 : i32
    return %c0_i32, %arg1 : i32, i32
  }
  func.func @transform_3(%arg0: i32, %arg1: i32, %arg2: i32) -> (i32, i32) {
    %c0_i32 = arith.constant 0 : i32
    return %arg0, %arg1 : i32, i32
  }
}

module attributes {stable_mosaic.version = 11 : i64} {
  func.func @_maxpool2x2_kernel(%arg0: i32, %arg1: memref<8x2x8x256xf32, #tpu.memory_space<vmem>>, %arg2: memref<8x8x128xbf16, #tpu.memory_space<vmem>>) attributes {dimension_semantics = [#tpu.dimension_semantics<parallel>], iteration_bounds = array<i64: 2>, scalar_prefetch = 0 : i64, scratch_operands = 0 : i64, tpu.core_type = #tpu.core_type<tc>, window_params = [{transform_indices = @transform_0, window_bounds = array<i64: 8, 2, 8, 256>}, {transform_indices = @transform_1, window_bounds = array<i64: 8, 8, 128>}]} {
    %c0 = arith.constant 0 : index
    %c0_0 = arith.constant 0 : index
    %c0_1 = arith.constant 0 : index
    %c0_2 = arith.constant 0 : index
    %0 = vector.load %arg1[%c0, %c0_0, %c0_1, %c0_2] : memref<8x2x8x256xf32, #tpu.memory_space<vmem>>, vector<8x2x8x256xf32>
    %1 = vector.extract_strided_slice %0 {offsets = [0, 0, 0, 0], sizes = [8, 1, 8, 256], strides = [1, 1, 1, 1]} : vector<8x2x8x256xf32> to vector<8x1x8x256xf32>
    %2 = vector.shape_cast %1 : vector<8x1x8x256xf32> to vector<8x8x256xf32>
    %3 = vector.extract_strided_slice %0 {offsets = [0, 1, 0, 0], sizes = [8, 1, 8, 256], strides = [1, 1, 1, 1]} : vector<8x2x8x256xf32> to vector<8x1x8x256xf32>
    %4 = vector.shape_cast %3 : vector<8x1x8x256xf32> to vector<8x8x256xf32>
    %5 = arith.maximumf %2, %4 : vector<8x8x256xf32>
    %6 = vector.extract_strided_slice %5 {offsets = [0, 0, 0], sizes = [8, 8, 128], strides = [1, 1, 1]} : vector<8x8x256xf32> to vector<8x8x128xf32>
    %7 = vector.extract_strided_slice %5 {offsets = [0, 0, 128], sizes = [8, 8, 128], strides = [1, 1, 1]} : vector<8x8x256xf32> to vector<8x8x128xf32>
    %8 = arith.maximumf %6, %7 : vector<8x8x128xf32>
    %9 = arith.truncf %8 : vector<8x8x128xf32> to vector<8x8x128xbf16>
    %c0_3 = arith.constant 0 : index
    %c0_4 = arith.constant 0 : index
    %c0_5 = arith.constant 0 : index
    %10 = vector.load %arg2[%c0_3, %c0_4, %c0_5] : memref<8x8x128xbf16, #tpu.memory_space<vmem>>, vector<8x8x128xbf16>
    tpu.vector_store %arg2[%c0_3, %c0_4, %c0_5], %9 {strides = array<i32>} : memref<8x8x128xbf16, #tpu.memory_space<vmem>>, vector<8x8x128xbf16>,
    return
  }
  func.func @transform_0(%arg0: i32) -> (i32, i32, i32, i32) {
    %c0_i32 = arith.constant 0 : i32
    %c0_i32_0 = arith.constant 0 : i32
    %c0_i32_1 = arith.constant 0 : i32
    %c0_i32_2 = arith.constant 0 : i32
    return %arg0, %c0_i32, %c0_i32_0, %c0_i32_1 : i32, i32, i32, i32
  }
  func.func @transform_1(%arg0: i32) -> (i32, i32, i32) {
    %c0_i32 = arith.constant 0 : i32
    %c0_i32_0 = arith.constant 0 : i32
    %c0_i32_1 = arith.constant 0 : i32
    return %arg0, %c0_i32, %c0_i32_0 : i32, i32, i32
  }
}

module attributes {stable_mosaic.version = 11 : i64} {
  func.func @_matmul_bias_act_kernel(%arg0: i32, %arg1: i32, %arg2: i32, %arg3: memref<2x1024xbf16, #tpu.memory_space<vmem>>, %arg4: memref<1024x256xbf16, #tpu.memory_space<vmem>>, %arg5: memref<1x256xf32, #tpu.memory_space<vmem>>, %arg6: memref<2x256xf32, #tpu.memory_space<vmem>>) attributes {dimension_semantics = [#tpu.dimension_semantics<parallel>, #tpu.dimension_semantics<parallel>, #tpu.dimension_semantics<arbitrary>], iteration_bounds = array<i64: 1, 2, 8>, scalar_prefetch = 0 : i64, scratch_operands = 0 : i64, tpu.core_type = #tpu.core_type<tc>, window_params = [{transform_indices = @transform_0, window_bounds = array<i64: 2, 1024>}, {transform_indices = @transform_1, window_bounds = array<i64: 1024, 256>}, {transform_indices = @transform_2, window_bounds = array<i64: 1, 256>}, {transform_indices = @transform_3, window_bounds = array<i64: 2, 256>}]} {
    %c0_i32 = arith.constant 0 : i32
    %0 = arith.cmpi eq, %arg2, %c0_i32 : i32
    %1 = arith.extui %0 : i1 to i32
    %c0_i32_0 = arith.constant 0 : i32
    %2 = arith.cmpi ne, %1, %c0_i32_0 : i32
    scf.if %2 {
      %cst_9 = arith.constant 0.000000e+00 : f32
      %12 = vector.broadcast %cst_9 : f32 to vector<2x256xf32>
      %c0_10 = arith.constant 0 : index
      %c0_11 = arith.constant 0 : index
      %13 = vector.load %arg6[%c0_10, %c0_11] : memref<2x256xf32, #tpu.memory_space<vmem>>, vector<2x256xf32>
      tpu.vector_store %arg6[%c0_10, %c0_11], %12 {strides = array<i32>} : memref<2x256xf32, #tpu.memory_space<vmem>>, vector<2x256xf32>,
    } else {
    }
    %c0 = arith.constant 0 : index
    %c0_1 = arith.constant 0 : index
    %3 = vector.load %arg6[%c0, %c0_1] : memref<2x256xf32, #tpu.memory_space<vmem>>, vector<2x256xf32>
    %c0_2 = arith.constant 0 : index
    %c0_3 = arith.constant 0 : index
    %4 = vector.load %arg3[%c0_2, %c0_3] : memref<2x1024xbf16, #tpu.memory_space<vmem>>, vector<2x1024xbf16>
    %c0_4 = arith.constant 0 : index
    %c0_5 = arith.constant 0 : index
    %5 = vector.load %arg4[%c0_4, %c0_5] : memref<1024x256xbf16, #tpu.memory_space<vmem>>, vector<1024x256xbf16>
    %cst = arith.constant dense<0.000000e+00> : vector<2x256xf32>
    %6 = tpu.matmul %4, %5, %cst {dimension_numbers = #tpu.dot_dimension_numbers<[1], [0], [0], [1], [0, 0, 1, 1], [], []>} : vector<2x1024xbf16>, vector<1024x256xbf16>, vector<2x256xf32> -> vector<2x256xf32>
    %7 = arith.addf %3, %6 : vector<2x256xf32>
    %c0_6 = arith.constant 0 : index
    %c0_7 = arith.constant 0 : index
    %8 = vector.load %arg6[%c0_6, %c0_7] : memref<2x256xf32, #tpu.memory_space<vmem>>, vector<2x256xf32>
    tpu.vector_store %arg6[%c0_6, %c0_7], %7 {strides = array<i32>} : memref<2x256xf32, #tpu.memory_space<vmem>>, vector<2x256xf32>,
    %c7_i32 = arith.constant 7 : i32
    %9 = arith.cmpi eq, %arg2, %c7_i32 : i32
    %10 = arith.extui %9 : i1 to i32
    %c0_i32_8 = arith.constant 0 : i32
    %11 = arith.cmpi ne, %10, %c0_i32_8 : i32
    scf.if %11 {
      %c0_9 = arith.constant 0 : index
      %c0_10 = arith.constant 0 : index
      %12 = vector.load %arg6[%c0_9, %c0_10] : memref<2x256xf32, #tpu.memory_space<vmem>>, vector<2x256xf32>
      %c0_11 = arith.constant 0 : index
      %c0_12 = arith.constant 0 : index
      %13 = vector.load %arg5[%c0_11, %c0_12] : memref<1x256xf32, #tpu.memory_space<vmem>>, vector<1x256xf32>
      %14 = vector.broadcast %13 : vector<1x256xf32> to vector<2x256xf32>
      %15 = arith.addf %12, %14 : vector<2x256xf32>
      %cst_13 = arith.constant 0.000000e+00 : f32
      %16 = vector.broadcast %cst_13 : f32 to vector<2x256xf32>
      %17 = arith.maximumf %15, %16 : vector<2x256xf32>
      %c0_14 = arith.constant 0 : index
      %c0_15 = arith.constant 0 : index
      %18 = vector.load %arg6[%c0_14, %c0_15] : memref<2x256xf32, #tpu.memory_space<vmem>>, vector<2x256xf32>
      tpu.vector_store %arg6[%c0_14, %c0_15], %17 {strides = array<i32>} : memref<2x256xf32, #tpu.memory_space<vmem>>, vector<2x256xf32>,
    } else {
    }
    return
  }
  func.func @transform_0(%arg0: i32, %arg1: i32, %arg2: i32) -> (i32, i32) {
    %c0_i32 = arith.constant 0 : i32
    return %arg0, %arg2 : i32, i32
  }
  func.func @transform_1(%arg0: i32, %arg1: i32, %arg2: i32) -> (i32, i32) {
    %c0_i32 = arith.constant 0 : i32
    return %arg2, %arg1 : i32, i32
  }
  func.func @transform_2(%arg0: i32, %arg1: i32, %arg2: i32) -> (i32, i32) {
    %c0_i32 = arith.constant 0 : i32
    %c0_i32_0 = arith.constant 0 : i32
    return %c0_i32, %arg1 : i32, i32
  }
  func.func @transform_3(%arg0: i32, %arg1: i32, %arg2: i32) -> (i32, i32) {
    %c0_i32 = arith.constant 0 : i32
    return %arg0, %arg1 : i32, i32
  }
}

module attributes {stable_mosaic.version = 11 : i64} {
  func.func @_matmul_bias_act_kernel(%arg0: i32, %arg1: i32, %arg2: i32, %arg3: memref<2x512xbf16, #tpu.memory_space<vmem>>, %arg4: memref<512x3xbf16, #tpu.memory_space<vmem>>, %arg5: memref<1x3xf32, #tpu.memory_space<vmem>>, %arg6: memref<2x3xf32, #tpu.memory_space<vmem>>) attributes {dimension_semantics = [#tpu.dimension_semantics<parallel>, #tpu.dimension_semantics<parallel>, #tpu.dimension_semantics<arbitrary>], iteration_bounds = array<i64: 1, 1, 1>, scalar_prefetch = 0 : i64, scratch_operands = 0 : i64, tpu.core_type = #tpu.core_type<tc>, window_params = [{transform_indices = @transform_0, window_bounds = array<i64: 2, 512>}, {transform_indices = @transform_1, window_bounds = array<i64: 512, 3>}, {transform_indices = @transform_2, window_bounds = array<i64: 1, 3>}, {transform_indices = @transform_3, window_bounds = array<i64: 2, 3>}]} {
    %c0_i32 = arith.constant 0 : i32
    %0 = arith.cmpi eq, %arg2, %c0_i32 : i32
    %1 = arith.extui %0 : i1 to i32
    %c0_i32_0 = arith.constant 0 : i32
    %2 = arith.cmpi ne, %1, %c0_i32_0 : i32
    scf.if %2 {
      %cst_10 = arith.constant 0.000000e+00 : f32
      %12 = vector.broadcast %cst_10 : f32 to vector<2x3xf32>
      %c0_11 = arith.constant 0 : index
      %c0_12 = arith.constant 0 : index
      %13 = vector.load %arg6[%c0_11, %c0_12] : memref<2x3xf32, #tpu.memory_space<vmem>>, vector<2x3xf32>
      tpu.vector_store %arg6[%c0_11, %c0_12], %12 {strides = array<i32>} : memref<2x3xf32, #tpu.memory_space<vmem>>, vector<2x3xf32>,
    } else {
    }
    %c0 = arith.constant 0 : index
    %c0_1 = arith.constant 0 : index
    %3 = vector.load %arg6[%c0, %c0_1] : memref<2x3xf32, #tpu.memory_space<vmem>>, vector<2x3xf32>
    %c0_2 = arith.constant 0 : index
    %c0_3 = arith.constant 0 : index
    %4 = vector.load %arg3[%c0_2, %c0_3] : memref<2x512xbf16, #tpu.memory_space<vmem>>, vector<2x512xbf16>
    %c0_4 = arith.constant 0 : index
    %c0_5 = arith.constant 0 : index
    %5 = vector.load %arg4[%c0_4, %c0_5] : memref<512x3xbf16, #tpu.memory_space<vmem>>, vector<512x3xbf16>
    %cst = arith.constant dense<0.000000e+00> : vector<2x3xf32>
    %6 = tpu.matmul %4, %5, %cst {dimension_numbers = #tpu.dot_dimension_numbers<[1], [0], [0], [1], [0, 0, 1, 1], [], []>} : vector<2x512xbf16>, vector<512x3xbf16>, vector<2x3xf32> -> vector<2x3xf32>
    %7 = arith.addf %3, %6 : vector<2x3xf32>
    %c0_6 = arith.constant 0 : index
    %c0_7 = arith.constant 0 : index
    %8 = vector.load %arg6[%c0_6, %c0_7] : memref<2x3xf32, #tpu.memory_space<vmem>>, vector<2x3xf32>
    tpu.vector_store %arg6[%c0_6, %c0_7], %7 {strides = array<i32>} : memref<2x3xf32, #tpu.memory_space<vmem>>, vector<2x3xf32>,
    %c0_i32_8 = arith.constant 0 : i32
    %9 = arith.cmpi eq, %arg2, %c0_i32_8 : i32
    %10 = arith.extui %9 : i1 to i32
    %c0_i32_9 = arith.constant 0 : i32
    %11 = arith.cmpi ne, %10, %c0_i32_9 : i32
    scf.if %11 {
      %c0_10 = arith.constant 0 : index
      %c0_11 = arith.constant 0 : index
      %12 = vector.load %arg6[%c0_10, %c0_11] : memref<2x3xf32, #tpu.memory_space<vmem>>, vector<2x3xf32>
      %c0_12 = arith.constant 0 : index
      %c0_13 = arith.constant 0 : index
      %13 = vector.load %arg5[%c0_12, %c0_13] : memref<1x3xf32, #tpu.memory_space<vmem>>, vector<1x3xf32>
      %14 = vector.broadcast %13 : vector<1x3xf32> to vector<2x3xf32>
      %15 = arith.addf %12, %14 : vector<2x3xf32>
      %c0_14 = arith.constant 0 : index
      %c0_15 = arith.constant 0 : index
      %16 = vector.load %arg6[%c0_14, %c0_15] : memref<2x3xf32, #tpu.memory_space<vmem>>, vector<2x3xf32>
      tpu.vector_store %arg6[%c0_14, %c0_15], %15 {strides = array<i32>} : memref<2x3xf32, #tpu.memory_space<vmem>>, vector<2x3xf32>,
    } else {
    }
    return
  }
  func.func @transform_0(%arg0: i32, %arg1: i32, %arg2: i32) -> (i32, i32) {
    %c0_i32 = arith.constant 0 : i32
    return %arg0, %arg2 : i32, i32
  }
  func.func @transform_1(%arg0: i32, %arg1: i32, %arg2: i32) -> (i32, i32) {
    %c0_i32 = arith.constant 0 : i32
    return %arg2, %arg1 : i32, i32
  }
  func.func @transform_2(%arg0: i32, %arg1: i32, %arg2: i32) -> (i32, i32) {
    %c0_i32 = arith.constant 0 : i32
    %c0_i32_0 = arith.constant 0 : i32
    return %c0_i32, %arg1 : i32, i32
  }
  func.func @transform_3(%arg0: i32, %arg1: i32, %arg2: i32) -> (i32, i32) {
    %c0_i32 = arith.constant 0 : i32
    return %arg0, %arg1 : i32, i32
  }
}

</mosaic_0001>

<llo_original>
// kernel: simple_cnn_forward.8
$region0: #{simple_cnn_forward.8}
  #allocation0 [shape = 'u32[]', space=smem, size = 0x4, offset = 0x4, fixed_abs, tag = 'smem constant byte address 0x4 - core index']
  #allocation1 [shape = 'u32[144,128]{1,0:T(1,128)}', space=vmem, size = 0x12000, scoped, tag = 'internal scratch']
  %s0 = inlined_call_operand.vmem [shape: bf16[8192,9], index: 0, kind: input, shape index: {}]
  %s1 = inlined_call_operand.vmem [shape: bf16[9,32], index: 1, kind: input, shape index: {}]
  %s2 = inlined_call_operand.vmem [shape: f32[1,32], index: 2, kind: input, shape index: {}]
  %s3 = inlined_call_operand.vmem [shape: f32[8192,32], index: 3, kind: output, shape index: {}]
  %s4 = sld [smem:[#allocation0]]
  $region53: #{simple_cnn_forward.8} parent=0
    _
  %s6 = ssub.s32 1, %s4
  %s7 = scalar_select 0, %s6, %s4
  loop: start=0, step=1, limit=18
  $region2: #{simple_cnn_forward.8} parent=0 // loop_pre_header
    _
  $region3: #{simple_cnn_forward.8} parent=0 // loop_header
    %s9 = sphi 0, %s13
    %p10 = scmp.ge.s32.totalorder %s9, 18
    %s16 = sphi 0, %s35
    %s17 = sphi 0, %s31
    %s18 = sphi 0, %s27
    %s19 = sphi 0, %s16
    %s20 = sphi 0, %s17
    %s21 = sphi 0, %s18
    %s22 = sphi 0, %s19
    %s23 = sphi 0, %s20
    %s24 = sphi 0, %s21
    %s40 = sphi 0, %s42
    %s43 = sphi 0, %s40
    %s44 = sphi 0, %s43
    %s60 = sphi 0, %s44
    %s68 = sphi 0, %s70
    %s71 = sphi 0, %s68
    %s72 = sphi 0, %s71
    %s88 = sphi 0, %s72
    %s94 = sphi 0, %s96
    %s97 = sphi 0, %s94
    %s98 = sphi 0, %s97
    %s114 = sphi 0, %s98
    %s122 = sphi 0, %s124
    %s125 = sphi 0, %s122
    %s126 = sphi 0, %s125
    %s142 = sphi 0, %s126
  $region4: #{simple_cnn_forward.8} parent=0 // loop_header_branch
    %12 = sbr.rel (%p10) target = $region8
  $region5: #{simple_cnn_forward.8} parent=0 // loop_body
    %s14 = ssub.s32 %s9, 1
    %s15 = ssub.s32 %s9, 2
    %s25 = sadd.s32 1, %s18
    %p26 = scmp.ge.s32.totalorder %s25, 1
    %s27 = scalar_select %p26, 0, %s25
    %s28 = sadd.s32 1, %s17
    %s29 = scalar_select %p26, %s28, %s17
    %p30 = scmp.ge.s32.totalorder %s29, 1
    %s31 = scalar_select %p30, 0, %s29
    %s32 = sadd.s32 1, %s16
    %s33 = scalar_select %p30, %s32, %s16
    %p34 = scmp.ge.s32.totalorder %s33, 16
    %s35 = scalar_select %p34, 0, %s33
    %s36 = ssub.s32 %s16, %s35
    %s37 = ssub.s32 %s18, %s27
    %s38 = sor.u32 %s36, %s37
    %p39 = scmp.eq.s32.totalorder %s38, 0
    %s41 = sadd.s32 %s40, 1
    %s42 = scalar_select %p39, %s40, %s41
    %p45 = pneg %p39
    %p46 = scmp.eq.s32.totalorder %s9, 15
    %p47 = por %p45, %p46
    %p48 = scmp.ne.s32.totalorder %s40, %s43
    %p49 = scmp.eq.s32.totalorder %s9, 0
    %p50 = por %p48, %p49
    %p51 = scmp.ne.s32.totalorder %s40, %s43
    %p52 = scmp.eq.s32.totalorder %s14, 15
    %p53 = por %p51, %p52
    %p54 = scmp.ne.s32.totalorder %s43, %s44
    %p55 = scmp.eq.s32.totalorder %s14, 0
    %p56 = por %p54, %p55
    %p57 = scmp.ne.s32.totalorder %s43, %s44
    %p58 = scmp.eq.s32.totalorder %s15, 15
    %p59 = por %p57, %p58
    %p61 = scmp.ne.s32.totalorder %s44, %s60
    %p62 = scmp.eq.s32.totalorder %s15, 0
    %p63 = por %p61, %p62
    %s64 = ssub.s32 %s18, %s27
    %s65 = ssub.s32 %s17, %s31
    %s66 = sor.u32 %s64, %s65
    %p67 = scmp.eq.s32.totalorder %s66, 0
    %s69 = sadd.s32 %s68, 1
    %s70 = scalar_select %p67, %s68, %s69
    %p73 = pneg %p67
    %p74 = scmp.eq.s32.totalorder %s9, 15
    %p75 = por %p73, %p74
    %p76 = scmp.ne.s32.totalorder %s68, %s71
    %p77 = scmp.eq.s32.totalorder %s9, 0
    %p78 = por %p76, %p77
    %p79 = scmp.ne.s32.totalorder %s68, %s71
    %p80 = scmp.eq.s32.totalorder %s14, 15
    %p81 = por %p79, %p80
    %p82 = scmp.ne.s32.totalorder %s71, %s72
    %p83 = scmp.eq.s32.totalorder %s14, 0
    %p84 = por %p82, %p83
    %p85 = scmp.ne.s32.totalorder %s71, %s72
    %p86 = scmp.eq.s32.totalorder %s15, 15
    %p87 = por %p85, %p86
    %p89 = scmp.ne.s32.totalorder %s72, %s88
    %p90 = scmp.eq.s32.totalorder %s15, 0
    %p91 = por %p89, %p90
    %s92 = ssub.s32 %s17, %s31
    %p93 = scmp.eq.s32.totalorder %s92, 0
    %s95 = sadd.s32 %s94, 1
    %s96 = scalar_select %p93, %s94, %s95
    %p99 = pneg %p93
    %p100 = scmp.eq.s32.totalorder %s9, 15
    %p101 = por %p99, %p100
    %p102 = scmp.ne.s32.totalorder %s94, %s97
    %p103 = scmp.eq.s32.totalorder %s9, 0
    %p104 = por %p102, %p103
    %p105 = scmp.ne.s32.totalorder %s94, %s97
    %p106 = scmp.eq.s32.totalorder %s14, 15
    %p107 = por %p105, %p106
    %p108 = scmp.ne.s32.totalorder %s97, %s98
    %p109 = scmp.eq.s32.totalorder %s14, 0
    %p110 = por %p108, %p109
    %p111 = scmp.ne.s32.totalorder %s97, %s98
    %p112 = scmp.eq.s32.totalorder %s15, 15
    %p113 = por %p111, %p112
    %p115 = scmp.ne.s32.totalorder %s98, %s114
    %p116 = scmp.eq.s32.totalorder %s15, 0
    %p117 = por %p115, %p116
    %s118 = ssub.s32 %s16, %s35
    %s119 = ssub.s32 %s17, %s31
    %s120 = sor.u32 %s118, %s119
    %p121 = scmp.eq.s32.totalorder %s120, 0
    %s123 = sadd.s32 %s122, 1
    %s124 = scalar_select %p121, %s122, %s123
    %p127 = pneg %p121
    %p128 = scmp.eq.s32.totalorder %s9, 15
    %p129 = por %p127, %p128
    %p130 = scmp.ne.s32.totalorder %s122, %s125
    %p131 = scmp.eq.s32.totalorder %s9, 0
    %p132 = por %p130, %p131
    %p133 = scmp.ne.s32.totalorder %s122, %s125
    %p134 = scmp.eq.s32.totalorder %s14, 15
    %p135 = por %p133, %p134
    %p136 = scmp.ne.s32.totalorder %s125, %s126
    %p137 = scmp.eq.s32.totalorder %s14, 0
    %p138 = por %p136, %p137
    %p139 = scmp.ne.s32.totalorder %s125, %s126
    %p140 = scmp.eq.s32.totalorder %s15, 15
    %p141 = por %p139, %p140
    %p143 = scmp.ne.s32.totalorder %s126, %s142
    %p144 = scmp.eq.s32.totalorder %s15, 0
    %p145 = por %p143, %p144
    %p146 = scmp.le.s32.totalorder 1, %s9
    %p147 = scmp.lt.s32.totalorder %s9, 17
    %p148 = pnand %p146, %p147
    %p149 = pneg %p148
    // Predicated region
    $region9: #{simple_cnn_forward.8} parent=5 // pred_check
      _
    $region10: #{simple_cnn_forward.8} parent=5 // pred_check_branch
      %151 = sbr.rel (%p148) target = $region12
    $region11: #{simple_cnn_forward.8} parent=5 // pred_region
      %s152 = ssub.s32 %s9, 1
      // Predicated region
      $region13: #{simple_cnn_forward.8} parent=11 // pred_check
        %p153 = pneg %p84
      $region14: #{simple_cnn_forward.8} parent=11 // pred_check_branch
        %155 = sbr.rel (%p153) target = $region16
      $region15: #{simple_cnn_forward.8} parent=11 // pred_region
        %s156 = smul.u32 2, %s21
        %p157 = scmp.lt.s32.totalorder %s156, 1
        %s158 = scalar_select %p157, %s156, 1
        %p159 = scmp.lt.s32.totalorder %s20, 0
        %s160 = scalar_select %p159, %s20, 0
        %s161 = sadd.s32 %s160, %s158
        %s162 = smul.addr %s161, 4
        %s163 = scalar_lea.vmem %s1, %s162
        %s164 = smul.u32 2, %s21
      $region16: #{simple_cnn_forward.8} parent=11 // pred_fallthru
        _
      // Predicated region
      $region17: #{simple_cnn_forward.8} parent=11 // pred_check
        %p165 = pneg %p110
      $region18: #{simple_cnn_forward.8} parent=11 // pred_check_branch
        %167 = sbr.rel (%p165) target = $region20
      $region19: #{simple_cnn_forward.8} parent=11 // pred_region
        %p168 = scmp.lt.s32.totalorder %s20, 0
        %s169 = scalar_select %p168, %s20, 0
        %s170 = scalar_lea.vmem %s2, %s169
      $region20: #{simple_cnn_forward.8} parent=11 // pred_fallthru
        _
    $region12: #{simple_cnn_forward.8} parent=5 // pred_fallthru
      _
    %p171 = scmp.lt.s32.totalorder %s9, 16
    // Predicated region
    $region21: #{simple_cnn_forward.8} parent=5 // pred_check
      %p172 = pneg %p171
    $region22: #{simple_cnn_forward.8} parent=5 // pred_check_branch
      %174 = sbr.rel (%p172) target = $region24
    $region23: #{simple_cnn_forward.8} parent=5 // pred_region
      // Predicated region
      $region25: #{simple_cnn_forward.8} parent=23 // pred_check
        %p175 = pneg %p50
      $region26: #{simple_cnn_forward.8} parent=23 // pred_check_branch
        %177 = sbr.rel (%p175) target = $region28
      $region27: #{simple_cnn_forward.8} parent=23 // pred_region
        %s178 = smul.u32 64, %s16
        %p179 = scmp.lt.s32.totalorder %s178, 1023
        %s180 = scalar_select %p179, %s178, 1023
        %p181 = scmp.lt.s32.totalorder %s18, 0
        %s182 = scalar_select %p181, %s18, 0
        %s183 = sadd.s32 %s182, %s180
        %s184 = smul.addr %s183, 4
        %s185 = scalar_lea.vmem %s0, %s184
        %s186 = smul.u32 64, %s16
      $region28: #{simple_cnn_forward.8} parent=23 // pred_fallthru
        _
    $region24: #{simple_cnn_forward.8} parent=5 // pred_fallthru
      _
    %p187 = scmp.le.s32.totalorder 1, %s9
    %p188 = scmp.lt.s32.totalorder %s9, 17
    %p189 = pnand %p187, %p188
    %p190 = pneg %p189
    // Predicated region
    $region29: #{simple_cnn_forward.8} parent=5 // pred_check
      _
    $region30: #{simple_cnn_forward.8} parent=5 // pred_check_branch
      %192 = sbr.rel (%p189) target = $region32
    $region31: #{simple_cnn_forward.8} parent=5 // pred_region
      %s193 = ssub.s32 %s9, 1
      %s194 = smul.u32 64, %s19
      %p195 = scmp.lt.s32.totalorder %s194, 1023
      %s196 = scalar_select %p195, %s194, 1023
      %p197 = scmp.lt.s32.totalorder %s21, 0
      %s198 = scalar_select %p197, %s21, 0
      %s199 = sadd.s32 %s198, %s196
      %s200 = smul.addr %s199, 4
      %s201 = scalar_lea.vmem %s0, %s200
      %p202 = pneg %p56
      %p203 = pneg %p53
      %s204 = smul.u32 2, %s21
      %p205 = scmp.lt.s32.totalorder %s204, 1
      %s206 = scalar_select %p205, %s204, 1
      %p207 = scmp.lt.s32.totalorder %s20, 0
      %s208 = scalar_select %p207, %s20, 0
      %s209 = sadd.s32 %s208, %s206
      %s210 = smul.addr %s209, 4
      %s211 = scalar_lea.vmem %s1, %s210
      %p212 = pneg %p84
      %p213 = pneg %p81
      %p214 = scmp.lt.s32.totalorder %s20, 0
      %s215 = scalar_select %p214, %s20, 0
      %s216 = scalar_lea.vmem %s2, %s215
      %p217 = pneg %p110
      %p218 = pneg %p107
      %p219 = pneg %p138
      %p220 = pneg %p135
      %s221 = smul.u32 64, %s19
      %p222 = scmp.lt.s32.totalorder %s221, 1023
      %s223 = scalar_select %p222, %s221, 1023
      %p224 = scmp.lt.s32.totalorder %s20, 0
      %s225 = scalar_select %p224, %s20, 0
      %s226 = sadd.s32 %s225, %s223
      %s227 = smul.addr %s226, 8
      %s228 = scalar_lea.vmem %s3, %s227
      %s229 = smul.u32 64, %s19
      %p230 = scmp.lt.s32.totalorder %s229, 1023
      %s231 = scalar_select %p230, %s229, 1023
      %p232 = scmp.lt.s32.totalorder %s21, 0
      %s233 = scalar_select %p232, %s21, 0
      %s234 = sadd.s32 %s233, %s231
      %s235 = smul.addr %s234, 4
      %s236 = scalar_lea.vmem %s0, %s235
      %s237 = smul.u32 64, %s19
      %s238 = smul.u32 2, %s21
      %p239 = scmp.lt.s32.totalorder %s238, 1
      %s240 = scalar_select %p239, %s238, 1
      %p241 = scmp.lt.s32.totalorder %s20, 0
      %s242 = scalar_select %p241, %s20, 0
      %s243 = sadd.s32 %s242, %s240
      %s244 = smul.addr %s243, 4
      %s245 = scalar_lea.vmem %s1, %s244
      %s246 = smul.u32 2, %s21
      %p247 = scmp.lt.s32.totalorder %s20, 0
      %s248 = scalar_select %p247, %s20, 0
      %s249 = scalar_lea.vmem %s2, %s248
      %s250 = smul.u32 64, %s19
      %p251 = scmp.lt.s32.totalorder %s250, 1023
      %s252 = scalar_select %p251, %s250, 1023
      %p253 = scmp.lt.s32.totalorder %s20, 0
      %s254 = scalar_select %p253, %s20, 0
      %s255 = sadd.s32 %s254, %s252
      %s256 = smul.addr %s255, 8
      %s257 = scalar_lea.vmem %s3, %s256
      %s258 = smul.u32 64, %s19
      %p260 = scmp.eq.s32.totalorder %s21, 0
      // Predicated region
      $region33: #{simple_cnn_forward.8} parent=31 // pred_check
        %p261 = pneg %p260
      $region34: #{simple_cnn_forward.8} parent=31 // pred_check_branch
        %263 = sbr.rel (%p261) target = $region36
      $region35: #{simple_cnn_forward.8} parent=31 // pred_region
        %vm264 = vcmask 261120
        %265 = vst.msk [vmem:[%s257] sm:$0xff] %vm264, 0.0
        %266 = vst.msk [vmem:[%s257 + $0x8] sm:$0xff] %vm264, 0.0
        %267 = vst.msk [vmem:[%s257 + $0x10] sm:$0xff] %vm264, 0.0
        %268 = vst.msk [vmem:[%s257 + $0x18] sm:$0xff] %vm264, 0.0
        %269 = vst.msk [vmem:[%s257 + $0x20] sm:$0xff] %vm264, 0.0
        %270 = vst.msk [vmem:[%s257 + $0x28] sm:$0xff] %vm264, 0.0
        %271 = vst.msk [vmem:[%s257 + $0x30] sm:$0xff] %vm264, 0.0
        %272 = vst.msk [vmem:[%s257 + $0x38] sm:$0xff] %vm264, 0.0
        %273 = vst.msk [vmem:[%s257 + $0x40] sm:$0xff] %vm264, 0.0
        %274 = vst.msk [vmem:[%s257 + $0x48] sm:$0xff] %vm264, 0.0
        %275 = vst.msk [vmem:[%s257 + $0x50] sm:$0xff] %vm264, 0.0
        %276 = vst.msk [vmem:[%s257 + $0x58] sm:$0xff] %vm264, 0.0
        %277 = vst.msk [vmem:[%s257 + $0x60] sm:$0xff] %vm264, 0.0
        %278 = vst.msk [vmem:[%s257 + $0x68] sm:$0xff] %vm264, 0.0
        %279 = vst.msk [vmem:[%s257 + $0x70] sm:$0xff] %vm264, 0.0
        %280 = vst.msk [vmem:[%s257 + $0x78] sm:$0xff] %vm264, 0.0
        %281 = vst.msk [vmem:[%s257 + $0x80] sm:$0xff] %vm264, 0.0
        %282 = vst.msk [vmem:[%s257 + $0x88] sm:$0xff] %vm264, 0.0
        %283 = vst.msk [vmem:[%s257 + $0x90] sm:$0xff] %vm264, 0.0
        %284 = vst.msk [vmem:[%s257 + $0x98] sm:$0xff] %vm264, 0.0
        %285 = vst.msk [vmem:[%s257 + $0xa0] sm:$0xff] %vm264, 0.0
        %286 = vst.msk [vmem:[%s257 + $0xa8] sm:$0xff] %vm264, 0.0
        %287 = vst.msk [vmem:[%s257 + $0xb0] sm:$0xff] %vm264, 0.0
        %288 = vst.msk [vmem:[%s257 + $0xb8] sm:$0xff] %vm264, 0.0
        %289 = vst.msk [vmem:[%s257 + $0xc0] sm:$0xff] %vm264, 0.0
        %290 = vst.msk [vmem:[%s257 + $0xc8] sm:$0xff] %vm264, 0.0
        %291 = vst.msk [vmem:[%s257 + $0xd0] sm:$0xff] %vm264, 0.0
        %292 = vst.msk [vmem:[%s257 + $0xd8] sm:$0xff] %vm264, 0.0
        %293 = vst.msk [vmem:[%s257 + $0xe0] sm:$0xff] %vm264, 0.0
        %294 = vst.msk [vmem:[%s257 + $0xe8] sm:$0xff] %vm264, 0.0
        %295 = vst.msk [vmem:[%s257 + $0xf0] sm:$0xff] %vm264, 0.0
        %296 = vst.msk [vmem:[%s257 + $0xf8] sm:$0xff] %vm264, 0.0
        %297 = vst.msk [vmem:[%s257 + $0x100] sm:$0xff] %vm264, 0.0
        %298 = vst.msk [vmem:[%s257 + $0x108] sm:$0xff] %vm264, 0.0
        %299 = vst.msk [vmem:[%s257 + $0x110] sm:$0xff] %vm264, 0.0
        %300 = vst.msk [vmem:[%s257 + $0x118] sm:$0xff] %vm264, 0.0
        %301 = vst.msk [vmem:[%s257 + $0x120] sm:$0xff] %vm264, 0.0
        %302 = vst.msk [vmem:[%s257 + $0x128] sm:$0xff] %vm264, 0.0
        %303 = vst.msk [vmem:[%s257 + $0x130] sm:$0xff] %vm264, 0.0
        %304 = vst.msk [vmem:[%s257 + $0x138] sm:$0xff] %vm264, 0.0
        %305 = vst.msk [vmem:[%s257 + $0x140] sm:$0xff] %vm264, 0.0
        %306 = vst.msk [vmem:[%s257 + $0x148] sm:$0xff] %vm264, 0.0
        %307 = vst.msk [vmem:[%s257 + $0x150] sm:$0xff] %vm264, 0.0
        %308 = vst.msk [vmem:[%s257 + $0x158] sm:$0xff] %vm264, 0.0
        %309 = vst.msk [vmem:[%s257 + $0x160] sm:$0xff] %vm264, 0.0
        %310 = vst.msk [vmem:[%s257 + $0x168] sm:$0xff] %vm264, 0.0
        %311 = vst.msk [vmem:[%s257 + $0x170] sm:$0xff] %vm264, 0.0
        %312 = vst.msk [vmem:[%s257 + $0x178] sm:$0xff] %vm264, 0.0
        %313 = vst.msk [vmem:[%s257 + $0x180] sm:$0xff] %vm264, 0.0
        %314 = vst.msk [vmem:[%s257 + $0x188] sm:$0xff] %vm264, 0.0
        %315 = vst.msk [vmem:[%s257 + $0x190] sm:$0xff] %vm264, 0.0
        %316 = vst.msk [vmem:[%s257 + $0x198] sm:$0xff] %vm264, 0.0
        %317 = vst.msk [vmem:[%s257 + $0x1a0] sm:$0xff] %vm264, 0.0
        %318 = vst.msk [vmem:[%s257 + $0x1a8] sm:$0xff] %vm264, 0.0
        %319 = vst.msk [vmem:[%s257 + $0x1b0] sm:$0xff] %vm264, 0.0
        %320 = vst.msk [vmem:[%s257 + $0x1b8] sm:$0xff] %vm264, 0.0
        %321 = vst.msk [vmem:[%s257 + $0x1c0] sm:$0xff] %vm264, 0.0
        %322 = vst.msk [vmem:[%s257 + $0x1c8] sm:$0xff] %vm264, 0.0
        %323 = vst.msk [vmem:[%s257 + $0x1d0] sm:$0xff] %vm264, 0.0
        %324 = vst.msk [vmem:[%s257 + $0x1d8] sm:$0xff] %vm264, 0.0
        %325 = vst.msk [vmem:[%s257 + $0x1e0] sm:$0xff] %vm264, 0.0
        %326 = vst.msk [vmem:[%s257 + $0x1e8] sm:$0xff] %vm264, 0.0
        %327 = vst.msk [vmem:[%s257 + $0x1f0] sm:$0xff] %vm264, 0.0
        %328 = vst.msk [vmem:[%s257 + $0x1f8] sm:$0xff] %vm264, 0.0
      $region36: #{simple_cnn_forward.8} parent=31 // pred_fallthru
        _
      %v329 = vld [vmem:[%s257] sm:$0xff]
      %v330 = vld [vmem:[%s257 + $0x8] sm:$0xff]
      %v331 = vld [vmem:[%s257 + $0x10] sm:$0xff]
      %v332 = vld [vmem:[%s257 + $0x18] sm:$0xff]
      %v333 = vld [vmem:[%s257 + $0x20] sm:$0xff]
      %v334 = vld [vmem:[%s257 + $0x28] sm:$0xff]
      %v335 = vld [vmem:[%s257 + $0x30] sm:$0xff]
      %v336 = vld [vmem:[%s257 + $0x38] sm:$0xff]
      %v337 = vld [vmem:[%s257 + $0x40] sm:$0xff]
      %v338 = vld [vmem:[%s257 + $0x48] sm:$0xff]
      %v339 = vld [vmem:[%s257 + $0x50] sm:$0xff]
      %v340 = vld [vmem:[%s257 + $0x58] sm:$0xff]
      %v341 = vld [vmem:[%s257 + $0x60] sm:$0xff]
      %v342 = vld [vmem:[%s257 + $0x68] sm:$0xff]
      %v343 = vld [vmem:[%s257 + $0x70] sm:$0xff]
      %v344 = vld [vmem:[%s257 + $0x78] sm:$0xff]
      %v345 = vld [vmem:[%s257 + $0x80] sm:$0xff]
      %v346 = vld [vmem:[%s257 + $0x88] sm:$0xff]
      %v347 = vld [vmem:[%s257 + $0x90] sm:$0xff]
      %v348 = vld [vmem:[%s257 + $0x98] sm:$0xff]
      %v349 = vld [vmem:[%s257 + $0xa0] sm:$0xff]
      %v350 = vld [vmem:[%s257 + $0xa8] sm:$0xff]
      %v351 = vld [vmem:[%s257 + $0xb0] sm:$0xff]
      %v352 = vld [vmem:[%s257 + $0xb8] sm:$0xff]
      %v353 = vld [vmem:[%s257 + $0xc0] sm:$0xff]
      %v354 = vld [vmem:[%s257 + $0xc8] sm:$0xff]
      %v355 = vld [vmem:[%s257 + $0xd0] sm:$0xff]
      %v356 = vld [vmem:[%s257 + $0xd8] sm:$0xff]
      %v357 = vld [vmem:[%s257 + $0xe0] sm:$0xff]
      %v358 = vld [vmem:[%s257 + $0xe8] sm:$0xff]
      %v359 = vld [vmem:[%s257 + $0xf0] sm:$0xff]
      %v360 = vld [vmem:[%s257 + $0xf8] sm:$0xff]
      %v361 = vld [vmem:[%s257 + $0x100] sm:$0xff]
      %v362 = vld [vmem:[%s257 + $0x108] sm:$0xff]
      %v363 = vld [vmem:[%s257 + $0x110] sm:$0xff]
      %v364 = vld [vmem:[%s257 + $0x118] sm:$0xff]
      %v365 = vld [vmem:[%s257 + $0x120] sm:$0xff]
      %v366 = vld [vmem:[%s257 + $0x128] sm:$0xff]
      %v367 = vld [vmem:[%s257 + $0x130] sm:$0xff]
      %v368 = vld [vmem:[%s257 + $0x138] sm:$0xff]
      %v369 = vld [vmem:[%s257 + $0x140] sm:$0xff]
      %v370 = vld [vmem:[%s257 + $0x148] sm:$0xff]
      %v371 = vld [vmem:[%s257 + $0x150] sm:$0xff]
      %v372 = vld [vmem:[%s257 + $0x158] sm:$0xff]
      %v373 = vld [vmem:[%s257 + $0x160] sm:$0xff]
      %v374 = vld [vmem:[%s257 + $0x168] sm:$0xff]
      %v375 = vld [vmem:[%s257 + $0x170] sm:$0xff]
      %v376 = vld [vmem:[%s257 + $0x178] sm:$0xff]
      %v377 = vld [vmem:[%s257 + $0x180] sm:$0xff]
      %v378 = vld [vmem:[%s257 + $0x188] sm:$0xff]
      %v379 = vld [vmem:[%s257 + $0x190] sm:$0xff]
      %v380 = vld [vmem:[%s257 + $0x198] sm:$0xff]
      %v381 = vld [vmem:[%s257 + $0x1a0] sm:$0xff]
      %v382 = vld [vmem:[%s257 + $0x1a8] sm:$0xff]
      %v383 = vld [vmem:[%s257 + $0x1b0] sm:$0xff]
      %v384 = vld [vmem:[%s257 + $0x1b8] sm:$0xff]
      %v385 = vld [vmem:[%s257 + $0x1c0] sm:$0xff]
      %v386 = vld [vmem:[%s257 + $0x1c8] sm:$0xff]
      %v387 = vld [vmem:[%s257 + $0x1d0] sm:$0xff]
      %v388 = vld [vmem:[%s257 + $0x1d8] sm:$0xff]
      %v389 = vld [vmem:[%s257 + $0x1e0] sm:$0xff]
      %v390 = vld [vmem:[%s257 + $0x1e8] sm:$0xff]
      %v391 = vld [vmem:[%s257 + $0x1f0] sm:$0xff]
      %v392 = vld [vmem:[%s257 + $0x1f8] sm:$0xff]
      %v393 = vld [vmem:[%s236] sm:$0xf]
      %v394 = vld [vmem:[%s236 + $0x4] sm:$0xf]
      %v395 = vld [vmem:[%s236 + $0x8] sm:$0xf]
      %v396 = vld [vmem:[%s236 + $0xc] sm:$0xf]
      %v397 = vld [vmem:[%s236 + $0x10] sm:$0xf]
      %v398 = vld [vmem:[%s236 + $0x14] sm:$0xf]
      %v399 = vld [vmem:[%s236 + $0x18] sm:$0xf]
      %v400 = vld [vmem:[%s236 + $0x1c] sm:$0xf]
      %v401 = vld [vmem:[%s236 + $0x20] sm:$0xf]
      %v402 = vld [vmem:[%s236 + $0x24] sm:$0xf]
      %v403 = vld [vmem:[%s236 + $0x28] sm:$0xf]
      %v404 = vld [vmem:[%s236 + $0x2c] sm:$0xf]
      %v405 = vld [vmem:[%s236 + $0x30] sm:$0xf]
      %v406 = vld [vmem:[%s236 + $0x34] sm:$0xf]
      %v407 = vld [vmem:[%s236 + $0x38] sm:$0xf]
      %v408 = vld [vmem:[%s236 + $0x3c] sm:$0xf]
      %v409 = vld [vmem:[%s236 + $0x40] sm:$0xf]
      %v410 = vld [vmem:[%s236 + $0x44] sm:$0xf]
      %v411 = vld [vmem:[%s236 + $0x48] sm:$0xf]
      %v412 = vld [vmem:[%s236 + $0x4c] sm:$0xf]
      %v413 = vld [vmem:[%s236 + $0x50] sm:$0xf]
      %v414 = vld [vmem:[%s236 + $0x54] sm:$0xf]
      %v415 = vld [vmem:[%s236 + $0x58] sm:$0xf]
      %v416 = vld [vmem:[%s236 + $0x5c] sm:$0xf]
      %v417 = vld [vmem:[%s236 + $0x60] sm:$0xf]
      %v418 = vld [vmem:[%s236 + $0x64] sm:$0xf]
      %v419 = vld [vmem:[%s236 + $0x68] sm:$0xf]
      %v420 = vld [vmem:[%s236 + $0x6c] sm:$0xf]
      %v421 = vld [vmem:[%s236 + $0x70] sm:$0xf]
      %v422 = vld [vmem:[%s236 + $0x74] sm:$0xf]
      %v423 = vld [vmem:[%s236 + $0x78] sm:$0xf]
      %v424 = vld [vmem:[%s236 + $0x7c] sm:$0xf]
      %v425 = vld [vmem:[%s236 + $0x80] sm:$0xf]
      %v426 = vld [vmem:[%s236 + $0x84] sm:$0xf]
      %v427 = vld [vmem:[%s236 + $0x88] sm:$0xf]
      %v428 = vld [vmem:[%s236 + $0x8c] sm:$0xf]
      %v429 = vld [vmem:[%s236 + $0x90] sm:$0xf]
      %v430 = vld [vmem:[%s236 + $0x94] sm:$0xf]
      %v431 = vld [vmem:[%s236 + $0x98] sm:$0xf]
      %v432 = vld [vmem:[%s236 + $0x9c] sm:$0xf]
      %v433 = vld [vmem:[%s236 + $0xa0] sm:$0xf]
      %v434 = vld [vmem:[%s236 + $0xa4] sm:$0xf]
      %v435 = vld [vmem:[%s236 + $0xa8] sm:$0xf]
      %v436 = vld [vmem:[%s236 + $0xac] sm:$0xf]
      %v437 = vld [vmem:[%s236 + $0xb0] sm:$0xf]
      %v438 = vld [vmem:[%s236 + $0xb4] sm:$0xf]
      %v439 = vld [vmem:[%s236 + $0xb8] sm:$0xf]
      %v440 = vld [vmem:[%s236 + $0xbc] sm:$0xf]
      %v441 = vld [vmem:[%s236 + $0xc0] sm:$0xf]
      %v442 = vld [vmem:[%s236 + $0xc4] sm:$0xf]
      %v443 = vld [vmem:[%s236 + $0xc8] sm:$0xf]
      %v444 = vld [vmem:[%s236 + $0xcc] sm:$0xf]
      %v445 = vld [vmem:[%s236 + $0xd0] sm:$0xf]
      %v446 = vld [vmem:[%s236 + $0xd4] sm:$0xf]
      %v447 = vld [vmem:[%s236 + $0xd8] sm:$0xf]
      %v448 = vld [vmem:[%s236 + $0xdc] sm:$0xf]
      %v449 = vld [vmem:[%s236 + $0xe0] sm:$0xf]
      %v450 = vld [vmem:[%s236 + $0xe4] sm:$0xf]
      %v451 = vld [vmem:[%s236 + $0xe8] sm:$0xf]
      %v452 = vld [vmem:[%s236 + $0xec] sm:$0xf]
      %v453 = vld [vmem:[%s236 + $0xf0] sm:$0xf]
      %v454 = vld [vmem:[%s236 + $0xf4] sm:$0xf]
      %v455 = vld [vmem:[%s236 + $0xf8] sm:$0xf]
      %v456 = vld [vmem:[%s236 + $0xfc] sm:$0xf]
      %v457 = vld [vmem:[%s245] sm:$0xf]
      %v458 = vld [vmem:[%s245 + $0x4] sm:$0x1]
      %v523 = vunpack.c.l.b16 %v393
      %v524 = vunpack.c.l.b16 %v394
      %v525 = vunpack.c.l.b16 %v395
      %v526 = vunpack.c.l.b16 %v396
      %v527 = vunpack.c.l.b16 %v397
      %v528 = vunpack.c.l.b16 %v398
      %v529 = vunpack.c.l.b16 %v399
      %v530 = vunpack.c.l.b16 %v400
      %v531 = vunpack.c.l.b16 %v401
      %v532 = vunpack.c.l.b16 %v402
      %v533 = vunpack.c.l.b16 %v403
      %v534 = vunpack.c.l.b16 %v404
      %v535 = vunpack.c.l.b16 %v405
      %v536 = vunpack.c.l.b16 %v406
      %v537 = vunpack.c.l.b16 %v407
      %v538 = vunpack.c.l.b16 %v408
      %v539 = vunpack.c.l.b16 %v409
      %v540 = vunpack.c.l.b16 %v410
      %v541 = vunpack.c.l.b16 %v411
      %v542 = vunpack.c.l.b16 %v412
      %v543 = vunpack.c.l.b16 %v413
      %v544 = vunpack.c.l.b16 %v414
      %v545 = vunpack.c.l.b16 %v415
      %v546 = vunpack.c.l.b16 %v416
      %v547 = vunpack.c.l.b16 %v417
      %v548 = vunpack.c.l.b16 %v418
      %v549 = vunpack.c.l.b16 %v419
      %v550 = vunpack.c.l.b16 %v420
      %v551 = vunpack.c.l.b16 %v421
      %v552 = vunpack.c.l.b16 %v422
      %v553 = vunpack.c.l.b16 %v423
      %v554 = vunpack.c.l.b16 %v424
      %v555 = vunpack.c.l.b16 %v425
      %v556 = vunpack.c.l.b16 %v426
      %v557 = vunpack.c.l.b16 %v427
      %v558 = vunpack.c.l.b16 %v428
      %v559 = vunpack.c.l.b16 %v429
      %v560 = vunpack.c.l.b16 %v430
      %v561 = vunpack.c.l.b16 %v431
      %v562 = vunpack.c.l.b16 %v432
      %v563 = vunpack.c.l.b16 %v433
      %v564 = vunpack.c.l.b16 %v434
      %v565 = vunpack.c.l.b16 %v435
      %v566 = vunpack.c.l.b16 %v436
      %v567 = vunpack.c.l.b16 %v437
      %v568 = vunpack.c.l.b16 %v438
      %v569 = vunpack.c.l.b16 %v439
      %v570 = vunpack.c.l.b16 %v440
      %v571 = vunpack.c.l.b16 %v441
      %v572 = vunpack.c.l.b16 %v442
      %v573 = vunpack.c.l.b16 %v443
      %v574 = vunpack.c.l.b16 %v444
      %v575 = vunpack.c.l.b16 %v445
      %v576 = vunpack.c.l.b16 %v446
      %v577 = vunpack.c.l.b16 %v447
      %v578 = vunpack.c.l.b16 %v448
      %v579 = vunpack.c.l.b16 %v449
      %v580 = vunpack.c.l.b16 %v450
      %v581 = vunpack.c.l.b16 %v451
      %v582 = vunpack.c.l.b16 %v452
      %v583 = vunpack.c.l.b16 %v453
      %v584 = vunpack.c.l.b16 %v454
      %v585 = vunpack.c.l.b16 %v455
      %v586 = vunpack.c.l.b16 %v456
      %v587 = vpack.c.b16 %v524, %v523
      %v588 = vpack.c.b16 %v526, %v525
      %v589 = vpack.c.b16 %v528, %v527
      %v590 = vpack.c.b16 %v530, %v529
      %v591 = vpack.c.b16 %v532, %v531
      %v592 = vpack.c.b16 %v534, %v533
      %v593 = vpack.c.b16 %v536, %v535
      %v594 = vpack.c.b16 %v538, %v537
      %v595 = vpack.c.b16 %v540, %v539
      %v596 = vpack.c.b16 %v542, %v541
      %v597 = vpack.c.b16 %v544, %v543
      %v598 = vpack.c.b16 %v546, %v545
      %v599 = vpack.c.b16 %v548, %v547
      %v600 = vpack.c.b16 %v550, %v549
      %v601 = vpack.c.b16 %v552, %v551
      %v602 = vpack.c.b16 %v554, %v553
      %v603 = vpack.c.b16 %v556, %v555
      %v604 = vpack.c.b16 %v558, %v557
      %v605 = vpack.c.b16 %v560, %v559
      %v606 = vpack.c.b16 %v562, %v561
      %v607 = vpack.c.b16 %v564, %v563
      %v608 = vpack.c.b16 %v566, %v565
      %v609 = vpack.c.b16 %v568, %v567
      %v610 = vpack.c.b16 %v570, %v569
      %v611 = vpack.c.b16 %v572, %v571
      %v612 = vpack.c.b16 %v574, %v573
      %v613 = vpack.c.b16 %v576, %v575
      %v614 = vpack.c.b16 %v578, %v577
      %v615 = vpack.c.b16 %v580, %v579
      %v616 = vpack.c.b16 %v582, %v581
      %v617 = vpack.c.b16 %v584, %v583
      %v618 = vpack.c.b16 %v586, %v585
      %v621 = vunpack.c.l.b16 %v457
      %v622 = vunpack.c.l.b16 %v458
      %v623 = vpack.c.b16 %v622, %v621
      %vm624 = vcmask 72704
      %v626 = vsel %vm624, %v587, 0
      %v629 = vsel %vm624, %v588, 0
      %v632 = vsel %vm624, %v589, 0
      %v635 = vsel %vm624, %v590, 0
      %v638 = vsel %vm624, %v591, 0
      %v641 = vsel %vm624, %v592, 0
      %v644 = vsel %vm624, %v593, 0
      %v647 = vsel %vm624, %v594, 0
      %v650 = vsel %vm624, %v595, 0
      %v653 = vsel %vm624, %v596, 0
      %v656 = vsel %vm624, %v597, 0
      %v659 = vsel %vm624, %v598, 0
      %v662 = vsel %vm624, %v599, 0
      %v665 = vsel %vm624, %v600, 0
      %v668 = vsel %vm624, %v601, 0
      %v671 = vsel %vm624, %v602, 0
      %v674 = vsel %vm624, %v603, 0
      %v677 = vsel %vm624, %v604, 0
      %v680 = vsel %vm624, %v605, 0
      %v683 = vsel %vm624, %v606, 0
      %v686 = vsel %vm624, %v607, 0
      %v689 = vsel %vm624, %v608, 0
      %v692 = vsel %vm624, %v609, 0
      %v695 = vsel %vm624, %v610, 0
      %v698 = vsel %vm624, %v611, 0
      %v701 = vsel %vm624, %v612, 0
      %v704 = vsel %vm624, %v613, 0
      %v707 = vsel %vm624, %v614, 0
      %v710 = vsel %vm624, %v615, 0
      %v713 = vsel %vm624, %v616, 0
      %v716 = vsel %vm624, %v617, 0
      %v719 = vsel %vm624, %v618, 0
      %vm721 = vcmask 1043456
      %vm722 = vcmask 1044480
      %v723 = vsel %vm721, 4294967295, 65535
      %v724 = vsel %vm722, %v723, 0
      %v726 = vand.u32 %v623, %v724
      %728 = vmatprep.subr.bf16.mxu0 0
      %729 = vmatpush1.bf16.msra.mxu0 %v726
      %730 = vmatprep.subr.bf16.mxu0 0
      %731 = vmatpush1.bf16.msra.mxu0 0
      %732 = vmatprep.subr.bf16.mxu0 0
      %733 = vmatpush1.bf16.msra.mxu0 0
      %734 = vmatprep.subr.bf16.mxu0 0
      %735 = vmatpush1.bf16.msra.mxu0 0
      %736 = vmatprep.subr.bf16.mxu0 0
      %737 = vmatpush1.bf16.msra.mxu0 0
      %738 = vmatprep.subr.bf16.mxu0 0
      %739 = vmatpush1.bf16.msra.mxu0 0
      %740 = vmatprep.subr.bf16.mxu0 0
      %741 = vmatpush1.bf16.msra.mxu0 0
      %742 = vmatprep.subr.bf16.mxu0 0
      %743 = vmatpush1.bf16.msra.mxu0 0
      %744 = vmatprep.subr.bf16.mxu0 0
      %745 = vmatpush1.bf16.msra.mxu0 0
      %746 = vmatprep.subr.bf16.mxu0 0
      %747 = vmatpush1.bf16.msra.mxu0 0
      %748 = vmatprep.subr.bf16.mxu0 0
      %749 = vmatpush1.bf16.msra.mxu0 0
      %750 = vmatprep.subr.bf16.mxu0 0
      %751 = vmatpush1.bf16.msra.mxu0 0
      %752 = vmatprep.subr.bf16.mxu0 0
      %753 = vmatpush1.bf16.msra.mxu0 0
      %754 = vmatprep.subr.bf16.mxu0 0
      %755 = vmatpush1.bf16.msra.mxu0 0
      %756 = vmatprep.subr.bf16.mxu0 0
      %757 = vmatpush1.bf16.msra.mxu0 0
      %758 = vmatprep.subr.bf16.mxu0 0
      %759 = vmatpush1.bf16.msra.mxu0 0
      %760 = vmatprep.mubr.bf16.mxu0 0
      %761 = vmatmul.mubr.bf16.gmra.mrb[0].mxu0 %v626
      %v762 = vpop.f32.mrb[0].mxu0
      %v763 = vadd.f32 0.0, %v762
      %v764 = vpop.f32.mrb[0].mxu0
      %v765 = vpop.f32.mrb[0].mxu0
      %v766 = vadd.f32 0.0, %v765
      %v767 = vpop.f32.mrb[0].mxu0
      %768 = vmatprep.mubr.bf16.mxu0 0
      %769 = vmatmul.mubr.bf16.gmra.mrb[0].mxu0 %v629
      %v770 = vpop.f32.mrb[0].mxu0
      %v771 = vadd.f32 0.0, %v770
      %v772 = vpop.f32.mrb[0].mxu0
      %v773 = vpop.f32.mrb[0].mxu0
      %v774 = vadd.f32 0.0, %v773
      %v775 = vpop.f32.mrb[0].mxu0
      %776 = vmatprep.mubr.bf16.mxu0 0
      %777 = vmatmul.mubr.bf16.gmra.mrb[0].mxu0 %v632
      %v778 = vpop.f32.mrb[0].mxu0
      %v779 = vadd.f32 0.0, %v778
      %v780 = vpop.f32.mrb[0].mxu0
      %v781 = vpop.f32.mrb[0].mxu0
      %v782 = vadd.f32 0.0, %v781
      %v783 = vpop.f32.mrb[0].mxu0
      %784 = vmatprep.mubr.bf16.mxu0 0
      %785 = vmatmul.mubr.bf16.gmra.mrb[0].mxu0 %v635
      %v786 = vpop.f32.mrb[0].mxu0
      %v787 = vadd.f32 0.0, %v786
      %v788 = vpop.f32.mrb[0].mxu0
      %v789 = vpop.f32.mrb[0].mxu0
      %v790 = vadd.f32 0.0, %v789
      %v791 = vpop.f32.mrb[0].mxu0
      %792 = vmatprep.mubr.bf16.mxu0 0
      %793 = vmatmul.mubr.bf16.gmra.mrb[0].mxu0 %v638
      %v794 = vpop.f32.mrb[0].mxu0
      %v795 = vadd.f32 0.0, %v794
      %v796 = vpop.f32.mrb[0].mxu0
      %v797 = vpop.f32.mrb[0].mxu0
      %v798 = vadd.f32 0.0, %v797
      %v799 = vpop.f32.mrb[0].mxu0
      %800 = vmatprep.mubr.bf16.mxu0 0
      %801 = vmatmul.mubr.bf16.gmra.mrb[0].mxu0 %v641
      %v802 = vpop.f32.mrb[0].mxu0
      %v803 = vadd.f32 0.0, %v802
      %v804 = vpop.f32.mrb[0].mxu0
      %v805 = vpop.f32.mrb[0].mxu0
      %v806 = vadd.f32 0.0, %v805
      %v807 = vpop.f32.mrb[0].mxu0
      %808 = vmatprep.mubr.bf16.mxu0 0
      %809 = vmatmul.mubr.bf16.gmra.mrb[0].mxu0 %v644
      %v810 = vpop.f32.mrb[0].mxu0
      %v811 = vadd.f32 0.0, %v810
      %v812 = vpop.f32.mrb[0].mxu0
      %v813 = vpop.f32.mrb[0].mxu0
      %v814 = vadd.f32 0.0, %v813
      %v815 = vpop.f32.mrb[0].mxu0
      %816 = vmatprep.mubr.bf16.mxu0 0
      %817 = vmatmul.mubr.bf16.gmra.mrb[0].mxu0 %v647
      %v818 = vpop.f32.mrb[0].mxu0
      %v819 = vadd.f32 0.0, %v818
      %v820 = vpop.f32.mrb[0].mxu0
      %v821 = vpop.f32.mrb[0].mxu0
      %v822 = vadd.f32 0.0, %v821
      %v823 = vpop.f32.mrb[0].mxu0
      %824 = vmatprep.mubr.bf16.mxu0 0
      %825 = vmatmul.mubr.bf16.gmra.mrb[0].mxu0 %v650
      %v826 = vpop.f32.mrb[0].mxu0
      %v827 = vadd.f32 0.0, %v826
      %v828 = vpop.f32.mrb[0].mxu0
      %v829 = vpop.f32.mrb[0].mxu0
      %v830 = vadd.f32 0.0, %v829
      %v831 = vpop.f32.mrb[0].mxu0
      %832 = vmatprep.mubr.bf16.mxu0 0
      %833 = vmatmul.mubr.bf16.gmra.mrb[0].mxu0 %v653
      %v834 = vpop.f32.mrb[0].mxu0
      %v835 = vadd.f32 0.0, %v834
      %v836 = vpop.f32.mrb[0].mxu0
      %v837 = vpop.f32.mrb[0].mxu0
      %v838 = vadd.f32 0.0, %v837
      %v839 = vpop.f32.mrb[0].mxu0
      %840 = vmatprep.mubr.bf16.mxu0 0
      %841 = vmatmul.mubr.bf16.gmra.mrb[0].mxu0 %v656
      %v842 = vpop.f32.mrb[0].mxu0
      %v843 = vadd.f32 0.0, %v842
      %v844 = vpop.f32.mrb[0].mxu0
      %v845 = vpop.f32.mrb[0].mxu0
      %v846 = vadd.f32 0.0, %v845
      %v847 = vpop.f32.mrb[0].mxu0
      %848 = vmatprep.mubr.bf16.mxu0 0
      %849 = vmatmul.mubr.bf16.gmra.mrb[0].mxu0 %v659
      %v850 = vpop.f32.mrb[0].mxu0
      %v851 = vadd.f32 0.0, %v850
      %v852 = vpop.f32.mrb[0].mxu0
      %v853 = vpop.f32.mrb[0].mxu0
      %v854 = vadd.f32 0.0, %v853
      %v855 = vpop.f32.mrb[0].mxu0
      %856 = vmatprep.mubr.bf16.mxu0 0
      %857 = vmatmul.mubr.bf16.gmra.mrb[0].mxu0 %v662
      %v858 = vpop.f32.mrb[0].mxu0
      %v859 = vadd.f32 0.0, %v858
      %v860 = vpop.f32.mrb[0].mxu0
      %v861 = vpop.f32.mrb[0].mxu0
      %v862 = vadd.f32 0.0, %v861
      %v863 = vpop.f32.mrb[0].mxu0
      %864 = vmatprep.mubr.bf16.mxu0 0
      %865 = vmatmul.mubr.bf16.gmra.mrb[0].mxu0 %v665
      %v866 = vpop.f32.mrb[0].mxu0
      %v867 = vadd.f32 0.0, %v866
      %v868 = vpop.f32.mrb[0].mxu0
      %v869 = vpop.f32.mrb[0].mxu0
      %v870 = vadd.f32 0.0, %v869
      %v871 = vpop.f32.mrb[0].mxu0
      %872 = vmatprep.mubr.bf16.mxu0 0
      %873 = vmatmul.mubr.bf16.gmra.mrb[0].mxu0 %v668
      %v874 = vpop.f32.mrb[0].mxu0
      %v875 = vadd.f32 0.0, %v874
      %v876 = vpop.f32.mrb[0].mxu0
      %v877 = vpop.f32.mrb[0].mxu0
      %v878 = vadd.f32 0.0, %v877
      %v879 = vpop.f32.mrb[0].mxu0
      %880 = vmatprep.mubr.bf16.mxu0 0
      %881 = vmatmul.mubr.bf16.gmra.mrb[0].mxu0 %v671
      %v882 = vpop.f32.mrb[0].mxu0
      %v883 = vadd.f32 0.0, %v882
      %v884 = vpop.f32.mrb[0].mxu0
      %v885 = vpop.f32.mrb[0].mxu0
      %v886 = vadd.f32 0.0, %v885
      %v887 = vpop.f32.mrb[0].mxu0
      %888 = vmatprep.mubr.bf16.mxu0 0
      %889 = vmatmul.mubr.bf16.gmra.mrb[0].mxu0 %v674
      %v890 = vpop.f32.mrb[0].mxu0
      %v891 = vadd.f32 0.0, %v890
      %v892 = vpop.f32.mrb[0].mxu0
      %v893 = vpop.f32.mrb[0].mxu0
      %v894 = vadd.f32 0.0, %v893
      %v895 = vpop.f32.mrb[0].mxu0
      %896 = vmatprep.mubr.bf16.mxu0 0
      %897 = vmatmul.mubr.bf16.gmra.mrb[0].mxu0 %v677
      %v898 = vpop.f32.mrb[0].mxu0
      %v899 = vadd.f32 0.0, %v898
      %v900 = vpop.f32.mrb[0].mxu0
      %v901 = vpop.f32.mrb[0].mxu0
      %v902 = vadd.f32 0.0, %v901
      %v903 = vpop.f32.mrb[0].mxu0
      %904 = vmatprep.mubr.bf16.mxu0 0
      %905 = vmatmul.mubr.bf16.gmra.mrb[0].mxu0 %v680
      %v906 = vpop.f32.mrb[0].mxu0
      %v907 = vadd.f32 0.0, %v906
      %v908 = vpop.f32.mrb[0].mxu0
      %v909 = vpop.f32.mrb[0].mxu0
      %v910 = vadd.f32 0.0, %v909
      %v911 = vpop.f32.mrb[0].mxu0
      %912 = vmatprep.mubr.bf16.mxu0 0
      %913 = vmatmul.mubr.bf16.gmra.mrb[0].mxu0 %v683
      %v914 = vpop.f32.mrb[0].mxu0
      %v915 = vadd.f32 0.0, %v914
      %v916 = vpop.f32.mrb[0].mxu0
      %v917 = vpop.f32.mrb[0].mxu0
      %v918 = vadd.f32 0.0, %v917
      %v919 = vpop.f32.mrb[0].mxu0
      %920 = vmatprep.mubr.bf16.mxu0 0
      %921 = vmatmul.mubr.bf16.gmra.mrb[0].mxu0 %v686
      %v922 = vpop.f32.mrb[0].mxu0
      %v923 = vadd.f32 0.0, %v922
      %v924 = vpop.f32.mrb[0].mxu0
      %v925 = vpop.f32.mrb[0].mxu0
      %v926 = vadd.f32 0.0, %v925
      %v927 = vpop.f32.mrb[0].mxu0
      %928 = vmatprep.mubr.bf16.mxu0 0
      %929 = vmatmul.mubr.bf16.gmra.mrb[0].mxu0 %v689
      %v930 = vpop.f32.mrb[0].mxu0
      %v931 = vadd.f32 0.0, %v930
      %v932 = vpop.f32.mrb[0].mxu0
      %v933 = vpop.f32.mrb[0].mxu0
      %v934 = vadd.f32 0.0, %v933
      %v935 = vpop.f32.mrb[0].mxu0
      %936 = vmatprep.mubr.bf16.mxu0 0
      %937 = vmatmul.mubr.bf16.gmra.mrb[0].mxu0 %v692
      %v938 = vpop.f32.mrb[0].mxu0
      %v939 = vadd.f32 0.0, %v938
      %v940 = vpop.f32.mrb[0].mxu0
      %v941 = vpop.f32.mrb[0].mxu0
      %v942 = vadd.f32 0.0, %v941
      %v943 = vpop.f32.mrb[0].mxu0
      %944 = vmatprep.mubr.bf16.mxu0 0
      %945 = vmatmul.mubr.bf16.gmra.mrb[0].mxu0 %v695
      %v946 = vpop.f32.mrb[0].mxu0
      %v947 = vadd.f32 0.0, %v946
      %v948 = vpop.f32.mrb[0].mxu0
      %v949 = vpop.f32.mrb[0].mxu0
      %v950 = vadd.f32 0.0, %v949
      %v951 = vpop.f32.mrb[0].mxu0
      %952 = vmatprep.mubr.bf16.mxu0 0
      %953 = vmatmul.mubr.bf16.gmra.mrb[0].mxu0 %v698
      %v954 = vpop.f32.mrb[0].mxu0
      %v955 = vadd.f32 0.0, %v954
      %v956 = vpop.f32.mrb[0].mxu0
      %v957 = vpop.f32.mrb[0].mxu0
      %v958 = vadd.f32 0.0, %v957
      %v959 = vpop.f32.mrb[0].mxu0
      %960 = vmatprep.mubr.bf16.mxu0 0
      %961 = vmatmul.mubr.bf16.gmra.mrb[0].mxu0 %v701
      %v962 = vpop.f32.mrb[0].mxu0
      %v963 = vadd.f32 0.0, %v962
      %v964 = vpop.f32.mrb[0].mxu0
      %v965 = vpop.f32.mrb[0].mxu0
      %v966 = vadd.f32 0.0, %v965
      %v967 = vpop.f32.mrb[0].mxu0
      %968 = vmatprep.mubr.bf16.mxu0 0
      %969 = vmatmul.mubr.bf16.gmra.mrb[0].mxu0 %v704
      %v970 = vpop.f32.mrb[0].mxu0
      %v971 = vadd.f32 0.0, %v970
      %v972 = vpop.f32.mrb[0].mxu0
      %v973 = vpop.f32.mrb[0].mxu0
      %v974 = vadd.f32 0.0, %v973
      %v975 = vpop.f32.mrb[0].mxu0
      %976 = vmatprep.mubr.bf16.mxu0 0
      %977 = vmatmul.mubr.bf16.gmra.mrb[0].mxu0 %v707
      %v978 = vpop.f32.mrb[0].mxu0
      %v979 = vadd.f32 0.0, %v978
      %v980 = vpop.f32.mrb[0].mxu0
      %v981 = vpop.f32.mrb[0].mxu0
      %v982 = vadd.f32 0.0, %v981
      %v983 = vpop.f32.mrb[0].mxu0
      %984 = vmatprep.mubr.bf16.mxu0 0
      %985 = vmatmul.mubr.bf16.gmra.mrb[0].mxu0 %v710
      %v986 = vpop.f32.mrb[0].mxu0
      %v987 = vadd.f32 0.0, %v986
      %v988 = vpop.f32.mrb[0].mxu0
      %v989 = vpop.f32.mrb[0].mxu0
      %v990 = vadd.f32 0.0, %v989
      %v991 = vpop.f32.mrb[0].mxu0
      %992 = vmatprep.mubr.bf16.mxu0 0
      %993 = vmatmul.mubr.bf16.gmra.mrb[0].mxu0 %v713
      %v994 = vpop.f32.mrb[0].mxu0
      %v995 = vadd.f32 0.0, %v994
      %v996 = vpop.f32.mrb[0].mxu0
      %v997 = vpop.f32.mrb[0].mxu0
      %v998 = vadd.f32 0.0, %v997
      %v999 = vpop.f32.mrb[0].mxu0
      %1000 = vmatprep.mubr.bf16.mxu0 0
      %1001 = vmatmul.mubr.bf16.gmra.mrb[0].mxu0 %v716
      %v1002 = vpop.f32.mrb[0].mxu0
      %v1003 = vadd.f32 0.0, %v1002
      %v1004 = vpop.f32.mrb[0].mxu0
      %v1005 = vpop.f32.mrb[0].mxu0
      %v1006 = vadd.f32 0.0, %v1005
      %v1007 = vpop.f32.mrb[0].mxu0
      %1008 = vmatprep.mubr.bf16.mxu0 0
      %1009 = vmatmul.mubr.bf16.gmra.mrb[0].mxu0 %v719
      %v1010 = vpop.f32.mrb[0].mxu0
      %v1011 = vadd.f32 0.0, %v1010
      %v1012 = vpop.f32.mrb[0].mxu0
      %v1013 = vpop.f32.mrb[0].mxu0
      %v1014 = vadd.f32 0.0, %v1013
      %v1015 = vpop.f32.mrb[0].mxu0
      %1016 = vdwg.mxu0
      %v1017 = vadd.f32 %v329, %v763
      %v1018 = vadd.f32 %v330, %v766
      %v1019 = vadd.f32 %v331, %v771
      %v1020 = vadd.f32 %v332, %v774
      %v1021 = vadd.f32 %v333, %v779
      %v1022 = vadd.f32 %v334, %v782
      %v1023 = vadd.f32 %v335, %v787
      %v1024 = vadd.f32 %v336, %v790
      %v1025 = vadd.f32 %v337, %v795
      %v1026 = vadd.f32 %v338, %v798
      %v1027 = vadd.f32 %v339, %v803
      %v1028 = vadd.f32 %v340, %v806
      %v1029 = vadd.f32 %v341, %v811
      %v1030 = vadd.f32 %v342, %v814
      %v1031 = vadd.f32 %v343, %v819
      %v1032 = vadd.f32 %v344, %v822
      %v1033 = vadd.f32 %v345, %v827
      %v1034 = vadd.f32 %v346, %v830
      %v1035 = vadd.f32 %v347, %v835
      %v1036 = vadd.f32 %v348, %v838
      %v1037 = vadd.f32 %v349, %v843
      %v1038 = vadd.f32 %v350, %v846
      %v1039 = vadd.f32 %v351, %v851
      %v1040 = vadd.f32 %v352, %v854
      %v1041 = vadd.f32 %v353, %v859
      %v1042 = vadd.f32 %v354, %v862
      %v1043 = vadd.f32 %v355, %v867
      %v1044 = vadd.f32 %v356, %v870
      %v1045 = vadd.f32 %v357, %v875
      %v1046 = vadd.f32 %v358, %v878
      %v1047 = vadd.f32 %v359, %v883
      %v1048 = vadd.f32 %v360, %v886
      %v1049 = vadd.f32 %v361, %v891
      %v1050 = vadd.f32 %v362, %v894
      %v1051 = vadd.f32 %v363, %v899
      %v1052 = vadd.f32 %v364, %v902
      %v1053 = vadd.f32 %v365, %v907
      %v1054 = vadd.f32 %v366, %v910
      %v1055 = vadd.f32 %v367, %v915
      %v1056 = vadd.f32 %v368, %v918
      %v1057 = vadd.f32 %v369, %v923
      %v1058 = vadd.f32 %v370, %v926
      %v1059 = vadd.f32 %v371, %v931
      %v1060 = vadd.f32 %v372, %v934
      %v1061 = vadd.f32 %v373, %v939
      %v1062 = vadd.f32 %v374, %v942
      %v1063 = vadd.f32 %v375, %v947
      %v1064 = vadd.f32 %v376, %v950
      %v1065 = vadd.f32 %v377, %v955
      %v1066 = vadd.f32 %v378, %v958
      %v1067 = vadd.f32 %v379, %v963
      %v1068 = vadd.f32 %v380, %v966
      %v1069 = vadd.f32 %v381, %v971
      %v1070 = vadd.f32 %v382, %v974
      %v1071 = vadd.f32 %v383, %v979
      %v1072 = vadd.f32 %v384, %v982
      %v1073 = vadd.f32 %v385, %v987
      %v1074 = vadd.f32 %v386, %v990
      %v1075 = vadd.f32 %v387, %v995
      %v1076 = vadd.f32 %v388, %v998
      %v1077 = vadd.f32 %v389, %v1003
      %v1078 = vadd.f32 %v390, %v1006
      %v1079 = vadd.f32 %v391, %v1011
      %v1080 = vadd.f32 %v392, %v1014
      %vm1081 = vcmask 261120
      %1082 = vst.msk [vmem:[%s257] sm:$0xff] %vm1081, %v1017
      %1083 = vst.msk [vmem:[%s257 + $0x8] sm:$0xff] %vm1081, %v1018
      %1084 = vst.msk [vmem:[%s257 + $0x10] sm:$0xff] %vm1081, %v1019
      %1085 = vst.msk [vmem:[%s257 + $0x18] sm:$0xff] %vm1081, %v1020
      %1086 = vst.msk [vmem:[%s257 + $0x20] sm:$0xff] %vm1081, %v1021
      %1087 = vst.msk [vmem:[%s257 + $0x28] sm:$0xff] %vm1081, %v1022
      %1088 = vst.msk [vmem:[%s257 + $0x30] sm:$0xff] %vm1081, %v1023
      %1089 = vst.msk [vmem:[%s257 + $0x38] sm:$0xff] %vm1081, %v1024
      %1090 = vst.msk [vmem:[%s257 + $0x40] sm:$0xff] %vm1081, %v1025
      %1091 = vst.msk [vmem:[%s257 + $0x48] sm:$0xff] %vm1081, %v1026
      %1092 = vst.msk [vmem:[%s257 + $0x50] sm:$0xff] %vm1081, %v1027
      %1093 = vst.msk [vmem:[%s257 + $0x58] sm:$0xff] %vm1081, %v1028
      %1094 = vst.msk [vmem:[%s257 + $0x60] sm:$0xff] %vm1081, %v1029
      %1095 = vst.msk [vmem:[%s257 + $0x68] sm:$0xff] %vm1081, %v1030
      %1096 = vst.msk [vmem:[%s257 + $0x70] sm:$0xff] %vm1081, %v1031
      %1097 = vst.msk [vmem:[%s257 + $0x78] sm:$0xff] %vm1081, %v1032
      %1098 = vst.msk [vmem:[%s257 + $0x80] sm:$0xff] %vm1081, %v1033
      %1099 = vst.msk [vmem:[%s257 + $0x88] sm:$0xff] %vm1081, %v1034
      %1100 = vst.msk [vmem:[%s257 + $0x90] sm:$0xff] %vm1081, %v1035
      %1101 = vst.msk [vmem:[%s257 + $0x98] sm:$0xff] %vm1081, %v1036
      %1102 = vst.msk [vmem:[%s257 + $0xa0] sm:$0xff] %vm1081, %v1037
      %1103 = vst.msk [vmem:[%s257 + $0xa8] sm:$0xff] %vm1081, %v1038
      %1104 = vst.msk [vmem:[%s257 + $0xb0] sm:$0xff] %vm1081, %v1039
      %1105 = vst.msk [vmem:[%s257 + $0xb8] sm:$0xff] %vm1081, %v1040
      %1106 = vst.msk [vmem:[%s257 + $0xc0] sm:$0xff] %vm1081, %v1041
      %1107 = vst.msk [vmem:[%s257 + $0xc8] sm:$0xff] %vm1081, %v1042
      %1108 = vst.msk [vmem:[%s257 + $0xd0] sm:$0xff] %vm1081, %v1043
      %1109 = vst.msk [vmem:[%s257 + $0xd8] sm:$0xff] %vm1081, %v1044
      %1110 = vst.msk [vmem:[%s257 + $0xe0] sm:$0xff] %vm1081, %v1045
      %1111 = vst.msk [vmem:[%s257 + $0xe8] sm:$0xff] %vm1081, %v1046
      %1112 = vst.msk [vmem:[%s257 + $0xf0] sm:$0xff] %vm1081, %v1047
      %1113 = vst.msk [vmem:[%s257 + $0xf8] sm:$0xff] %vm1081, %v1048
      %1114 = vst.msk [vmem:[%s257 + $0x100] sm:$0xff] %vm1081, %v1049
      %1115 = vst.msk [vmem:[%s257 + $0x108] sm:$0xff] %vm1081, %v1050
      %1116 = vst.msk [vmem:[%s257 + $0x110] sm:$0xff] %vm1081, %v1051
      %1117 = vst.msk [vmem:[%s257 + $0x118] sm:$0xff] %vm1081, %v1052
      %1118 = vst.msk [vmem:[%s257 + $0x120] sm:$0xff] %vm1081, %v1053
      %1119 = vst.msk [vmem:[%s257 + $0x128] sm:$0xff] %vm1081, %v1054
      %1120 = vst.msk [vmem:[%s257 + $0x130] sm:$0xff] %vm1081, %v1055
      %1121 = vst.msk [vmem:[%s257 + $0x138] sm:$0xff] %vm1081, %v1056
      %1122 = vst.msk [vmem:[%s257 + $0x140] sm:$0xff] %vm1081, %v1057
      %1123 = vst.msk [vmem:[%s257 + $0x148] sm:$0xff] %vm1081, %v1058
      %1124 = vst.msk [vmem:[%s257 + $0x150] sm:$0xff] %vm1081, %v1059
      %1125 = vst.msk [vmem:[%s257 + $0x158] sm:$0xff] %vm1081, %v1060
      %1126 = vst.msk [vmem:[%s257 + $0x160] sm:$0xff] %vm1081, %v1061
      %1127 = vst.msk [vmem:[%s257 + $0x168] sm:$0xff] %vm1081, %v1062
      %1128 = vst.msk [vmem:[%s257 + $0x170] sm:$0xff] %vm1081, %v1063
      %1129 = vst.msk [vmem:[%s257 + $0x178] sm:$0xff] %vm1081, %v1064
      %1130 = vst.msk [vmem:[%s257 + $0x180] sm:$0xff] %vm1081, %v1065
      %1131 = vst.msk [vmem:[%s257 + $0x188] sm:$0xff] %vm1081, %v1066
      %1132 = vst.msk [vmem:[%s257 + $0x190] sm:$0xff] %vm1081, %v1067
      %1133 = vst.msk [vmem:[%s257 + $0x198] sm:$0xff] %vm1081, %v1068
      %1134 = vst.msk [vmem:[%s257 + $0x1a0] sm:$0xff] %vm1081, %v1069
      %1135 = vst.msk [vmem:[%s257 + $0x1a8] sm:$0xff] %vm1081, %v1070
      %1136 = vst.msk [vmem:[%s257 + $0x1b0] sm:$0xff] %vm1081, %v1071
      %1137 = vst.msk [vmem:[%s257 + $0x1b8] sm:$0xff] %vm1081, %v1072
      %1138 = vst.msk [vmem:[%s257 + $0x1c0] sm:$0xff] %vm1081, %v1073
      %1139 = vst.msk [vmem:[%s257 + $0x1c8] sm:$0xff] %vm1081, %v1074
      %1140 = vst.msk [vmem:[%s257 + $0x1d0] sm:$0xff] %vm1081, %v1075
      %1141 = vst.msk [vmem:[%s257 + $0x1d8] sm:$0xff] %vm1081, %v1076
      %1142 = vst.msk [vmem:[%s257 + $0x1e0] sm:$0xff] %vm1081, %v1077
      %1143 = vst.msk [vmem:[%s257 + $0x1e8] sm:$0xff] %vm1081, %v1078
      %1144 = vst.msk [vmem:[%s257 + $0x1f0] sm:$0xff] %vm1081, %v1079
      %1145 = vst.msk [vmem:[%s257 + $0x1f8] sm:$0xff] %vm1081, %v1080
      // Predicated region
      $region37: #{simple_cnn_forward.8} parent=31 // pred_check
        %p1146 = pneg %p260
      $region38: #{simple_cnn_forward.8} parent=31 // pred_check_branch
        %1148 = sbr.rel (%p1146) target = $region40
      $region39: #{simple_cnn_forward.8} parent=31 // pred_region
        %v1149 = vld [vmem:[%s257] sm:$0xff]
        %v1150 = vld [vmem:[%s257 + $0x8] sm:$0xff]
        %v1151 = vld [vmem:[%s257 + $0x10] sm:$0xff]
        %v1152 = vld [vmem:[%s257 + $0x18] sm:$0xff]
        %v1153 = vld [vmem:[%s257 + $0x20] sm:$0xff]
        %v1154 = vld [vmem:[%s257 + $0x28] sm:$0xff]
        %v1155 = vld [vmem:[%s257 + $0x30] sm:$0xff]
        %v1156 = vld [vmem:[%s257 + $0x38] sm:$0xff]
        %v1157 = vld [vmem:[%s257 + $0x40] sm:$0xff]
        %v1158 = vld [vmem:[%s257 + $0x48] sm:$0xff]
        %v1159 = vld [vmem:[%s257 + $0x50] sm:$0xff]
        %v1160 = vld [vmem:[%s257 + $0x58] sm:$0xff]
        %v1161 = vld [vmem:[%s257 + $0x60] sm:$0xff]
        %v1162 = vld [vmem:[%s257 + $0x68] sm:$0xff]
        %v1163 = vld [vmem:[%s257 + $0x70] sm:$0xff]
        %v1164 = vld [vmem:[%s257 + $0x78] sm:$0xff]
        %v1165 = vld [vmem:[%s257 + $0x80] sm:$0xff]
        %v1166 = vld [vmem:[%s257 + $0x88] sm:$0xff]
        %v1167 = vld [vmem:[%s257 + $0x90] sm:$0xff]
        %v1168 = vld [vmem:[%s257 + $0x98] sm:$0xff]
        %v1169 = vld [vmem:[%s257 + $0xa0] sm:$0xff]
        %v1170 = vld [vmem:[%s257 + $0xa8] sm:$0xff]
        %v1171 = vld [vmem:[%s257 + $0xb0] sm:$0xff]
        %v1172 = vld [vmem:[%s257 + $0xb8] sm:$0xff]
        %v1173 = vld [vmem:[%s257 + $0xc0] sm:$0xff]
        %v1174 = vld [vmem:[%s257 + $0xc8] sm:$0xff]
        %v1175 = vld [vmem:[%s257 + $0xd0] sm:$0xff]
        %v1176 = vld [vmem:[%s257 + $0xd8] sm:$0xff]
        %v1177 = vld [vmem:[%s257 + $0xe0] sm:$0xff]
        %v1178 = vld [vmem:[%s257 + $0xe8] sm:$0xff]
        %v1179 = vld [vmem:[%s257 + $0xf0] sm:$0xff]
        %v1180 = vld [vmem:[%s257 + $0xf8] sm:$0xff]
        %v1181 = vld [vmem:[%s257 + $0x100] sm:$0xff]
        %v1182 = vld [vmem:[%s257 + $0x108] sm:$0xff]
        %v1183 = vld [vmem:[%s257 + $0x110] sm:$0xff]
        %v1184 = vld [vmem:[%s257 + $0x118] sm:$0xff]
        %v1185 = vld [vmem:[%s257 + $0x120] sm:$0xff]
        %v1186 = vld [vmem:[%s257 + $0x128] sm:$0xff]
        %v1187 = vld [vmem:[%s257 + $0x130] sm:$0xff]
        %v1188 = vld [vmem:[%s257 + $0x138] sm:$0xff]
        %v1189 = vld [vmem:[%s257 + $0x140] sm:$0xff]
        %v1190 = vld [vmem:[%s257 + $0x148] sm:$0xff]
        %v1191 = vld [vmem:[%s257 + $0x150] sm:$0xff]
        %v1192 = vld [vmem:[%s257 + $0x158] sm:$0xff]
        %v1193 = vld [vmem:[%s257 + $0x160] sm:$0xff]
        %v1194 = vld [vmem:[%s257 + $0x168] sm:$0xff]
        %v1195 = vld [vmem:[%s257 + $0x170] sm:$0xff]
        %v1196 = vld [vmem:[%s257 + $0x178] sm:$0xff]
        %v1197 = vld [vmem:[%s257 + $0x180] sm:$0xff]
        %v1198 = vld [vmem:[%s257 + $0x188] sm:$0xff]
        %v1199 = vld [vmem:[%s257 + $0x190] sm:$0xff]
        %v1200 = vld [vmem:[%s257 + $0x198] sm:$0xff]
        %v1201 = vld [vmem:[%s257 + $0x1a0] sm:$0xff]
        %v1202 = vld [vmem:[%s257 + $0x1a8] sm:$0xff]
        %v1203 = vld [vmem:[%s257 + $0x1b0] sm:$0xff]
        %v1204 = vld [vmem:[%s257 + $0x1b8] sm:$0xff]
        %v1205 = vld [vmem:[%s257 + $0x1c0] sm:$0xff]
        %v1206 = vld [vmem:[%s257 + $0x1c8] sm:$0xff]
        %v1207 = vld [vmem:[%s257 + $0x1d0] sm:$0xff]
        %v1208 = vld [vmem:[%s257 + $0x1d8] sm:$0xff]
        %v1209 = vld [vmem:[%s257 + $0x1e0] sm:$0xff]
        %v1210 = vld [vmem:[%s257 + $0x1e8] sm:$0xff]
        %v1211 = vld [vmem:[%s257 + $0x1f0] sm:$0xff]
        %v1212 = vld [vmem:[%s257 + $0x1f8] sm:$0xff]
        %v1213 = vld [vmem:[%s249] sm:$0x1]
        %v1215 = vlaneseq
        %v1216 = vshrl.u32 %v1215, 7
        %v1217 = vsub.s32 0, %v1216
        %v1218 = vrot.slane %v1213, %v1217
        %v1220 = vadd.f32 %v1149, %v1218
        %v1221 = vadd.f32 %v1150, %v1218
        %v1222 = vadd.f32 %v1151, %v1218
        %v1223 = vadd.f32 %v1152, %v1218
        %v1224 = vadd.f32 %v1153, %v1218
        %v1225 = vadd.f32 %v1154, %v1218
        %v1226 = vadd.f32 %v1155, %v1218
        %v1227 = vadd.f32 %v1156, %v1218
        %v1228 = vadd.f32 %v1157, %v1218
        %v1229 = vadd.f32 %v1158, %v1218
        %v1230 = vadd.f32 %v1159, %v1218
        %v1231 = vadd.f32 %v1160, %v1218
        %v1232 = vadd.f32 %v1161, %v1218
        %v1233 = vadd.f32 %v1162, %v1218
        %v1234 = vadd.f32 %v1163, %v1218
        %v1235 = vadd.f32 %v1164, %v1218
        %v1236 = vadd.f32 %v1165, %v1218
        %v1237 = vadd.f32 %v1166, %v1218
        %v1238 = vadd.f32 %v1167, %v1218
        %v1239 = vadd.f32 %v1168, %v1218
        %v1240 = vadd.f32 %v1169, %v1218
        %v1241 = vadd.f32 %v1170, %v1218
        %v1242 = vadd.f32 %v1171, %v1218
        %v1243 = vadd.f32 %v1172, %v1218
        %v1244 = vadd.f32 %v1173, %v1218
        %v1245 = vadd.f32 %v1174, %v1218
        %v1246 = vadd.f32 %v1175, %v1218
        %v1247 = vadd.f32 %v1176, %v1218
        %v1248 = vadd.f32 %v1177, %v1218
        %v1249 = vadd.f32 %v1178, %v1218
        %v1250 = vadd.f32 %v1179, %v1218
        %v1251 = vadd.f32 %v1180, %v1218
        %v1252 = vadd.f32 %v1181, %v1218
        %v1253 = vadd.f32 %v1182, %v1218
        %v1254 = vadd.f32 %v1183, %v1218
        %v1255 = vadd.f32 %v1184, %v1218
        %v1256 = vadd.f32 %v1185, %v1218
        %v1257 = vadd.f32 %v1186, %v1218
        %v1258 = vadd.f32 %v1187, %v1218
        %v1259 = vadd.f32 %v1188, %v1218
        %v1260 = vadd.f32 %v1189, %v1218
        %v1261 = vadd.f32 %v1190, %v1218
        %v1262 = vadd.f32 %v1191, %v1218
        %v1263 = vadd.f32 %v1192, %v1218
        %v1264 = vadd.f32 %v1193, %v1218
        %v1265 = vadd.f32 %v1194, %v1218
        %v1266 = vadd.f32 %v1195, %v1218
        %v1267 = vadd.f32 %v1196, %v1218
        %v1268 = vadd.f32 %v1197, %v1218
        %v1269 = vadd.f32 %v1198, %v1218
        %v1270 = vadd.f32 %v1199, %v1218
        %v1271 = vadd.f32 %v1200, %v1218
        %v1272 = vadd.f32 %v1201, %v1218
        %v1273 = vadd.f32 %v1202, %v1218
        %v1274 = vadd.f32 %v1203, %v1218
        %v1275 = vadd.f32 %v1204, %v1218
        %v1276 = vadd.f32 %v1205, %v1218
        %v1277 = vadd.f32 %v1206, %v1218
        %v1278 = vadd.f32 %v1207, %v1218
        %v1279 = vadd.f32 %v1208, %v1218
        %v1280 = vadd.f32 %v1209, %v1218
        %v1281 = vadd.f32 %v1210, %v1218
        %v1282 = vadd.f32 %v1211, %v1218
        %v1283 = vadd.f32 %v1212, %v1218
        %v1284 = vmax.f32 %v1220, 0.0
        %v1285 = vmax.f32 %v1221, 0.0
        %v1286 = vmax.f32 %v1222, 0.0
        %v1287 = vmax.f32 %v1223, 0.0
        %v1288 = vmax.f32 %v1224, 0.0
        %v1289 = vmax.f32 %v1225, 0.0
        %v1290 = vmax.f32 %v1226, 0.0
        %v1291 = vmax.f32 %v1227, 0.0
        %v1292 = vmax.f32 %v1228, 0.0
        %v1293 = vmax.f32 %v1229, 0.0
        %v1294 = vmax.f32 %v1230, 0.0
        %v1295 = vmax.f32 %v1231, 0.0
        %v1296 = vmax.f32 %v1232, 0.0
        %v1297 = vmax.f32 %v1233, 0.0
        %v1298 = vmax.f32 %v1234, 0.0
        %v1299 = vmax.f32 %v1235, 0.0
        %v1300 = vmax.f32 %v1236, 0.0
        %v1301 = vmax.f32 %v1237, 0.0
        %v1302 = vmax.f32 %v1238, 0.0
        %v1303 = vmax.f32 %v1239, 0.0
        %v1304 = vmax.f32 %v1240, 0.0
        %v1305 = vmax.f32 %v1241, 0.0
        %v1306 = vmax.f32 %v1242, 0.0
        %v1307 = vmax.f32 %v1243, 0.0
        %v1308 = vmax.f32 %v1244, 0.0
        %v1309 = vmax.f32 %v1245, 0.0
        %v1310 = vmax.f32 %v1246, 0.0
        %v1311 = vmax.f32 %v1247, 0.0
        %v1312 = vmax.f32 %v1248, 0.0
        %v1313 = vmax.f32 %v1249, 0.0
        %v1314 = vmax.f32 %v1250, 0.0
        %v1315 = vmax.f32 %v1251, 0.0
        %v1316 = vmax.f32 %v1252, 0.0
        %v1317 = vmax.f32 %v1253, 0.0
        %v1318 = vmax.f32 %v1254, 0.0
        %v1319 = vmax.f32 %v1255, 0.0
        %v1320 = vmax.f32 %v1256, 0.0
        %v1321 = vmax.f32 %v1257, 0.0
        %v1322 = vmax.f32 %v1258, 0.0
        %v1323 = vmax.f32 %v1259, 0.0
        %v1324 = vmax.f32 %v1260, 0.0
        %v1325 = vmax.f32 %v1261, 0.0
        %v1326 = vmax.f32 %v1262, 0.0
        %v1327 = vmax.f32 %v1263, 0.0
        %v1328 = vmax.f32 %v1264, 0.0
        %v1329 = vmax.f32 %v1265, 0.0
        %v1330 = vmax.f32 %v1266, 0.0
        %v1331 = vmax.f32 %v1267, 0.0
        %v1332 = vmax.f32 %v1268, 0.0
        %v1333 = vmax.f32 %v1269, 0.0
        %v1334 = vmax.f32 %v1270, 0.0
        %v1335 = vmax.f32 %v1271, 0.0
        %v1336 = vmax.f32 %v1272, 0.0
        %v1337 = vmax.f32 %v1273, 0.0
        %v1338 = vmax.f32 %v1274, 0.0
        %v1339 = vmax.f32 %v1275, 0.0
        %v1340 = vmax.f32 %v1276, 0.0
        %v1341 = vmax.f32 %v1277, 0.0
        %v1342 = vmax.f32 %v1278, 0.0
        %v1343 = vmax.f32 %v1279, 0.0
        %v1344 = vmax.f32 %v1280, 0.0
        %v1345 = vmax.f32 %v1281, 0.0
        %v1346 = vmax.f32 %v1282, 0.0
        %v1347 = vmax.f32 %v1283, 0.0
        %1348 = vst.msk [vmem:[%s257] sm:$0xff] %vm1081, %v1284
        %1349 = vst.msk [vmem:[%s257 + $0x8] sm:$0xff] %vm1081, %v1285
        %1350 = vst.msk [vmem:[%s257 + $0x10] sm:$0xff] %vm1081, %v1286
        %1351 = vst.msk [vmem:[%s257 + $0x18] sm:$0xff] %vm1081, %v1287
        %1352 = vst.msk [vmem:[%s257 + $0x20] sm:$0xff] %vm1081, %v1288
        %1353 = vst.msk [vmem:[%s257 + $0x28] sm:$0xff] %vm1081, %v1289
        %1354 = vst.msk [vmem:[%s257 + $0x30] sm:$0xff] %vm1081, %v1290
        %1355 = vst.msk [vmem:[%s257 + $0x38] sm:$0xff] %vm1081, %v1291
        %1356 = vst.msk [vmem:[%s257 + $0x40] sm:$0xff] %vm1081, %v1292
        %1357 = vst.msk [vmem:[%s257 + $0x48] sm:$0xff] %vm1081, %v1293
        %1358 = vst.msk [vmem:[%s257 + $0x50] sm:$0xff] %vm1081, %v1294
        %1359 = vst.msk [vmem:[%s257 + $0x58] sm:$0xff] %vm1081, %v1295
        %1360 = vst.msk [vmem:[%s257 + $0x60] sm:$0xff] %vm1081, %v1296
        %1361 = vst.msk [vmem:[%s257 + $0x68] sm:$0xff] %vm1081, %v1297
        %1362 = vst.msk [vmem:[%s257 + $0x70] sm:$0xff] %vm1081, %v1298
        %1363 = vst.msk [vmem:[%s257 + $0x78] sm:$0xff] %vm1081, %v1299
        %1364 = vst.msk [vmem:[%s257 + $0x80] sm:$0xff] %vm1081, %v1300
        %1365 = vst.msk [vmem:[%s257 + $0x88] sm:$0xff] %vm1081, %v1301
        %1366 = vst.msk [vmem:[%s257 + $0x90] sm:$0xff] %vm1081, %v1302
        %1367 = vst.msk [vmem:[%s257 + $0x98] sm:$0xff] %vm1081, %v1303
        %1368 = vst.msk [vmem:[%s257 + $0xa0] sm:$0xff] %vm1081, %v1304
        %1369 = vst.msk [vmem:[%s257 + $0xa8] sm:$0xff] %vm1081, %v1305
        %1370 = vst.msk [vmem:[%s257 + $0xb0] sm:$0xff] %vm1081, %v1306
        %1371 = vst.msk [vmem:[%s257 + $0xb8] sm:$0xff] %vm1081, %v1307
        %1372 = vst.msk [vmem:[%s257 + $0xc0] sm:$0xff] %vm1081, %v1308
        %1373 = vst.msk [vmem:[%s257 + $0xc8] sm:$0xff] %vm1081, %v1309
        %1374 = vst.msk [vmem:[%s257 + $0xd0] sm:$0xff] %vm1081, %v1310
        %1375 = vst.msk [vmem:[%s257 + $0xd8] sm:$0xff] %vm1081, %v1311
        %1376 = vst.msk [vmem:[%s257 + $0xe0] sm:$0xff] %vm1081, %v1312
        %1377 = vst.msk [vmem:[%s257 + $0xe8] sm:$0xff] %vm1081, %v1313
        %1378 = vst.msk [vmem:[%s257 + $0xf0] sm:$0xff] %vm1081, %v1314
        %1379 = vst.msk [vmem:[%s257 + $0xf8] sm:$0xff] %vm1081, %v1315
        %1380 = vst.msk [vmem:[%s257 + $0x100] sm:$0xff] %vm1081, %v1316
        %1381 = vst.msk [vmem:[%s257 + $0x108] sm:$0xff] %vm1081, %v1317
        %1382 = vst.msk [vmem:[%s257 + $0x110] sm:$0xff] %vm1081, %v1318
        %1383 = vst.msk [vmem:[%s257 + $0x118] sm:$0xff] %vm1081, %v1319
        %1384 = vst.msk [vmem:[%s257 + $0x120] sm:$0xff] %vm1081, %v1320
        %1385 = vst.msk [vmem:[%s257 + $0x128] sm:$0xff] %vm1081, %v1321
        %1386 = vst.msk [vmem:[%s257 + $0x130] sm:$0xff] %vm1081, %v1322
        %1387 = vst.msk [vmem:[%s257 + $0x138] sm:$0xff] %vm1081, %v1323
        %1388 = vst.msk [vmem:[%s257 + $0x140] sm:$0xff] %vm1081, %v1324
        %1389 = vst.msk [vmem:[%s257 + $0x148] sm:$0xff] %vm1081, %v1325
        %1390 = vst.msk [vmem:[%s257 + $0x150] sm:$0xff] %vm1081, %v1326
        %1391 = vst.msk [vmem:[%s257 + $0x158] sm:$0xff] %vm1081, %v1327
        %1392 = vst.msk [vmem:[%s257 + $0x160] sm:$0xff] %vm1081, %v1328
        %1393 = vst.msk [vmem:[%s257 + $0x168] sm:$0xff] %vm1081, %v1329
        %1394 = vst.msk [vmem:[%s257 + $0x170] sm:$0xff] %vm1081, %v1330
        %1395 = vst.msk [vmem:[%s257 + $0x178] sm:$0xff] %vm1081, %v1331
        %1396 = vst.msk [vmem:[%s257 + $0x180] sm:$0xff] %vm1081, %v1332
        %1397 = vst.msk [vmem:[%s257 + $0x188] sm:$0xff] %vm1081, %v1333
        %1398 = vst.msk [vmem:[%s257 + $0x190] sm:$0xff] %vm1081, %v1334
        %1399 = vst.msk [vmem:[%s257 + $0x198] sm:$0xff] %vm1081, %v1335
        %1400 = vst.msk [vmem:[%s257 + $0x1a0] sm:$0xff] %vm1081, %v1336
        %1401 = vst.msk [vmem:[%s257 + $0x1a8] sm:$0xff] %vm1081, %v1337
        %1402 = vst.msk [vmem:[%s257 + $0x1b0] sm:$0xff] %vm1081, %v1338
        %1403 = vst.msk [vmem:[%s257 + $0x1b8] sm:$0xff] %vm1081, %v1339
        %1404 = vst.msk [vmem:[%s257 + $0x1c0] sm:$0xff] %vm1081, %v1340
        %1405 = vst.msk [vmem:[%s257 + $0x1c8] sm:$0xff] %vm1081, %v1341
        %1406 = vst.msk [vmem:[%s257 + $0x1d0] sm:$0xff] %vm1081, %v1342
        %1407 = vst.msk [vmem:[%s257 + $0x1d8] sm:$0xff] %vm1081, %v1343
        %1408 = vst.msk [vmem:[%s257 + $0x1e0] sm:$0xff] %vm1081, %v1344
        %1409 = vst.msk [vmem:[%s257 + $0x1e8] sm:$0xff] %vm1081, %v1345
        %1410 = vst.msk [vmem:[%s257 + $0x1f0] sm:$0xff] %vm1081, %v1346
        %1411 = vst.msk [vmem:[%s257 + $0x1f8] sm:$0xff] %vm1081, %v1347
      $region40: #{simple_cnn_forward.8} parent=31 // pred_fallthru
        _
      %s1412 = smul.u32 64, %s19
      %p1413 = scmp.lt.s32.totalorder %s1412, 1023
      %s1414 = scalar_select %p1413, %s1412, 1023
      %p1415 = scmp.lt.s32.totalorder %s20, 0
      %s1416 = scalar_select %p1415, %s20, 0
      %s1417 = sadd.s32 %s1416, %s1414
      %s1418 = smul.addr %s1417, 8
      %s1419 = scalar_lea.vmem %s3, %s1418
      // Predicated region
      $region41: #{simple_cnn_forward.8} parent=31 // pred_check
        %p1420 = pneg %p135
      $region42: #{simple_cnn_forward.8} parent=31 // pred_check_branch
        %1422 = sbr.rel (%p1420) target = $region44
      $region43: #{simple_cnn_forward.8} parent=31 // pred_region
        %s1423 = smul.u32 64, %s19
      $region44: #{simple_cnn_forward.8} parent=31 // pred_fallthru
        _
    $region32: #{simple_cnn_forward.8} parent=5 // pred_fallthru
      _
    %p1424 = scmp.le.s32.totalorder 2, %s9
    // Predicated region
    $region45: #{simple_cnn_forward.8} parent=5 // pred_check
      %p1425 = pneg %p1424
    $region46: #{simple_cnn_forward.8} parent=5 // pred_check_branch
      %1427 = sbr.rel (%p1425) target = $region48
    $region47: #{simple_cnn_forward.8} parent=5 // pred_region
      %s1428 = ssub.s32 %s9, 2
      // Predicated region
      $region49: #{simple_cnn_forward.8} parent=47 // pred_check
        %p1429 = pneg %p141
      $region50: #{simple_cnn_forward.8} parent=47 // pred_check_branch
        %1431 = sbr.rel (%p1429) target = $region52
      $region51: #{simple_cnn_forward.8} parent=47 // pred_region
        %s1432 = smul.u32 64, %s22
        %p1433 = scmp.lt.s32.totalorder %s1432, 1023
        %s1434 = scalar_select %p1433, %s1432, 1023
        %p1435 = scmp.lt.s32.totalorder %s23, 0
        %s1436 = scalar_select %p1435, %s23, 0
        %s1437 = sadd.s32 %s1436, %s1434
        %s1438 = smul.addr %s1437, 8
        %s1439 = scalar_lea.vmem %s3, %s1438
      $region52: #{simple_cnn_forward.8} parent=47 // pred_fallthru
        _
    $region48: #{simple_cnn_forward.8} parent=5 // pred_fallthru
      _
  $region6: #{simple_cnn_forward.8} parent=0 // loop_footer
    %s13 = sadd.s32 1, %s9
  $region7: #{simple_cnn_forward.8} parent=0 // loop_footer_branch
    %8 = sbr.rel target = $region3
  $region8: #{simple_cnn_forward.8} parent=0 // loop_exit
    _

// kernel: simple_cnn_forward.9
$region0: #{simple_cnn_forward.9}
  #allocation0 [shape = 'u32[]', space=smem, size = 0x4, offset = 0x4, fixed_abs, tag = 'smem constant byte address 0x4 - core index']
  #allocation1 [shape = 'u32[144,128]{1,0:T(1,128)}', space=vmem, size = 0x12000, scoped, tag = 'internal scratch']
  %s0 = inlined_call_operand.vmem [shape: f32[64,2,32,64], index: 0, kind: input, shape index: {}]
  %s1 = inlined_call_operand.vmem [shape: bf16[64,32,32], index: 1, kind: output, shape index: {}]
  %s2 = sld [smem:[#allocation0]]
  $region37: #{simple_cnn_forward.9} parent=0
    _
  %s4 = ssub.s32 1, %s2
  %s5 = scalar_select 0, %s4, %s2
  loop: start=0, step=1, limit=4
  $region2: #{simple_cnn_forward.9} parent=0 // loop_pre_header
    _
  $region3: #{simple_cnn_forward.9} parent=0 // loop_header
    %s7 = sphi 0, %s11
    %p8 = scmp.ge.s32.totalorder %s7, 4
    %s17 = sphi 0, %s19
    %s20 = sphi 0, %s17
    %s21 = sphi 0, %s20
    %s37 = sphi 0, %s21
    %s43 = sphi 0, %s45
    %s46 = sphi 0, %s43
    %s47 = sphi 0, %s46
    %s63 = sphi 0, %s47
  $region4: #{simple_cnn_forward.9} parent=0 // loop_header_branch
    %10 = sbr.rel (%p8) target = $region8
  $region5: #{simple_cnn_forward.9} parent=0 // loop_body
    %s12 = ssub.s32 %s7, 1
    %s13 = ssub.s32 %s7, 2
    %s14 = sadd.s32 %s7, 1
    %s15 = ssub.s32 %s7, %s14
    %p16 = scmp.eq.s32.totalorder %s15, 0
    %s18 = sadd.s32 %s17, 1
    %s19 = scalar_select %p16, %s17, %s18
    %p22 = pneg %p16
    %p23 = scmp.eq.s32.totalorder %s7, 1
    %p24 = por %p22, %p23
    %p25 = scmp.ne.s32.totalorder %s17, %s20
    %p26 = scmp.eq.s32.totalorder %s7, 0
    %p27 = por %p25, %p26
    %p28 = scmp.ne.s32.totalorder %s17, %s20
    %p29 = scmp.eq.s32.totalorder %s12, 1
    %p30 = por %p28, %p29
    %p31 = scmp.ne.s32.totalorder %s20, %s21
    %p32 = scmp.eq.s32.totalorder %s12, 0
    %p33 = por %p31, %p32
    %p34 = scmp.ne.s32.totalorder %s20, %s21
    %p35 = scmp.eq.s32.totalorder %s13, 1
    %p36 = por %p34, %p35
    %p38 = scmp.ne.s32.totalorder %s21, %s37
    %p39 = scmp.eq.s32.totalorder %s13, 0
    %p40 = por %p38, %p39
    %s41 = ssub.s32 %s7, %s14
    %p42 = scmp.eq.s32.totalorder %s41, 0
    %s44 = sadd.s32 %s43, 1
    %s45 = scalar_select %p42, %s43, %s44
    %p48 = pneg %p42
    %p49 = scmp.eq.s32.totalorder %s7, 1
    %p50 = por %p48, %p49
    %p51 = scmp.ne.s32.totalorder %s43, %s46
    %p52 = scmp.eq.s32.totalorder %s7, 0
    %p53 = por %p51, %p52
    %p54 = scmp.ne.s32.totalorder %s43, %s46
    %p55 = scmp.eq.s32.totalorder %s12, 1
    %p56 = por %p54, %p55
    %p57 = scmp.ne.s32.totalorder %s46, %s47
    %p58 = scmp.eq.s32.totalorder %s12, 0
    %p59 = por %p57, %p58
    %p60 = scmp.ne.s32.totalorder %s46, %s47
    %p61 = scmp.eq.s32.totalorder %s13, 1
    %p62 = por %p60, %p61
    %p64 = scmp.ne.s32.totalorder %s47, %s63
    %p65 = scmp.eq.s32.totalorder %s13, 0
    %p66 = por %p64, %p65
    %p67 = scmp.le.s32.totalorder 1, %s7
    %p68 = scmp.lt.s32.totalorder %s7, 3
    %p69 = pnand %p67, %p68
    %p70 = pneg %p69
    // Predicated region
    $region9: #{simple_cnn_forward.9} parent=5 // pred_check
      _
    $region10: #{simple_cnn_forward.9} parent=5 // pred_check_branch
      %72 = sbr.rel (%p69) target = $region12
    $region11: #{simple_cnn_forward.9} parent=5 // pred_region
      %s73 = ssub.s32 %s7, 1
    $region12: #{simple_cnn_forward.9} parent=5 // pred_fallthru
      _
    %p74 = scmp.lt.s32.totalorder %s7, 2
    // Predicated region
    $region13: #{simple_cnn_forward.9} parent=5 // pred_check
      %p75 = pneg %p74
    $region14: #{simple_cnn_forward.9} parent=5 // pred_check_branch
      %77 = sbr.rel (%p75) target = $region16
    $region15: #{simple_cnn_forward.9} parent=5 // pred_region
      // Predicated region
      $region17: #{simple_cnn_forward.9} parent=15 // pred_check
        %p78 = pneg %p27
      $region18: #{simple_cnn_forward.9} parent=15 // pred_check_branch
        %80 = sbr.rel (%p78) target = $region20
      $region19: #{simple_cnn_forward.9} parent=15 // pred_region
        %s81 = smul.u32 32, %s7
        %p82 = scmp.lt.s32.totalorder %s81, 63
        %s83 = scalar_select %p82, %s81, 63
        %s84 = smul.addr %s83, 8
        %s85 = smul.addr %s84, 8
        %s86 = scalar_lea.vmem %s0, %s85
        %s87 = smul.u32 32, %s7
      $region20: #{simple_cnn_forward.9} parent=15 // pred_fallthru
        _
    $region16: #{simple_cnn_forward.9} parent=5 // pred_fallthru
      _
    %p88 = scmp.le.s32.totalorder 1, %s7
    %p89 = scmp.lt.s32.totalorder %s7, 3
    %p90 = pnand %p88, %p89
    %p91 = pneg %p90
    // Predicated region
    $region21: #{simple_cnn_forward.9} parent=5 // pred_check
      _
    $region22: #{simple_cnn_forward.9} parent=5 // pred_check_branch
      %93 = sbr.rel (%p90) target = $region24
    $region23: #{simple_cnn_forward.9} parent=5 // pred_region
      %s94 = ssub.s32 %s7, 1
      %s95 = smul.u32 32, %s12
      %p96 = scmp.lt.s32.totalorder %s95, 63
      %s97 = scalar_select %p96, %s95, 63
      %s98 = smul.addr %s97, 8
      %s99 = smul.addr %s98, 8
      %s100 = scalar_lea.vmem %s0, %s99
      %p101 = pneg %p33
      %p102 = pneg %p30
      %p103 = pneg %p59
      %p104 = pneg %p56
      %s105 = smul.u32 32, %s12
      %p106 = scmp.lt.s32.totalorder %s105, 63
      %s107 = scalar_select %p106, %s105, 63
      %s108 = smul.addr %s107, 4
      %s109 = smul.addr %s108, 4
      %s110 = scalar_lea.vmem %s1, %s109
      %s111 = smul.u32 32, %s12
      %p112 = scmp.lt.s32.totalorder %s111, 63
      %s113 = scalar_select %p112, %s111, 63
      %s114 = smul.addr %s113, 8
      %s115 = smul.addr %s114, 8
      %s116 = scalar_lea.vmem %s0, %s115
      %s117 = smul.u32 32, %s12
      %s118 = smul.u32 32, %s12
      %p119 = scmp.lt.s32.totalorder %s118, 63
      %s120 = scalar_select %p119, %s118, 63
      %s121 = smul.addr %s120, 4
      %s122 = smul.addr %s121, 4
      %s123 = scalar_lea.vmem %s1, %s122
      %s124 = smul.u32 32, %s12
      %v125 = vld [vmem:[%s116] sm:$0xff]
      %v126 = vld [vmem:[%s116 + $0x8] sm:$0xff]
      %v127 = vld [vmem:[%s116 + $0x10] sm:$0xff]
      %v128 = vld [vmem:[%s116 + $0x18] sm:$0xff]
      %v129 = vld [vmem:[%s116 + $0x20] sm:$0xff]
      %v130 = vld [vmem:[%s116 + $0x28] sm:$0xff]
      %v131 = vld [vmem:[%s116 + $0x30] sm:$0xff]
      %v132 = vld [vmem:[%s116 + $0x38] sm:$0xff]
      %v133 = vld [vmem:[%s116 + $0x40] sm:$0xff]
      %v134 = vld [vmem:[%s116 + $0x48] sm:$0xff]
      %v135 = vld [vmem:[%s116 + $0x50] sm:$0xff]
      %v136 = vld [vmem:[%s116 + $0x58] sm:$0xff]
      %v137 = vld [vmem:[%s116 + $0x60] sm:$0xff]
      %v138 = vld [vmem:[%s116 + $0x68] sm:$0xff]
      %v139 = vld [vmem:[%s116 + $0x70] sm:$0xff]
      %v140 = vld [vmem:[%s116 + $0x78] sm:$0xff]
      %v141 = vld [vmem:[%s116 + $0x80] sm:$0xff]
      %v142 = vld [vmem:[%s116 + $0x88] sm:$0xff]
      %v143 = vld [vmem:[%s116 + $0x90] sm:$0xff]
      %v144 = vld [vmem:[%s116 + $0x98] sm:$0xff]
      %v145 = vld [vmem:[%s116 + $0xa0] sm:$0xff]
      %v146 = vld [vmem:[%s116 + $0xa8] sm:$0xff]
      %v147 = vld [vmem:[%s116 + $0xb0] sm:$0xff]
      %v148 = vld [vmem:[%s116 + $0xb8] sm:$0xff]
      %v149 = vld [vmem:[%s116 + $0xc0] sm:$0xff]
      %v150 = vld [vmem:[%s116 + $0xc8] sm:$0xff]
      %v151 = vld [vmem:[%s116 + $0xd0] sm:$0xff]
      %v152 = vld [vmem:[%s116 + $0xd8] sm:$0xff]
      %v153 = vld [vmem:[%s116 + $0xe0] sm:$0xff]
      %v154 = vld [vmem:[%s116 + $0xe8] sm:$0xff]
      %v155 = vld [vmem:[%s116 + $0xf0] sm:$0xff]
      %v156 = vld [vmem:[%s116 + $0xf8] sm:$0xff]
      %v157 = vld [vmem:[%s116 + $0x100] sm:$0xff]
      %v158 = vld [vmem:[%s116 + $0x108] sm:$0xff]
      %v159 = vld [vmem:[%s116 + $0x110] sm:$0xff]
      %v160 = vld [vmem:[%s116 + $0x118] sm:$0xff]
      %v161 = vld [vmem:[%s116 + $0x120] sm:$0xff]
      %v162 = vld [vmem:[%s116 + $0x128] sm:$0xff]
      %v163 = vld [vmem:[%s116 + $0x130] sm:$0xff]
      %v164 = vld [vmem:[%s116 + $0x138] sm:$0xff]
      %v165 = vld [vmem:[%s116 + $0x140] sm:$0xff]
      %v166 = vld [vmem:[%s116 + $0x148] sm:$0xff]
      %v167 = vld [vmem:[%s116 + $0x150] sm:$0xff]
      %v168 = vld [vmem:[%s116 + $0x158] sm:$0xff]
      %v169 = vld [vmem:[%s116 + $0x160] sm:$0xff]
      %v170 = vld [vmem:[%s116 + $0x168] sm:$0xff]
      %v171 = vld [vmem:[%s116 + $0x170] sm:$0xff]
      %v172 = vld [vmem:[%s116 + $0x178] sm:$0xff]
      %v173 = vld [vmem:[%s116 + $0x180] sm:$0xff]
      %v174 = vld [vmem:[%s116 + $0x188] sm:$0xff]
      %v175 = vld [vmem:[%s116 + $0x190] sm:$0xff]
      %v176 = vld [vmem:[%s116 + $0x198] sm:$0xff]
      %v177 = vld [vmem:[%s116 + $0x1a0] sm:$0xff]
      %v178 = vld [vmem:[%s116 + $0x1a8] sm:$0xff]
      %v179 = vld [vmem:[%s116 + $0x1b0] sm:$0xff]
      %v180 = vld [vmem:[%s116 + $0x1b8] sm:$0xff]
      %v181 = vld [vmem:[%s116 + $0x1c0] sm:$0xff]
      %v182 = vld [vmem:[%s116 + $0x1c8] sm:$0xff]
      %v183 = vld [vmem:[%s116 + $0x1d0] sm:$0xff]
      %v184 = vld [vmem:[%s116 + $0x1d8] sm:$0xff]
      %v185 = vld [vmem:[%s116 + $0x1e0] sm:$0xff]
      %v186 = vld [vmem:[%s116 + $0x1e8] sm:$0xff]
      %v187 = vld [vmem:[%s116 + $0x1f0] sm:$0xff]
      %v188 = vld [vmem:[%s116 + $0x1f8] sm:$0xff]
      %v189 = vld [vmem:[%s116 + $0x200] sm:$0xff]
      %v190 = vld [vmem:[%s116 + $0x208] sm:$0xff]
      %v191 = vld [vmem:[%s116 + $0x210] sm:$0xff]
      %v192 = vld [vmem:[%s116 + $0x218] sm:$0xff]
      %v193 = vld [vmem:[%s116 + $0x220] sm:$0xff]
      %v194 = vld [vmem:[%s116 + $0x228] sm:$0xff]
      %v195 = vld [vmem:[%s116 + $0x230] sm:$0xff]
      %v196 = vld [vmem:[%s116 + $0x238] sm:$0xff]
      %v197 = vld [vmem:[%s116 + $0x240] sm:$0xff]
      %v198 = vld [vmem:[%s116 + $0x248] sm:$0xff]
      %v199 = vld [vmem:[%s116 + $0x250] sm:$0xff]
      %v200 = vld [vmem:[%s116 + $0x258] sm:$0xff]
      %v201 = vld [vmem:[%s116 + $0x260] sm:$0xff]
      %v202 = vld [vmem:[%s116 + $0x268] sm:$0xff]
      %v203 = vld [vmem:[%s116 + $0x270] sm:$0xff]
      %v204 = vld [vmem:[%s116 + $0x278] sm:$0xff]
      %v205 = vld [vmem:[%s116 + $0x280] sm:$0xff]
      %v206 = vld [vmem:[%s116 + $0x288] sm:$0xff]
      %v207 = vld [vmem:[%s116 + $0x290] sm:$0xff]
      %v208 = vld [vmem:[%s116 + $0x298] sm:$0xff]
      %v209 = vld [vmem:[%s116 + $0x2a0] sm:$0xff]
      %v210 = vld [vmem:[%s116 + $0x2a8] sm:$0xff]
      %v211 = vld [vmem:[%s116 + $0x2b0] sm:$0xff]
      %v212 = vld [vmem:[%s116 + $0x2b8] sm:$0xff]
      %v213 = vld [vmem:[%s116 + $0x2c0] sm:$0xff]
      %v214 = vld [vmem:[%s116 + $0x2c8] sm:$0xff]
      %v215 = vld [vmem:[%s116 + $0x2d0] sm:$0xff]
      %v216 = vld [vmem:[%s116 + $0x2d8] sm:$0xff]
      %v217 = vld [vmem:[%s116 + $0x2e0] sm:$0xff]
      %v218 = vld [vmem:[%s116 + $0x2e8] sm:$0xff]
      %v219 = vld [vmem:[%s116 + $0x2f0] sm:$0xff]
      %v220 = vld [vmem:[%s116 + $0x2f8] sm:$0xff]
      %v221 = vld [vmem:[%s116 + $0x300] sm:$0xff]
      %v222 = vld [vmem:[%s116 + $0x308] sm:$0xff]
      %v223 = vld [vmem:[%s116 + $0x310] sm:$0xff]
      %v224 = vld [vmem:[%s116 + $0x318] sm:$0xff]
      %v225 = vld [vmem:[%s116 + $0x320] sm:$0xff]
      %v226 = vld [vmem:[%s116 + $0x328] sm:$0xff]
      %v227 = vld [vmem:[%s116 + $0x330] sm:$0xff]
      %v228 = vld [vmem:[%s116 + $0x338] sm:$0xff]
      %v229 = vld [vmem:[%s116 + $0x340] sm:$0xff]
      %v230 = vld [vmem:[%s116 + $0x348] sm:$0xff]
      %v231 = vld [vmem:[%s116 + $0x350] sm:$0xff]
      %v232 = vld [vmem:[%s116 + $0x358] sm:$0xff]
      %v233 = vld [vmem:[%s116 + $0x360] sm:$0xff]
      %v234 = vld [vmem:[%s116 + $0x368] sm:$0xff]
      %v235 = vld [vmem:[%s116 + $0x370] sm:$0xff]
      %v236 = vld [vmem:[%s116 + $0x378] sm:$0xff]
      %v237 = vld [vmem:[%s116 + $0x380] sm:$0xff]
      %v238 = vld [vmem:[%s116 + $0x388] sm:$0xff]
      %v239 = vld [vmem:[%s116 + $0x390] sm:$0xff]
      %v240 = vld [vmem:[%s116 + $0x398] sm:$0xff]
      %v241 = vld [vmem:[%s116 + $0x3a0] sm:$0xff]
      %v242 = vld [vmem:[%s116 + $0x3a8] sm:$0xff]
      %v243 = vld [vmem:[%s116 + $0x3b0] sm:$0xff]
      %v244 = vld [vmem:[%s116 + $0x3b8] sm:$0xff]
      %v245 = vld [vmem:[%s116 + $0x3c0] sm:$0xff]
      %v246 = vld [vmem:[%s116 + $0x3c8] sm:$0xff]
      %v247 = vld [vmem:[%s116 + $0x3d0] sm:$0xff]
      %v248 = vld [vmem:[%s116 + $0x3d8] sm:$0xff]
      %v249 = vld [vmem:[%s116 + $0x3e0] sm:$0xff]
      %v250 = vld [vmem:[%s116 + $0x3e8] sm:$0xff]
      %v251 = vld [vmem:[%s116 + $0x3f0] sm:$0xff]
      %v252 = vld [vmem:[%s116 + $0x3f8] sm:$0xff]
      %v253 = vld [vmem:[%s116 + $0x400] sm:$0xff]
      %v254 = vld [vmem:[%s116 + $0x408] sm:$0xff]
      %v255 = vld [vmem:[%s116 + $0x410] sm:$0xff]
      %v256 = vld [vmem:[%s116 + $0x418] sm:$0xff]
      %v257 = vld [vmem:[%s116 + $0x420] sm:$0xff]
      %v258 = vld [vmem:[%s116 + $0x428] sm:$0xff]
      %v259 = vld [vmem:[%s116 + $0x430] sm:$0xff]
      %v260 = vld [vmem:[%s116 + $0x438] sm:$0xff]
      %v261 = vld [vmem:[%s116 + $0x440] sm:$0xff]
      %v262 = vld [vmem:[%s116 + $0x448] sm:$0xff]
      %v263 = vld [vmem:[%s116 + $0x450] sm:$0xff]
      %v264 = vld [vmem:[%s116 + $0x458] sm:$0xff]
      %v265 = vld [vmem:[%s116 + $0x460] sm:$0xff]
      %v266 = vld [vmem:[%s116 + $0x468] sm:$0xff]
      %v267 = vld [vmem:[%s116 + $0x470] sm:$0xff]
      %v268 = vld [vmem:[%s116 + $0x478] sm:$0xff]
      %v269 = vld [vmem:[%s116 + $0x480] sm:$0xff]
      %v270 = vld [vmem:[%s116 + $0x488] sm:$0xff]
      %v271 = vld [vmem:[%s116 + $0x490] sm:$0xff]
      %v272 = vld [vmem:[%s116 + $0x498] sm:$0xff]
      %v273 = vld [vmem:[%s116 + $0x4a0] sm:$0xff]
      %v274 = vld [vmem:[%s116 + $0x4a8] sm:$0xff]
      %v275 = vld [vmem:[%s116 + $0x4b0] sm:$0xff]
      %v276 = vld [vmem:[%s116 + $0x4b8] sm:$0xff]
      %v277 = vld [vmem:[%s116 + $0x4c0] sm:$0xff]
      %v278 = vld [vmem:[%s116 + $0x4c8] sm:$0xff]
      %v279 = vld [vmem:[%s116 + $0x4d0] sm:$0xff]
      %v280 = vld [vmem:[%s116 + $0x4d8] sm:$0xff]
      %v281 = vld [vmem:[%s116 + $0x4e0] sm:$0xff]
      %v282 = vld [vmem:[%s116 + $0x4e8] sm:$0xff]
      %v283 = vld [vmem:[%s116 + $0x4f0] sm:$0xff]
      %v284 = vld [vmem:[%s116 + $0x4f8] sm:$0xff]
      %v285 = vld [vmem:[%s116 + $0x500] sm:$0xff]
      %v286 = vld [vmem:[%s116 + $0x508] sm:$0xff]
      %v287 = vld [vmem:[%s116 + $0x510] sm:$0xff]
      %v288 = vld [vmem:[%s116 + $0x518] sm:$0xff]
      %v289 = vld [vmem:[%s116 + $0x520] sm:$0xff]
      %v290 = vld [vmem:[%s116 + $0x528] sm:$0xff]
      %v291 = vld [vmem:[%s116 + $0x530] sm:$0xff]
      %v292 = vld [vmem:[%s116 + $0x538] sm:$0xff]
      %v293 = vld [vmem:[%s116 + $0x540] sm:$0xff]
      %v294 = vld [vmem:[%s116 + $0x548] sm:$0xff]
      %v295 = vld [vmem:[%s116 + $0x550] sm:$0xff]
      %v296 = vld [vmem:[%s116 + $0x558] sm:$0xff]
      %v297 = vld [vmem:[%s116 + $0x560] sm:$0xff]
      %v298 = vld [vmem:[%s116 + $0x568] sm:$0xff]
      %v299 = vld [vmem:[%s116 + $0x570] sm:$0xff]
      %v300 = vld [vmem:[%s116 + $0x578] sm:$0xff]
      %v301 = vld [vmem:[%s116 + $0x580] sm:$0xff]
      %v302 = vld [vmem:[%s116 + $0x588] sm:$0xff]
      %v303 = vld [vmem:[%s116 + $0x590] sm:$0xff]
      %v304 = vld [vmem:[%s116 + $0x598] sm:$0xff]
      %v305 = vld [vmem:[%s116 + $0x5a0] sm:$0xff]
      %v306 = vld [vmem:[%s116 + $0x5a8] sm:$0xff]
      %v307 = vld [vmem:[%s116 + $0x5b0] sm:$0xff]
      %v308 = vld [vmem:[%s116 + $0x5b8] sm:$0xff]
      %v309 = vld [vmem:[%s116 + $0x5c0] sm:$0xff]
      %v310 = vld [vmem:[%s116 + $0x5c8] sm:$0xff]
      %v311 = vld [vmem:[%s116 + $0x5d0] sm:$0xff]
      %v312 = vld [vmem:[%s116 + $0x5d8] sm:$0xff]
      %v313 = vld [vmem:[%s116 + $0x5e0] sm:$0xff]
      %v314 = vld [vmem:[%s116 + $0x5e8] sm:$0xff]
      %v315 = vld [vmem:[%s116 + $0x5f0] sm:$0xff]
      %v316 = vld [vmem:[%s116 + $0x5f8] sm:$0xff]
      %v317 = vld [vmem:[%s116 + $0x600] sm:$0xff]
      %v318 = vld [vmem:[%s116 + $0x608] sm:$0xff]
      %v319 = vld [vmem:[%s116 + $0x610] sm:$0xff]
      %v320 = vld [vmem:[%s116 + $0x618] sm:$0xff]
      %v321 = vld [vmem:[%s116 + $0x620] sm:$0xff]
      %v322 = vld [vmem:[%s116 + $0x628] sm:$0xff]
      %v323 = vld [vmem:[%s116 + $0x630] sm:$0xff]
      %v324 = vld [vmem:[%s116 + $0x638] sm:$0xff]
      %v325 = vld [vmem:[%s116 + $0x640] sm:$0xff]
      %v326 = vld [vmem:[%s116 + $0x648] sm:$0xff]
      %v327 = vld [vmem:[%s116 + $0x650] sm:$0xff]
      %v328 = vld [vmem:[%s116 + $0x658] sm:$0xff]
      %v329 = vld [vmem:[%s116 + $0x660] sm:$0xff]
      %v330 = vld [vmem:[%s116 + $0x668] sm:$0xff]
      %v331 = vld [vmem:[%s116 + $0x670] sm:$0xff]
      %v332 = vld [vmem:[%s116 + $0x678] sm:$0xff]
      %v333 = vld [vmem:[%s116 + $0x680] sm:$0xff]
      %v334 = vld [vmem:[%s116 + $0x688] sm:$0xff]
      %v335 = vld [vmem:[%s116 + $0x690] sm:$0xff]
      %v336 = vld [vmem:[%s116 + $0x698] sm:$0xff]
      %v337 = vld [vmem:[%s116 + $0x6a0] sm:$0xff]
      %v338 = vld [vmem:[%s116 + $0x6a8] sm:$0xff]
      %v339 = vld [vmem:[%s116 + $0x6b0] sm:$0xff]
      %v340 = vld [vmem:[%s116 + $0x6b8] sm:$0xff]
      %v341 = vld [vmem:[%s116 + $0x6c0] sm:$0xff]
      %v342 = vld [vmem:[%s116 + $0x6c8] sm:$0xff]
      %v343 = vld [vmem:[%s116 + $0x6d0] sm:$0xff]
      %v344 = vld [vmem:[%s116 + $0x6d8] sm:$0xff]
      %v345 = vld [vmem:[%s116 + $0x6e0] sm:$0xff]
      %v346 = vld [vmem:[%s116 + $0x6e8] sm:$0xff]
      %v347 = vld [vmem:[%s116 + $0x6f0] sm:$0xff]
      %v348 = vld [vmem:[%s116 + $0x6f8] sm:$0xff]
      %v349 = vld [vmem:[%s116 + $0x700] sm:$0xff]
      %v350 = vld [vmem:[%s116 + $0x708] sm:$0xff]
      %v351 = vld [vmem:[%s116 + $0x710] sm:$0xff]
      %v352 = vld [vmem:[%s116 + $0x718] sm:$0xff]
      %v353 = vld [vmem:[%s116 + $0x720] sm:$0xff]
      %v354 = vld [vmem:[%s116 + $0x728] sm:$0xff]
      %v355 = vld [vmem:[%s116 + $0x730] sm:$0xff]
      %v356 = vld [vmem:[%s116 + $0x738] sm:$0xff]
      %v357 = vld [vmem:[%s116 + $0x740] sm:$0xff]
      %v358 = vld [vmem:[%s116 + $0x748] sm:$0xff]
      %v359 = vld [vmem:[%s116 + $0x750] sm:$0xff]
      %v360 = vld [vmem:[%s116 + $0x758] sm:$0xff]
      %v361 = vld [vmem:[%s116 + $0x760] sm:$0xff]
      %v362 = vld [vmem:[%s116 + $0x768] sm:$0xff]
      %v363 = vld [vmem:[%s116 + $0x770] sm:$0xff]
      %v364 = vld [vmem:[%s116 + $0x778] sm:$0xff]
      %v365 = vld [vmem:[%s116 + $0x780] sm:$0xff]
      %v366 = vld [vmem:[%s116 + $0x788] sm:$0xff]
      %v367 = vld [vmem:[%s116 + $0x790] sm:$0xff]
      %v368 = vld [vmem:[%s116 + $0x798] sm:$0xff]
      %v369 = vld [vmem:[%s116 + $0x7a0] sm:$0xff]
      %v370 = vld [vmem:[%s116 + $0x7a8] sm:$0xff]
      %v371 = vld [vmem:[%s116 + $0x7b0] sm:$0xff]
      %v372 = vld [vmem:[%s116 + $0x7b8] sm:$0xff]
      %v373 = vld [vmem:[%s116 + $0x7c0] sm:$0xff]
      %v374 = vld [vmem:[%s116 + $0x7c8] sm:$0xff]
      %v375 = vld [vmem:[%s116 + $0x7d0] sm:$0xff]
      %v376 = vld [vmem:[%s116 + $0x7d8] sm:$0xff]
      %v377 = vld [vmem:[%s116 + $0x7e0] sm:$0xff]
      %v378 = vld [vmem:[%s116 + $0x7e8] sm:$0xff]
      %v379 = vld [vmem:[%s116 + $0x7f0] sm:$0xff]
      %v380 = vld [vmem:[%s116 + $0x7f8] sm:$0xff]
      %v381 = vmax.f32 %v125, %v129
      %v382 = vmax.f32 %v126, %v130
      %v383 = vmax.f32 %v127, %v131
      %v384 = vmax.f32 %v128, %v132
      %v385 = vmax.f32 %v133, %v137
      %v386 = vmax.f32 %v134, %v138
      %v387 = vmax.f32 %v135, %v139
      %v388 = vmax.f32 %v136, %v140
      %v389 = vmax.f32 %v141, %v145
      %v390 = vmax.f32 %v142, %v146
      %v391 = vmax.f32 %v143, %v147
      %v392 = vmax.f32 %v144, %v148
      %v393 = vmax.f32 %v149, %v153
      %v394 = vmax.f32 %v150, %v154
      %v395 = vmax.f32 %v151, %v155
      %v396 = vmax.f32 %v152, %v156
      %v397 = vmax.f32 %v157, %v161
      %v398 = vmax.f32 %v158, %v162
      %v399 = vmax.f32 %v159, %v163
      %v400 = vmax.f32 %v160, %v164
      %v401 = vmax.f32 %v165, %v169
      %v402 = vmax.f32 %v166, %v170
      %v403 = vmax.f32 %v167, %v171
      %v404 = vmax.f32 %v168, %v172
      %v405 = vmax.f32 %v173, %v177
      %v406 = vmax.f32 %v174, %v178
      %v407 = vmax.f32 %v175, %v179
      %v408 = vmax.f32 %v176, %v180
      %v409 = vmax.f32 %v181, %v185
      %v410 = vmax.f32 %v182, %v186
      %v411 = vmax.f32 %v183, %v187
      %v412 = vmax.f32 %v184, %v188
      %v413 = vmax.f32 %v189, %v193
      %v414 = vmax.f32 %v190, %v194
      %v415 = vmax.f32 %v191, %v195
      %v416 = vmax.f32 %v192, %v196
      %v417 = vmax.f32 %v197, %v201
      %v418 = vmax.f32 %v198, %v202
      %v419 = vmax.f32 %v199, %v203
      %v420 = vmax.f32 %v200, %v204
      %v421 = vmax.f32 %v205, %v209
      %v422 = vmax.f32 %v206, %v210
      %v423 = vmax.f32 %v207, %v211
      %v424 = vmax.f32 %v208, %v212
      %v425 = vmax.f32 %v213, %v217
      %v426 = vmax.f32 %v214, %v218
      %v427 = vmax.f32 %v215, %v219
      %v428 = vmax.f32 %v216, %v220
      %v429 = vmax.f32 %v221, %v225
      %v430 = vmax.f32 %v222, %v226
      %v431 = vmax.f32 %v223, %v227
      %v432 = vmax.f32 %v224, %v228
      %v433 = vmax.f32 %v229, %v233
      %v434 = vmax.f32 %v230, %v234
      %v435 = vmax.f32 %v231, %v235
      %v436 = vmax.f32 %v232, %v236
      %v437 = vmax.f32 %v237, %v241
      %v438 = vmax.f32 %v238, %v242
      %v439 = vmax.f32 %v239, %v243
      %v440 = vmax.f32 %v240, %v244
      %v441 = vmax.f32 %v245, %v249
      %v442 = vmax.f32 %v246, %v250
      %v443 = vmax.f32 %v247, %v251
      %v444 = vmax.f32 %v248, %v252
      %v445 = vmax.f32 %v253, %v257
      %v446 = vmax.f32 %v254, %v258
      %v447 = vmax.f32 %v255, %v259
      %v448 = vmax.f32 %v256, %v260
      %v449 = vmax.f32 %v261, %v265
      %v450 = vmax.f32 %v262, %v266
      %v451 = vmax.f32 %v263, %v267
      %v452 = vmax.f32 %v264, %v268
      %v453 = vmax.f32 %v269, %v273
      %v454 = vmax.f32 %v270, %v274
      %v455 = vmax.f32 %v271, %v275
      %v456 = vmax.f32 %v272, %v276
      %v457 = vmax.f32 %v277, %v281
      %v458 = vmax.f32 %v278, %v282
      %v459 = vmax.f32 %v279, %v283
      %v460 = vmax.f32 %v280, %v284
      %v461 = vmax.f32 %v285, %v289
      %v462 = vmax.f32 %v286, %v290
      %v463 = vmax.f32 %v287, %v291
      %v464 = vmax.f32 %v288, %v292
      %v465 = vmax.f32 %v293, %v297
      %v466 = vmax.f32 %v294, %v298
      %v467 = vmax.f32 %v295, %v299
      %v468 = vmax.f32 %v296, %v300
      %v469 = vmax.f32 %v301, %v305
      %v470 = vmax.f32 %v302, %v306
      %v471 = vmax.f32 %v303, %v307
      %v472 = vmax.f32 %v304, %v308
      %v473 = vmax.f32 %v309, %v313
      %v474 = vmax.f32 %v310, %v314
      %v475 = vmax.f32 %v311, %v315
      %v476 = vmax.f32 %v312, %v316
      %v477 = vmax.f32 %v317, %v321
      %v478 = vmax.f32 %v318, %v322
      %v479 = vmax.f32 %v319, %v323
      %v480 = vmax.f32 %v320, %v324
      %v481 = vmax.f32 %v325, %v329
      %v482 = vmax.f32 %v326, %v330
      %v483 = vmax.f32 %v327, %v331
      %v484 = vmax.f32 %v328, %v332
      %v485 = vmax.f32 %v333, %v337
      %v486 = vmax.f32 %v334, %v338
      %v487 = vmax.f32 %v335, %v339
      %v488 = vmax.f32 %v336, %v340
      %v489 = vmax.f32 %v341, %v345
      %v490 = vmax.f32 %v342, %v346
      %v491 = vmax.f32 %v343, %v347
      %v492 = vmax.f32 %v344, %v348
      %v493 = vmax.f32 %v349, %v353
      %v494 = vmax.f32 %v350, %v354
      %v495 = vmax.f32 %v351, %v355
      %v496 = vmax.f32 %v352, %v356
      %v497 = vmax.f32 %v357, %v361
      %v498 = vmax.f32 %v358, %v362
      %v499 = vmax.f32 %v359, %v363
      %v500 = vmax.f32 %v360, %v364
      %v501 = vmax.f32 %v365, %v369
      %v502 = vmax.f32 %v366, %v370
      %v503 = vmax.f32 %v367, %v371
      %v504 = vmax.f32 %v368, %v372
      %v505 = vmax.f32 %v373, %v377
      %v506 = vmax.f32 %v374, %v378
      %v507 = vmax.f32 %v375, %v379
      %v508 = vmax.f32 %v376, %v380
      %637 = vrot.lane.b32.xlu0 %v381, 96
      %v638 = vpop.permute.xlu0 %637
      %639 = vrot.lane.b32.xlu0 %v382, 96
      %v640 = vpop.permute.xlu0 %639
      %641 = vrot.lane.b32.xlu0 %v383, 96
      %v642 = vpop.permute.xlu0 %641
      %643 = vrot.lane.b32.xlu0 %v384, 96
      %v644 = vpop.permute.xlu0 %643
      %645 = vrot.lane.b32.xlu0 %v385, 96
      %v646 = vpop.permute.xlu0 %645
      %647 = vrot.lane.b32.xlu0 %v386, 96
      %v648 = vpop.permute.xlu0 %647
      %649 = vrot.lane.b32.xlu0 %v387, 96
      %v650 = vpop.permute.xlu0 %649
      %651 = vrot.lane.b32.xlu0 %v388, 96
      %v652 = vpop.permute.xlu0 %651
      %653 = vrot.lane.b32.xlu0 %v389, 96
      %v654 = vpop.permute.xlu0 %653
      %655 = vrot.lane.b32.xlu0 %v390, 96
      %v656 = vpop.permute.xlu0 %655
      %657 = vrot.lane.b32.xlu0 %v391, 96
      %v658 = vpop.permute.xlu0 %657
      %659 = vrot.lane.b32.xlu0 %v392, 96
      %v660 = vpop.permute.xlu0 %659
      %661 = vrot.lane.b32.xlu0 %v393, 96
      %v662 = vpop.permute.xlu0 %661
      %663 = vrot.lane.b32.xlu0 %v394, 96
      %v664 = vpop.permute.xlu0 %663
      %665 = vrot.lane.b32.xlu0 %v395, 96
      %v666 = vpop.permute.xlu0 %665
      %667 = vrot.lane.b32.xlu0 %v396, 96
      %v668 = vpop.permute.xlu0 %667
      %669 = vrot.lane.b32.xlu0 %v397, 96
      %v670 = vpop.permute.xlu0 %669
      %671 = vrot.lane.b32.xlu0 %v398, 96
      %v672 = vpop.permute.xlu0 %671
      %673 = vrot.lane.b32.xlu0 %v399, 96
      %v674 = vpop.permute.xlu0 %673
      %675 = vrot.lane.b32.xlu0 %v400, 96
      %v676 = vpop.permute.xlu0 %675
      %677 = vrot.lane.b32.xlu0 %v401, 96
      %v678 = vpop.permute.xlu0 %677
      %679 = vrot.lane.b32.xlu0 %v402, 96
      %v680 = vpop.permute.xlu0 %679
      %681 = vrot.lane.b32.xlu0 %v403, 96
      %v682 = vpop.permute.xlu0 %681
      %683 = vrot.lane.b32.xlu0 %v404, 96
      %v684 = vpop.permute.xlu0 %683
      %685 = vrot.lane.b32.xlu0 %v405, 96
      %v686 = vpop.permute.xlu0 %685
      %687 = vrot.lane.b32.xlu0 %v406, 96
      %v688 = vpop.permute.xlu0 %687
      %689 = vrot.lane.b32.xlu0 %v407, 96
      %v690 = vpop.permute.xlu0 %689
      %691 = vrot.lane.b32.xlu0 %v408, 96
      %v692 = vpop.permute.xlu0 %691
      %693 = vrot.lane.b32.xlu0 %v409, 96
      %v694 = vpop.permute.xlu0 %693
      %695 = vrot.lane.b32.xlu0 %v410, 96
      %v696 = vpop.permute.xlu0 %695
      %697 = vrot.lane.b32.xlu0 %v411, 96
      %v698 = vpop.permute.xlu0 %697
      %699 = vrot.lane.b32.xlu0 %v412, 96
      %v700 = vpop.permute.xlu0 %699
      %701 = vrot.lane.b32.xlu0 %v413, 96
      %v702 = vpop.permute.xlu0 %701
      %703 = vrot.lane.b32.xlu0 %v414, 96
      %v704 = vpop.permute.xlu0 %703
      %705 = vrot.lane.b32.xlu0 %v415, 96
      %v706 = vpop.permute.xlu0 %705
      %707 = vrot.lane.b32.xlu0 %v416, 96
      %v708 = vpop.permute.xlu0 %707
      %709 = vrot.lane.b32.xlu0 %v417, 96
      %v710 = vpop.permute.xlu0 %709
      %711 = vrot.lane.b32.xlu0 %v418, 96
      %v712 = vpop.permute.xlu0 %711
      %713 = vrot.lane.b32.xlu0 %v419, 96
      %v714 = vpop.permute.xlu0 %713
      %715 = vrot.lane.b32.xlu0 %v420, 96
      %v716 = vpop.permute.xlu0 %715
      %717 = vrot.lane.b32.xlu0 %v421, 96
      %v718 = vpop.permute.xlu0 %717
      %719 = vrot.lane.b32.xlu0 %v422, 96
      %v720 = vpop.permute.xlu0 %719
      %721 = vrot.lane.b32.xlu0 %v423, 96
      %v722 = vpop.permute.xlu0 %721
      %723 = vrot.lane.b32.xlu0 %v424, 96
      %v724 = vpop.permute.xlu0 %723
      %725 = vrot.lane.b32.xlu0 %v425, 96
      %v726 = vpop.permute.xlu0 %725
      %727 = vrot.lane.b32.xlu0 %v426, 96
      %v728 = vpop.permute.xlu0 %727
      %729 = vrot.lane.b32.xlu0 %v427, 96
      %v730 = vpop.permute.xlu0 %729
      %731 = vrot.lane.b32.xlu0 %v428, 96
      %v732 = vpop.permute.xlu0 %731
      %733 = vrot.lane.b32.xlu0 %v429, 96
      %v734 = vpop.permute.xlu0 %733
      %735 = vrot.lane.b32.xlu0 %v430, 96
      %v736 = vpop.permute.xlu0 %735
      %737 = vrot.lane.b32.xlu0 %v431, 96
      %v738 = vpop.permute.xlu0 %737
      %739 = vrot.lane.b32.xlu0 %v432, 96
      %v740 = vpop.permute.xlu0 %739
      %741 = vrot.lane.b32.xlu0 %v433, 96
      %v742 = vpop.permute.xlu0 %741
      %743 = vrot.lane.b32.xlu0 %v434, 96
      %v744 = vpop.permute.xlu0 %743
      %745 = vrot.lane.b32.xlu0 %v435, 96
      %v746 = vpop.permute.xlu0 %745
      %747 = vrot.lane.b32.xlu0 %v436, 96
      %v748 = vpop.permute.xlu0 %747
      %749 = vrot.lane.b32.xlu0 %v437, 96
      %v750 = vpop.permute.xlu0 %749
      %751 = vrot.lane.b32.xlu0 %v438, 96
      %v752 = vpop.permute.xlu0 %751
      %753 = vrot.lane.b32.xlu0 %v439, 96
      %v754 = vpop.permute.xlu0 %753
      %755 = vrot.lane.b32.xlu0 %v440, 96
      %v756 = vpop.permute.xlu0 %755
      %757 = vrot.lane.b32.xlu0 %v441, 96
      %v758 = vpop.permute.xlu0 %757
      %759 = vrot.lane.b32.xlu0 %v442, 96
      %v760 = vpop.permute.xlu0 %759
      %761 = vrot.lane.b32.xlu0 %v443, 96
      %v762 = vpop.permute.xlu0 %761
      %763 = vrot.lane.b32.xlu0 %v444, 96
      %v764 = vpop.permute.xlu0 %763
      %765 = vrot.lane.b32.xlu0 %v445, 96
      %v766 = vpop.permute.xlu0 %765
      %767 = vrot.lane.b32.xlu0 %v446, 96
      %v768 = vpop.permute.xlu0 %767
      %769 = vrot.lane.b32.xlu0 %v447, 96
      %v770 = vpop.permute.xlu0 %769
      %771 = vrot.lane.b32.xlu0 %v448, 96
      %v772 = vpop.permute.xlu0 %771
      %773 = vrot.lane.b32.xlu0 %v449, 96
      %v774 = vpop.permute.xlu0 %773
      %775 = vrot.lane.b32.xlu0 %v450, 96
      %v776 = vpop.permute.xlu0 %775
      %777 = vrot.lane.b32.xlu0 %v451, 96
      %v778 = vpop.permute.xlu0 %777
      %779 = vrot.lane.b32.xlu0 %v452, 96
      %v780 = vpop.permute.xlu0 %779
      %781 = vrot.lane.b32.xlu0 %v453, 96
      %v782 = vpop.permute.xlu0 %781
      %783 = vrot.lane.b32.xlu0 %v454, 96
      %v784 = vpop.permute.xlu0 %783
      %785 = vrot.lane.b32.xlu0 %v455, 96
      %v786 = vpop.permute.xlu0 %785
      %787 = vrot.lane.b32.xlu0 %v456, 96
      %v788 = vpop.permute.xlu0 %787
      %789 = vrot.lane.b32.xlu0 %v457, 96
      %v790 = vpop.permute.xlu0 %789
      %791 = vrot.lane.b32.xlu0 %v458, 96
      %v792 = vpop.permute.xlu0 %791
      %793 = vrot.lane.b32.xlu0 %v459, 96
      %v794 = vpop.permute.xlu0 %793
      %795 = vrot.lane.b32.xlu0 %v460, 96
      %v796 = vpop.permute.xlu0 %795
      %797 = vrot.lane.b32.xlu0 %v461, 96
      %v798 = vpop.permute.xlu0 %797
      %799 = vrot.lane.b32.xlu0 %v462, 96
      %v800 = vpop.permute.xlu0 %799
      %801 = vrot.lane.b32.xlu0 %v463, 96
      %v802 = vpop.permute.xlu0 %801
      %803 = vrot.lane.b32.xlu0 %v464, 96
      %v804 = vpop.permute.xlu0 %803
      %805 = vrot.lane.b32.xlu0 %v465, 96
      %v806 = vpop.permute.xlu0 %805
      %807 = vrot.lane.b32.xlu0 %v466, 96
      %v808 = vpop.permute.xlu0 %807
      %809 = vrot.lane.b32.xlu0 %v467, 96
      %v810 = vpop.permute.xlu0 %809
      %811 = vrot.lane.b32.xlu0 %v468, 96
      %v812 = vpop.permute.xlu0 %811
      %813 = vrot.lane.b32.xlu0 %v469, 96
      %v814 = vpop.permute.xlu0 %813
      %815 = vrot.lane.b32.xlu0 %v470, 96
      %v816 = vpop.permute.xlu0 %815
      %817 = vrot.lane.b32.xlu0 %v471, 96
      %v818 = vpop.permute.xlu0 %817
      %819 = vrot.lane.b32.xlu0 %v472, 96
      %v820 = vpop.permute.xlu0 %819
      %821 = vrot.lane.b32.xlu0 %v473, 96
      %v822 = vpop.permute.xlu0 %821
      %823 = vrot.lane.b32.xlu0 %v474, 96
      %v824 = vpop.permute.xlu0 %823
      %825 = vrot.lane.b32.xlu0 %v475, 96
      %v826 = vpop.permute.xlu0 %825
      %827 = vrot.lane.b32.xlu0 %v476, 96
      %v828 = vpop.permute.xlu0 %827
      %829 = vrot.lane.b32.xlu0 %v477, 96
      %v830 = vpop.permute.xlu0 %829
      %831 = vrot.lane.b32.xlu0 %v478, 96
      %v832 = vpop.permute.xlu0 %831
      %833 = vrot.lane.b32.xlu0 %v479, 96
      %v834 = vpop.permute.xlu0 %833
      %835 = vrot.lane.b32.xlu0 %v480, 96
      %v836 = vpop.permute.xlu0 %835
      %837 = vrot.lane.b32.xlu0 %v481, 96
      %v838 = vpop.permute.xlu0 %837
      %839 = vrot.lane.b32.xlu0 %v482, 96
      %v840 = vpop.permute.xlu0 %839
      %841 = vrot.lane.b32.xlu0 %v483, 96
      %v842 = vpop.permute.xlu0 %841
      %843 = vrot.lane.b32.xlu0 %v484, 96
      %v844 = vpop.permute.xlu0 %843
      %845 = vrot.lane.b32.xlu0 %v485, 96
      %v846 = vpop.permute.xlu0 %845
      %847 = vrot.lane.b32.xlu0 %v486, 96
      %v848 = vpop.permute.xlu0 %847
      %849 = vrot.lane.b32.xlu0 %v487, 96
      %v850 = vpop.permute.xlu0 %849
      %851 = vrot.lane.b32.xlu0 %v488, 96
      %v852 = vpop.permute.xlu0 %851
      %853 = vrot.lane.b32.xlu0 %v489, 96
      %v854 = vpop.permute.xlu0 %853
      %855 = vrot.lane.b32.xlu0 %v490, 96
      %v856 = vpop.permute.xlu0 %855
      %857 = vrot.lane.b32.xlu0 %v491, 96
      %v858 = vpop.permute.xlu0 %857
      %859 = vrot.lane.b32.xlu0 %v492, 96
      %v860 = vpop.permute.xlu0 %859
      %861 = vrot.lane.b32.xlu0 %v493, 96
      %v862 = vpop.permute.xlu0 %861
      %863 = vrot.lane.b32.xlu0 %v494, 96
      %v864 = vpop.permute.xlu0 %863
      %865 = vrot.lane.b32.xlu0 %v495, 96
      %v866 = vpop.permute.xlu0 %865
      %867 = vrot.lane.b32.xlu0 %v496, 96
      %v868 = vpop.permute.xlu0 %867
      %869 = vrot.lane.b32.xlu0 %v497, 96
      %v870 = vpop.permute.xlu0 %869
      %871 = vrot.lane.b32.xlu0 %v498, 96
      %v872 = vpop.permute.xlu0 %871
      %873 = vrot.lane.b32.xlu0 %v499, 96
      %v874 = vpop.permute.xlu0 %873
      %875 = vrot.lane.b32.xlu0 %v500, 96
      %v876 = vpop.permute.xlu0 %875
      %877 = vrot.lane.b32.xlu0 %v501, 96
      %v878 = vpop.permute.xlu0 %877
      %879 = vrot.lane.b32.xlu0 %v502, 96
      %v880 = vpop.permute.xlu0 %879
      %881 = vrot.lane.b32.xlu0 %v503, 96
      %v882 = vpop.permute.xlu0 %881
      %883 = vrot.lane.b32.xlu0 %v504, 96
      %v884 = vpop.permute.xlu0 %883
      %885 = vrot.lane.b32.xlu0 %v505, 96
      %v886 = vpop.permute.xlu0 %885
      %887 = vrot.lane.b32.xlu0 %v506, 96
      %v888 = vpop.permute.xlu0 %887
      %889 = vrot.lane.b32.xlu0 %v507, 96
      %v890 = vpop.permute.xlu0 %889
      %891 = vrot.lane.b32.xlu0 %v508, 96
      %v892 = vpop.permute.xlu0 %891
      %v1021 = vmax.f32 %v381, %v638
      %v1022 = vmax.f32 %v382, %v640
      %v1023 = vmax.f32 %v383, %v642
      %v1024 = vmax.f32 %v384, %v644
      %v1025 = vmax.f32 %v385, %v646
      %v1026 = vmax.f32 %v386, %v648
      %v1027 = vmax.f32 %v387, %v650
      %v1028 = vmax.f32 %v388, %v652
      %v1029 = vmax.f32 %v389, %v654
      %v1030 = vmax.f32 %v390, %v656
      %v1031 = vmax.f32 %v391, %v658
      %v1032 = vmax.f32 %v392, %v660
      %v1033 = vmax.f32 %v393, %v662
      %v1034 = vmax.f32 %v394, %v664
      %v1035 = vmax.f32 %v395, %v666
      %v1036 = vmax.f32 %v396, %v668
      %v1037 = vmax.f32 %v397, %v670
      %v1038 = vmax.f32 %v398, %v672
      %v1039 = vmax.f32 %v399, %v674
      %v1040 = vmax.f32 %v400, %v676
      %v1041 = vmax.f32 %v401, %v678
      %v1042 = vmax.f32 %v402, %v680
      %v1043 = vmax.f32 %v403, %v682
      %v1044 = vmax.f32 %v404, %v684
      %v1045 = vmax.f32 %v405, %v686
      %v1046 = vmax.f32 %v406, %v688
      %v1047 = vmax.f32 %v407, %v690
      %v1048 = vmax.f32 %v408, %v692
      %v1049 = vmax.f32 %v409, %v694
      %v1050 = vmax.f32 %v410, %v696
      %v1051 = vmax.f32 %v411, %v698
      %v1052 = vmax.f32 %v412, %v700
      %v1053 = vmax.f32 %v413, %v702
      %v1054 = vmax.f32 %v414, %v704
      %v1055 = vmax.f32 %v415, %v706
      %v1056 = vmax.f32 %v416, %v708
      %v1057 = vmax.f32 %v417, %v710
      %v1058 = vmax.f32 %v418, %v712
      %v1059 = vmax.f32 %v419, %v714
      %v1060 = vmax.f32 %v420, %v716
      %v1061 = vmax.f32 %v421, %v718
      %v1062 = vmax.f32 %v422, %v720
      %v1063 = vmax.f32 %v423, %v722
      %v1064 = vmax.f32 %v424, %v724
      %v1065 = vmax.f32 %v425, %v726
      %v1066 = vmax.f32 %v426, %v728
      %v1067 = vmax.f32 %v427, %v730
      %v1068 = vmax.f32 %v428, %v732
      %v1069 = vmax.f32 %v429, %v734
      %v1070 = vmax.f32 %v430, %v736
      %v1071 = vmax.f32 %v431, %v738
      %v1072 = vmax.f32 %v432, %v740
      %v1073 = vmax.f32 %v433, %v742
      %v1074 = vmax.f32 %v434, %v744
      %v1075 = vmax.f32 %v435, %v746
      %v1076 = vmax.f32 %v436, %v748
      %v1077 = vmax.f32 %v437, %v750
      %v1078 = vmax.f32 %v438, %v752
      %v1079 = vmax.f32 %v439, %v754
      %v1080 = vmax.f32 %v440, %v756
      %v1081 = vmax.f32 %v441, %v758
      %v1082 = vmax.f32 %v442, %v760
      %v1083 = vmax.f32 %v443, %v762
      %v1084 = vmax.f32 %v444, %v764
      %v1085 = vmax.f32 %v445, %v766
      %v1086 = vmax.f32 %v446, %v768
      %v1087 = vmax.f32 %v447, %v770
      %v1088 = vmax.f32 %v448, %v772
      %v1089 = vmax.f32 %v449, %v774
      %v1090 = vmax.f32 %v450, %v776
      %v1091 = vmax.f32 %v451, %v778
      %v1092 = vmax.f32 %v452, %v780
      %v1093 = vmax.f32 %v453, %v782
      %v1094 = vmax.f32 %v454, %v784
      %v1095 = vmax.f32 %v455, %v786
      %v1096 = vmax.f32 %v456, %v788
      %v1097 = vmax.f32 %v457, %v790
      %v1098 = vmax.f32 %v458, %v792
      %v1099 = vmax.f32 %v459, %v794
      %v1100 = vmax.f32 %v460, %v796
      %v1101 = vmax.f32 %v461, %v798
      %v1102 = vmax.f32 %v462, %v800
      %v1103 = vmax.f32 %v463, %v802
      %v1104 = vmax.f32 %v464, %v804
      %v1105 = vmax.f32 %v465, %v806
      %v1106 = vmax.f32 %v466, %v808
      %v1107 = vmax.f32 %v467, %v810
      %v1108 = vmax.f32 %v468, %v812
      %v1109 = vmax.f32 %v469, %v814
      %v1110 = vmax.f32 %v470, %v816
      %v1111 = vmax.f32 %v471, %v818
      %v1112 = vmax.f32 %v472, %v820
      %v1113 = vmax.f32 %v473, %v822
      %v1114 = vmax.f32 %v474, %v824
      %v1115 = vmax.f32 %v475, %v826
      %v1116 = vmax.f32 %v476, %v828
      %v1117 = vmax.f32 %v477, %v830
      %v1118 = vmax.f32 %v478, %v832
      %v1119 = vmax.f32 %v479, %v834
      %v1120 = vmax.f32 %v480, %v836
      %v1121 = vmax.f32 %v481, %v838
      %v1122 = vmax.f32 %v482, %v840
      %v1123 = vmax.f32 %v483, %v842
      %v1124 = vmax.f32 %v484, %v844
      %v1125 = vmax.f32 %v485, %v846
      %v1126 = vmax.f32 %v486, %v848
      %v1127 = vmax.f32 %v487, %v850
      %v1128 = vmax.f32 %v488, %v852
      %v1129 = vmax.f32 %v489, %v854
      %v1130 = vmax.f32 %v490, %v856
      %v1131 = vmax.f32 %v491, %v858
      %v1132 = vmax.f32 %v492, %v860
      %v1133 = vmax.f32 %v493, %v862
      %v1134 = vmax.f32 %v494, %v864
      %v1135 = vmax.f32 %v495, %v866
      %v1136 = vmax.f32 %v496, %v868
      %v1137 = vmax.f32 %v497, %v870
      %v1138 = vmax.f32 %v498, %v872
      %v1139 = vmax.f32 %v499, %v874
      %v1140 = vmax.f32 %v500, %v876
      %v1141 = vmax.f32 %v501, %v878
      %v1142 = vmax.f32 %v502, %v880
      %v1143 = vmax.f32 %v503, %v882
      %v1144 = vmax.f32 %v504, %v884
      %v1145 = vmax.f32 %v505, %v886
      %v1146 = vmax.f32 %v506, %v888
      %v1147 = vmax.f32 %v507, %v890
      %v1148 = vmax.f32 %v508, %v892
      %v1149 = vpack.c.bf16 %v1022, %v1021
      %v1150 = vpack.c.bf16 %v1024, %v1023
      %v1151 = vpack.c.bf16 %v1026, %v1025
      %v1152 = vpack.c.bf16 %v1028, %v1027
      %v1153 = vpack.c.bf16 %v1030, %v1029
      %v1154 = vpack.c.bf16 %v1032, %v1031
      %v1155 = vpack.c.bf16 %v1034, %v1033
      %v1156 = vpack.c.bf16 %v1036, %v1035
      %v1157 = vpack.c.bf16 %v1038, %v1037
      %v1158 = vpack.c.bf16 %v1040, %v1039
      %v1159 = vpack.c.bf16 %v1042, %v1041
      %v1160 = vpack.c.bf16 %v1044, %v1043
      %v1161 = vpack.c.bf16 %v1046, %v1045
      %v1162 = vpack.c.bf16 %v1048, %v1047
      %v1163 = vpack.c.bf16 %v1050, %v1049
      %v1164 = vpack.c.bf16 %v1052, %v1051
      %v1165 = vpack.c.bf16 %v1054, %v1053
      %v1166 = vpack.c.bf16 %v1056, %v1055
      %v1167 = vpack.c.bf16 %v1058, %v1057
      %v1168 = vpack.c.bf16 %v1060, %v1059
      %v1169 = vpack.c.bf16 %v1062, %v1061
      %v1170 = vpack.c.bf16 %v1064, %v1063
      %v1171 = vpack.c.bf16 %v1066, %v1065
      %v1172 = vpack.c.bf16 %v1068, %v1067
      %v1173 = vpack.c.bf16 %v1070, %v1069
      %v1174 = vpack.c.bf16 %v1072, %v1071
      %v1175 = vpack.c.bf16 %v1074, %v1073
      %v1176 = vpack.c.bf16 %v1076, %v1075
      %v1177 = vpack.c.bf16 %v1078, %v1077
      %v1178 = vpack.c.bf16 %v1080, %v1079
      %v1179 = vpack.c.bf16 %v1082, %v1081
      %v1180 = vpack.c.bf16 %v1084, %v1083
      %v1181 = vpack.c.bf16 %v1086, %v1085
      %v1182 = vpack.c.bf16 %v1088, %v1087
      %v1183 = vpack.c.bf16 %v1090, %v1089
      %v1184 = vpack.c.bf16 %v1092, %v1091
      %v1185 = vpack.c.bf16 %v1094, %v1093
      %v1186 = vpack.c.bf16 %v1096, %v1095
      %v1187 = vpack.c.bf16 %v1098, %v1097
      %v1188 = vpack.c.bf16 %v1100, %v1099
      %v1189 = vpack.c.bf16 %v1102, %v1101
      %v1190 = vpack.c.bf16 %v1104, %v1103
      %v1191 = vpack.c.bf16 %v1106, %v1105
      %v1192 = vpack.c.bf16 %v1108, %v1107
      %v1193 = vpack.c.bf16 %v1110, %v1109
      %v1194 = vpack.c.bf16 %v1112, %v1111
      %v1195 = vpack.c.bf16 %v1114, %v1113
      %v1196 = vpack.c.bf16 %v1116, %v1115
      %v1197 = vpack.c.bf16 %v1118, %v1117
      %v1198 = vpack.c.bf16 %v1120, %v1119
      %v1199 = vpack.c.bf16 %v1122, %v1121
      %v1200 = vpack.c.bf16 %v1124, %v1123
      %v1201 = vpack.c.bf16 %v1126, %v1125
      %v1202 = vpack.c.bf16 %v1128, %v1127
      %v1203 = vpack.c.bf16 %v1130, %v1129
      %v1204 = vpack.c.bf16 %v1132, %v1131
      %v1205 = vpack.c.bf16 %v1134, %v1133
      %v1206 = vpack.c.bf16 %v1136, %v1135
      %v1207 = vpack.c.bf16 %v1138, %v1137
      %v1208 = vpack.c.bf16 %v1140, %v1139
      %v1209 = vpack.c.bf16 %v1142, %v1141
      %v1210 = vpack.c.bf16 %v1144, %v1143
      %v1211 = vpack.c.bf16 %v1146, %v1145
      %v1212 = vpack.c.bf16 %v1148, %v1147
      %v1277 = vunpack.c.l.b16 %v1149
      %v1278 = vunpack.c.h.b16 %v1149
      %v1279 = vunpack.c.l.b16 %v1150
      %v1280 = vunpack.c.h.b16 %v1150
      %v1281 = vunpack.c.l.b16 %v1151
      %v1282 = vunpack.c.h.b16 %v1151
      %v1283 = vunpack.c.l.b16 %v1152
      %v1284 = vunpack.c.h.b16 %v1152
      %v1285 = vunpack.c.l.b16 %v1153
      %v1286 = vunpack.c.h.b16 %v1153
      %v1287 = vunpack.c.l.b16 %v1154
      %v1288 = vunpack.c.h.b16 %v1154
      %v1289 = vunpack.c.l.b16 %v1155
      %v1290 = vunpack.c.h.b16 %v1155
      %v1291 = vunpack.c.l.b16 %v1156
      %v1292 = vunpack.c.h.b16 %v1156
      %v1293 = vunpack.c.l.b16 %v1157
      %v1294 = vunpack.c.h.b16 %v1157
      %v1295 = vunpack.c.l.b16 %v1158
      %v1296 = vunpack.c.h.b16 %v1158
      %v1297 = vunpack.c.l.b16 %v1159
      %v1298 = vunpack.c.h.b16 %v1159
      %v1299 = vunpack.c.l.b16 %v1160
      %v1300 = vunpack.c.h.b16 %v1160
      %v1301 = vunpack.c.l.b16 %v1161
      %v1302 = vunpack.c.h.b16 %v1161
      %v1303 = vunpack.c.l.b16 %v1162
      %v1304 = vunpack.c.h.b16 %v1162
      %v1305 = vunpack.c.l.b16 %v1163
      %v1306 = vunpack.c.h.b16 %v1163
      %v1307 = vunpack.c.l.b16 %v1164
      %v1308 = vunpack.c.h.b16 %v1164
      %v1309 = vunpack.c.l.b16 %v1165
      %v1310 = vunpack.c.h.b16 %v1165
      %v1311 = vunpack.c.l.b16 %v1166
      %v1312 = vunpack.c.h.b16 %v1166
      %v1313 = vunpack.c.l.b16 %v1167
      %v1314 = vunpack.c.h.b16 %v1167
      %v1315 = vunpack.c.l.b16 %v1168
      %v1316 = vunpack.c.h.b16 %v1168
      %v1317 = vunpack.c.l.b16 %v1169
      %v1318 = vunpack.c.h.b16 %v1169
      %v1319 = vunpack.c.l.b16 %v1170
      %v1320 = vunpack.c.h.b16 %v1170
      %v1321 = vunpack.c.l.b16 %v1171
      %v1322 = vunpack.c.h.b16 %v1171
      %v1323 = vunpack.c.l.b16 %v1172
      %v1324 = vunpack.c.h.b16 %v1172
      %v1325 = vunpack.c.l.b16 %v1173
      %v1326 = vunpack.c.h.b16 %v1173
      %v1327 = vunpack.c.l.b16 %v1174
      %v1328 = vunpack.c.h.b16 %v1174
      %v1329 = vunpack.c.l.b16 %v1175
      %v1330 = vunpack.c.h.b16 %v1175
      %v1331 = vunpack.c.l.b16 %v1176
      %v1332 = vunpack.c.h.b16 %v1176
      %v1333 = vunpack.c.l.b16 %v1177
      %v1334 = vunpack.c.h.b16 %v1177
      %v1335 = vunpack.c.l.b16 %v1178
      %v1336 = vunpack.c.h.b16 %v1178
      %v1337 = vunpack.c.l.b16 %v1179
      %v1338 = vunpack.c.h.b16 %v1179
      %v1339 = vunpack.c.l.b16 %v1180
      %v1340 = vunpack.c.h.b16 %v1180
      %v1341 = vunpack.c.l.b16 %v1181
      %v1342 = vunpack.c.h.b16 %v1181
      %v1343 = vunpack.c.l.b16 %v1182
      %v1344 = vunpack.c.h.b16 %v1182
      %v1345 = vunpack.c.l.b16 %v1183
      %v1346 = vunpack.c.h.b16 %v1183
      %v1347 = vunpack.c.l.b16 %v1184
      %v1348 = vunpack.c.h.b16 %v1184
      %v1349 = vunpack.c.l.b16 %v1185
      %v1350 = vunpack.c.h.b16 %v1185
      %v1351 = vunpack.c.l.b16 %v1186
      %v1352 = vunpack.c.h.b16 %v1186
      %v1353 = vunpack.c.l.b16 %v1187
      %v1354 = vunpack.c.h.b16 %v1187
      %v1355 = vunpack.c.l.b16 %v1188
      %v1356 = vunpack.c.h.b16 %v1188
      %v1357 = vunpack.c.l.b16 %v1189
      %v1358 = vunpack.c.h.b16 %v1189
      %v1359 = vunpack.c.l.b16 %v1190
      %v1360 = vunpack.c.h.b16 %v1190
      %v1361 = vunpack.c.l.b16 %v1191
      %v1362 = vunpack.c.h.b16 %v1191
      %v1363 = vunpack.c.l.b16 %v1192
      %v1364 = vunpack.c.h.b16 %v1192
      %v1365 = vunpack.c.l.b16 %v1193
      %v1366 = vunpack.c.h.b16 %v1193
      %v1367 = vunpack.c.l.b16 %v1194
      %v1368 = vunpack.c.h.b16 %v1194
      %v1369 = vunpack.c.l.b16 %v1195
      %v1370 = vunpack.c.h.b16 %v1195
      %v1371 = vunpack.c.l.b16 %v1196
      %v1372 = vunpack.c.h.b16 %v1196
      %v1373 = vunpack.c.l.b16 %v1197
      %v1374 = vunpack.c.h.b16 %v1197
      %v1375 = vunpack.c.l.b16 %v1198
      %v1376 = vunpack.c.h.b16 %v1198
      %v1377 = vunpack.c.l.b16 %v1199
      %v1378 = vunpack.c.h.b16 %v1199
      %v1379 = vunpack.c.l.b16 %v1200
      %v1380 = vunpack.c.h.b16 %v1200
      %v1381 = vunpack.c.l.b16 %v1201
      %v1382 = vunpack.c.h.b16 %v1201
      %v1383 = vunpack.c.l.b16 %v1202
      %v1384 = vunpack.c.h.b16 %v1202
      %v1385 = vunpack.c.l.b16 %v1203
      %v1386 = vunpack.c.h.b16 %v1203
      %v1387 = vunpack.c.l.b16 %v1204
      %v1388 = vunpack.c.h.b16 %v1204
      %v1389 = vunpack.c.l.b16 %v1205
      %v1390 = vunpack.c.h.b16 %v1205
      %v1391 = vunpack.c.l.b16 %v1206
      %v1392 = vunpack.c.h.b16 %v1206
      %v1393 = vunpack.c.l.b16 %v1207
      %v1394 = vunpack.c.h.b16 %v1207
      %v1395 = vunpack.c.l.b16 %v1208
      %v1396 = vunpack.c.h.b16 %v1208
      %v1397 = vunpack.c.l.b16 %v1209
      %v1398 = vunpack.c.h.b16 %v1209
      %v1399 = vunpack.c.l.b16 %v1210
      %v1400 = vunpack.c.h.b16 %v1210
      %v1401 = vunpack.c.l.b16 %v1211
      %v1402 = vunpack.c.h.b16 %v1211
      %v1403 = vunpack.c.l.b16 %v1212
      %v1404 = vunpack.c.h.b16 %v1212
      %v1405 = vpack.c.b16 %v1277, %v1277
      %v1406 = vpack.c.b16 %v1278, %v1278
      %v1407 = vpack.c.b16 %v1279, %v1279
      %v1408 = vpack.c.b16 %v1280, %v1280
      %v1409 = vpack.c.b16 %v1281, %v1281
      %v1410 = vpack.c.b16 %v1282, %v1282
      %v1411 = vpack.c.b16 %v1283, %v1283
      %v1412 = vpack.c.b16 %v1284, %v1284
      %v1413 = vpack.c.b16 %v1285, %v1285
      %v1414 = vpack.c.b16 %v1286, %v1286
      %v1415 = vpack.c.b16 %v1287, %v1287
      %v1416 = vpack.c.b16 %v1288, %v1288
      %v1417 = vpack.c.b16 %v1289, %v1289
      %v1418 = vpack.c.b16 %v1290, %v1290
      %v1419 = vpack.c.b16 %v1291, %v1291
      %v1420 = vpack.c.b16 %v1292, %v1292
      %v1421 = vpack.c.b16 %v1293, %v1293
      %v1422 = vpack.c.b16 %v1294, %v1294
      %v1423 = vpack.c.b16 %v1295, %v1295
      %v1424 = vpack.c.b16 %v1296, %v1296
      %v1425 = vpack.c.b16 %v1297, %v1297
      %v1426 = vpack.c.b16 %v1298, %v1298
      %v1427 = vpack.c.b16 %v1299, %v1299
      %v1428 = vpack.c.b16 %v1300, %v1300
      %v1429 = vpack.c.b16 %v1301, %v1301
      %v1430 = vpack.c.b16 %v1302, %v1302
      %v1431 = vpack.c.b16 %v1303, %v1303
      %v1432 = vpack.c.b16 %v1304, %v1304
      %v1433 = vpack.c.b16 %v1305, %v1305
      %v1434 = vpack.c.b16 %v1306, %v1306
      %v1435 = vpack.c.b16 %v1307, %v1307
      %v1436 = vpack.c.b16 %v1308, %v1308
      %v1437 = vpack.c.b16 %v1309, %v1309
      %v1438 = vpack.c.b16 %v1310, %v1310
      %v1439 = vpack.c.b16 %v1311, %v1311
      %v1440 = vpack.c.b16 %v1312, %v1312
      %v1441 = vpack.c.b16 %v1313, %v1313
      %v1442 = vpack.c.b16 %v1314, %v1314
      %v1443 = vpack.c.b16 %v1315, %v1315
      %v1444 = vpack.c.b16 %v1316, %v1316
      %v1445 = vpack.c.b16 %v1317, %v1317
      %v1446 = vpack.c.b16 %v1318, %v1318
      %v1447 = vpack.c.b16 %v1319, %v1319
      %v1448 = vpack.c.b16 %v1320, %v1320
      %v1449 = vpack.c.b16 %v1321, %v1321
      %v1450 = vpack.c.b16 %v1322, %v1322
      %v1451 = vpack.c.b16 %v1323, %v1323
      %v1452 = vpack.c.b16 %v1324, %v1324
      %v1453 = vpack.c.b16 %v1325, %v1325
      %v1454 = vpack.c.b16 %v1326, %v1326
      %v1455 = vpack.c.b16 %v1327, %v1327
      %v1456 = vpack.c.b16 %v1328, %v1328
      %v1457 = vpack.c.b16 %v1329, %v1329
      %v1458 = vpack.c.b16 %v1330, %v1330
      %v1459 = vpack.c.b16 %v1331, %v1331
      %v1460 = vpack.c.b16 %v1332, %v1332
      %v1461 = vpack.c.b16 %v1333, %v1333
      %v1462 = vpack.c.b16 %v1334, %v1334
      %v1463 = vpack.c.b16 %v1335, %v1335
      %v1464 = vpack.c.b16 %v1336, %v1336
      %v1465 = vpack.c.b16 %v1337, %v1337
      %v1466 = vpack.c.b16 %v1338, %v1338
      %v1467 = vpack.c.b16 %v1339, %v1339
      %v1468 = vpack.c.b16 %v1340, %v1340
      %v1469 = vpack.c.b16 %v1341, %v1341
      %v1470 = vpack.c.b16 %v1342, %v1342
      %v1471 = vpack.c.b16 %v1343, %v1343
      %v1472 = vpack.c.b16 %v1344, %v1344
      %v1473 = vpack.c.b16 %v1345, %v1345
      %v1474 = vpack.c.b16 %v1346, %v1346
      %v1475 = vpack.c.b16 %v1347, %v1347
      %v1476 = vpack.c.b16 %v1348, %v1348
      %v1477 = vpack.c.b16 %v1349, %v1349
      %v1478 = vpack.c.b16 %v1350, %v1350
      %v1479 = vpack.c.b16 %v1351, %v1351
      %v1480 = vpack.c.b16 %v1352, %v1352
      %v1481 = vpack.c.b16 %v1353, %v1353
      %v1482 = vpack.c.b16 %v1354, %v1354
      %v1483 = vpack.c.b16 %v1355, %v1355
      %v1484 = vpack.c.b16 %v1356, %v1356
      %v1485 = vpack.c.b16 %v1357, %v1357
      %v1486 = vpack.c.b16 %v1358, %v1358
      %v1487 = vpack.c.b16 %v1359, %v1359
      %v1488 = vpack.c.b16 %v1360, %v1360
      %v1489 = vpack.c.b16 %v1361, %v1361
      %v1490 = vpack.c.b16 %v1362, %v1362
      %v1491 = vpack.c.b16 %v1363, %v1363
      %v1492 = vpack.c.b16 %v1364, %v1364
      %v1493 = vpack.c.b16 %v1365, %v1365
      %v1494 = vpack.c.b16 %v1366, %v1366
      %v1495 = vpack.c.b16 %v1367, %v1367
      %v1496 = vpack.c.b16 %v1368, %v1368
      %v1497 = vpack.c.b16 %v1369, %v1369
      %v1498 = vpack.c.b16 %v1370, %v1370
      %v1499 = vpack.c.b16 %v1371, %v1371
      %v1500 = vpack.c.b16 %v1372, %v1372
      %v1501 = vpack.c.b16 %v1373, %v1373
      %v1502 = vpack.c.b16 %v1374, %v1374
      %v1503 = vpack.c.b16 %v1375, %v1375
      %v1504 = vpack.c.b16 %v1376, %v1376
      %v1505 = vpack.c.b16 %v1377, %v1377
      %v1506 = vpack.c.b16 %v1378, %v1378
      %v1507 = vpack.c.b16 %v1379, %v1379
      %v1508 = vpack.c.b16 %v1380, %v1380
      %v1509 = vpack.c.b16 %v1381, %v1381
      %v1510 = vpack.c.b16 %v1382, %v1382
      %v1511 = vpack.c.b16 %v1383, %v1383
      %v1512 = vpack.c.b16 %v1384, %v1384
      %v1513 = vpack.c.b16 %v1385, %v1385
      %v1514 = vpack.c.b16 %v1386, %v1386
      %v1515 = vpack.c.b16 %v1387, %v1387
      %v1516 = vpack.c.b16 %v1388, %v1388
      %v1517 = vpack.c.b16 %v1389, %v1389
      %v1518 = vpack.c.b16 %v1390, %v1390
      %v1519 = vpack.c.b16 %v1391, %v1391
      %v1520 = vpack.c.b16 %v1392, %v1392
      %v1521 = vpack.c.b16 %v1393, %v1393
      %v1522 = vpack.c.b16 %v1394, %v1394
      %v1523 = vpack.c.b16 %v1395, %v1395
      %v1524 = vpack.c.b16 %v1396, %v1396
      %v1525 = vpack.c.b16 %v1397, %v1397
      %v1526 = vpack.c.b16 %v1398, %v1398
      %v1527 = vpack.c.b16 %v1399, %v1399
      %v1528 = vpack.c.b16 %v1400, %v1400
      %v1529 = vpack.c.b16 %v1401, %v1401
      %v1530 = vpack.c.b16 %v1402, %v1402
      %v1531 = vpack.c.b16 %v1403, %v1403
      %v1532 = vpack.c.b16 %v1404, %v1404
      %vm1661 = vcmask 257024
      %1662 = vst.msk [vmem:[%s123] sm:$0xf] %vm1661, %v1405
      %1663 = vst.msk [vmem:[%s123 + $0x4] sm:$0xf] %vm1661, %v1406
      %1664 = vst.msk [vmem:[%s123 + $0x8] sm:$0xf] %vm1661, %v1407
      %1665 = vst.msk [vmem:[%s123 + $0xc] sm:$0xf] %vm1661, %v1408
      %1666 = vst.msk [vmem:[%s123 + $0x10] sm:$0xf] %vm1661, %v1409
      %1667 = vst.msk [vmem:[%s123 + $0x14] sm:$0xf] %vm1661, %v1410
      %1668 = vst.msk [vmem:[%s123 + $0x18] sm:$0xf] %vm1661, %v1411
      %1669 = vst.msk [vmem:[%s123 + $0x1c] sm:$0xf] %vm1661, %v1412
      %1670 = vst.msk [vmem:[%s123 + $0x20] sm:$0xf] %vm1661, %v1413
      %1671 = vst.msk [vmem:[%s123 + $0x24] sm:$0xf] %vm1661, %v1414
      %1672 = vst.msk [vmem:[%s123 + $0x28] sm:$0xf] %vm1661, %v1415
      %1673 = vst.msk [vmem:[%s123 + $0x2c] sm:$0xf] %vm1661, %v1416
      %1674 = vst.msk [vmem:[%s123 + $0x30] sm:$0xf] %vm1661, %v1417
      %1675 = vst.msk [vmem:[%s123 + $0x34] sm:$0xf] %vm1661, %v1418
      %1676 = vst.msk [vmem:[%s123 + $0x38] sm:$0xf] %vm1661, %v1419
      %1677 = vst.msk [vmem:[%s123 + $0x3c] sm:$0xf] %vm1661, %v1420
      %1678 = vst.msk [vmem:[%s123 + $0x40] sm:$0xf] %vm1661, %v1421
      %1679 = vst.msk [vmem:[%s123 + $0x44] sm:$0xf] %vm1661, %v1422
      %1680 = vst.msk [vmem:[%s123 + $0x48] sm:$0xf] %vm1661, %v1423
      %1681 = vst.msk [vmem:[%s123 + $0x4c] sm:$0xf] %vm1661, %v1424
      %1682 = vst.msk [vmem:[%s123 + $0x50] sm:$0xf] %vm1661, %v1425
      %1683 = vst.msk [vmem:[%s123 + $0x54] sm:$0xf] %vm1661, %v1426
      %1684 = vst.msk [vmem:[%s123 + $0x58] sm:$0xf] %vm1661, %v1427
      %1685 = vst.msk [vmem:[%s123 + $0x5c] sm:$0xf] %vm1661, %v1428
      %1686 = vst.msk [vmem:[%s123 + $0x60] sm:$0xf] %vm1661, %v1429
      %1687 = vst.msk [vmem:[%s123 + $0x64] sm:$0xf] %vm1661, %v1430
      %1688 = vst.msk [vmem:[%s123 + $0x68] sm:$0xf] %vm1661, %v1431
      %1689 = vst.msk [vmem:[%s123 + $0x6c] sm:$0xf] %vm1661, %v1432
      %1690 = vst.msk [vmem:[%s123 + $0x70] sm:$0xf] %vm1661, %v1433
      %1691 = vst.msk [vmem:[%s123 + $0x74] sm:$0xf] %vm1661, %v1434
      %1692 = vst.msk [vmem:[%s123 + $0x78] sm:$0xf] %vm1661, %v1435
      %1693 = vst.msk [vmem:[%s123 + $0x7c] sm:$0xf] %vm1661, %v1436
      %1694 = vst.msk [vmem:[%s123 + $0x80] sm:$0xf] %vm1661, %v1437
      %1695 = vst.msk [vmem:[%s123 + $0x84] sm:$0xf] %vm1661, %v1438
      %1696 = vst.msk [vmem:[%s123 + $0x88] sm:$0xf] %vm1661, %v1439
      %1697 = vst.msk [vmem:[%s123 + $0x8c] sm:$0xf] %vm1661, %v1440
      %1698 = vst.msk [vmem:[%s123 + $0x90] sm:$0xf] %vm1661, %v1441
      %1699 = vst.msk [vmem:[%s123 + $0x94] sm:$0xf] %vm1661, %v1442
      %1700 = vst.msk [vmem:[%s123 + $0x98] sm:$0xf] %vm1661, %v1443
      %1701 = vst.msk [vmem:[%s123 + $0x9c] sm:$0xf] %vm1661, %v1444
      %1702 = vst.msk [vmem:[%s123 + $0xa0] sm:$0xf] %vm1661, %v1445
      %1703 = vst.msk [vmem:[%s123 + $0xa4] sm:$0xf] %vm1661, %v1446
      %1704 = vst.msk [vmem:[%s123 + $0xa8] sm:$0xf] %vm1661, %v1447
      %1705 = vst.msk [vmem:[%s123 + $0xac] sm:$0xf] %vm1661, %v1448
      %1706 = vst.msk [vmem:[%s123 + $0xb0] sm:$0xf] %vm1661, %v1449
      %1707 = vst.msk [vmem:[%s123 + $0xb4] sm:$0xf] %vm1661, %v1450
      %1708 = vst.msk [vmem:[%s123 + $0xb8] sm:$0xf] %vm1661, %v1451
      %1709 = vst.msk [vmem:[%s123 + $0xbc] sm:$0xf] %vm1661, %v1452
      %1710 = vst.msk [vmem:[%s123 + $0xc0] sm:$0xf] %vm1661, %v1453
      %1711 = vst.msk [vmem:[%s123 + $0xc4] sm:$0xf] %vm1661, %v1454
      %1712 = vst.msk [vmem:[%s123 + $0xc8] sm:$0xf] %vm1661, %v1455
      %1713 = vst.msk [vmem:[%s123 + $0xcc] sm:$0xf] %vm1661, %v1456
      %1714 = vst.msk [vmem:[%s123 + $0xd0] sm:$0xf] %vm1661, %v1457
      %1715 = vst.msk [vmem:[%s123 + $0xd4] sm:$0xf] %vm1661, %v1458
      %1716 = vst.msk [vmem:[%s123 + $0xd8] sm:$0xf] %vm1661, %v1459
      %1717 = vst.msk [vmem:[%s123 + $0xdc] sm:$0xf] %vm1661, %v1460
      %1718 = vst.msk [vmem:[%s123 + $0xe0] sm:$0xf] %vm1661, %v1461
      %1719 = vst.msk [vmem:[%s123 + $0xe4] sm:$0xf] %vm1661, %v1462
      %1720 = vst.msk [vmem:[%s123 + $0xe8] sm:$0xf] %vm1661, %v1463
      %1721 = vst.msk [vmem:[%s123 + $0xec] sm:$0xf] %vm1661, %v1464
      %1722 = vst.msk [vmem:[%s123 + $0xf0] sm:$0xf] %vm1661, %v1465
      %1723 = vst.msk [vmem:[%s123 + $0xf4] sm:$0xf] %vm1661, %v1466
      %1724 = vst.msk [vmem:[%s123 + $0xf8] sm:$0xf] %vm1661, %v1467
      %1725 = vst.msk [vmem:[%s123 + $0xfc] sm:$0xf] %vm1661, %v1468
      %1726 = vst.msk [vmem:[%s123 + $0x100] sm:$0xf] %vm1661, %v1469
      %1727 = vst.msk [vmem:[%s123 + $0x104] sm:$0xf] %vm1661, %v1470
      %1728 = vst.msk [vmem:[%s123 + $0x108] sm:$0xf] %vm1661, %v1471
      %1729 = vst.msk [vmem:[%s123 + $0x10c] sm:$0xf] %vm1661, %v1472
      %1730 = vst.msk [vmem:[%s123 + $0x110] sm:$0xf] %vm1661, %v1473
      %1731 = vst.msk [vmem:[%s123 + $0x114] sm:$0xf] %vm1661, %v1474
      %1732 = vst.msk [vmem:[%s123 + $0x118] sm:$0xf] %vm1661, %v1475
      %1733 = vst.msk [vmem:[%s123 + $0x11c] sm:$0xf] %vm1661, %v1476
      %1734 = vst.msk [vmem:[%s123 + $0x120] sm:$0xf] %vm1661, %v1477
      %1735 = vst.msk [vmem:[%s123 + $0x124] sm:$0xf] %vm1661, %v1478
      %1736 = vst.msk [vmem:[%s123 + $0x128] sm:$0xf] %vm1661, %v1479
      %1737 = vst.msk [vmem:[%s123 + $0x12c] sm:$0xf] %vm1661, %v1480
      %1738 = vst.msk [vmem:[%s123 + $0x130] sm:$0xf] %vm1661, %v1481
      %1739 = vst.msk [vmem:[%s123 + $0x134] sm:$0xf] %vm1661, %v1482
      %1740 = vst.msk [vmem:[%s123 + $0x138] sm:$0xf] %vm1661, %v1483
      %1741 = vst.msk [vmem:[%s123 + $0x13c] sm:$0xf] %vm1661, %v1484
      %1742 = vst.msk [vmem:[%s123 + $0x140] sm:$0xf] %vm1661, %v1485
      %1743 = vst.msk [vmem:[%s123 + $0x144] sm:$0xf] %vm1661, %v1486
      %1744 = vst.msk [vmem:[%s123 + $0x148] sm:$0xf] %vm1661, %v1487
      %1745 = vst.msk [vmem:[%s123 + $0x14c] sm:$0xf] %vm1661, %v1488
      %1746 = vst.msk [vmem:[%s123 + $0x150] sm:$0xf] %vm1661, %v1489
      %1747 = vst.msk [vmem:[%s123 + $0x154] sm:$0xf] %vm1661, %v1490
      %1748 = vst.msk [vmem:[%s123 + $0x158] sm:$0xf] %vm1661, %v1491
      %1749 = vst.msk [vmem:[%s123 + $0x15c] sm:$0xf] %vm1661, %v1492
      %1750 = vst.msk [vmem:[%s123 + $0x160] sm:$0xf] %vm1661, %v1493
      %1751 = vst.msk [vmem:[%s123 + $0x164] sm:$0xf] %vm1661, %v1494
      %1752 = vst.msk [vmem:[%s123 + $0x168] sm:$0xf] %vm1661, %v1495
      %1753 = vst.msk [vmem:[%s123 + $0x16c] sm:$0xf] %vm1661, %v1496
      %1754 = vst.msk [vmem:[%s123 + $0x170] sm:$0xf] %vm1661, %v1497
      %1755 = vst.msk [vmem:[%s123 + $0x174] sm:$0xf] %vm1661, %v1498
      %1756 = vst.msk [vmem:[%s123 + $0x178] sm:$0xf] %vm1661, %v1499
      %1757 = vst.msk [vmem:[%s123 + $0x17c] sm:$0xf] %vm1661, %v1500
      %1758 = vst.msk [vmem:[%s123 + $0x180] sm:$0xf] %vm1661, %v1501
      %1759 = vst.msk [vmem:[%s123 + $0x184] sm:$0xf] %vm1661, %v1502
      %1760 = vst.msk [vmem:[%s123 + $0x188] sm:$0xf] %vm1661, %v1503
      %1761 = vst.msk [vmem:[%s123 + $0x18c] sm:$0xf] %vm1661, %v1504
      %1762 = vst.msk [vmem:[%s123 + $0x190] sm:$0xf] %vm1661, %v1505
      %1763 = vst.msk [vmem:[%s123 + $0x194] sm:$0xf] %vm1661, %v1506
      %1764 = vst.msk [vmem:[%s123 + $0x198] sm:$0xf] %vm1661, %v1507
      %1765 = vst.msk [vmem:[%s123 + $0x19c] sm:$0xf] %vm1661, %v1508
      %1766 = vst.msk [vmem:[%s123 + $0x1a0] sm:$0xf] %vm1661, %v1509
      %1767 = vst.msk [vmem:[%s123 + $0x1a4] sm:$0xf] %vm1661, %v1510
      %1768 = vst.msk [vmem:[%s123 + $0x1a8] sm:$0xf] %vm1661, %v1511
      %1769 = vst.msk [vmem:[%s123 + $0x1ac] sm:$0xf] %vm1661, %v1512
      %1770 = vst.msk [vmem:[%s123 + $0x1b0] sm:$0xf] %vm1661, %v1513
      %1771 = vst.msk [vmem:[%s123 + $0x1b4] sm:$0xf] %vm1661, %v1514
      %1772 = vst.msk [vmem:[%s123 + $0x1b8] sm:$0xf] %vm1661, %v1515
      %1773 = vst.msk [vmem:[%s123 + $0x1bc] sm:$0xf] %vm1661, %v1516
      %1774 = vst.msk [vmem:[%s123 + $0x1c0] sm:$0xf] %vm1661, %v1517
      %1775 = vst.msk [vmem:[%s123 + $0x1c4] sm:$0xf] %vm1661, %v1518
      %1776 = vst.msk [vmem:[%s123 + $0x1c8] sm:$0xf] %vm1661, %v1519
      %1777 = vst.msk [vmem:[%s123 + $0x1cc] sm:$0xf] %vm1661, %v1520
      %1778 = vst.msk [vmem:[%s123 + $0x1d0] sm:$0xf] %vm1661, %v1521
      %1779 = vst.msk [vmem:[%s123 + $0x1d4] sm:$0xf] %vm1661, %v1522
      %1780 = vst.msk [vmem:[%s123 + $0x1d8] sm:$0xf] %vm1661, %v1523
      %1781 = vst.msk [vmem:[%s123 + $0x1dc] sm:$0xf] %vm1661, %v1524
      %1782 = vst.msk [vmem:[%s123 + $0x1e0] sm:$0xf] %vm1661, %v1525
      %1783 = vst.msk [vmem:[%s123 + $0x1e4] sm:$0xf] %vm1661, %v1526
      %1784 = vst.msk [vmem:[%s123 + $0x1e8] sm:$0xf] %vm1661, %v1527
      %1785 = vst.msk [vmem:[%s123 + $0x1ec] sm:$0xf] %vm1661, %v1528
      %1786 = vst.msk [vmem:[%s123 + $0x1f0] sm:$0xf] %vm1661, %v1529
      %1787 = vst.msk [vmem:[%s123 + $0x1f4] sm:$0xf] %vm1661, %v1530
      %1788 = vst.msk [vmem:[%s123 + $0x1f8] sm:$0xf] %vm1661, %v1531
      %1789 = vst.msk [vmem:[%s123 + $0x1fc] sm:$0xf] %vm1661, %v1532
      %s1790 = smul.u32 32, %s12
      %p1791 = scmp.lt.s32.totalorder %s1790, 63
      %s1792 = scalar_select %p1791, %s1790, 63
      %s1793 = smul.addr %s1792, 4
      %s1794 = smul.addr %s1793, 4
      %s1795 = scalar_lea.vmem %s1, %s1794
      // Predicated region
      $region25: #{simple_cnn_forward.9} parent=23 // pred_check
        %p1796 = pneg %p56
      $region26: #{simple_cnn_forward.9} parent=23 // pred_check_branch
        %1798 = sbr.rel (%p1796) target = $region28
      $region27: #{simple_cnn_forward.9} parent=23 // pred_region
        %s1799 = smul.u32 32, %s12
      $region28: #{simple_cnn_forward.9} parent=23 // pred_fallthru
        _
    $region24: #{simple_cnn_forward.9} parent=5 // pred_fallthru
      _
    %p1800 = scmp.le.s32.totalorder 2, %s7
    // Predicated region
    $region29: #{simple_cnn_forward.9} parent=5 // pred_check
      %p1801 = pneg %p1800
    $region30: #{simple_cnn_forward.9} parent=5 // pred_check_branch
      %1803 = sbr.rel (%p1801) target = $region32
    $region31: #{simple_cnn_forward.9} parent=5 // pred_region
      %s1804 = ssub.s32 %s7, 2
      // Predicated region
      $region33: #{simple_cnn_forward.9} parent=31 // pred_check
        %p1805 = pneg %p62
      $region34: #{simple_cnn_forward.9} parent=31 // pred_check_branch
        %1807 = sbr.rel (%p1805) target = $region36
      $region35: #{simple_cnn_forward.9} parent=31 // pred_region
        %s1808 = smul.u32 32, %s13
        %p1809 = scmp.lt.s32.totalorder %s1808, 63
        %s1810 = scalar_select %p1809, %s1808, 63
        %s1811 = smul.addr %s1810, 4
        %s1812 = smul.addr %s1811, 4
        %s1813 = scalar_lea.vmem %s1, %s1812
      $region36: #{simple_cnn_forward.9} parent=31 // pred_fallthru
        _
    $region32: #{simple_cnn_forward.9} parent=5 // pred_fallthru
      _
  $region6: #{simple_cnn_forward.9} parent=0 // loop_footer
    %s11 = sadd.s32 1, %s7
  $region7: #{simple_cnn_forward.9} parent=0 // loop_footer_branch
    %6 = sbr.rel target = $region3
  $region8: #{simple_cnn_forward.9} parent=0 // loop_exit
    _

// kernel: simple_cnn_forward.11
$region0: #{simple_cnn_forward.11}
  #allocation0 [shape = 'u32[]', space=smem, size = 0x4, offset = 0x4, fixed_abs, tag = 'smem constant byte address 0x4 - core index']
  #allocation1 [shape = 'u32[144,128]{1,0:T(1,128)}', space=vmem, size = 0x12000, scoped, tag = 'internal scratch']
  %s0 = inlined_call_operand.vmem [shape: f32[32,2,16,128], index: 0, kind: input, shape index: {}]
  %s1 = inlined_call_operand.vmem [shape: bf16[32,16,64], index: 1, kind: output, shape index: {}]
  %s2 = sld [smem:[#allocation0]]
  $region37: #{simple_cnn_forward.11} parent=0
    _
  %s4 = ssub.s32 1, %s2
  %s5 = scalar_select 0, %s4, %s2
  loop: start=0, step=1, limit=4
  $region2: #{simple_cnn_forward.11} parent=0 // loop_pre_header
    _
  $region3: #{simple_cnn_forward.11} parent=0 // loop_header
    %s7 = sphi 0, %s11
    %p8 = scmp.ge.s32.totalorder %s7, 4
    %s17 = sphi 0, %s19
    %s20 = sphi 0, %s17
    %s21 = sphi 0, %s20
    %s37 = sphi 0, %s21
    %s43 = sphi 0, %s45
    %s46 = sphi 0, %s43
    %s47 = sphi 0, %s46
    %s63 = sphi 0, %s47
  $region4: #{simple_cnn_forward.11} parent=0 // loop_header_branch
    %10 = sbr.rel (%p8) target = $region8
  $region5: #{simple_cnn_forward.11} parent=0 // loop_body
    %s12 = ssub.s32 %s7, 1
    %s13 = ssub.s32 %s7, 2
    %s14 = sadd.s32 %s7, 1
    %s15 = ssub.s32 %s7, %s14
    %p16 = scmp.eq.s32.totalorder %s15, 0
    %s18 = sadd.s32 %s17, 1
    %s19 = scalar_select %p16, %s17, %s18
    %p22 = pneg %p16
    %p23 = scmp.eq.s32.totalorder %s7, 1
    %p24 = por %p22, %p23
    %p25 = scmp.ne.s32.totalorder %s17, %s20
    %p26 = scmp.eq.s32.totalorder %s7, 0
    %p27 = por %p25, %p26
    %p28 = scmp.ne.s32.totalorder %s17, %s20
    %p29 = scmp.eq.s32.totalorder %s12, 1
    %p30 = por %p28, %p29
    %p31 = scmp.ne.s32.totalorder %s20, %s21
    %p32 = scmp.eq.s32.totalorder %s12, 0
    %p33 = por %p31, %p32
    %p34 = scmp.ne.s32.totalorder %s20, %s21
    %p35 = scmp.eq.s32.totalorder %s13, 1
    %p36 = por %p34, %p35
    %p38 = scmp.ne.s32.totalorder %s21, %s37
    %p39 = scmp.eq.s32.totalorder %s13, 0
    %p40 = por %p38, %p39
    %s41 = ssub.s32 %s7, %s14
    %p42 = scmp.eq.s32.totalorder %s41, 0
    %s44 = sadd.s32 %s43, 1
    %s45 = scalar_select %p42, %s43, %s44
    %p48 = pneg %p42
    %p49 = scmp.eq.s32.totalorder %s7, 1
    %p50 = por %p48, %p49
    %p51 = scmp.ne.s32.totalorder %s43, %s46
    %p52 = scmp.eq.s32.totalorder %s7, 0
    %p53 = por %p51, %p52
    %p54 = scmp.ne.s32.totalorder %s43, %s46
    %p55 = scmp.eq.s32.totalorder %s12, 1
    %p56 = por %p54, %p55
    %p57 = scmp.ne.s32.totalorder %s46, %s47
    %p58 = scmp.eq.s32.totalorder %s12, 0
    %p59 = por %p57, %p58
    %p60 = scmp.ne.s32.totalorder %s46, %s47
    %p61 = scmp.eq.s32.totalorder %s13, 1
    %p62 = por %p60, %p61
    %p64 = scmp.ne.s32.totalorder %s47, %s63
    %p65 = scmp.eq.s32.totalorder %s13, 0
    %p66 = por %p64, %p65
    %p67 = scmp.le.s32.totalorder 1, %s7
    %p68 = scmp.lt.s32.totalorder %s7, 3
    %p69 = pnand %p67, %p68
    %p70 = pneg %p69
    // Predicated region
    $region9: #{simple_cnn_forward.11} parent=5 // pred_check
      _
    $region10: #{simple_cnn_forward.11} parent=5 // pred_check_branch
      %72 = sbr.rel (%p69) target = $region12
    $region11: #{simple_cnn_forward.11} parent=5 // pred_region
      %s73 = ssub.s32 %s7, 1
    $region12: #{simple_cnn_forward.11} parent=5 // pred_fallthru
      _
    %p74 = scmp.lt.s32.totalorder %s7, 2
    // Predicated region
    $region13: #{simple_cnn_forward.11} parent=5 // pred_check
      %p75 = pneg %p74
    $region14: #{simple_cnn_forward.11} parent=5 // pred_check_branch
      %77 = sbr.rel (%p75) target = $region16
    $region15: #{simple_cnn_forward.11} parent=5 // pred_region
      // Predicated region
      $region17: #{simple_cnn_forward.11} parent=15 // pred_check
        %p78 = pneg %p27
      $region18: #{simple_cnn_forward.11} parent=15 // pred_check_branch
        %80 = sbr.rel (%p78) target = $region20
      $region19: #{simple_cnn_forward.11} parent=15 // pred_region
        %s81 = smul.u32 16, %s7
        %p82 = scmp.lt.s32.totalorder %s81, 31
        %s83 = scalar_select %p82, %s81, 31
        %s84 = smul.addr %s83, 4
        %s85 = smul.addr %s84, 8
        %s86 = scalar_lea.vmem %s0, %s85
        %s87 = smul.u32 16, %s7
      $region20: #{simple_cnn_forward.11} parent=15 // pred_fallthru
        _
    $region16: #{simple_cnn_forward.11} parent=5 // pred_fallthru
      _
    %p88 = scmp.le.s32.totalorder 1, %s7
    %p89 = scmp.lt.s32.totalorder %s7, 3
    %p90 = pnand %p88, %p89
    %p91 = pneg %p90
    // Predicated region
    $region21: #{simple_cnn_forward.11} parent=5 // pred_check
      _
    $region22: #{simple_cnn_forward.11} parent=5 // pred_check_branch
      %93 = sbr.rel (%p90) target = $region24
    $region23: #{simple_cnn_forward.11} parent=5 // pred_region
      %s94 = ssub.s32 %s7, 1
      %s95 = smul.u32 16, %s12
      %p96 = scmp.lt.s32.totalorder %s95, 31
      %s97 = scalar_select %p96, %s95, 31
      %s98 = smul.addr %s97, 4
      %s99 = smul.addr %s98, 8
      %s100 = scalar_lea.vmem %s0, %s99
      %p101 = pneg %p33
      %p102 = pneg %p30
      %p103 = pneg %p59
      %p104 = pneg %p56
      %s105 = smul.u32 16, %s12
      %p106 = scmp.lt.s32.totalorder %s105, 31
      %s107 = scalar_select %p106, %s105, 31
      %s108 = smul.addr %s107, 2
      %s109 = smul.addr %s108, 4
      %s110 = scalar_lea.vmem %s1, %s109
      %s111 = smul.u32 16, %s12
      %p112 = scmp.lt.s32.totalorder %s111, 31
      %s113 = scalar_select %p112, %s111, 31
      %s114 = smul.addr %s113, 4
      %s115 = smul.addr %s114, 8
      %s116 = scalar_lea.vmem %s0, %s115
      %s117 = smul.u32 16, %s12
      %s118 = smul.u32 16, %s12
      %p119 = scmp.lt.s32.totalorder %s118, 31
      %s120 = scalar_select %p119, %s118, 31
      %s121 = smul.addr %s120, 2
      %s122 = smul.addr %s121, 4
      %s123 = scalar_lea.vmem %s1, %s122
      %s124 = smul.u32 16, %s12
      %v125 = vld [vmem:[%s116] sm:$0xff]
      %v126 = vld [vmem:[%s116 + $0x8] sm:$0xff]
      %v127 = vld [vmem:[%s116 + $0x10] sm:$0xff]
      %v128 = vld [vmem:[%s116 + $0x18] sm:$0xff]
      %v129 = vld [vmem:[%s116 + $0x20] sm:$0xff]
      %v130 = vld [vmem:[%s116 + $0x28] sm:$0xff]
      %v131 = vld [vmem:[%s116 + $0x30] sm:$0xff]
      %v132 = vld [vmem:[%s116 + $0x38] sm:$0xff]
      %v133 = vld [vmem:[%s116 + $0x40] sm:$0xff]
      %v134 = vld [vmem:[%s116 + $0x48] sm:$0xff]
      %v135 = vld [vmem:[%s116 + $0x50] sm:$0xff]
      %v136 = vld [vmem:[%s116 + $0x58] sm:$0xff]
      %v137 = vld [vmem:[%s116 + $0x60] sm:$0xff]
      %v138 = vld [vmem:[%s116 + $0x68] sm:$0xff]
      %v139 = vld [vmem:[%s116 + $0x70] sm:$0xff]
      %v140 = vld [vmem:[%s116 + $0x78] sm:$0xff]
      %v141 = vld [vmem:[%s116 + $0x80] sm:$0xff]
      %v142 = vld [vmem:[%s116 + $0x88] sm:$0xff]
      %v143 = vld [vmem:[%s116 + $0x90] sm:$0xff]
      %v144 = vld [vmem:[%s116 + $0x98] sm:$0xff]
      %v145 = vld [vmem:[%s116 + $0xa0] sm:$0xff]
      %v146 = vld [vmem:[%s116 + $0xa8] sm:$0xff]
      %v147 = vld [vmem:[%s116 + $0xb0] sm:$0xff]
      %v148 = vld [vmem:[%s116 + $0xb8] sm:$0xff]
      %v149 = vld [vmem:[%s116 + $0xc0] sm:$0xff]
      %v150 = vld [vmem:[%s116 + $0xc8] sm:$0xff]
      %v151 = vld [vmem:[%s116 + $0xd0] sm:$0xff]
      %v152 = vld [vmem:[%s116 + $0xd8] sm:$0xff]
      %v153 = vld [vmem:[%s116 + $0xe0] sm:$0xff]
      %v154 = vld [vmem:[%s116 + $0xe8] sm:$0xff]
      %v155 = vld [vmem:[%s116 + $0xf0] sm:$0xff]
      %v156 = vld [vmem:[%s116 + $0xf8] sm:$0xff]
      %v157 = vld [vmem:[%s116 + $0x100] sm:$0xff]
      %v158 = vld [vmem:[%s116 + $0x108] sm:$0xff]
      %v159 = vld [vmem:[%s116 + $0x110] sm:$0xff]
      %v160 = vld [vmem:[%s116 + $0x118] sm:$0xff]
      %v161 = vld [vmem:[%s116 + $0x120] sm:$0xff]
      %v162 = vld [vmem:[%s116 + $0x128] sm:$0xff]
      %v163 = vld [vmem:[%s116 + $0x130] sm:$0xff]
      %v164 = vld [vmem:[%s116 + $0x138] sm:$0xff]
      %v165 = vld [vmem:[%s116 + $0x140] sm:$0xff]
      %v166 = vld [vmem:[%s116 + $0x148] sm:$0xff]
      %v167 = vld [vmem:[%s116 + $0x150] sm:$0xff]
      %v168 = vld [vmem:[%s116 + $0x158] sm:$0xff]
      %v169 = vld [vmem:[%s116 + $0x160] sm:$0xff]
      %v170 = vld [vmem:[%s116 + $0x168] sm:$0xff]
      %v171 = vld [vmem:[%s116 + $0x170] sm:$0xff]
      %v172 = vld [vmem:[%s116 + $0x178] sm:$0xff]
      %v173 = vld [vmem:[%s116 + $0x180] sm:$0xff]
      %v174 = vld [vmem:[%s116 + $0x188] sm:$0xff]
      %v175 = vld [vmem:[%s116 + $0x190] sm:$0xff]
      %v176 = vld [vmem:[%s116 + $0x198] sm:$0xff]
      %v177 = vld [vmem:[%s116 + $0x1a0] sm:$0xff]
      %v178 = vld [vmem:[%s116 + $0x1a8] sm:$0xff]
      %v179 = vld [vmem:[%s116 + $0x1b0] sm:$0xff]
      %v180 = vld [vmem:[%s116 + $0x1b8] sm:$0xff]
      %v181 = vld [vmem:[%s116 + $0x1c0] sm:$0xff]
      %v182 = vld [vmem:[%s116 + $0x1c8] sm:$0xff]
      %v183 = vld [vmem:[%s116 + $0x1d0] sm:$0xff]
      %v184 = vld [vmem:[%s116 + $0x1d8] sm:$0xff]
      %v185 = vld [vmem:[%s116 + $0x1e0] sm:$0xff]
      %v186 = vld [vmem:[%s116 + $0x1e8] sm:$0xff]
      %v187 = vld [vmem:[%s116 + $0x1f0] sm:$0xff]
      %v188 = vld [vmem:[%s116 + $0x1f8] sm:$0xff]
      %v189 = vmax.f32 %v125, %v127
      %v190 = vmax.f32 %v126, %v128
      %v191 = vmax.f32 %v129, %v131
      %v192 = vmax.f32 %v130, %v132
      %v193 = vmax.f32 %v133, %v135
      %v194 = vmax.f32 %v134, %v136
      %v195 = vmax.f32 %v137, %v139
      %v196 = vmax.f32 %v138, %v140
      %v197 = vmax.f32 %v141, %v143
      %v198 = vmax.f32 %v142, %v144
      %v199 = vmax.f32 %v145, %v147
      %v200 = vmax.f32 %v146, %v148
      %v201 = vmax.f32 %v149, %v151
      %v202 = vmax.f32 %v150, %v152
      %v203 = vmax.f32 %v153, %v155
      %v204 = vmax.f32 %v154, %v156
      %v205 = vmax.f32 %v157, %v159
      %v206 = vmax.f32 %v158, %v160
      %v207 = vmax.f32 %v161, %v163
      %v208 = vmax.f32 %v162, %v164
      %v209 = vmax.f32 %v165, %v167
      %v210 = vmax.f32 %v166, %v168
      %v211 = vmax.f32 %v169, %v171
      %v212 = vmax.f32 %v170, %v172
      %v213 = vmax.f32 %v173, %v175
      %v214 = vmax.f32 %v174, %v176
      %v215 = vmax.f32 %v177, %v179
      %v216 = vmax.f32 %v178, %v180
      %v217 = vmax.f32 %v181, %v183
      %v218 = vmax.f32 %v182, %v184
      %v219 = vmax.f32 %v185, %v187
      %v220 = vmax.f32 %v186, %v188
      %253 = vrot.lane.b32.xlu0 %v189, 64
      %v254 = vpop.permute.xlu0 %253
      %255 = vrot.lane.b32.xlu0 %v190, 64
      %v256 = vpop.permute.xlu0 %255
      %257 = vrot.lane.b32.xlu0 %v191, 64
      %v258 = vpop.permute.xlu0 %257
      %259 = vrot.lane.b32.xlu0 %v192, 64
      %v260 = vpop.permute.xlu0 %259
      %261 = vrot.lane.b32.xlu0 %v193, 64
      %v262 = vpop.permute.xlu0 %261
      %263 = vrot.lane.b32.xlu0 %v194, 64
      %v264 = vpop.permute.xlu0 %263
      %265 = vrot.lane.b32.xlu0 %v195, 64
      %v266 = vpop.permute.xlu0 %265
      %267 = vrot.lane.b32.xlu0 %v196, 64
      %v268 = vpop.permute.xlu0 %267
      %269 = vrot.lane.b32.xlu0 %v197, 64
      %v270 = vpop.permute.xlu0 %269
      %271 = vrot.lane.b32.xlu0 %v198, 64
      %v272 = vpop.permute.xlu0 %271
      %273 = vrot.lane.b32.xlu0 %v199, 64
      %v274 = vpop.permute.xlu0 %273
      %275 = vrot.lane.b32.xlu0 %v200, 64
      %v276 = vpop.permute.xlu0 %275
      %277 = vrot.lane.b32.xlu0 %v201, 64
      %v278 = vpop.permute.xlu0 %277
      %279 = vrot.lane.b32.xlu0 %v202, 64
      %v280 = vpop.permute.xlu0 %279
      %281 = vrot.lane.b32.xlu0 %v203, 64
      %v282 = vpop.permute.xlu0 %281
      %283 = vrot.lane.b32.xlu0 %v204, 64
      %v284 = vpop.permute.xlu0 %283
      %285 = vrot.lane.b32.xlu0 %v205, 64
      %v286 = vpop.permute.xlu0 %285
      %287 = vrot.lane.b32.xlu0 %v206, 64
      %v288 = vpop.permute.xlu0 %287
      %289 = vrot.lane.b32.xlu0 %v207, 64
      %v290 = vpop.permute.xlu0 %289
      %291 = vrot.lane.b32.xlu0 %v208, 64
      %v292 = vpop.permute.xlu0 %291
      %293 = vrot.lane.b32.xlu0 %v209, 64
      %v294 = vpop.permute.xlu0 %293
      %295 = vrot.lane.b32.xlu0 %v210, 64
      %v296 = vpop.permute.xlu0 %295
      %297 = vrot.lane.b32.xlu0 %v211, 64
      %v298 = vpop.permute.xlu0 %297
      %299 = vrot.lane.b32.xlu0 %v212, 64
      %v300 = vpop.permute.xlu0 %299
      %301 = vrot.lane.b32.xlu0 %v213, 64
      %v302 = vpop.permute.xlu0 %301
      %303 = vrot.lane.b32.xlu0 %v214, 64
      %v304 = vpop.permute.xlu0 %303
      %305 = vrot.lane.b32.xlu0 %v215, 64
      %v306 = vpop.permute.xlu0 %305
      %307 = vrot.lane.b32.xlu0 %v216, 64
      %v308 = vpop.permute.xlu0 %307
      %309 = vrot.lane.b32.xlu0 %v217, 64
      %v310 = vpop.permute.xlu0 %309
      %311 = vrot.lane.b32.xlu0 %v218, 64
      %v312 = vpop.permute.xlu0 %311
      %313 = vrot.lane.b32.xlu0 %v219, 64
      %v314 = vpop.permute.xlu0 %313
      %315 = vrot.lane.b32.xlu0 %v220, 64
      %v316 = vpop.permute.xlu0 %315
      %v349 = vmax.f32 %v189, %v254
      %v350 = vmax.f32 %v190, %v256
      %v351 = vmax.f32 %v191, %v258
      %v352 = vmax.f32 %v192, %v260
      %v353 = vmax.f32 %v193, %v262
      %v354 = vmax.f32 %v194, %v264
      %v355 = vmax.f32 %v195, %v266
      %v356 = vmax.f32 %v196, %v268
      %v357 = vmax.f32 %v197, %v270
      %v358 = vmax.f32 %v198, %v272
      %v359 = vmax.f32 %v199, %v274
      %v360 = vmax.f32 %v200, %v276
      %v361 = vmax.f32 %v201, %v278
      %v362 = vmax.f32 %v202, %v280
      %v363 = vmax.f32 %v203, %v282
      %v364 = vmax.f32 %v204, %v284
      %v365 = vmax.f32 %v205, %v286
      %v366 = vmax.f32 %v206, %v288
      %v367 = vmax.f32 %v207, %v290
      %v368 = vmax.f32 %v208, %v292
      %v369 = vmax.f32 %v209, %v294
      %v370 = vmax.f32 %v210, %v296
      %v371 = vmax.f32 %v211, %v298
      %v372 = vmax.f32 %v212, %v300
      %v373 = vmax.f32 %v213, %v302
      %v374 = vmax.f32 %v214, %v304
      %v375 = vmax.f32 %v215, %v306
      %v376 = vmax.f32 %v216, %v308
      %v377 = vmax.f32 %v217, %v310
      %v378 = vmax.f32 %v218, %v312
      %v379 = vmax.f32 %v219, %v314
      %v380 = vmax.f32 %v220, %v316
      %v381 = vpack.c.bf16 %v350, %v349
      %v382 = vpack.c.bf16 %v352, %v351
      %v383 = vpack.c.bf16 %v354, %v353
      %v384 = vpack.c.bf16 %v356, %v355
      %v385 = vpack.c.bf16 %v358, %v357
      %v386 = vpack.c.bf16 %v360, %v359
      %v387 = vpack.c.bf16 %v362, %v361
      %v388 = vpack.c.bf16 %v364, %v363
      %v389 = vpack.c.bf16 %v366, %v365
      %v390 = vpack.c.bf16 %v368, %v367
      %v391 = vpack.c.bf16 %v370, %v369
      %v392 = vpack.c.bf16 %v372, %v371
      %v393 = vpack.c.bf16 %v374, %v373
      %v394 = vpack.c.bf16 %v376, %v375
      %v395 = vpack.c.bf16 %v378, %v377
      %v396 = vpack.c.bf16 %v380, %v379
      %v413 = vunpack.c.l.b16 %v381
      %v414 = vunpack.c.h.b16 %v381
      %v415 = vunpack.c.l.b16 %v382
      %v416 = vunpack.c.h.b16 %v382
      %v417 = vunpack.c.l.b16 %v383
      %v418 = vunpack.c.h.b16 %v383
      %v419 = vunpack.c.l.b16 %v384
      %v420 = vunpack.c.h.b16 %v384
      %v421 = vunpack.c.l.b16 %v385
      %v422 = vunpack.c.h.b16 %v385
      %v423 = vunpack.c.l.b16 %v386
      %v424 = vunpack.c.h.b16 %v386
      %v425 = vunpack.c.l.b16 %v387
      %v426 = vunpack.c.h.b16 %v387
      %v427 = vunpack.c.l.b16 %v388
      %v428 = vunpack.c.h.b16 %v388
      %v429 = vunpack.c.l.b16 %v389
      %v430 = vunpack.c.h.b16 %v389
      %v431 = vunpack.c.l.b16 %v390
      %v432 = vunpack.c.h.b16 %v390
      %v433 = vunpack.c.l.b16 %v391
      %v434 = vunpack.c.h.b16 %v391
      %v435 = vunpack.c.l.b16 %v392
      %v436 = vunpack.c.h.b16 %v392
      %v437 = vunpack.c.l.b16 %v393
      %v438 = vunpack.c.h.b16 %v393
      %v439 = vunpack.c.l.b16 %v394
      %v440 = vunpack.c.h.b16 %v394
      %v441 = vunpack.c.l.b16 %v395
      %v442 = vunpack.c.h.b16 %v395
      %v443 = vunpack.c.l.b16 %v396
      %v444 = vunpack.c.h.b16 %v396
      %v445 = vpack.c.b16 %v413, %v413
      %v446 = vpack.c.b16 %v414, %v414
      %v447 = vpack.c.b16 %v415, %v415
      %v448 = vpack.c.b16 %v416, %v416
      %v449 = vpack.c.b16 %v417, %v417
      %v450 = vpack.c.b16 %v418, %v418
      %v451 = vpack.c.b16 %v419, %v419
      %v452 = vpack.c.b16 %v420, %v420
      %v453 = vpack.c.b16 %v421, %v421
      %v454 = vpack.c.b16 %v422, %v422
      %v455 = vpack.c.b16 %v423, %v423
      %v456 = vpack.c.b16 %v424, %v424
      %v457 = vpack.c.b16 %v425, %v425
      %v458 = vpack.c.b16 %v426, %v426
      %v459 = vpack.c.b16 %v427, %v427
      %v460 = vpack.c.b16 %v428, %v428
      %v461 = vpack.c.b16 %v429, %v429
      %v462 = vpack.c.b16 %v430, %v430
      %v463 = vpack.c.b16 %v431, %v431
      %v464 = vpack.c.b16 %v432, %v432
      %v465 = vpack.c.b16 %v433, %v433
      %v466 = vpack.c.b16 %v434, %v434
      %v467 = vpack.c.b16 %v435, %v435
      %v468 = vpack.c.b16 %v436, %v436
      %v469 = vpack.c.b16 %v437, %v437
      %v470 = vpack.c.b16 %v438, %v438
      %v471 = vpack.c.b16 %v439, %v439
      %v472 = vpack.c.b16 %v440, %v440
      %v473 = vpack.c.b16 %v441, %v441
      %v474 = vpack.c.b16 %v442, %v442
      %v475 = vpack.c.b16 %v443, %v443
      %v476 = vpack.c.b16 %v444, %v444
      %vm509 = vcmask 519168
      %510 = vst.msk [vmem:[%s123] sm:$0xf] %vm509, %v445
      %511 = vst.msk [vmem:[%s123 + $0x4] sm:$0xf] %vm509, %v446
      %512 = vst.msk [vmem:[%s123 + $0x8] sm:$0xf] %vm509, %v447
      %513 = vst.msk [vmem:[%s123 + $0xc] sm:$0xf] %vm509, %v448
      %514 = vst.msk [vmem:[%s123 + $0x10] sm:$0xf] %vm509, %v449
      %515 = vst.msk [vmem:[%s123 + $0x14] sm:$0xf] %vm509, %v450
      %516 = vst.msk [vmem:[%s123 + $0x18] sm:$0xf] %vm509, %v451
      %517 = vst.msk [vmem:[%s123 + $0x1c] sm:$0xf] %vm509, %v452
      %518 = vst.msk [vmem:[%s123 + $0x20] sm:$0xf] %vm509, %v453
      %519 = vst.msk [vmem:[%s123 + $0x24] sm:$0xf] %vm509, %v454
      %520 = vst.msk [vmem:[%s123 + $0x28] sm:$0xf] %vm509, %v455
      %521 = vst.msk [vmem:[%s123 + $0x2c] sm:$0xf] %vm509, %v456
      %522 = vst.msk [vmem:[%s123 + $0x30] sm:$0xf] %vm509, %v457
      %523 = vst.msk [vmem:[%s123 + $0x34] sm:$0xf] %vm509, %v458
      %524 = vst.msk [vmem:[%s123 + $0x38] sm:$0xf] %vm509, %v459
      %525 = vst.msk [vmem:[%s123 + $0x3c] sm:$0xf] %vm509, %v460
      %526 = vst.msk [vmem:[%s123 + $0x40] sm:$0xf] %vm509, %v461
      %527 = vst.msk [vmem:[%s123 + $0x44] sm:$0xf] %vm509, %v462
      %528 = vst.msk [vmem:[%s123 + $0x48] sm:$0xf] %vm509, %v463
      %529 = vst.msk [vmem:[%s123 + $0x4c] sm:$0xf] %vm509, %v464
      %530 = vst.msk [vmem:[%s123 + $0x50] sm:$0xf] %vm509, %v465
      %531 = vst.msk [vmem:[%s123 + $0x54] sm:$0xf] %vm509, %v466
      %532 = vst.msk [vmem:[%s123 + $0x58] sm:$0xf] %vm509, %v467
      %533 = vst.msk [vmem:[%s123 + $0x5c] sm:$0xf] %vm509, %v468
      %534 = vst.msk [vmem:[%s123 + $0x60] sm:$0xf] %vm509, %v469
      %535 = vst.msk [vmem:[%s123 + $0x64] sm:$0xf] %vm509, %v470
      %536 = vst.msk [vmem:[%s123 + $0x68] sm:$0xf] %vm509, %v471
      %537 = vst.msk [vmem:[%s123 + $0x6c] sm:$0xf] %vm509, %v472
      %538 = vst.msk [vmem:[%s123 + $0x70] sm:$0xf] %vm509, %v473
      %539 = vst.msk [vmem:[%s123 + $0x74] sm:$0xf] %vm509, %v474
      %540 = vst.msk [vmem:[%s123 + $0x78] sm:$0xf] %vm509, %v475
      %541 = vst.msk [vmem:[%s123 + $0x7c] sm:$0xf] %vm509, %v476
      %s542 = smul.u32 16, %s12
      %p543 = scmp.lt.s32.totalorder %s542, 31
      %s544 = scalar_select %p543, %s542, 31
      %s545 = smul.addr %s544, 2
      %s546 = smul.addr %s545, 4
      %s547 = scalar_lea.vmem %s1, %s546
      // Predicated region
      $region25: #{simple_cnn_forward.11} parent=23 // pred_check
        %p548 = pneg %p56
      $region26: #{simple_cnn_forward.11} parent=23 // pred_check_branch
        %550 = sbr.rel (%p548) target = $region28
      $region27: #{simple_cnn_forward.11} parent=23 // pred_region
        %s551 = smul.u32 16, %s12
      $region28: #{simple_cnn_forward.11} parent=23 // pred_fallthru
        _
    $region24: #{simple_cnn_forward.11} parent=5 // pred_fallthru
      _
    %p552 = scmp.le.s32.totalorder 2, %s7
    // Predicated region
    $region29: #{simple_cnn_forward.11} parent=5 // pred_check
      %p553 = pneg %p552
    $region30: #{simple_cnn_forward.11} parent=5 // pred_check_branch
      %555 = sbr.rel (%p553) target = $region32
    $region31: #{simple_cnn_forward.11} parent=5 // pred_region
      %s556 = ssub.s32 %s7, 2
      // Predicated region
      $region33: #{simple_cnn_forward.11} parent=31 // pred_check
        %p557 = pneg %p62
      $region34: #{simple_cnn_forward.11} parent=31 // pred_check_branch
        %559 = sbr.rel (%p557) target = $region36
      $region35: #{simple_cnn_forward.11} parent=31 // pred_region
        %s560 = smul.u32 16, %s13
        %p561 = scmp.lt.s32.totalorder %s560, 31
        %s562 = scalar_select %p561, %s560, 31
        %s563 = smul.addr %s562, 2
        %s564 = smul.addr %s563, 4
        %s565 = scalar_lea.vmem %s1, %s564
      $region36: #{simple_cnn_forward.11} parent=31 // pred_fallthru
        _
    $region32: #{simple_cnn_forward.11} parent=5 // pred_fallthru
      _
  $region6: #{simple_cnn_forward.11} parent=0 // loop_footer
    %s11 = sadd.s32 1, %s7
  $region7: #{simple_cnn_forward.11} parent=0 // loop_footer_branch
    %6 = sbr.rel target = $region3
  $region8: #{simple_cnn_forward.11} parent=0 // loop_exit
    _

// kernel: simple_cnn_forward.10
$region0: #{simple_cnn_forward.10}
  #allocation0 [shape = 'u32[]', space=smem, size = 0x4, offset = 0x4, fixed_abs, tag = 'smem constant byte address 0x4 - core index']
  #allocation1 [shape = 'u32[144,128]{1,0:T(1,128)}', space=vmem, size = 0x12000, scoped, tag = 'internal scratch']
  %s0 = inlined_call_operand.vmem [shape: bf16[2048,288], index: 0, kind: input, shape index: {}]
  %s1 = inlined_call_operand.vmem [shape: bf16[288,64], index: 1, kind: input, shape index: {}]
  %s2 = inlined_call_operand.vmem [shape: f32[1,64], index: 2, kind: input, shape index: {}]
  %s3 = inlined_call_operand.vmem [shape: f32[2048,64], index: 3, kind: output, shape index: {}]
  %s4 = sld [smem:[#allocation0]]
  $region53: #{simple_cnn_forward.10} parent=0
    _
  %s6 = ssub.s32 1, %s4
  %s7 = scalar_select 0, %s6, %s4
  loop: start=0, step=1, limit=6
  $region2: #{simple_cnn_forward.10} parent=0 // loop_pre_header
    _
  $region3: #{simple_cnn_forward.10} parent=0 // loop_header
    %s9 = sphi 0, %s13
    %p10 = scmp.ge.s32.totalorder %s9, 6
    %s16 = sphi 0, %s35
    %s17 = sphi 0, %s31
    %s18 = sphi 0, %s27
    %s19 = sphi 0, %s16
    %s20 = sphi 0, %s17
    %s21 = sphi 0, %s18
    %s22 = sphi 0, %s19
    %s23 = sphi 0, %s20
    %s24 = sphi 0, %s21
    %s40 = sphi 0, %s42
    %s43 = sphi 0, %s40
    %s44 = sphi 0, %s43
    %s60 = sphi 0, %s44
    %s68 = sphi 0, %s70
    %s71 = sphi 0, %s68
    %s72 = sphi 0, %s71
    %s88 = sphi 0, %s72
    %s94 = sphi 0, %s96
    %s97 = sphi 0, %s94
    %s98 = sphi 0, %s97
    %s114 = sphi 0, %s98
    %s122 = sphi 0, %s124
    %s125 = sphi 0, %s122
    %s126 = sphi 0, %s125
    %s142 = sphi 0, %s126
  $region4: #{simple_cnn_forward.10} parent=0 // loop_header_branch
    %12 = sbr.rel (%p10) target = $region8
  $region5: #{simple_cnn_forward.10} parent=0 // loop_body
    %s14 = ssub.s32 %s9, 1
    %s15 = ssub.s32 %s9, 2
    %s25 = sadd.s32 1, %s18
    %p26 = scmp.ge.s32.totalorder %s25, 1
    %s27 = scalar_select %p26, 0, %s25
    %s28 = sadd.s32 1, %s17
    %s29 = scalar_select %p26, %s28, %s17
    %p30 = scmp.ge.s32.totalorder %s29, 1
    %s31 = scalar_select %p30, 0, %s29
    %s32 = sadd.s32 1, %s16
    %s33 = scalar_select %p30, %s32, %s16
    %p34 = scmp.ge.s32.totalorder %s33, 4
    %s35 = scalar_select %p34, 0, %s33
    %s36 = ssub.s32 %s16, %s35
    %s37 = ssub.s32 %s18, %s27
    %s38 = sor.u32 %s36, %s37
    %p39 = scmp.eq.s32.totalorder %s38, 0
    %s41 = sadd.s32 %s40, 1
    %s42 = scalar_select %p39, %s40, %s41
    %p45 = pneg %p39
    %p46 = scmp.eq.s32.totalorder %s9, 3
    %p47 = por %p45, %p46
    %p48 = scmp.ne.s32.totalorder %s40, %s43
    %p49 = scmp.eq.s32.totalorder %s9, 0
    %p50 = por %p48, %p49
    %p51 = scmp.ne.s32.totalorder %s40, %s43
    %p52 = scmp.eq.s32.totalorder %s14, 3
    %p53 = por %p51, %p52
    %p54 = scmp.ne.s32.totalorder %s43, %s44
    %p55 = scmp.eq.s32.totalorder %s14, 0
    %p56 = por %p54, %p55
    %p57 = scmp.ne.s32.totalorder %s43, %s44
    %p58 = scmp.eq.s32.totalorder %s15, 3
    %p59 = por %p57, %p58
    %p61 = scmp.ne.s32.totalorder %s44, %s60
    %p62 = scmp.eq.s32.totalorder %s15, 0
    %p63 = por %p61, %p62
    %s64 = ssub.s32 %s18, %s27
    %s65 = ssub.s32 %s17, %s31
    %s66 = sor.u32 %s64, %s65
    %p67 = scmp.eq.s32.totalorder %s66, 0
    %s69 = sadd.s32 %s68, 1
    %s70 = scalar_select %p67, %s68, %s69
    %p73 = pneg %p67
    %p74 = scmp.eq.s32.totalorder %s9, 3
    %p75 = por %p73, %p74
    %p76 = scmp.ne.s32.totalorder %s68, %s71
    %p77 = scmp.eq.s32.totalorder %s9, 0
    %p78 = por %p76, %p77
    %p79 = scmp.ne.s32.totalorder %s68, %s71
    %p80 = scmp.eq.s32.totalorder %s14, 3
    %p81 = por %p79, %p80
    %p82 = scmp.ne.s32.totalorder %s71, %s72
    %p83 = scmp.eq.s32.totalorder %s14, 0
    %p84 = por %p82, %p83
    %p85 = scmp.ne.s32.totalorder %s71, %s72
    %p86 = scmp.eq.s32.totalorder %s15, 3
    %p87 = por %p85, %p86
    %p89 = scmp.ne.s32.totalorder %s72, %s88
    %p90 = scmp.eq.s32.totalorder %s15, 0
    %p91 = por %p89, %p90
    %s92 = ssub.s32 %s17, %s31
    %p93 = scmp.eq.s32.totalorder %s92, 0
    %s95 = sadd.s32 %s94, 1
    %s96 = scalar_select %p93, %s94, %s95
    %p99 = pneg %p93
    %p100 = scmp.eq.s32.totalorder %s9, 3
    %p101 = por %p99, %p100
    %p102 = scmp.ne.s32.totalorder %s94, %s97
    %p103 = scmp.eq.s32.totalorder %s9, 0
    %p104 = por %p102, %p103
    %p105 = scmp.ne.s32.totalorder %s94, %s97
    %p106 = scmp.eq.s32.totalorder %s14, 3
    %p107 = por %p105, %p106
    %p108 = scmp.ne.s32.totalorder %s97, %s98
    %p109 = scmp.eq.s32.totalorder %s14, 0
    %p110 = por %p108, %p109
    %p111 = scmp.ne.s32.totalorder %s97, %s98
    %p112 = scmp.eq.s32.totalorder %s15, 3
    %p113 = por %p111, %p112
    %p115 = scmp.ne.s32.totalorder %s98, %s114
    %p116 = scmp.eq.s32.totalorder %s15, 0
    %p117 = por %p115, %p116
    %s118 = ssub.s32 %s16, %s35
    %s119 = ssub.s32 %s17, %s31
    %s120 = sor.u32 %s118, %s119
    %p121 = scmp.eq.s32.totalorder %s120, 0
    %s123 = sadd.s32 %s122, 1
    %s124 = scalar_select %p121, %s122, %s123
    %p127 = pneg %p121
    %p128 = scmp.eq.s32.totalorder %s9, 3
    %p129 = por %p127, %p128
    %p130 = scmp.ne.s32.totalorder %s122, %s125
    %p131 = scmp.eq.s32.totalorder %s9, 0
    %p132 = por %p130, %p131
    %p133 = scmp.ne.s32.totalorder %s122, %s125
    %p134 = scmp.eq.s32.totalorder %s14, 3
    %p135 = por %p133, %p134
    %p136 = scmp.ne.s32.totalorder %s125, %s126
    %p137 = scmp.eq.s32.totalorder %s14, 0
    %p138 = por %p136, %p137
    %p139 = scmp.ne.s32.totalorder %s125, %s126
    %p140 = scmp.eq.s32.totalorder %s15, 3
    %p141 = por %p139, %p140
    %p143 = scmp.ne.s32.totalorder %s126, %s142
    %p144 = scmp.eq.s32.totalorder %s15, 0
    %p145 = por %p143, %p144
    %p146 = scmp.le.s32.totalorder 1, %s9
    %p147 = scmp.lt.s32.totalorder %s9, 5
    %p148 = pnand %p146, %p147
    %p149 = pneg %p148
    // Predicated region
    $region9: #{simple_cnn_forward.10} parent=5 // pred_check
      _
    $region10: #{simple_cnn_forward.10} parent=5 // pred_check_branch
      %151 = sbr.rel (%p148) target = $region12
    $region11: #{simple_cnn_forward.10} parent=5 // pred_region
      %s152 = ssub.s32 %s9, 1
      // Predicated region
      $region13: #{simple_cnn_forward.10} parent=11 // pred_check
        %p153 = pneg %p84
      $region14: #{simple_cnn_forward.10} parent=11 // pred_check_branch
        %155 = sbr.rel (%p153) target = $region16
      $region15: #{simple_cnn_forward.10} parent=11 // pred_region
        %s156 = smul.u32 36, %s21
        %p157 = scmp.lt.s32.totalorder %s156, 35
        %s158 = scalar_select %p157, %s156, 35
        %p159 = scmp.lt.s32.totalorder %s20, 0
        %s160 = scalar_select %p159, %s20, 0
        %s161 = sadd.s32 %s160, %s158
        %s162 = smul.addr %s161, 4
        %s163 = scalar_lea.vmem %s1, %s162
        %s164 = smul.u32 36, %s21
      $region16: #{simple_cnn_forward.10} parent=11 // pred_fallthru
        _
      // Predicated region
      $region17: #{simple_cnn_forward.10} parent=11 // pred_check
        %p165 = pneg %p110
      $region18: #{simple_cnn_forward.10} parent=11 // pred_check_branch
        %167 = sbr.rel (%p165) target = $region20
      $region19: #{simple_cnn_forward.10} parent=11 // pred_region
        %p168 = scmp.lt.s32.totalorder %s20, 0
        %s169 = scalar_select %p168, %s20, 0
        %s170 = scalar_lea.vmem %s2, %s169
      $region20: #{simple_cnn_forward.10} parent=11 // pred_fallthru
        _
    $region12: #{simple_cnn_forward.10} parent=5 // pred_fallthru
      _
    %p171 = scmp.lt.s32.totalorder %s9, 4
    // Predicated region
    $region21: #{simple_cnn_forward.10} parent=5 // pred_check
      %p172 = pneg %p171
    $region22: #{simple_cnn_forward.10} parent=5 // pred_check_branch
      %174 = sbr.rel (%p172) target = $region24
    $region23: #{simple_cnn_forward.10} parent=5 // pred_region
      // Predicated region
      $region25: #{simple_cnn_forward.10} parent=23 // pred_check
        %p175 = pneg %p50
      $region26: #{simple_cnn_forward.10} parent=23 // pred_check_branch
        %177 = sbr.rel (%p175) target = $region28
      $region27: #{simple_cnn_forward.10} parent=23 // pred_region
        %s178 = smul.u32 64, %s16
        %s179 = smul.u32 3, %s18
        %p180 = scmp.lt.s32.totalorder %s178, 255
        %s181 = scalar_select %p180, %s178, 255
        %p182 = scmp.lt.s32.totalorder %s179, 2
        %s183 = scalar_select %p182, %s179, 2
        %s184 = smul.addr %s181, 3
        %s185 = sadd.s32 %s183, %s184
        %s186 = smul.addr %s185, 4
        %s187 = scalar_lea.vmem %s0, %s186
        %s188 = smul.u32 64, %s16
        %s189 = smul.u32 3, %s18
      $region28: #{simple_cnn_forward.10} parent=23 // pred_fallthru
        _
    $region24: #{simple_cnn_forward.10} parent=5 // pred_fallthru
      _
    %p190 = scmp.le.s32.totalorder 1, %s9
    %p191 = scmp.lt.s32.totalorder %s9, 5
    %p192 = pnand %p190, %p191
    %p193 = pneg %p192
    // Predicated region
    $region29: #{simple_cnn_forward.10} parent=5 // pred_check
      _
    $region30: #{simple_cnn_forward.10} parent=5 // pred_check_branch
      %195 = sbr.rel (%p192) target = $region32
    $region31: #{simple_cnn_forward.10} parent=5 // pred_region
      %s196 = ssub.s32 %s9, 1
      %s197 = smul.u32 64, %s19
      %s198 = smul.u32 3, %s21
      %p199 = scmp.lt.s32.totalorder %s197, 255
      %s200 = scalar_select %p199, %s197, 255
      %p201 = scmp.lt.s32.totalorder %s198, 2
      %s202 = scalar_select %p201, %s198, 2
      %s203 = smul.addr %s200, 3
      %s204 = sadd.s32 %s202, %s203
      %s205 = smul.addr %s204, 4
      %s206 = scalar_lea.vmem %s0, %s205
      %p207 = pneg %p56
      %p208 = pneg %p53
      %s209 = smul.u32 36, %s21
      %p210 = scmp.lt.s32.totalorder %s209, 35
      %s211 = scalar_select %p210, %s209, 35
      %p212 = scmp.lt.s32.totalorder %s20, 0
      %s213 = scalar_select %p212, %s20, 0
      %s214 = sadd.s32 %s213, %s211
      %s215 = smul.addr %s214, 4
      %s216 = scalar_lea.vmem %s1, %s215
      %p217 = pneg %p84
      %p218 = pneg %p81
      %p219 = scmp.lt.s32.totalorder %s20, 0
      %s220 = scalar_select %p219, %s20, 0
      %s221 = scalar_lea.vmem %s2, %s220
      %p222 = pneg %p110
      %p223 = pneg %p107
      %p224 = pneg %p138
      %p225 = pneg %p135
      %s226 = smul.u32 64, %s19
      %p227 = scmp.lt.s32.totalorder %s226, 255
      %s228 = scalar_select %p227, %s226, 255
      %p229 = scmp.lt.s32.totalorder %s20, 0
      %s230 = scalar_select %p229, %s20, 0
      %s231 = sadd.s32 %s230, %s228
      %s232 = smul.addr %s231, 8
      %s233 = scalar_lea.vmem %s3, %s232
      %s234 = smul.u32 64, %s19
      %s235 = smul.u32 3, %s21
      %p236 = scmp.lt.s32.totalorder %s234, 255
      %s237 = scalar_select %p236, %s234, 255
      %p238 = scmp.lt.s32.totalorder %s235, 2
      %s239 = scalar_select %p238, %s235, 2
      %s240 = smul.addr %s237, 3
      %s241 = sadd.s32 %s239, %s240
      %s242 = smul.addr %s241, 4
      %s243 = scalar_lea.vmem %s0, %s242
      %s244 = smul.u32 64, %s19
      %s245 = smul.u32 3, %s21
      %s246 = smul.u32 36, %s21
      %p247 = scmp.lt.s32.totalorder %s246, 35
      %s248 = scalar_select %p247, %s246, 35
      %p249 = scmp.lt.s32.totalorder %s20, 0
      %s250 = scalar_select %p249, %s20, 0
      %s251 = sadd.s32 %s250, %s248
      %s252 = smul.addr %s251, 4
      %s253 = scalar_lea.vmem %s1, %s252
      %s254 = smul.u32 36, %s21
      %p255 = scmp.lt.s32.totalorder %s20, 0
      %s256 = scalar_select %p255, %s20, 0
      %s257 = scalar_lea.vmem %s2, %s256
      %s258 = smul.u32 64, %s19
      %p259 = scmp.lt.s32.totalorder %s258, 255
      %s260 = scalar_select %p259, %s258, 255
      %p261 = scmp.lt.s32.totalorder %s20, 0
      %s262 = scalar_select %p261, %s20, 0
      %s263 = sadd.s32 %s262, %s260
      %s264 = smul.addr %s263, 8
      %s265 = scalar_lea.vmem %s3, %s264
      %s266 = smul.u32 64, %s19
      %p268 = scmp.eq.s32.totalorder %s21, 0
      // Predicated region
      $region33: #{simple_cnn_forward.10} parent=31 // pred_check
        %p269 = pneg %p268
      $region34: #{simple_cnn_forward.10} parent=31 // pred_check_branch
        %271 = sbr.rel (%p269) target = $region36
      $region35: #{simple_cnn_forward.10} parent=31 // pred_region
        %vm272 = vcmask 523264
        %273 = vst.msk [vmem:[%s265] sm:$0xff] %vm272, 0.0
        %274 = vst.msk [vmem:[%s265 + $0x8] sm:$0xff] %vm272, 0.0
        %275 = vst.msk [vmem:[%s265 + $0x10] sm:$0xff] %vm272, 0.0
        %276 = vst.msk [vmem:[%s265 + $0x18] sm:$0xff] %vm272, 0.0
        %277 = vst.msk [vmem:[%s265 + $0x20] sm:$0xff] %vm272, 0.0
        %278 = vst.msk [vmem:[%s265 + $0x28] sm:$0xff] %vm272, 0.0
        %279 = vst.msk [vmem:[%s265 + $0x30] sm:$0xff] %vm272, 0.0
        %280 = vst.msk [vmem:[%s265 + $0x38] sm:$0xff] %vm272, 0.0
        %281 = vst.msk [vmem:[%s265 + $0x40] sm:$0xff] %vm272, 0.0
        %282 = vst.msk [vmem:[%s265 + $0x48] sm:$0xff] %vm272, 0.0
        %283 = vst.msk [vmem:[%s265 + $0x50] sm:$0xff] %vm272, 0.0
        %284 = vst.msk [vmem:[%s265 + $0x58] sm:$0xff] %vm272, 0.0
        %285 = vst.msk [vmem:[%s265 + $0x60] sm:$0xff] %vm272, 0.0
        %286 = vst.msk [vmem:[%s265 + $0x68] sm:$0xff] %vm272, 0.0
        %287 = vst.msk [vmem:[%s265 + $0x70] sm:$0xff] %vm272, 0.0
        %288 = vst.msk [vmem:[%s265 + $0x78] sm:$0xff] %vm272, 0.0
        %289 = vst.msk [vmem:[%s265 + $0x80] sm:$0xff] %vm272, 0.0
        %290 = vst.msk [vmem:[%s265 + $0x88] sm:$0xff] %vm272, 0.0
        %291 = vst.msk [vmem:[%s265 + $0x90] sm:$0xff] %vm272, 0.0
        %292 = vst.msk [vmem:[%s265 + $0x98] sm:$0xff] %vm272, 0.0
        %293 = vst.msk [vmem:[%s265 + $0xa0] sm:$0xff] %vm272, 0.0
        %294 = vst.msk [vmem:[%s265 + $0xa8] sm:$0xff] %vm272, 0.0
        %295 = vst.msk [vmem:[%s265 + $0xb0] sm:$0xff] %vm272, 0.0
        %296 = vst.msk [vmem:[%s265 + $0xb8] sm:$0xff] %vm272, 0.0
        %297 = vst.msk [vmem:[%s265 + $0xc0] sm:$0xff] %vm272, 0.0
        %298 = vst.msk [vmem:[%s265 + $0xc8] sm:$0xff] %vm272, 0.0
        %299 = vst.msk [vmem:[%s265 + $0xd0] sm:$0xff] %vm272, 0.0
        %300 = vst.msk [vmem:[%s265 + $0xd8] sm:$0xff] %vm272, 0.0
        %301 = vst.msk [vmem:[%s265 + $0xe0] sm:$0xff] %vm272, 0.0
        %302 = vst.msk [vmem:[%s265 + $0xe8] sm:$0xff] %vm272, 0.0
        %303 = vst.msk [vmem:[%s265 + $0xf0] sm:$0xff] %vm272, 0.0
        %304 = vst.msk [vmem:[%s265 + $0xf8] sm:$0xff] %vm272, 0.0
        %305 = vst.msk [vmem:[%s265 + $0x100] sm:$0xff] %vm272, 0.0
        %306 = vst.msk [vmem:[%s265 + $0x108] sm:$0xff] %vm272, 0.0
        %307 = vst.msk [vmem:[%s265 + $0x110] sm:$0xff] %vm272, 0.0
        %308 = vst.msk [vmem:[%s265 + $0x118] sm:$0xff] %vm272, 0.0
        %309 = vst.msk [vmem:[%s265 + $0x120] sm:$0xff] %vm272, 0.0
        %310 = vst.msk [vmem:[%s265 + $0x128] sm:$0xff] %vm272, 0.0
        %311 = vst.msk [vmem:[%s265 + $0x130] sm:$0xff] %vm272, 0.0
        %312 = vst.msk [vmem:[%s265 + $0x138] sm:$0xff] %vm272, 0.0
        %313 = vst.msk [vmem:[%s265 + $0x140] sm:$0xff] %vm272, 0.0
        %314 = vst.msk [vmem:[%s265 + $0x148] sm:$0xff] %vm272, 0.0
        %315 = vst.msk [vmem:[%s265 + $0x150] sm:$0xff] %vm272, 0.0
        %316 = vst.msk [vmem:[%s265 + $0x158] sm:$0xff] %vm272, 0.0
        %317 = vst.msk [vmem:[%s265 + $0x160] sm:$0xff] %vm272, 0.0
        %318 = vst.msk [vmem:[%s265 + $0x168] sm:$0xff] %vm272, 0.0
        %319 = vst.msk [vmem:[%s265 + $0x170] sm:$0xff] %vm272, 0.0
        %320 = vst.msk [vmem:[%s265 + $0x178] sm:$0xff] %vm272, 0.0
        %321 = vst.msk [vmem:[%s265 + $0x180] sm:$0xff] %vm272, 0.0
        %322 = vst.msk [vmem:[%s265 + $0x188] sm:$0xff] %vm272, 0.0
        %323 = vst.msk [vmem:[%s265 + $0x190] sm:$0xff] %vm272, 0.0
        %324 = vst.msk [vmem:[%s265 + $0x198] sm:$0xff] %vm272, 0.0
        %325 = vst.msk [vmem:[%s265 + $0x1a0] sm:$0xff] %vm272, 0.0
        %326 = vst.msk [vmem:[%s265 + $0x1a8] sm:$0xff] %vm272, 0.0
        %327 = vst.msk [vmem:[%s265 + $0x1b0] sm:$0xff] %vm272, 0.0
        %328 = vst.msk [vmem:[%s265 + $0x1b8] sm:$0xff] %vm272, 0.0
        %329 = vst.msk [vmem:[%s265 + $0x1c0] sm:$0xff] %vm272, 0.0
        %330 = vst.msk [vmem:[%s265 + $0x1c8] sm:$0xff] %vm272, 0.0
        %331 = vst.msk [vmem:[%s265 + $0x1d0] sm:$0xff] %vm272, 0.0
        %332 = vst.msk [vmem:[%s265 + $0x1d8] sm:$0xff] %vm272, 0.0
        %333 = vst.msk [vmem:[%s265 + $0x1e0] sm:$0xff] %vm272, 0.0
        %334 = vst.msk [vmem:[%s265 + $0x1e8] sm:$0xff] %vm272, 0.0
        %335 = vst.msk [vmem:[%s265 + $0x1f0] sm:$0xff] %vm272, 0.0
        %336 = vst.msk [vmem:[%s265 + $0x1f8] sm:$0xff] %vm272, 0.0
      $region36: #{simple_cnn_forward.10} parent=31 // pred_fallthru
        _
      %v337 = vld [vmem:[%s265] sm:$0xff]
      %v338 = vld [vmem:[%s265 + $0x8] sm:$0xff]
      %v339 = vld [vmem:[%s265 + $0x10] sm:$0xff]
      %v340 = vld [vmem:[%s265 + $0x18] sm:$0xff]
      %v341 = vld [vmem:[%s265 + $0x20] sm:$0xff]
      %v342 = vld [vmem:[%s265 + $0x28] sm:$0xff]
      %v343 = vld [vmem:[%s265 + $0x30] sm:$0xff]
      %v344 = vld [vmem:[%s265 + $0x38] sm:$0xff]
      %v345 = vld [vmem:[%s265 + $0x40] sm:$0xff]
      %v346 = vld [vmem:[%s265 + $0x48] sm:$0xff]
      %v347 = vld [vmem:[%s265 + $0x50] sm:$0xff]
      %v348 = vld [vmem:[%s265 + $0x58] sm:$0xff]
      %v349 = vld [vmem:[%s265 + $0x60] sm:$0xff]
      %v350 = vld [vmem:[%s265 + $0x68] sm:$0xff]
      %v351 = vld [vmem:[%s265 + $0x70] sm:$0xff]
      %v352 = vld [vmem:[%s265 + $0x78] sm:$0xff]
      %v353 = vld [vmem:[%s265 + $0x80] sm:$0xff]
      %v354 = vld [vmem:[%s265 + $0x88] sm:$0xff]
      %v355 = vld [vmem:[%s265 + $0x90] sm:$0xff]
      %v356 = vld [vmem:[%s265 + $0x98] sm:$0xff]
      %v357 = vld [vmem:[%s265 + $0xa0] sm:$0xff]
      %v358 = vld [vmem:[%s265 + $0xa8] sm:$0xff]
      %v359 = vld [vmem:[%s265 + $0xb0] sm:$0xff]
      %v360 = vld [vmem:[%s265 + $0xb8] sm:$0xff]
      %v361 = vld [vmem:[%s265 + $0xc0] sm:$0xff]
      %v362 = vld [vmem:[%s265 + $0xc8] sm:$0xff]
      %v363 = vld [vmem:[%s265 + $0xd0] sm:$0xff]
      %v364 = vld [vmem:[%s265 + $0xd8] sm:$0xff]
      %v365 = vld [vmem:[%s265 + $0xe0] sm:$0xff]
      %v366 = vld [vmem:[%s265 + $0xe8] sm:$0xff]
      %v367 = vld [vmem:[%s265 + $0xf0] sm:$0xff]
      %v368 = vld [vmem:[%s265 + $0xf8] sm:$0xff]
      %v369 = vld [vmem:[%s265 + $0x100] sm:$0xff]
      %v370 = vld [vmem:[%s265 + $0x108] sm:$0xff]
      %v371 = vld [vmem:[%s265 + $0x110] sm:$0xff]
      %v372 = vld [vmem:[%s265 + $0x118] sm:$0xff]
      %v373 = vld [vmem:[%s265 + $0x120] sm:$0xff]
      %v374 = vld [vmem:[%s265 + $0x128] sm:$0xff]
      %v375 = vld [vmem:[%s265 + $0x130] sm:$0xff]
      %v376 = vld [vmem:[%s265 + $0x138] sm:$0xff]
      %v377 = vld [vmem:[%s265 + $0x140] sm:$0xff]
      %v378 = vld [vmem:[%s265 + $0x148] sm:$0xff]
      %v379 = vld [vmem:[%s265 + $0x150] sm:$0xff]
      %v380 = vld [vmem:[%s265 + $0x158] sm:$0xff]
      %v381 = vld [vmem:[%s265 + $0x160] sm:$0xff]
      %v382 = vld [vmem:[%s265 + $0x168] sm:$0xff]
      %v383 = vld [vmem:[%s265 + $0x170] sm:$0xff]
      %v384 = vld [vmem:[%s265 + $0x178] sm:$0xff]
      %v385 = vld [vmem:[%s265 + $0x180] sm:$0xff]
      %v386 = vld [vmem:[%s265 + $0x188] sm:$0xff]
      %v387 = vld [vmem:[%s265 + $0x190] sm:$0xff]
      %v388 = vld [vmem:[%s265 + $0x198] sm:$0xff]
      %v389 = vld [vmem:[%s265 + $0x1a0] sm:$0xff]
      %v390 = vld [vmem:[%s265 + $0x1a8] sm:$0xff]
      %v391 = vld [vmem:[%s265 + $0x1b0] sm:$0xff]
      %v392 = vld [vmem:[%s265 + $0x1b8] sm:$0xff]
      %v393 = vld [vmem:[%s265 + $0x1c0] sm:$0xff]
      %v394 = vld [vmem:[%s265 + $0x1c8] sm:$0xff]
      %v395 = vld [vmem:[%s265 + $0x1d0] sm:$0xff]
      %v396 = vld [vmem:[%s265 + $0x1d8] sm:$0xff]
      %v397 = vld [vmem:[%s265 + $0x1e0] sm:$0xff]
      %v398 = vld [vmem:[%s265 + $0x1e8] sm:$0xff]
      %v399 = vld [vmem:[%s265 + $0x1f0] sm:$0xff]
      %v400 = vld [vmem:[%s265 + $0x1f8] sm:$0xff]
      %v401 = vld [vmem:[%s243] sm:$0xff]
      %v402 = vld [vmem:[%s243 + $0x8] sm:$0xf]
      %v403 = vld [vmem:[%s243 + $0xc] sm:$0xff]
      %v404 = vld [vmem:[%s243 + $0x14] sm:$0xf]
      %v405 = vld [vmem:[%s243 + $0x18] sm:$0xff]
      %v406 = vld [vmem:[%s243 + $0x20] sm:$0xf]
      %v407 = vld [vmem:[%s243 + $0x24] sm:$0xff]
      %v408 = vld [vmem:[%s243 + $0x2c] sm:$0xf]
      %v409 = vld [vmem:[%s243 + $0x30] sm:$0xff]
      %v410 = vld [vmem:[%s243 + $0x38] sm:$0xf]
      %v411 = vld [vmem:[%s243 + $0x3c] sm:$0xff]
      %v412 = vld [vmem:[%s243 + $0x44] sm:$0xf]
      %v413 = vld [vmem:[%s243 + $0x48] sm:$0xff]
      %v414 = vld [vmem:[%s243 + $0x50] sm:$0xf]
      %v415 = vld [vmem:[%s243 + $0x54] sm:$0xff]
      %v416 = vld [vmem:[%s243 + $0x5c] sm:$0xf]
      %v417 = vld [vmem:[%s243 + $0x60] sm:$0xff]
      %v418 = vld [vmem:[%s243 + $0x68] sm:$0xf]
      %v419 = vld [vmem:[%s243 + $0x6c] sm:$0xff]
      %v420 = vld [vmem:[%s243 + $0x74] sm:$0xf]
      %v421 = vld [vmem:[%s243 + $0x78] sm:$0xff]
      %v422 = vld [vmem:[%s243 + $0x80] sm:$0xf]
      %v423 = vld [vmem:[%s243 + $0x84] sm:$0xff]
      %v424 = vld [vmem:[%s243 + $0x8c] sm:$0xf]
      %v425 = vld [vmem:[%s243 + $0x90] sm:$0xff]
      %v426 = vld [vmem:[%s243 + $0x98] sm:$0xf]
      %v427 = vld [vmem:[%s243 + $0x9c] sm:$0xff]
      %v428 = vld [vmem:[%s243 + $0xa4] sm:$0xf]
      %v429 = vld [vmem:[%s243 + $0xa8] sm:$0xff]
      %v430 = vld [vmem:[%s243 + $0xb0] sm:$0xf]
      %v431 = vld [vmem:[%s243 + $0xb4] sm:$0xff]
      %v432 = vld [vmem:[%s243 + $0xbc] sm:$0xf]
      %v433 = vld [vmem:[%s243 + $0xc0] sm:$0xff]
      %v434 = vld [vmem:[%s243 + $0xc8] sm:$0xf]
      %v435 = vld [vmem:[%s243 + $0xcc] sm:$0xff]
      %v436 = vld [vmem:[%s243 + $0xd4] sm:$0xf]
      %v437 = vld [vmem:[%s243 + $0xd8] sm:$0xff]
      %v438 = vld [vmem:[%s243 + $0xe0] sm:$0xf]
      %v439 = vld [vmem:[%s243 + $0xe4] sm:$0xff]
      %v440 = vld [vmem:[%s243 + $0xec] sm:$0xf]
      %v441 = vld [vmem:[%s243 + $0xf0] sm:$0xff]
      %v442 = vld [vmem:[%s243 + $0xf8] sm:$0xf]
      %v443 = vld [vmem:[%s243 + $0xfc] sm:$0xff]
      %v444 = vld [vmem:[%s243 + $0x104] sm:$0xf]
      %v445 = vld [vmem:[%s243 + $0x108] sm:$0xff]
      %v446 = vld [vmem:[%s243 + $0x110] sm:$0xf]
      %v447 = vld [vmem:[%s243 + $0x114] sm:$0xff]
      %v448 = vld [vmem:[%s243 + $0x11c] sm:$0xf]
      %v449 = vld [vmem:[%s243 + $0x120] sm:$0xff]
      %v450 = vld [vmem:[%s243 + $0x128] sm:$0xf]
      %v451 = vld [vmem:[%s243 + $0x12c] sm:$0xff]
      %v452 = vld [vmem:[%s243 + $0x134] sm:$0xf]
      %v453 = vld [vmem:[%s243 + $0x138] sm:$0xff]
      %v454 = vld [vmem:[%s243 + $0x140] sm:$0xf]
      %v455 = vld [vmem:[%s243 + $0x144] sm:$0xff]
      %v456 = vld [vmem:[%s243 + $0x14c] sm:$0xf]
      %v457 = vld [vmem:[%s243 + $0x150] sm:$0xff]
      %v458 = vld [vmem:[%s243 + $0x158] sm:$0xf]
      %v459 = vld [vmem:[%s243 + $0x15c] sm:$0xff]
      %v460 = vld [vmem:[%s243 + $0x164] sm:$0xf]
      %v461 = vld [vmem:[%s243 + $0x168] sm:$0xff]
      %v462 = vld [vmem:[%s243 + $0x170] sm:$0xf]
      %v463 = vld [vmem:[%s243 + $0x174] sm:$0xff]
      %v464 = vld [vmem:[%s243 + $0x17c] sm:$0xf]
      %v465 = vld [vmem:[%s243 + $0x180] sm:$0xff]
      %v466 = vld [vmem:[%s243 + $0x188] sm:$0xf]
      %v467 = vld [vmem:[%s243 + $0x18c] sm:$0xff]
      %v468 = vld [vmem:[%s243 + $0x194] sm:$0xf]
      %v469 = vld [vmem:[%s243 + $0x198] sm:$0xff]
      %v470 = vld [vmem:[%s243 + $0x1a0] sm:$0xf]
      %v471 = vld [vmem:[%s243 + $0x1a4] sm:$0xff]
      %v472 = vld [vmem:[%s243 + $0x1ac] sm:$0xf]
      %v473 = vld [vmem:[%s243 + $0x1b0] sm:$0xff]
      %v474 = vld [vmem:[%s243 + $0x1b8] sm:$0xf]
      %v475 = vld [vmem:[%s243 + $0x1bc] sm:$0xff]
      %v476 = vld [vmem:[%s243 + $0x1c4] sm:$0xf]
      %v477 = vld [vmem:[%s243 + $0x1c8] sm:$0xff]
      %v478 = vld [vmem:[%s243 + $0x1d0] sm:$0xf]
      %v479 = vld [vmem:[%s243 + $0x1d4] sm:$0xff]
      %v480 = vld [vmem:[%s243 + $0x1dc] sm:$0xf]
      %v481 = vld [vmem:[%s243 + $0x1e0] sm:$0xff]
      %v482 = vld [vmem:[%s243 + $0x1e8] sm:$0xf]
      %v483 = vld [vmem:[%s243 + $0x1ec] sm:$0xff]
      %v484 = vld [vmem:[%s243 + $0x1f4] sm:$0xf]
      %v485 = vld [vmem:[%s243 + $0x1f8] sm:$0xff]
      %v486 = vld [vmem:[%s243 + $0x200] sm:$0xf]
      %v487 = vld [vmem:[%s243 + $0x204] sm:$0xff]
      %v488 = vld [vmem:[%s243 + $0x20c] sm:$0xf]
      %v489 = vld [vmem:[%s243 + $0x210] sm:$0xff]
      %v490 = vld [vmem:[%s243 + $0x218] sm:$0xf]
      %v491 = vld [vmem:[%s243 + $0x21c] sm:$0xff]
      %v492 = vld [vmem:[%s243 + $0x224] sm:$0xf]
      %v493 = vld [vmem:[%s243 + $0x228] sm:$0xff]
      %v494 = vld [vmem:[%s243 + $0x230] sm:$0xf]
      %v495 = vld [vmem:[%s243 + $0x234] sm:$0xff]
      %v496 = vld [vmem:[%s243 + $0x23c] sm:$0xf]
      %v497 = vld [vmem:[%s243 + $0x240] sm:$0xff]
      %v498 = vld [vmem:[%s243 + $0x248] sm:$0xf]
      %v499 = vld [vmem:[%s243 + $0x24c] sm:$0xff]
      %v500 = vld [vmem:[%s243 + $0x254] sm:$0xf]
      %v501 = vld [vmem:[%s243 + $0x258] sm:$0xff]
      %v502 = vld [vmem:[%s243 + $0x260] sm:$0xf]
      %v503 = vld [vmem:[%s243 + $0x264] sm:$0xff]
      %v504 = vld [vmem:[%s243 + $0x26c] sm:$0xf]
      %v505 = vld [vmem:[%s243 + $0x270] sm:$0xff]
      %v506 = vld [vmem:[%s243 + $0x278] sm:$0xf]
      %v507 = vld [vmem:[%s243 + $0x27c] sm:$0xff]
      %v508 = vld [vmem:[%s243 + $0x284] sm:$0xf]
      %v509 = vld [vmem:[%s243 + $0x288] sm:$0xff]
      %v510 = vld [vmem:[%s243 + $0x290] sm:$0xf]
      %v511 = vld [vmem:[%s243 + $0x294] sm:$0xff]
      %v512 = vld [vmem:[%s243 + $0x29c] sm:$0xf]
      %v513 = vld [vmem:[%s243 + $0x2a0] sm:$0xff]
      %v514 = vld [vmem:[%s243 + $0x2a8] sm:$0xf]
      %v515 = vld [vmem:[%s243 + $0x2ac] sm:$0xff]
      %v516 = vld [vmem:[%s243 + $0x2b4] sm:$0xf]
      %v517 = vld [vmem:[%s243 + $0x2b8] sm:$0xff]
      %v518 = vld [vmem:[%s243 + $0x2c0] sm:$0xf]
      %v519 = vld [vmem:[%s243 + $0x2c4] sm:$0xff]
      %v520 = vld [vmem:[%s243 + $0x2cc] sm:$0xf]
      %v521 = vld [vmem:[%s243 + $0x2d0] sm:$0xff]
      %v522 = vld [vmem:[%s243 + $0x2d8] sm:$0xf]
      %v523 = vld [vmem:[%s243 + $0x2dc] sm:$0xff]
      %v524 = vld [vmem:[%s243 + $0x2e4] sm:$0xf]
      %v525 = vld [vmem:[%s243 + $0x2e8] sm:$0xff]
      %v526 = vld [vmem:[%s243 + $0x2f0] sm:$0xf]
      %v527 = vld [vmem:[%s243 + $0x2f4] sm:$0xff]
      %v528 = vld [vmem:[%s243 + $0x2fc] sm:$0xf]
      %v529 = vld [vmem:[%s253] sm:$0xf]
      %v530 = vld [vmem:[%s253 + $0x4] sm:$0xf]
      %v531 = vld [vmem:[%s253 + $0x8] sm:$0xf]
      %v532 = vld [vmem:[%s253 + $0xc] sm:$0xf]
      %v533 = vld [vmem:[%s253 + $0x10] sm:$0xf]
      %v534 = vld [vmem:[%s253 + $0x14] sm:$0xf]
      %v535 = vld [vmem:[%s253 + $0x18] sm:$0xf]
      %v536 = vld [vmem:[%s253 + $0x1c] sm:$0xf]
      %v537 = vld [vmem:[%s253 + $0x20] sm:$0xf]
      %v538 = vld [vmem:[%s253 + $0x24] sm:$0xf]
      %v539 = vld [vmem:[%s253 + $0x28] sm:$0xf]
      %v540 = vld [vmem:[%s253 + $0x2c] sm:$0xf]
      %v541 = vld [vmem:[%s253 + $0x30] sm:$0xf]
      %v542 = vld [vmem:[%s253 + $0x34] sm:$0xf]
      %v543 = vld [vmem:[%s253 + $0x38] sm:$0xf]
      %v544 = vld [vmem:[%s253 + $0x3c] sm:$0xf]
      %v545 = vld [vmem:[%s253 + $0x40] sm:$0xf]
      %v546 = vld [vmem:[%s253 + $0x44] sm:$0xf]
      %v547 = vld [vmem:[%s253 + $0x48] sm:$0xf]
      %v548 = vld [vmem:[%s253 + $0x4c] sm:$0xf]
      %v549 = vld [vmem:[%s253 + $0x50] sm:$0xf]
      %v550 = vld [vmem:[%s253 + $0x54] sm:$0xf]
      %v551 = vld [vmem:[%s253 + $0x58] sm:$0xf]
      %v552 = vld [vmem:[%s253 + $0x5c] sm:$0xf]
      %v553 = vld [vmem:[%s253 + $0x60] sm:$0xf]
      %v554 = vld [vmem:[%s253 + $0x64] sm:$0xf]
      %v555 = vld [vmem:[%s253 + $0x68] sm:$0xf]
      %v556 = vld [vmem:[%s253 + $0x6c] sm:$0xf]
      %v557 = vld [vmem:[%s253 + $0x70] sm:$0xf]
      %v558 = vld [vmem:[%s253 + $0x74] sm:$0xf]
      %v559 = vld [vmem:[%s253 + $0x78] sm:$0xf]
      %v560 = vld [vmem:[%s253 + $0x7c] sm:$0xf]
      %v561 = vld [vmem:[%s253 + $0x80] sm:$0xf]
      %v562 = vld [vmem:[%s253 + $0x84] sm:$0xf]
      %v563 = vld [vmem:[%s253 + $0x88] sm:$0xf]
      %v564 = vld [vmem:[%s253 + $0x8c] sm:$0xf]
      %v693 = vunpack.c.l.b16 %v401
      %v694 = vunpack.c.h.b16 %v401
      %v695 = vunpack.c.l.b16 %v402
      %v696 = vunpack.c.l.b16 %v403
      %v697 = vunpack.c.h.b16 %v403
      %v698 = vunpack.c.l.b16 %v404
      %v699 = vunpack.c.l.b16 %v405
      %v700 = vunpack.c.h.b16 %v405
      %v701 = vunpack.c.l.b16 %v406
      %v702 = vunpack.c.l.b16 %v407
      %v703 = vunpack.c.h.b16 %v407
      %v704 = vunpack.c.l.b16 %v408
      %v705 = vunpack.c.l.b16 %v409
      %v706 = vunpack.c.h.b16 %v409
      %v707 = vunpack.c.l.b16 %v410
      %v708 = vunpack.c.l.b16 %v411
      %v709 = vunpack.c.h.b16 %v411
      %v710 = vunpack.c.l.b16 %v412
      %v711 = vunpack.c.l.b16 %v413
      %v712 = vunpack.c.h.b16 %v413
      %v713 = vunpack.c.l.b16 %v414
      %v714 = vunpack.c.l.b16 %v415
      %v715 = vunpack.c.h.b16 %v415
      %v716 = vunpack.c.l.b16 %v416
      %v717 = vunpack.c.l.b16 %v417
      %v718 = vunpack.c.h.b16 %v417
      %v719 = vunpack.c.l.b16 %v418
      %v720 = vunpack.c.l.b16 %v419
      %v721 = vunpack.c.h.b16 %v419
      %v722 = vunpack.c.l.b16 %v420
      %v723 = vunpack.c.l.b16 %v421
      %v724 = vunpack.c.h.b16 %v421
      %v725 = vunpack.c.l.b16 %v422
      %v726 = vunpack.c.l.b16 %v423
      %v727 = vunpack.c.h.b16 %v423
      %v728 = vunpack.c.l.b16 %v424
      %v729 = vunpack.c.l.b16 %v425
      %v730 = vunpack.c.h.b16 %v425
      %v731 = vunpack.c.l.b16 %v426
      %v732 = vunpack.c.l.b16 %v427
      %v733 = vunpack.c.h.b16 %v427
      %v734 = vunpack.c.l.b16 %v428
      %v735 = vunpack.c.l.b16 %v429
      %v736 = vunpack.c.h.b16 %v429
      %v737 = vunpack.c.l.b16 %v430
      %v738 = vunpack.c.l.b16 %v431
      %v739 = vunpack.c.h.b16 %v431
      %v740 = vunpack.c.l.b16 %v432
      %v741 = vunpack.c.l.b16 %v433
      %v742 = vunpack.c.h.b16 %v433
      %v743 = vunpack.c.l.b16 %v434
      %v744 = vunpack.c.l.b16 %v435
      %v745 = vunpack.c.h.b16 %v435
      %v746 = vunpack.c.l.b16 %v436
      %v747 = vunpack.c.l.b16 %v437
      %v748 = vunpack.c.h.b16 %v437
      %v749 = vunpack.c.l.b16 %v438
      %v750 = vunpack.c.l.b16 %v439
      %v751 = vunpack.c.h.b16 %v439
      %v752 = vunpack.c.l.b16 %v440
      %v753 = vunpack.c.l.b16 %v441
      %v754 = vunpack.c.h.b16 %v441
      %v755 = vunpack.c.l.b16 %v442
      %v756 = vunpack.c.l.b16 %v443
      %v757 = vunpack.c.h.b16 %v443
      %v758 = vunpack.c.l.b16 %v444
      %v759 = vunpack.c.l.b16 %v445
      %v760 = vunpack.c.h.b16 %v445
      %v761 = vunpack.c.l.b16 %v446
      %v762 = vunpack.c.l.b16 %v447
      %v763 = vunpack.c.h.b16 %v447
      %v764 = vunpack.c.l.b16 %v448
      %v765 = vunpack.c.l.b16 %v449
      %v766 = vunpack.c.h.b16 %v449
      %v767 = vunpack.c.l.b16 %v450
      %v768 = vunpack.c.l.b16 %v451
      %v769 = vunpack.c.h.b16 %v451
      %v770 = vunpack.c.l.b16 %v452
      %v771 = vunpack.c.l.b16 %v453
      %v772 = vunpack.c.h.b16 %v453
      %v773 = vunpack.c.l.b16 %v454
      %v774 = vunpack.c.l.b16 %v455
      %v775 = vunpack.c.h.b16 %v455
      %v776 = vunpack.c.l.b16 %v456
      %v777 = vunpack.c.l.b16 %v457
      %v778 = vunpack.c.h.b16 %v457
      %v779 = vunpack.c.l.b16 %v458
      %v780 = vunpack.c.l.b16 %v459
      %v781 = vunpack.c.h.b16 %v459
      %v782 = vunpack.c.l.b16 %v460
      %v783 = vunpack.c.l.b16 %v461
      %v784 = vunpack.c.h.b16 %v461
      %v785 = vunpack.c.l.b16 %v462
      %v786 = vunpack.c.l.b16 %v463
      %v787 = vunpack.c.h.b16 %v463
      %v788 = vunpack.c.l.b16 %v464
      %v789 = vunpack.c.l.b16 %v465
      %v790 = vunpack.c.h.b16 %v465
      %v791 = vunpack.c.l.b16 %v466
      %v792 = vunpack.c.l.b16 %v467
      %v793 = vunpack.c.h.b16 %v467
      %v794 = vunpack.c.l.b16 %v468
      %v795 = vunpack.c.l.b16 %v469
      %v796 = vunpack.c.h.b16 %v469
      %v797 = vunpack.c.l.b16 %v470
      %v798 = vunpack.c.l.b16 %v471
      %v799 = vunpack.c.h.b16 %v471
      %v800 = vunpack.c.l.b16 %v472
      %v801 = vunpack.c.l.b16 %v473
      %v802 = vunpack.c.h.b16 %v473
      %v803 = vunpack.c.l.b16 %v474
      %v804 = vunpack.c.l.b16 %v475
      %v805 = vunpack.c.h.b16 %v475
      %v806 = vunpack.c.l.b16 %v476
      %v807 = vunpack.c.l.b16 %v477
      %v808 = vunpack.c.h.b16 %v477
      %v809 = vunpack.c.l.b16 %v478
      %v810 = vunpack.c.l.b16 %v479
      %v811 = vunpack.c.h.b16 %v479
      %v812 = vunpack.c.l.b16 %v480
      %v813 = vunpack.c.l.b16 %v481
      %v814 = vunpack.c.h.b16 %v481
      %v815 = vunpack.c.l.b16 %v482
      %v816 = vunpack.c.l.b16 %v483
      %v817 = vunpack.c.h.b16 %v483
      %v818 = vunpack.c.l.b16 %v484
      %v819 = vunpack.c.l.b16 %v485
      %v820 = vunpack.c.h.b16 %v485
      %v821 = vunpack.c.l.b16 %v486
      %v822 = vunpack.c.l.b16 %v487
      %v823 = vunpack.c.h.b16 %v487
      %v824 = vunpack.c.l.b16 %v488
      %v825 = vunpack.c.l.b16 %v489
      %v826 = vunpack.c.h.b16 %v489
      %v827 = vunpack.c.l.b16 %v490
      %v828 = vunpack.c.l.b16 %v491
      %v829 = vunpack.c.h.b16 %v491
      %v830 = vunpack.c.l.b16 %v492
      %v831 = vunpack.c.l.b16 %v493
      %v832 = vunpack.c.h.b16 %v493
      %v833 = vunpack.c.l.b16 %v494
      %v834 = vunpack.c.l.b16 %v495
      %v835 = vunpack.c.h.b16 %v495
      %v836 = vunpack.c.l.b16 %v496
      %v837 = vunpack.c.l.b16 %v497
      %v838 = vunpack.c.h.b16 %v497
      %v839 = vunpack.c.l.b16 %v498
      %v840 = vunpack.c.l.b16 %v499
      %v841 = vunpack.c.h.b16 %v499
      %v842 = vunpack.c.l.b16 %v500
      %v843 = vunpack.c.l.b16 %v501
      %v844 = vunpack.c.h.b16 %v501
      %v845 = vunpack.c.l.b16 %v502
      %v846 = vunpack.c.l.b16 %v503
      %v847 = vunpack.c.h.b16 %v503
      %v848 = vunpack.c.l.b16 %v504
      %v849 = vunpack.c.l.b16 %v505
      %v850 = vunpack.c.h.b16 %v505
      %v851 = vunpack.c.l.b16 %v506
      %v852 = vunpack.c.l.b16 %v507
      %v853 = vunpack.c.h.b16 %v507
      %v854 = vunpack.c.l.b16 %v508
      %v855 = vunpack.c.l.b16 %v509
      %v856 = vunpack.c.h.b16 %v509
      %v857 = vunpack.c.l.b16 %v510
      %v858 = vunpack.c.l.b16 %v511
      %v859 = vunpack.c.h.b16 %v511
      %v860 = vunpack.c.l.b16 %v512
      %v861 = vunpack.c.l.b16 %v513
      %v862 = vunpack.c.h.b16 %v513
      %v863 = vunpack.c.l.b16 %v514
      %v864 = vunpack.c.l.b16 %v515
      %v865 = vunpack.c.h.b16 %v515
      %v866 = vunpack.c.l.b16 %v516
      %v867 = vunpack.c.l.b16 %v517
      %v868 = vunpack.c.h.b16 %v517
      %v869 = vunpack.c.l.b16 %v518
      %v870 = vunpack.c.l.b16 %v519
      %v871 = vunpack.c.h.b16 %v519
      %v872 = vunpack.c.l.b16 %v520
      %v873 = vunpack.c.l.b16 %v521
      %v874 = vunpack.c.h.b16 %v521
      %v875 = vunpack.c.l.b16 %v522
      %v876 = vunpack.c.l.b16 %v523
      %v877 = vunpack.c.h.b16 %v523
      %v878 = vunpack.c.l.b16 %v524
      %v879 = vunpack.c.l.b16 %v525
      %v880 = vunpack.c.h.b16 %v525
      %v881 = vunpack.c.l.b16 %v526
      %v882 = vunpack.c.l.b16 %v527
      %v883 = vunpack.c.h.b16 %v527
      %v884 = vunpack.c.l.b16 %v528
      %v885 = vpack.c.b16 %v696, %v693
      %v886 = vpack.c.b16 %v697, %v694
      %v887 = vpack.c.b16 %v698, %v695
      %v888 = vpack.c.b16 %v702, %v699
      %v889 = vpack.c.b16 %v703, %v700
      %v890 = vpack.c.b16 %v704, %v701
      %v891 = vpack.c.b16 %v708, %v705
      %v892 = vpack.c.b16 %v709, %v706
      %v893 = vpack.c.b16 %v710, %v707
      %v894 = vpack.c.b16 %v714, %v711
      %v895 = vpack.c.b16 %v715, %v712
      %v896 = vpack.c.b16 %v716, %v713
      %v897 = vpack.c.b16 %v720, %v717
      %v898 = vpack.c.b16 %v721, %v718
      %v899 = vpack.c.b16 %v722, %v719
      %v900 = vpack.c.b16 %v726, %v723
      %v901 = vpack.c.b16 %v727, %v724
      %v902 = vpack.c.b16 %v728, %v725
      %v903 = vpack.c.b16 %v732, %v729
      %v904 = vpack.c.b16 %v733, %v730
      %v905 = vpack.c.b16 %v734, %v731
      %v906 = vpack.c.b16 %v738, %v735
      %v907 = vpack.c.b16 %v739, %v736
      %v908 = vpack.c.b16 %v740, %v737
      %v909 = vpack.c.b16 %v744, %v741
      %v910 = vpack.c.b16 %v745, %v742
      %v911 = vpack.c.b16 %v746, %v743
      %v912 = vpack.c.b16 %v750, %v747
      %v913 = vpack.c.b16 %v751, %v748
      %v914 = vpack.c.b16 %v752, %v749
      %v915 = vpack.c.b16 %v756, %v753
      %v916 = vpack.c.b16 %v757, %v754
      %v917 = vpack.c.b16 %v758, %v755
      %v918 = vpack.c.b16 %v762, %v759
      %v919 = vpack.c.b16 %v763, %v760
      %v920 = vpack.c.b16 %v764, %v761
      %v921 = vpack.c.b16 %v768, %v765
      %v922 = vpack.c.b16 %v769, %v766
      %v923 = vpack.c.b16 %v770, %v767
      %v924 = vpack.c.b16 %v774, %v771
      %v925 = vpack.c.b16 %v775, %v772
      %v926 = vpack.c.b16 %v776, %v773
      %v927 = vpack.c.b16 %v780, %v777
      %v928 = vpack.c.b16 %v781, %v778
      %v929 = vpack.c.b16 %v782, %v779
      %v930 = vpack.c.b16 %v786, %v783
      %v931 = vpack.c.b16 %v787, %v784
      %v932 = vpack.c.b16 %v788, %v785
      %v933 = vpack.c.b16 %v792, %v789
      %v934 = vpack.c.b16 %v793, %v790
      %v935 = vpack.c.b16 %v794, %v791
      %v936 = vpack.c.b16 %v798, %v795
      %v937 = vpack.c.b16 %v799, %v796
      %v938 = vpack.c.b16 %v800, %v797
      %v939 = vpack.c.b16 %v804, %v801
      %v940 = vpack.c.b16 %v805, %v802
      %v941 = vpack.c.b16 %v806, %v803
      %v942 = vpack.c.b16 %v810, %v807
      %v943 = vpack.c.b16 %v811, %v808
      %v944 = vpack.c.b16 %v812, %v809
      %v945 = vpack.c.b16 %v816, %v813
      %v946 = vpack.c.b16 %v817, %v814
      %v947 = vpack.c.b16 %v818, %v815
      %v948 = vpack.c.b16 %v822, %v819
      %v949 = vpack.c.b16 %v823, %v820
      %v950 = vpack.c.b16 %v824, %v821
      %v951 = vpack.c.b16 %v828, %v825
      %v952 = vpack.c.b16 %v829, %v826
      %v953 = vpack.c.b16 %v830, %v827
      %v954 = vpack.c.b16 %v834, %v831
      %v955 = vpack.c.b16 %v835, %v832
      %v956 = vpack.c.b16 %v836, %v833
      %v957 = vpack.c.b16 %v840, %v837
      %v958 = vpack.c.b16 %v841, %v838
      %v959 = vpack.c.b16 %v842, %v839
      %v960 = vpack.c.b16 %v846, %v843
      %v961 = vpack.c.b16 %v847, %v844
      %v962 = vpack.c.b16 %v848, %v845
      %v963 = vpack.c.b16 %v852, %v849
      %v964 = vpack.c.b16 %v853, %v850
      %v965 = vpack.c.b16 %v854, %v851
      %v966 = vpack.c.b16 %v858, %v855
      %v967 = vpack.c.b16 %v859, %v856
      %v968 = vpack.c.b16 %v860, %v857
      %v969 = vpack.c.b16 %v864, %v861
      %v970 = vpack.c.b16 %v865, %v862
      %v971 = vpack.c.b16 %v866, %v863
      %v972 = vpack.c.b16 %v870, %v867
      %v973 = vpack.c.b16 %v871, %v868
      %v974 = vpack.c.b16 %v872, %v869
      %v975 = vpack.c.b16 %v876, %v873
      %v976 = vpack.c.b16 %v877, %v874
      %v977 = vpack.c.b16 %v878, %v875
      %v978 = vpack.c.b16 %v882, %v879
      %v979 = vpack.c.b16 %v883, %v880
      %v980 = vpack.c.b16 %v884, %v881
      %v1081 = vunpack.c.l.b16 %v529
      %v1082 = vunpack.c.l.b16 %v530
      %v1083 = vunpack.c.l.b16 %v531
      %v1084 = vunpack.c.l.b16 %v532
      %v1085 = vunpack.c.l.b16 %v533
      %v1086 = vunpack.c.l.b16 %v534
      %v1087 = vunpack.c.l.b16 %v535
      %v1088 = vunpack.c.l.b16 %v536
      %v1089 = vunpack.c.l.b16 %v537
      %v1090 = vunpack.c.l.b16 %v538
      %v1091 = vunpack.c.l.b16 %v539
      %v1092 = vunpack.c.l.b16 %v540
      %v1093 = vunpack.c.l.b16 %v541
      %v1094 = vunpack.c.l.b16 %v542
      %v1095 = vunpack.c.l.b16 %v543
      %v1096 = vunpack.c.l.b16 %v544
      %v1097 = vunpack.c.l.b16 %v545
      %v1098 = vunpack.c.l.b16 %v546
      %v1099 = vunpack.c.l.b16 %v547
      %v1100 = vunpack.c.l.b16 %v548
      %v1101 = vunpack.c.l.b16 %v549
      %v1102 = vunpack.c.l.b16 %v550
      %v1103 = vunpack.c.l.b16 %v551
      %v1104 = vunpack.c.l.b16 %v552
      %v1105 = vunpack.c.l.b16 %v553
      %v1106 = vunpack.c.l.b16 %v554
      %v1107 = vunpack.c.l.b16 %v555
      %v1108 = vunpack.c.l.b16 %v556
      %v1109 = vunpack.c.l.b16 %v557
      %v1110 = vunpack.c.l.b16 %v558
      %v1111 = vunpack.c.l.b16 %v559
      %v1112 = vunpack.c.l.b16 %v560
      %v1113 = vunpack.c.l.b16 %v561
      %v1114 = vunpack.c.l.b16 %v562
      %v1115 = vunpack.c.l.b16 %v563
      %v1116 = vunpack.c.l.b16 %v564
      %v1117 = vpack.c.b16 %v1082, %v1081
      %v1118 = vpack.c.b16 %v1084, %v1083
      %v1119 = vpack.c.b16 %v1086, %v1085
      %v1120 = vpack.c.b16 %v1088, %v1087
      %v1121 = vpack.c.b16 %v1090, %v1089
      %v1122 = vpack.c.b16 %v1092, %v1091
      %v1123 = vpack.c.b16 %v1094, %v1093
      %v1124 = vpack.c.b16 %v1096, %v1095
      %v1125 = vpack.c.b16 %v1098, %v1097
      %v1126 = vpack.c.b16 %v1100, %v1099
      %v1127 = vpack.c.b16 %v1102, %v1101
      %v1128 = vpack.c.b16 %v1104, %v1103
      %v1129 = vpack.c.b16 %v1106, %v1105
      %v1130 = vpack.c.b16 %v1108, %v1107
      %v1131 = vpack.c.b16 %v1110, %v1109
      %v1132 = vpack.c.b16 %v1112, %v1111
      %v1133 = vpack.c.b16 %v1114, %v1113
      %v1134 = vpack.c.b16 %v1116, %v1115
      %vm1153 = vcmask 261120
      %v1155 = vsel %vm1153, %v887, 0
      %v1158 = vsel %vm1153, %v890, 0
      %v1161 = vsel %vm1153, %v893, 0
      %v1164 = vsel %vm1153, %v896, 0
      %v1167 = vsel %vm1153, %v899, 0
      %v1170 = vsel %vm1153, %v902, 0
      %v1173 = vsel %vm1153, %v905, 0
      %v1176 = vsel %vm1153, %v908, 0
      %v1179 = vsel %vm1153, %v911, 0
      %v1182 = vsel %vm1153, %v914, 0
      %v1185 = vsel %vm1153, %v917, 0
      %v1188 = vsel %vm1153, %v920, 0
      %v1191 = vsel %vm1153, %v923, 0
      %v1194 = vsel %vm1153, %v926, 0
      %v1197 = vsel %vm1153, %v929, 0
      %v1200 = vsel %vm1153, %v932, 0
      %v1203 = vsel %vm1153, %v935, 0
      %v1206 = vsel %vm1153, %v938, 0
      %v1209 = vsel %vm1153, %v941, 0
      %v1212 = vsel %vm1153, %v944, 0
      %v1215 = vsel %vm1153, %v947, 0
      %v1218 = vsel %vm1153, %v950, 0
      %v1221 = vsel %vm1153, %v953, 0
      %v1224 = vsel %vm1153, %v956, 0
      %v1227 = vsel %vm1153, %v959, 0
      %v1230 = vsel %vm1153, %v962, 0
      %v1233 = vsel %vm1153, %v965, 0
      %v1236 = vsel %vm1153, %v968, 0
      %v1239 = vsel %vm1153, %v971, 0
      %v1242 = vsel %vm1153, %v974, 0
      %v1245 = vsel %vm1153, %v977, 0
      %v1248 = vsel %vm1153, %v980, 0
      %1250 = vmatprep.subr.bf16.mxu0 0
      %1251 = vmatpush1.bf16.msra.mxu0 %v1117
      %1252 = vmatprep.subr.bf16.mxu0 0
      %1253 = vmatpush1.bf16.msra.mxu0 %v1118
      %1254 = vmatprep.subr.bf16.mxu0 0
      %1255 = vmatpush1.bf16.msra.mxu0 %v1119
      %1256 = vmatprep.subr.bf16.mxu0 0
      %1257 = vmatpush1.bf16.msra.mxu0 %v1120
      %1258 = vmatprep.subr.bf16.mxu0 0
      %1259 = vmatpush1.bf16.msra.mxu0 %v1121
      %1260 = vmatprep.subr.bf16.mxu0 0
      %1261 = vmatpush1.bf16.msra.mxu0 %v1122
      %1262 = vmatprep.subr.bf16.mxu0 0
      %1263 = vmatpush1.bf16.msra.mxu0 %v1123
      %1264 = vmatprep.subr.bf16.mxu0 0
      %1265 = vmatpush1.bf16.msra.mxu0 %v1124
      %1266 = vmatprep.subr.bf16.mxu0 0
      %1267 = vmatpush1.bf16.msra.mxu0 %v1125
      %1268 = vmatprep.subr.bf16.mxu0 0
      %1269 = vmatpush1.bf16.msra.mxu0 %v1126
      %1270 = vmatprep.subr.bf16.mxu0 0
      %1271 = vmatpush1.bf16.msra.mxu0 %v1127
      %1272 = vmatprep.subr.bf16.mxu0 0
      %1273 = vmatpush1.bf16.msra.mxu0 %v1128
      %1274 = vmatprep.subr.bf16.mxu0 0
      %1275 = vmatpush1.bf16.msra.mxu0 %v1129
      %1276 = vmatprep.subr.bf16.mxu0 0
      %1277 = vmatpush1.bf16.msra.mxu0 %v1130
      %1278 = vmatprep.subr.bf16.mxu0 0
      %1279 = vmatpush1.bf16.msra.mxu0 %v1131
      %1280 = vmatprep.subr.bf16.mxu0 0
      %1281 = vmatpush1.bf16.msra.mxu0 %v1132
      %1282 = vmatprep.mubr.bf16.mxu0 %v886
      %1283 = vmatmul.mubr.bf16.gmra.mrb[0].mxu0 %v885
      %v1284 = vpop.f32.mrb[0].mxu0
      %v1285 = vadd.f32 0.0, %v1284
      %v1286 = vpop.f32.mrb[0].mxu0
      %v1287 = vpop.f32.mrb[0].mxu0
      %v1288 = vadd.f32 0.0, %v1287
      %v1289 = vpop.f32.mrb[0].mxu0
      %1290 = vmatprep.mubr.bf16.mxu0 %v889
      %1291 = vmatmul.mubr.bf16.gmra.mrb[0].mxu0 %v888
      %v1292 = vpop.f32.mrb[0].mxu0
      %v1293 = vadd.f32 0.0, %v1292
      %v1294 = vpop.f32.mrb[0].mxu0
      %v1295 = vpop.f32.mrb[0].mxu0
      %v1296 = vadd.f32 0.0, %v1295
      %v1297 = vpop.f32.mrb[0].mxu0
      %1298 = vmatprep.mubr.bf16.mxu0 %v892
      %1299 = vmatmul.mubr.bf16.gmra.mrb[0].mxu0 %v891
      %v1300 = vpop.f32.mrb[0].mxu0
      %v1301 = vadd.f32 0.0, %v1300
      %v1302 = vpop.f32.mrb[0].mxu0
      %v1303 = vpop.f32.mrb[0].mxu0
      %v1304 = vadd.f32 0.0, %v1303
      %v1305 = vpop.f32.mrb[0].mxu0
      %1306 = vmatprep.mubr.bf16.mxu0 %v895
      %1307 = vmatmul.mubr.bf16.gmra.mrb[0].mxu0 %v894
      %v1308 = vpop.f32.mrb[0].mxu0
      %v1309 = vadd.f32 0.0, %v1308
      %v1310 = vpop.f32.mrb[0].mxu0
      %v1311 = vpop.f32.mrb[0].mxu0
      %v1312 = vadd.f32 0.0, %v1311
      %v1313 = vpop.f32.mrb[0].mxu0
      %1314 = vmatprep.mubr.bf16.mxu0 %v898
      %1315 = vmatmul.mubr.bf16.gmra.mrb[0].mxu0 %v897
      %v1316 = vpop.f32.mrb[0].mxu0
      %v1317 = vadd.f32 0.0, %v1316
      %v1318 = vpop.f32.mrb[0].mxu0
      %v1319 = vpop.f32.mrb[0].mxu0
      %v1320 = vadd.f32 0.0, %v1319
      %v1321 = vpop.f32.mrb[0].mxu0
      %1322 = vmatprep.mubr.bf16.mxu0 %v901
      %1323 = vmatmul.mubr.bf16.gmra.mrb[0].mxu0 %v900
      %v1324 = vpop.f32.mrb[0].mxu0
      %v1325 = vadd.f32 0.0, %v1324
      %v1326 = vpop.f32.mrb[0].mxu0
      %v1327 = vpop.f32.mrb[0].mxu0
      %v1328 = vadd.f32 0.0, %v1327
      %v1329 = vpop.f32.mrb[0].mxu0
      %1330 = vmatprep.mubr.bf16.mxu0 %v904
      %1331 = vmatmul.mubr.bf16.gmra.mrb[0].mxu0 %v903
      %v1332 = vpop.f32.mrb[0].mxu0
      %v1333 = vadd.f32 0.0, %v1332
      %v1334 = vpop.f32.mrb[0].mxu0
      %v1335 = vpop.f32.mrb[0].mxu0
      %v1336 = vadd.f32 0.0, %v1335
      %v1337 = vpop.f32.mrb[0].mxu0
      %1338 = vmatprep.mubr.bf16.mxu0 %v907
      %1339 = vmatmul.mubr.bf16.gmra.mrb[0].mxu0 %v906
      %v1340 = vpop.f32.mrb[0].mxu0
      %v1341 = vadd.f32 0.0, %v1340
      %v1342 = vpop.f32.mrb[0].mxu0
      %v1343 = vpop.f32.mrb[0].mxu0
      %v1344 = vadd.f32 0.0, %v1343
      %v1345 = vpop.f32.mrb[0].mxu0
      %1346 = vmatprep.mubr.bf16.mxu0 %v910
      %1347 = vmatmul.mubr.bf16.gmra.mrb[0].mxu0 %v909
      %v1348 = vpop.f32.mrb[0].mxu0
      %v1349 = vadd.f32 0.0, %v1348
      %v1350 = vpop.f32.mrb[0].mxu0
      %v1351 = vpop.f32.mrb[0].mxu0
      %v1352 = vadd.f32 0.0, %v1351
      %v1353 = vpop.f32.mrb[0].mxu0
      %1354 = vmatprep.mubr.bf16.mxu0 %v913
      %1355 = vmatmul.mubr.bf16.gmra.mrb[0].mxu0 %v912
      %v1356 = vpop.f32.mrb[0].mxu0
      %v1357 = vadd.f32 0.0, %v1356
      %v1358 = vpop.f32.mrb[0].mxu0
      %v1359 = vpop.f32.mrb[0].mxu0
      %v1360 = vadd.f32 0.0, %v1359
      %v1361 = vpop.f32.mrb[0].mxu0
      %1362 = vmatprep.mubr.bf16.mxu0 %v916
      %1363 = vmatmul.mubr.bf16.gmra.mrb[0].mxu0 %v915
      %v1364 = vpop.f32.mrb[0].mxu0
      %v1365 = vadd.f32 0.0, %v1364
      %v1366 = vpop.f32.mrb[0].mxu0
      %v1367 = vpop.f32.mrb[0].mxu0
      %v1368 = vadd.f32 0.0, %v1367
      %v1369 = vpop.f32.mrb[0].mxu0
      %1370 = vmatprep.mubr.bf16.mxu0 %v919
      %1371 = vmatmul.mubr.bf16.gmra.mrb[0].mxu0 %v918
      %v1372 = vpop.f32.mrb[0].mxu0
      %v1373 = vadd.f32 0.0, %v1372
      %v1374 = vpop.f32.mrb[0].mxu0
      %v1375 = vpop.f32.mrb[0].mxu0
      %v1376 = vadd.f32 0.0, %v1375
      %v1377 = vpop.f32.mrb[0].mxu0
      %1378 = vmatprep.mubr.bf16.mxu0 %v922
      %1379 = vmatmul.mubr.bf16.gmra.mrb[0].mxu0 %v921
      %v1380 = vpop.f32.mrb[0].mxu0
      %v1381 = vadd.f32 0.0, %v1380
      %v1382 = vpop.f32.mrb[0].mxu0
      %v1383 = vpop.f32.mrb[0].mxu0
      %v1384 = vadd.f32 0.0, %v1383
      %v1385 = vpop.f32.mrb[0].mxu0
      %1386 = vmatprep.mubr.bf16.mxu0 %v925
      %1387 = vmatmul.mubr.bf16.gmra.mrb[0].mxu0 %v924
      %v1388 = vpop.f32.mrb[0].mxu0
      %v1389 = vadd.f32 0.0, %v1388
      %v1390 = vpop.f32.mrb[0].mxu0
      %v1391 = vpop.f32.mrb[0].mxu0
      %v1392 = vadd.f32 0.0, %v1391
      %v1393 = vpop.f32.mrb[0].mxu0
      %1394 = vmatprep.mubr.bf16.mxu0 %v928
      %1395 = vmatmul.mubr.bf16.gmra.mrb[0].mxu0 %v927
      %v1396 = vpop.f32.mrb[0].mxu0
      %v1397 = vadd.f32 0.0, %v1396
      %v1398 = vpop.f32.mrb[0].mxu0
      %v1399 = vpop.f32.mrb[0].mxu0
      %v1400 = vadd.f32 0.0, %v1399
      %v1401 = vpop.f32.mrb[0].mxu0
      %1402 = vmatprep.mubr.bf16.mxu0 %v931
      %1403 = vmatmul.mubr.bf16.gmra.mrb[0].mxu0 %v930
      %v1404 = vpop.f32.mrb[0].mxu0
      %v1405 = vadd.f32 0.0, %v1404
      %v1406 = vpop.f32.mrb[0].mxu0
      %v1407 = vpop.f32.mrb[0].mxu0
      %v1408 = vadd.f32 0.0, %v1407
      %v1409 = vpop.f32.mrb[0].mxu0
      %1410 = vmatprep.mubr.bf16.mxu0 %v934
      %1411 = vmatmul.mubr.bf16.gmra.mrb[0].mxu0 %v933
      %v1412 = vpop.f32.mrb[0].mxu0
      %v1413 = vadd.f32 0.0, %v1412
      %v1414 = vpop.f32.mrb[0].mxu0
      %v1415 = vpop.f32.mrb[0].mxu0
      %v1416 = vadd.f32 0.0, %v1415
      %v1417 = vpop.f32.mrb[0].mxu0
      %1418 = vmatprep.mubr.bf16.mxu0 %v937
      %1419 = vmatmul.mubr.bf16.gmra.mrb[0].mxu0 %v936
      %v1420 = vpop.f32.mrb[0].mxu0
      %v1421 = vadd.f32 0.0, %v1420
      %v1422 = vpop.f32.mrb[0].mxu0
      %v1423 = vpop.f32.mrb[0].mxu0
      %v1424 = vadd.f32 0.0, %v1423
      %v1425 = vpop.f32.mrb[0].mxu0
      %1426 = vmatprep.mubr.bf16.mxu0 %v940
      %1427 = vmatmul.mubr.bf16.gmra.mrb[0].mxu0 %v939
      %v1428 = vpop.f32.mrb[0].mxu0
      %v1429 = vadd.f32 0.0, %v1428
      %v1430 = vpop.f32.mrb[0].mxu0
      %v1431 = vpop.f32.mrb[0].mxu0
      %v1432 = vadd.f32 0.0, %v1431
      %v1433 = vpop.f32.mrb[0].mxu0
      %1434 = vmatprep.mubr.bf16.mxu0 %v943
      %1435 = vmatmul.mubr.bf16.gmra.mrb[0].mxu0 %v942
      %v1436 = vpop.f32.mrb[0].mxu0
      %v1437 = vadd.f32 0.0, %v1436
      %v1438 = vpop.f32.mrb[0].mxu0
      %v1439 = vpop.f32.mrb[0].mxu0
      %v1440 = vadd.f32 0.0, %v1439
      %v1441 = vpop.f32.mrb[0].mxu0
      %1442 = vmatprep.mubr.bf16.mxu0 %v946
      %1443 = vmatmul.mubr.bf16.gmra.mrb[0].mxu0 %v945
      %v1444 = vpop.f32.mrb[0].mxu0
      %v1445 = vadd.f32 0.0, %v1444
      %v1446 = vpop.f32.mrb[0].mxu0
      %v1447 = vpop.f32.mrb[0].mxu0
      %v1448 = vadd.f32 0.0, %v1447
      %v1449 = vpop.f32.mrb[0].mxu0
      %1450 = vmatprep.mubr.bf16.mxu0 %v949
      %1451 = vmatmul.mubr.bf16.gmra.mrb[0].mxu0 %v948
      %v1452 = vpop.f32.mrb[0].mxu0
      %v1453 = vadd.f32 0.0, %v1452
      %v1454 = vpop.f32.mrb[0].mxu0
      %v1455 = vpop.f32.mrb[0].mxu0
      %v1456 = vadd.f32 0.0, %v1455
      %v1457 = vpop.f32.mrb[0].mxu0
      %1458 = vmatprep.mubr.bf16.mxu0 %v952
      %1459 = vmatmul.mubr.bf16.gmra.mrb[0].mxu0 %v951
      %v1460 = vpop.f32.mrb[0].mxu0
      %v1461 = vadd.f32 0.0, %v1460
      %v1462 = vpop.f32.mrb[0].mxu0
      %v1463 = vpop.f32.mrb[0].mxu0
      %v1464 = vadd.f32 0.0, %v1463
      %v1465 = vpop.f32.mrb[0].mxu0
      %1466 = vmatprep.mubr.bf16.mxu0 %v955
      %1467 = vmatmul.mubr.bf16.gmra.mrb[0].mxu0 %v954
      %v1468 = vpop.f32.mrb[0].mxu0
      %v1469 = vadd.f32 0.0, %v1468
      %v1470 = vpop.f32.mrb[0].mxu0
      %v1471 = vpop.f32.mrb[0].mxu0
      %v1472 = vadd.f32 0.0, %v1471
      %v1473 = vpop.f32.mrb[0].mxu0
      %1474 = vmatprep.mubr.bf16.mxu0 %v958
      %1475 = vmatmul.mubr.bf16.gmra.mrb[0].mxu0 %v957
      %v1476 = vpop.f32.mrb[0].mxu0
      %v1477 = vadd.f32 0.0, %v1476
      %v1478 = vpop.f32.mrb[0].mxu0
      %v1479 = vpop.f32.mrb[0].mxu0
      %v1480 = vadd.f32 0.0, %v1479
      %v1481 = vpop.f32.mrb[0].mxu0
      %1482 = vmatprep.mubr.bf16.mxu0 %v961
      %1483 = vmatmul.mubr.bf16.gmra.mrb[0].mxu0 %v960
      %v1484 = vpop.f32.mrb[0].mxu0
      %v1485 = vadd.f32 0.0, %v1484
      %v1486 = vpop.f32.mrb[0].mxu0
      %v1487 = vpop.f32.mrb[0].mxu0
      %v1488 = vadd.f32 0.0, %v1487
      %v1489 = vpop.f32.mrb[0].mxu0
      %1490 = vmatprep.mubr.bf16.mxu0 %v964
      %1491 = vmatmul.mubr.bf16.gmra.mrb[0].mxu0 %v963
      %v1492 = vpop.f32.mrb[0].mxu0
      %v1493 = vadd.f32 0.0, %v1492
      %v1494 = vpop.f32.mrb[0].mxu0
      %v1495 = vpop.f32.mrb[0].mxu0
      %v1496 = vadd.f32 0.0, %v1495
      %v1497 = vpop.f32.mrb[0].mxu0
      %1498 = vmatprep.mubr.bf16.mxu0 %v967
      %1499 = vmatmul.mubr.bf16.gmra.mrb[0].mxu0 %v966
      %v1500 = vpop.f32.mrb[0].mxu0
      %v1501 = vadd.f32 0.0, %v1500
      %v1502 = vpop.f32.mrb[0].mxu0
      %v1503 = vpop.f32.mrb[0].mxu0
      %v1504 = vadd.f32 0.0, %v1503
      %v1505 = vpop.f32.mrb[0].mxu0
      %1506 = vmatprep.mubr.bf16.mxu0 %v970
      %1507 = vmatmul.mubr.bf16.gmra.mrb[0].mxu0 %v969
      %v1508 = vpop.f32.mrb[0].mxu0
      %v1509 = vadd.f32 0.0, %v1508
      %v1510 = vpop.f32.mrb[0].mxu0
      %v1511 = vpop.f32.mrb[0].mxu0
      %v1512 = vadd.f32 0.0, %v1511
      %v1513 = vpop.f32.mrb[0].mxu0
      %1514 = vmatprep.mubr.bf16.mxu0 %v973
      %1515 = vmatmul.mubr.bf16.gmra.mrb[0].mxu0 %v972
      %v1516 = vpop.f32.mrb[0].mxu0
      %v1517 = vadd.f32 0.0, %v1516
      %v1518 = vpop.f32.mrb[0].mxu0
      %v1519 = vpop.f32.mrb[0].mxu0
      %v1520 = vadd.f32 0.0, %v1519
      %v1521 = vpop.f32.mrb[0].mxu0
      %1522 = vmatprep.mubr.bf16.mxu0 %v976
      %1523 = vmatmul.mubr.bf16.gmra.mrb[0].mxu0 %v975
      %v1524 = vpop.f32.mrb[0].mxu0
      %v1525 = vadd.f32 0.0, %v1524
      %v1526 = vpop.f32.mrb[0].mxu0
      %v1527 = vpop.f32.mrb[0].mxu0
      %v1528 = vadd.f32 0.0, %v1527
      %v1529 = vpop.f32.mrb[0].mxu0
      %1530 = vmatprep.mubr.bf16.mxu0 %v979
      %1531 = vmatmul.mubr.bf16.gmra.mrb[0].mxu0 %v978
      %v1532 = vpop.f32.mrb[0].mxu0
      %v1533 = vadd.f32 0.0, %v1532
      %v1534 = vpop.f32.mrb[0].mxu0
      %v1535 = vpop.f32.mrb[0].mxu0
      %v1536 = vadd.f32 0.0, %v1535
      %v1537 = vpop.f32.mrb[0].mxu0
      %1538 = vdwg.mxu0
      %1539 = vmatprep.subr.bf16.mxu0 0
      %1540 = vmatpush1.bf16.msra.mxu0 %v1133
      %1541 = vmatprep.subr.bf16.mxu0 0
      %1542 = vmatpush1.bf16.msra.mxu0 %v1134
      %1543 = vmatprep.subr.bf16.mxu0 0
      %1544 = vmatpush1.bf16.msra.mxu0 0
      %1545 = vmatprep.subr.bf16.mxu0 0
      %1546 = vmatpush1.bf16.msra.mxu0 0
      %1547 = vmatprep.subr.bf16.mxu0 0
      %1548 = vmatpush1.bf16.msra.mxu0 0
      %1549 = vmatprep.subr.bf16.mxu0 0
      %1550 = vmatpush1.bf16.msra.mxu0 0
      %1551 = vmatprep.subr.bf16.mxu0 0
      %1552 = vmatpush1.bf16.msra.mxu0 0
      %1553 = vmatprep.subr.bf16.mxu0 0
      %1554 = vmatpush1.bf16.msra.mxu0 0
      %1555 = vmatprep.subr.bf16.mxu0 0
      %1556 = vmatpush1.bf16.msra.mxu0 0
      %1557 = vmatprep.subr.bf16.mxu0 0
      %1558 = vmatpush1.bf16.msra.mxu0 0
      %1559 = vmatprep.subr.bf16.mxu0 0
      %1560 = vmatpush1.bf16.msra.mxu0 0
      %1561 = vmatprep.subr.bf16.mxu0 0
      %1562 = vmatpush1.bf16.msra.mxu0 0
      %1563 = vmatprep.subr.bf16.mxu0 0
      %1564 = vmatpush1.bf16.msra.mxu0 0
      %1565 = vmatprep.subr.bf16.mxu0 0
      %1566 = vmatpush1.bf16.msra.mxu0 0
      %1567 = vmatprep.subr.bf16.mxu0 0
      %1568 = vmatpush1.bf16.msra.mxu0 0
      %1569 = vmatprep.subr.bf16.mxu0 0
      %1570 = vmatpush1.bf16.msra.mxu0 0
      %1571 = vmatprep.mubr.bf16.mxu0 0
      %1572 = vmatmul.mubr.bf16.gmra.mrb[0].mxu0 %v1155
      %v1573 = vpop.f32.mrb[0].mxu0
      %v1574 = vadd.f32 %v1285, %v1573
      %v1575 = vpop.f32.mrb[0].mxu0
      %v1576 = vpop.f32.mrb[0].mxu0
      %v1577 = vadd.f32 %v1288, %v1576
      %v1578 = vpop.f32.mrb[0].mxu0
      %1579 = vmatprep.mubr.bf16.mxu0 0
      %1580 = vmatmul.mubr.bf16.gmra.mrb[0].mxu0 %v1158
      %v1581 = vpop.f32.mrb[0].mxu0
      %v1582 = vadd.f32 %v1293, %v1581
      %v1583 = vpop.f32.mrb[0].mxu0
      %v1584 = vpop.f32.mrb[0].mxu0
      %v1585 = vadd.f32 %v1296, %v1584
      %v1586 = vpop.f32.mrb[0].mxu0
      %1587 = vmatprep.mubr.bf16.mxu0 0
      %1588 = vmatmul.mubr.bf16.gmra.mrb[0].mxu0 %v1161
      %v1589 = vpop.f32.mrb[0].mxu0
      %v1590 = vadd.f32 %v1301, %v1589
      %v1591 = vpop.f32.mrb[0].mxu0
      %v1592 = vpop.f32.mrb[0].mxu0
      %v1593 = vadd.f32 %v1304, %v1592
      %v1594 = vpop.f32.mrb[0].mxu0
      %1595 = vmatprep.mubr.bf16.mxu0 0
      %1596 = vmatmul.mubr.bf16.gmra.mrb[0].mxu0 %v1164
      %v1597 = vpop.f32.mrb[0].mxu0
      %v1598 = vadd.f32 %v1309, %v1597
      %v1599 = vpop.f32.mrb[0].mxu0
      %v1600 = vpop.f32.mrb[0].mxu0
      %v1601 = vadd.f32 %v1312, %v1600
      %v1602 = vpop.f32.mrb[0].mxu0
      %1603 = vmatprep.mubr.bf16.mxu0 0
      %1604 = vmatmul.mubr.bf16.gmra.mrb[0].mxu0 %v1167
      %v1605 = vpop.f32.mrb[0].mxu0
      %v1606 = vadd.f32 %v1317, %v1605
      %v1607 = vpop.f32.mrb[0].mxu0
      %v1608 = vpop.f32.mrb[0].mxu0
      %v1609 = vadd.f32 %v1320, %v1608
      %v1610 = vpop.f32.mrb[0].mxu0
      %1611 = vmatprep.mubr.bf16.mxu0 0
      %1612 = vmatmul.mubr.bf16.gmra.mrb[0].mxu0 %v1170
      %v1613 = vpop.f32.mrb[0].mxu0
      %v1614 = vadd.f32 %v1325, %v1613
      %v1615 = vpop.f32.mrb[0].mxu0
      %v1616 = vpop.f32.mrb[0].mxu0
      %v1617 = vadd.f32 %v1328, %v1616
      %v1618 = vpop.f32.mrb[0].mxu0
      %1619 = vmatprep.mubr.bf16.mxu0 0
      %1620 = vmatmul.mubr.bf16.gmra.mrb[0].mxu0 %v1173
      %v1621 = vpop.f32.mrb[0].mxu0
      %v1622 = vadd.f32 %v1333, %v1621
      %v1623 = vpop.f32.mrb[0].mxu0
      %v1624 = vpop.f32.mrb[0].mxu0
      %v1625 = vadd.f32 %v1336, %v1624
      %v1626 = vpop.f32.mrb[0].mxu0
      %1627 = vmatprep.mubr.bf16.mxu0 0
      %1628 = vmatmul.mubr.bf16.gmra.mrb[0].mxu0 %v1176
      %v1629 = vpop.f32.mrb[0].mxu0
      %v1630 = vadd.f32 %v1341, %v1629
      %v1631 = vpop.f32.mrb[0].mxu0
      %v1632 = vpop.f32.mrb[0].mxu0
      %v1633 = vadd.f32 %v1344, %v1632
      %v1634 = vpop.f32.mrb[0].mxu0
      %1635 = vmatprep.mubr.bf16.mxu0 0
      %1636 = vmatmul.mubr.bf16.gmra.mrb[0].mxu0 %v1179
      %v1637 = vpop.f32.mrb[0].mxu0
      %v1638 = vadd.f32 %v1349, %v1637
      %v1639 = vpop.f32.mrb[0].mxu0
      %v1640 = vpop.f32.mrb[0].mxu0
      %v1641 = vadd.f32 %v1352, %v1640
      %v1642 = vpop.f32.mrb[0].mxu0
      %1643 = vmatprep.mubr.bf16.mxu0 0
      %1644 = vmatmul.mubr.bf16.gmra.mrb[0].mxu0 %v1182
      %v1645 = vpop.f32.mrb[0].mxu0
      %v1646 = vadd.f32 %v1357, %v1645
      %v1647 = vpop.f32.mrb[0].mxu0
      %v1648 = vpop.f32.mrb[0].mxu0
      %v1649 = vadd.f32 %v1360, %v1648
      %v1650 = vpop.f32.mrb[0].mxu0
      %1651 = vmatprep.mubr.bf16.mxu0 0
      %1652 = vmatmul.mubr.bf16.gmra.mrb[0].mxu0 %v1185
      %v1653 = vpop.f32.mrb[0].mxu0
      %v1654 = vadd.f32 %v1365, %v1653
      %v1655 = vpop.f32.mrb[0].mxu0
      %v1656 = vpop.f32.mrb[0].mxu0
      %v1657 = vadd.f32 %v1368, %v1656
      %v1658 = vpop.f32.mrb[0].mxu0
      %1659 = vmatprep.mubr.bf16.mxu0 0
      %1660 = vmatmul.mubr.bf16.gmra.mrb[0].mxu0 %v1188
      %v1661 = vpop.f32.mrb[0].mxu0
      %v1662 = vadd.f32 %v1373, %v1661
      %v1663 = vpop.f32.mrb[0].mxu0
      %v1664 = vpop.f32.mrb[0].mxu0
      %v1665 = vadd.f32 %v1376, %v1664
      %v1666 = vpop.f32.mrb[0].mxu0
      %1667 = vmatprep.mubr.bf16.mxu0 0
      %1668 = vmatmul.mubr.bf16.gmra.mrb[0].mxu0 %v1191
      %v1669 = vpop.f32.mrb[0].mxu0
      %v1670 = vadd.f32 %v1381, %v1669
      %v1671 = vpop.f32.mrb[0].mxu0
      %v1672 = vpop.f32.mrb[0].mxu0
      %v1673 = vadd.f32 %v1384, %v1672
      %v1674 = vpop.f32.mrb[0].mxu0
      %1675 = vmatprep.mubr.bf16.mxu0 0
      %1676 = vmatmul.mubr.bf16.gmra.mrb[0].mxu0 %v1194
      %v1677 = vpop.f32.mrb[0].mxu0
      %v1678 = vadd.f32 %v1389, %v1677
      %v1679 = vpop.f32.mrb[0].mxu0
      %v1680 = vpop.f32.mrb[0].mxu0
      %v1681 = vadd.f32 %v1392, %v1680
      %v1682 = vpop.f32.mrb[0].mxu0
      %1683 = vmatprep.mubr.bf16.mxu0 0
      %1684 = vmatmul.mubr.bf16.gmra.mrb[0].mxu0 %v1197
      %v1685 = vpop.f32.mrb[0].mxu0
      %v1686 = vadd.f32 %v1397, %v1685
      %v1687 = vpop.f32.mrb[0].mxu0
      %v1688 = vpop.f32.mrb[0].mxu0
      %v1689 = vadd.f32 %v1400, %v1688
      %v1690 = vpop.f32.mrb[0].mxu0
      %1691 = vmatprep.mubr.bf16.mxu0 0
      %1692 = vmatmul.mubr.bf16.gmra.mrb[0].mxu0 %v1200
      %v1693 = vpop.f32.mrb[0].mxu0
      %v1694 = vadd.f32 %v1405, %v1693
      %v1695 = vpop.f32.mrb[0].mxu0
      %v1696 = vpop.f32.mrb[0].mxu0
      %v1697 = vadd.f32 %v1408, %v1696
      %v1698 = vpop.f32.mrb[0].mxu0
      %1699 = vmatprep.mubr.bf16.mxu0 0
      %1700 = vmatmul.mubr.bf16.gmra.mrb[0].mxu0 %v1203
      %v1701 = vpop.f32.mrb[0].mxu0
      %v1702 = vadd.f32 %v1413, %v1701
      %v1703 = vpop.f32.mrb[0].mxu0
      %v1704 = vpop.f32.mrb[0].mxu0
      %v1705 = vadd.f32 %v1416, %v1704
      %v1706 = vpop.f32.mrb[0].mxu0
      %1707 = vmatprep.mubr.bf16.mxu0 0
      %1708 = vmatmul.mubr.bf16.gmra.mrb[0].mxu0 %v1206
      %v1709 = vpop.f32.mrb[0].mxu0
      %v1710 = vadd.f32 %v1421, %v1709
      %v1711 = vpop.f32.mrb[0].mxu0
      %v1712 = vpop.f32.mrb[0].mxu0
      %v1713 = vadd.f32 %v1424, %v1712
      %v1714 = vpop.f32.mrb[0].mxu0
      %1715 = vmatprep.mubr.bf16.mxu0 0
      %1716 = vmatmul.mubr.bf16.gmra.mrb[0].mxu0 %v1209
      %v1717 = vpop.f32.mrb[0].mxu0
      %v1718 = vadd.f32 %v1429, %v1717
      %v1719 = vpop.f32.mrb[0].mxu0
      %v1720 = vpop.f32.mrb[0].mxu0
      %v1721 = vadd.f32 %v1432, %v1720
      %v1722 = vpop.f32.mrb[0].mxu0
      %1723 = vmatprep.mubr.bf16.mxu0 0
      %1724 = vmatmul.mubr.bf16.gmra.mrb[0].mxu0 %v1212
      %v1725 = vpop.f32.mrb[0].mxu0
      %v1726 = vadd.f32 %v1437, %v1725
      %v1727 = vpop.f32.mrb[0].mxu0
      %v1728 = vpop.f32.mrb[0].mxu0
      %v1729 = vadd.f32 %v1440, %v1728
      %v1730 = vpop.f32.mrb[0].mxu0
      %1731 = vmatprep.mubr.bf16.mxu0 0
      %1732 = vmatmul.mubr.bf16.gmra.mrb[0].mxu0 %v1215
      %v1733 = vpop.f32.mrb[0].mxu0
      %v1734 = vadd.f32 %v1445, %v1733
      %v1735 = vpop.f32.mrb[0].mxu0
      %v1736 = vpop.f32.mrb[0].mxu0
      %v1737 = vadd.f32 %v1448, %v1736
      %v1738 = vpop.f32.mrb[0].mxu0
      %1739 = vmatprep.mubr.bf16.mxu0 0
      %1740 = vmatmul.mubr.bf16.gmra.mrb[0].mxu0 %v1218
      %v1741 = vpop.f32.mrb[0].mxu0
      %v1742 = vadd.f32 %v1453, %v1741
      %v1743 = vpop.f32.mrb[0].mxu0
      %v1744 = vpop.f32.mrb[0].mxu0
      %v1745 = vadd.f32 %v1456, %v1744
      %v1746 = vpop.f32.mrb[0].mxu0
      %1747 = vmatprep.mubr.bf16.mxu0 0
      %1748 = vmatmul.mubr.bf16.gmra.mrb[0].mxu0 %v1221
      %v1749 = vpop.f32.mrb[0].mxu0
      %v1750 = vadd.f32 %v1461, %v1749
      %v1751 = vpop.f32.mrb[0].mxu0
      %v1752 = vpop.f32.mrb[0].mxu0
      %v1753 = vadd.f32 %v1464, %v1752
      %v1754 = vpop.f32.mrb[0].mxu0
      %1755 = vmatprep.mubr.bf16.mxu0 0
      %1756 = vmatmul.mubr.bf16.gmra.mrb[0].mxu0 %v1224
      %v1757 = vpop.f32.mrb[0].mxu0
      %v1758 = vadd.f32 %v1469, %v1757
      %v1759 = vpop.f32.mrb[0].mxu0
      %v1760 = vpop.f32.mrb[0].mxu0
      %v1761 = vadd.f32 %v1472, %v1760
      %v1762 = vpop.f32.mrb[0].mxu0
      %1763 = vmatprep.mubr.bf16.mxu0 0
      %1764 = vmatmul.mubr.bf16.gmra.mrb[0].mxu0 %v1227
      %v1765 = vpop.f32.mrb[0].mxu0
      %v1766 = vadd.f32 %v1477, %v1765
      %v1767 = vpop.f32.mrb[0].mxu0
      %v1768 = vpop.f32.mrb[0].mxu0
      %v1769 = vadd.f32 %v1480, %v1768
      %v1770 = vpop.f32.mrb[0].mxu0
      %1771 = vmatprep.mubr.bf16.mxu0 0
      %1772 = vmatmul.mubr.bf16.gmra.mrb[0].mxu0 %v1230
      %v1773 = vpop.f32.mrb[0].mxu0
      %v1774 = vadd.f32 %v1485, %v1773
      %v1775 = vpop.f32.mrb[0].mxu0
      %v1776 = vpop.f32.mrb[0].mxu0
      %v1777 = vadd.f32 %v1488, %v1776
      %v1778 = vpop.f32.mrb[0].mxu0
      %1779 = vmatprep.mubr.bf16.mxu0 0
      %1780 = vmatmul.mubr.bf16.gmra.mrb[0].mxu0 %v1233
      %v1781 = vpop.f32.mrb[0].mxu0
      %v1782 = vadd.f32 %v1493, %v1781
      %v1783 = vpop.f32.mrb[0].mxu0
      %v1784 = vpop.f32.mrb[0].mxu0
      %v1785 = vadd.f32 %v1496, %v1784
      %v1786 = vpop.f32.mrb[0].mxu0
      %1787 = vmatprep.mubr.bf16.mxu0 0
      %1788 = vmatmul.mubr.bf16.gmra.mrb[0].mxu0 %v1236
      %v1789 = vpop.f32.mrb[0].mxu0
      %v1790 = vadd.f32 %v1501, %v1789
      %v1791 = vpop.f32.mrb[0].mxu0
      %v1792 = vpop.f32.mrb[0].mxu0
      %v1793 = vadd.f32 %v1504, %v1792
      %v1794 = vpop.f32.mrb[0].mxu0
      %1795 = vmatprep.mubr.bf16.mxu0 0
      %1796 = vmatmul.mubr.bf16.gmra.mrb[0].mxu0 %v1239
      %v1797 = vpop.f32.mrb[0].mxu0
      %v1798 = vadd.f32 %v1509, %v1797
      %v1799 = vpop.f32.mrb[0].mxu0
      %v1800 = vpop.f32.mrb[0].mxu0
      %v1801 = vadd.f32 %v1512, %v1800
      %v1802 = vpop.f32.mrb[0].mxu0
      %1803 = vmatprep.mubr.bf16.mxu0 0
      %1804 = vmatmul.mubr.bf16.gmra.mrb[0].mxu0 %v1242
      %v1805 = vpop.f32.mrb[0].mxu0
      %v1806 = vadd.f32 %v1517, %v1805
      %v1807 = vpop.f32.mrb[0].mxu0
      %v1808 = vpop.f32.mrb[0].mxu0
      %v1809 = vadd.f32 %v1520, %v1808
      %v1810 = vpop.f32.mrb[0].mxu0
      %1811 = vmatprep.mubr.bf16.mxu0 0
      %1812 = vmatmul.mubr.bf16.gmra.mrb[0].mxu0 %v1245
      %v1813 = vpop.f32.mrb[0].mxu0
      %v1814 = vadd.f32 %v1525, %v1813
      %v1815 = vpop.f32.mrb[0].mxu0
      %v1816 = vpop.f32.mrb[0].mxu0
      %v1817 = vadd.f32 %v1528, %v1816
      %v1818 = vpop.f32.mrb[0].mxu0
      %1819 = vmatprep.mubr.bf16.mxu0 0
      %1820 = vmatmul.mubr.bf16.gmra.mrb[0].mxu0 %v1248
      %v1821 = vpop.f32.mrb[0].mxu0
      %v1822 = vadd.f32 %v1533, %v1821
      %v1823 = vpop.f32.mrb[0].mxu0
      %v1824 = vpop.f32.mrb[0].mxu0
      %v1825 = vadd.f32 %v1536, %v1824
      %v1826 = vpop.f32.mrb[0].mxu0
      %1827 = vdwg.mxu0
      %v1828 = vadd.f32 %v337, %v1574
      %v1829 = vadd.f32 %v338, %v1577
      %v1830 = vadd.f32 %v339, %v1582
      %v1831 = vadd.f32 %v340, %v1585
      %v1832 = vadd.f32 %v341, %v1590
      %v1833 = vadd.f32 %v342, %v1593
      %v1834 = vadd.f32 %v343, %v1598
      %v1835 = vadd.f32 %v344, %v1601
      %v1836 = vadd.f32 %v345, %v1606
      %v1837 = vadd.f32 %v346, %v1609
      %v1838 = vadd.f32 %v347, %v1614
      %v1839 = vadd.f32 %v348, %v1617
      %v1840 = vadd.f32 %v349, %v1622
      %v1841 = vadd.f32 %v350, %v1625
      %v1842 = vadd.f32 %v351, %v1630
      %v1843 = vadd.f32 %v352, %v1633
      %v1844 = vadd.f32 %v353, %v1638
      %v1845 = vadd.f32 %v354, %v1641
      %v1846 = vadd.f32 %v355, %v1646
      %v1847 = vadd.f32 %v356, %v1649
      %v1848 = vadd.f32 %v357, %v1654
      %v1849 = vadd.f32 %v358, %v1657
      %v1850 = vadd.f32 %v359, %v1662
      %v1851 = vadd.f32 %v360, %v1665
      %v1852 = vadd.f32 %v361, %v1670
      %v1853 = vadd.f32 %v362, %v1673
      %v1854 = vadd.f32 %v363, %v1678
      %v1855 = vadd.f32 %v364, %v1681
      %v1856 = vadd.f32 %v365, %v1686
      %v1857 = vadd.f32 %v366, %v1689
      %v1858 = vadd.f32 %v367, %v1694
      %v1859 = vadd.f32 %v368, %v1697
      %v1860 = vadd.f32 %v369, %v1702
      %v1861 = vadd.f32 %v370, %v1705
      %v1862 = vadd.f32 %v371, %v1710
      %v1863 = vadd.f32 %v372, %v1713
      %v1864 = vadd.f32 %v373, %v1718
      %v1865 = vadd.f32 %v374, %v1721
      %v1866 = vadd.f32 %v375, %v1726
      %v1867 = vadd.f32 %v376, %v1729
      %v1868 = vadd.f32 %v377, %v1734
      %v1869 = vadd.f32 %v378, %v1737
      %v1870 = vadd.f32 %v379, %v1742
      %v1871 = vadd.f32 %v380, %v1745
      %v1872 = vadd.f32 %v381, %v1750
      %v1873 = vadd.f32 %v382, %v1753
      %v1874 = vadd.f32 %v383, %v1758
      %v1875 = vadd.f32 %v384, %v1761
      %v1876 = vadd.f32 %v385, %v1766
      %v1877 = vadd.f32 %v386, %v1769
      %v1878 = vadd.f32 %v387, %v1774
      %v1879 = vadd.f32 %v388, %v1777
      %v1880 = vadd.f32 %v389, %v1782
      %v1881 = vadd.f32 %v390, %v1785
      %v1882 = vadd.f32 %v391, %v1790
      %v1883 = vadd.f32 %v392, %v1793
      %v1884 = vadd.f32 %v393, %v1798
      %v1885 = vadd.f32 %v394, %v1801
      %v1886 = vadd.f32 %v395, %v1806
      %v1887 = vadd.f32 %v396, %v1809
      %v1888 = vadd.f32 %v397, %v1814
      %v1889 = vadd.f32 %v398, %v1817
      %v1890 = vadd.f32 %v399, %v1822
      %v1891 = vadd.f32 %v400, %v1825
      %vm1892 = vcmask 523264
      %1893 = vst.msk [vmem:[%s265] sm:$0xff] %vm1892, %v1828
      %1894 = vst.msk [vmem:[%s265 + $0x8] sm:$0xff] %vm1892, %v1829
      %1895 = vst.msk [vmem:[%s265 + $0x10] sm:$0xff] %vm1892, %v1830
      %1896 = vst.msk [vmem:[%s265 + $0x18] sm:$0xff] %vm1892, %v1831
      %1897 = vst.msk [vmem:[%s265 + $0x20] sm:$0xff] %vm1892, %v1832
      %1898 = vst.msk [vmem:[%s265 + $0x28] sm:$0xff] %vm1892, %v1833
      %1899 = vst.msk [vmem:[%s265 + $0x30] sm:$0xff] %vm1892, %v1834
      %1900 = vst.msk [vmem:[%s265 + $0x38] sm:$0xff] %vm1892, %v1835
      %1901 = vst.msk [vmem:[%s265 + $0x40] sm:$0xff] %vm1892, %v1836
      %1902 = vst.msk [vmem:[%s265 + $0x48] sm:$0xff] %vm1892, %v1837
      %1903 = vst.msk [vmem:[%s265 + $0x50] sm:$0xff] %vm1892, %v1838
      %1904 = vst.msk [vmem:[%s265 + $0x58] sm:$0xff] %vm1892, %v1839
      %1905 = vst.msk [vmem:[%s265 + $0x60] sm:$0xff] %vm1892, %v1840
      %1906 = vst.msk [vmem:[%s265 + $0x68] sm:$0xff] %vm1892, %v1841
      %1907 = vst.msk [vmem:[%s265 + $0x70] sm:$0xff] %vm1892, %v1842
      %1908 = vst.msk [vmem:[%s265 + $0x78] sm:$0xff] %vm1892, %v1843
      %1909 = vst.msk [vmem:[%s265 + $0x80] sm:$0xff] %vm1892, %v1844
      %1910 = vst.msk [vmem:[%s265 + $0x88] sm:$0xff] %vm1892, %v1845
      %1911 = vst.msk [vmem:[%s265 + $0x90] sm:$0xff] %vm1892, %v1846
      %1912 = vst.msk [vmem:[%s265 + $0x98] sm:$0xff] %vm1892, %v1847
      %1913 = vst.msk [vmem:[%s265 + $0xa0] sm:$0xff] %vm1892, %v1848
      %1914 = vst.msk [vmem:[%s265 + $0xa8] sm:$0xff] %vm1892, %v1849
      %1915 = vst.msk [vmem:[%s265 + $0xb0] sm:$0xff] %vm1892, %v1850
      %1916 = vst.msk [vmem:[%s265 + $0xb8] sm:$0xff] %vm1892, %v1851
      %1917 = vst.msk [vmem:[%s265 + $0xc0] sm:$0xff] %vm1892, %v1852
      %1918 = vst.msk [vmem:[%s265 + $0xc8] sm:$0xff] %vm1892, %v1853
      %1919 = vst.msk [vmem:[%s265 + $0xd0] sm:$0xff] %vm1892, %v1854
      %1920 = vst.msk [vmem:[%s265 + $0xd8] sm:$0xff] %vm1892, %v1855
      %1921 = vst.msk [vmem:[%s265 + $0xe0] sm:$0xff] %vm1892, %v1856
      %1922 = vst.msk [vmem:[%s265 + $0xe8] sm:$0xff] %vm1892, %v1857
      %1923 = vst.msk [vmem:[%s265 + $0xf0] sm:$0xff] %vm1892, %v1858
      %1924 = vst.msk [vmem:[%s265 + $0xf8] sm:$0xff] %vm1892, %v1859
      %1925 = vst.msk [vmem:[%s265 + $0x100] sm:$0xff] %vm1892, %v1860
      %1926 = vst.msk [vmem:[%s265 + $0x108] sm:$0xff] %vm1892, %v1861
      %1927 = vst.msk [vmem:[%s265 + $0x110] sm:$0xff] %vm1892, %v1862
      %1928 = vst.msk [vmem:[%s265 + $0x118] sm:$0xff] %vm1892, %v1863
      %1929 = vst.msk [vmem:[%s265 + $0x120] sm:$0xff] %vm1892, %v1864
      %1930 = vst.msk [vmem:[%s265 + $0x128] sm:$0xff] %vm1892, %v1865
      %1931 = vst.msk [vmem:[%s265 + $0x130] sm:$0xff] %vm1892, %v1866
      %1932 = vst.msk [vmem:[%s265 + $0x138] sm:$0xff] %vm1892, %v1867
      %1933 = vst.msk [vmem:[%s265 + $0x140] sm:$0xff] %vm1892, %v1868
      %1934 = vst.msk [vmem:[%s265 + $0x148] sm:$0xff] %vm1892, %v1869
      %1935 = vst.msk [vmem:[%s265 + $0x150] sm:$0xff] %vm1892, %v1870
      %1936 = vst.msk [vmem:[%s265 + $0x158] sm:$0xff] %vm1892, %v1871
      %1937 = vst.msk [vmem:[%s265 + $0x160] sm:$0xff] %vm1892, %v1872
      %1938 = vst.msk [vmem:[%s265 + $0x168] sm:$0xff] %vm1892, %v1873
      %1939 = vst.msk [vmem:[%s265 + $0x170] sm:$0xff] %vm1892, %v1874
      %1940 = vst.msk [vmem:[%s265 + $0x178] sm:$0xff] %vm1892, %v1875
      %1941 = vst.msk [vmem:[%s265 + $0x180] sm:$0xff] %vm1892, %v1876
      %1942 = vst.msk [vmem:[%s265 + $0x188] sm:$0xff] %vm1892, %v1877
      %1943 = vst.msk [vmem:[%s265 + $0x190] sm:$0xff] %vm1892, %v1878
      %1944 = vst.msk [vmem:[%s265 + $0x198] sm:$0xff] %vm1892, %v1879
      %1945 = vst.msk [vmem:[%s265 + $0x1a0] sm:$0xff] %vm1892, %v1880
      %1946 = vst.msk [vmem:[%s265 + $0x1a8] sm:$0xff] %vm1892, %v1881
      %1947 = vst.msk [vmem:[%s265 + $0x1b0] sm:$0xff] %vm1892, %v1882
      %1948 = vst.msk [vmem:[%s265 + $0x1b8] sm:$0xff] %vm1892, %v1883
      %1949 = vst.msk [vmem:[%s265 + $0x1c0] sm:$0xff] %vm1892, %v1884
      %1950 = vst.msk [vmem:[%s265 + $0x1c8] sm:$0xff] %vm1892, %v1885
      %1951 = vst.msk [vmem:[%s265 + $0x1d0] sm:$0xff] %vm1892, %v1886
      %1952 = vst.msk [vmem:[%s265 + $0x1d8] sm:$0xff] %vm1892, %v1887
      %1953 = vst.msk [vmem:[%s265 + $0x1e0] sm:$0xff] %vm1892, %v1888
      %1954 = vst.msk [vmem:[%s265 + $0x1e8] sm:$0xff] %vm1892, %v1889
      %1955 = vst.msk [vmem:[%s265 + $0x1f0] sm:$0xff] %vm1892, %v1890
      %1956 = vst.msk [vmem:[%s265 + $0x1f8] sm:$0xff] %vm1892, %v1891
      // Predicated region
      $region37: #{simple_cnn_forward.10} parent=31 // pred_check
        %p1957 = pneg %p268
      $region38: #{simple_cnn_forward.10} parent=31 // pred_check_branch
        %1959 = sbr.rel (%p1957) target = $region40
      $region39: #{simple_cnn_forward.10} parent=31 // pred_region
        %v1960 = vld [vmem:[%s265] sm:$0xff]
        %v1961 = vld [vmem:[%s265 + $0x8] sm:$0xff]
        %v1962 = vld [vmem:[%s265 + $0x10] sm:$0xff]
        %v1963 = vld [vmem:[%s265 + $0x18] sm:$0xff]
        %v1964 = vld [vmem:[%s265 + $0x20] sm:$0xff]
        %v1965 = vld [vmem:[%s265 + $0x28] sm:$0xff]
        %v1966 = vld [vmem:[%s265 + $0x30] sm:$0xff]
        %v1967 = vld [vmem:[%s265 + $0x38] sm:$0xff]
        %v1968 = vld [vmem:[%s265 + $0x40] sm:$0xff]
        %v1969 = vld [vmem:[%s265 + $0x48] sm:$0xff]
        %v1970 = vld [vmem:[%s265 + $0x50] sm:$0xff]
        %v1971 = vld [vmem:[%s265 + $0x58] sm:$0xff]
        %v1972 = vld [vmem:[%s265 + $0x60] sm:$0xff]
        %v1973 = vld [vmem:[%s265 + $0x68] sm:$0xff]
        %v1974 = vld [vmem:[%s265 + $0x70] sm:$0xff]
        %v1975 = vld [vmem:[%s265 + $0x78] sm:$0xff]
        %v1976 = vld [vmem:[%s265 + $0x80] sm:$0xff]
        %v1977 = vld [vmem:[%s265 + $0x88] sm:$0xff]
        %v1978 = vld [vmem:[%s265 + $0x90] sm:$0xff]
        %v1979 = vld [vmem:[%s265 + $0x98] sm:$0xff]
        %v1980 = vld [vmem:[%s265 + $0xa0] sm:$0xff]
        %v1981 = vld [vmem:[%s265 + $0xa8] sm:$0xff]
        %v1982 = vld [vmem:[%s265 + $0xb0] sm:$0xff]
        %v1983 = vld [vmem:[%s265 + $0xb8] sm:$0xff]
        %v1984 = vld [vmem:[%s265 + $0xc0] sm:$0xff]
        %v1985 = vld [vmem:[%s265 + $0xc8] sm:$0xff]
        %v1986 = vld [vmem:[%s265 + $0xd0] sm:$0xff]
        %v1987 = vld [vmem:[%s265 + $0xd8] sm:$0xff]
        %v1988 = vld [vmem:[%s265 + $0xe0] sm:$0xff]
        %v1989 = vld [vmem:[%s265 + $0xe8] sm:$0xff]
        %v1990 = vld [vmem:[%s265 + $0xf0] sm:$0xff]
        %v1991 = vld [vmem:[%s265 + $0xf8] sm:$0xff]
        %v1992 = vld [vmem:[%s265 + $0x100] sm:$0xff]
        %v1993 = vld [vmem:[%s265 + $0x108] sm:$0xff]
        %v1994 = vld [vmem:[%s265 + $0x110] sm:$0xff]
        %v1995 = vld [vmem:[%s265 + $0x118] sm:$0xff]
        %v1996 = vld [vmem:[%s265 + $0x120] sm:$0xff]
        %v1997 = vld [vmem:[%s265 + $0x128] sm:$0xff]
        %v1998 = vld [vmem:[%s265 + $0x130] sm:$0xff]
        %v1999 = vld [vmem:[%s265 + $0x138] sm:$0xff]
        %v2000 = vld [vmem:[%s265 + $0x140] sm:$0xff]
        %v2001 = vld [vmem:[%s265 + $0x148] sm:$0xff]
        %v2002 = vld [vmem:[%s265 + $0x150] sm:$0xff]
        %v2003 = vld [vmem:[%s265 + $0x158] sm:$0xff]
        %v2004 = vld [vmem:[%s265 + $0x160] sm:$0xff]
        %v2005 = vld [vmem:[%s265 + $0x168] sm:$0xff]
        %v2006 = vld [vmem:[%s265 + $0x170] sm:$0xff]
        %v2007 = vld [vmem:[%s265 + $0x178] sm:$0xff]
        %v2008 = vld [vmem:[%s265 + $0x180] sm:$0xff]
        %v2009 = vld [vmem:[%s265 + $0x188] sm:$0xff]
        %v2010 = vld [vmem:[%s265 + $0x190] sm:$0xff]
        %v2011 = vld [vmem:[%s265 + $0x198] sm:$0xff]
        %v2012 = vld [vmem:[%s265 + $0x1a0] sm:$0xff]
        %v2013 = vld [vmem:[%s265 + $0x1a8] sm:$0xff]
        %v2014 = vld [vmem:[%s265 + $0x1b0] sm:$0xff]
        %v2015 = vld [vmem:[%s265 + $0x1b8] sm:$0xff]
        %v2016 = vld [vmem:[%s265 + $0x1c0] sm:$0xff]
        %v2017 = vld [vmem:[%s265 + $0x1c8] sm:$0xff]
        %v2018 = vld [vmem:[%s265 + $0x1d0] sm:$0xff]
        %v2019 = vld [vmem:[%s265 + $0x1d8] sm:$0xff]
        %v2020 = vld [vmem:[%s265 + $0x1e0] sm:$0xff]
        %v2021 = vld [vmem:[%s265 + $0x1e8] sm:$0xff]
        %v2022 = vld [vmem:[%s265 + $0x1f0] sm:$0xff]
        %v2023 = vld [vmem:[%s265 + $0x1f8] sm:$0xff]
        %v2024 = vld [vmem:[%s257] sm:$0x1]
        %v2026 = vlaneseq
        %v2027 = vshrl.u32 %v2026, 7
        %v2028 = vsub.s32 0, %v2027
        %v2029 = vrot.slane %v2024, %v2028
        %v2031 = vadd.f32 %v1960, %v2029
        %v2032 = vadd.f32 %v1961, %v2029
        %v2033 = vadd.f32 %v1962, %v2029
        %v2034 = vadd.f32 %v1963, %v2029
        %v2035 = vadd.f32 %v1964, %v2029
        %v2036 = vadd.f32 %v1965, %v2029
        %v2037 = vadd.f32 %v1966, %v2029
        %v2038 = vadd.f32 %v1967, %v2029
        %v2039 = vadd.f32 %v1968, %v2029
        %v2040 = vadd.f32 %v1969, %v2029
        %v2041 = vadd.f32 %v1970, %v2029
        %v2042 = vadd.f32 %v1971, %v2029
        %v2043 = vadd.f32 %v1972, %v2029
        %v2044 = vadd.f32 %v1973, %v2029
        %v2045 = vadd.f32 %v1974, %v2029
        %v2046 = vadd.f32 %v1975, %v2029
        %v2047 = vadd.f32 %v1976, %v2029
        %v2048 = vadd.f32 %v1977, %v2029
        %v2049 = vadd.f32 %v1978, %v2029
        %v2050 = vadd.f32 %v1979, %v2029
        %v2051 = vadd.f32 %v1980, %v2029
        %v2052 = vadd.f32 %v1981, %v2029
        %v2053 = vadd.f32 %v1982, %v2029
        %v2054 = vadd.f32 %v1983, %v2029
        %v2055 = vadd.f32 %v1984, %v2029
        %v2056 = vadd.f32 %v1985, %v2029
        %v2057 = vadd.f32 %v1986, %v2029
        %v2058 = vadd.f32 %v1987, %v2029
        %v2059 = vadd.f32 %v1988, %v2029
        %v2060 = vadd.f32 %v1989, %v2029
        %v2061 = vadd.f32 %v1990, %v2029
        %v2062 = vadd.f32 %v1991, %v2029
        %v2063 = vadd.f32 %v1992, %v2029
        %v2064 = vadd.f32 %v1993, %v2029
        %v2065 = vadd.f32 %v1994, %v2029
        %v2066 = vadd.f32 %v1995, %v2029
        %v2067 = vadd.f32 %v1996, %v2029
        %v2068 = vadd.f32 %v1997, %v2029
        %v2069 = vadd.f32 %v1998, %v2029
        %v2070 = vadd.f32 %v1999, %v2029
        %v2071 = vadd.f32 %v2000, %v2029
        %v2072 = vadd.f32 %v2001, %v2029
        %v2073 = vadd.f32 %v2002, %v2029
        %v2074 = vadd.f32 %v2003, %v2029
        %v2075 = vadd.f32 %v2004, %v2029
        %v2076 = vadd.f32 %v2005, %v2029
        %v2077 = vadd.f32 %v2006, %v2029
        %v2078 = vadd.f32 %v2007, %v2029
        %v2079 = vadd.f32 %v2008, %v2029
        %v2080 = vadd.f32 %v2009, %v2029
        %v2081 = vadd.f32 %v2010, %v2029
        %v2082 = vadd.f32 %v2011, %v2029
        %v2083 = vadd.f32 %v2012, %v2029
        %v2084 = vadd.f32 %v2013, %v2029
        %v2085 = vadd.f32 %v2014, %v2029
        %v2086 = vadd.f32 %v2015, %v2029
        %v2087 = vadd.f32 %v2016, %v2029
        %v2088 = vadd.f32 %v2017, %v2029
        %v2089 = vadd.f32 %v2018, %v2029
        %v2090 = vadd.f32 %v2019, %v2029
        %v2091 = vadd.f32 %v2020, %v2029
        %v2092 = vadd.f32 %v2021, %v2029
        %v2093 = vadd.f32 %v2022, %v2029
        %v2094 = vadd.f32 %v2023, %v2029
        %v2095 = vmax.f32 %v2031, 0.0
        %v2096 = vmax.f32 %v2032, 0.0
        %v2097 = vmax.f32 %v2033, 0.0
        %v2098 = vmax.f32 %v2034, 0.0
        %v2099 = vmax.f32 %v2035, 0.0
        %v2100 = vmax.f32 %v2036, 0.0
        %v2101 = vmax.f32 %v2037, 0.0
        %v2102 = vmax.f32 %v2038, 0.0
        %v2103 = vmax.f32 %v2039, 0.0
        %v2104 = vmax.f32 %v2040, 0.0
        %v2105 = vmax.f32 %v2041, 0.0
        %v2106 = vmax.f32 %v2042, 0.0
        %v2107 = vmax.f32 %v2043, 0.0
        %v2108 = vmax.f32 %v2044, 0.0
        %v2109 = vmax.f32 %v2045, 0.0
        %v2110 = vmax.f32 %v2046, 0.0
        %v2111 = vmax.f32 %v2047, 0.0
        %v2112 = vmax.f32 %v2048, 0.0
        %v2113 = vmax.f32 %v2049, 0.0
        %v2114 = vmax.f32 %v2050, 0.0
        %v2115 = vmax.f32 %v2051, 0.0
        %v2116 = vmax.f32 %v2052, 0.0
        %v2117 = vmax.f32 %v2053, 0.0
        %v2118 = vmax.f32 %v2054, 0.0
        %v2119 = vmax.f32 %v2055, 0.0
        %v2120 = vmax.f32 %v2056, 0.0
        %v2121 = vmax.f32 %v2057, 0.0
        %v2122 = vmax.f32 %v2058, 0.0
        %v2123 = vmax.f32 %v2059, 0.0
        %v2124 = vmax.f32 %v2060, 0.0
        %v2125 = vmax.f32 %v2061, 0.0
        %v2126 = vmax.f32 %v2062, 0.0
        %v2127 = vmax.f32 %v2063, 0.0
        %v2128 = vmax.f32 %v2064, 0.0
        %v2129 = vmax.f32 %v2065, 0.0
        %v2130 = vmax.f32 %v2066, 0.0
        %v2131 = vmax.f32 %v2067, 0.0
        %v2132 = vmax.f32 %v2068, 0.0
        %v2133 = vmax.f32 %v2069, 0.0
        %v2134 = vmax.f32 %v2070, 0.0
        %v2135 = vmax.f32 %v2071, 0.0
        %v2136 = vmax.f32 %v2072, 0.0
        %v2137 = vmax.f32 %v2073, 0.0
        %v2138 = vmax.f32 %v2074, 0.0
        %v2139 = vmax.f32 %v2075, 0.0
        %v2140 = vmax.f32 %v2076, 0.0
        %v2141 = vmax.f32 %v2077, 0.0
        %v2142 = vmax.f32 %v2078, 0.0
        %v2143 = vmax.f32 %v2079, 0.0
        %v2144 = vmax.f32 %v2080, 0.0
        %v2145 = vmax.f32 %v2081, 0.0
        %v2146 = vmax.f32 %v2082, 0.0
        %v2147 = vmax.f32 %v2083, 0.0
        %v2148 = vmax.f32 %v2084, 0.0
        %v2149 = vmax.f32 %v2085, 0.0
        %v2150 = vmax.f32 %v2086, 0.0
        %v2151 = vmax.f32 %v2087, 0.0
        %v2152 = vmax.f32 %v2088, 0.0
        %v2153 = vmax.f32 %v2089, 0.0
        %v2154 = vmax.f32 %v2090, 0.0
        %v2155 = vmax.f32 %v2091, 0.0
        %v2156 = vmax.f32 %v2092, 0.0
        %v2157 = vmax.f32 %v2093, 0.0
        %v2158 = vmax.f32 %v2094, 0.0
        %2159 = vst.msk [vmem:[%s265] sm:$0xff] %vm1892, %v2095
        %2160 = vst.msk [vmem:[%s265 + $0x8] sm:$0xff] %vm1892, %v2096
        %2161 = vst.msk [vmem:[%s265 + $0x10] sm:$0xff] %vm1892, %v2097
        %2162 = vst.msk [vmem:[%s265 + $0x18] sm:$0xff] %vm1892, %v2098
        %2163 = vst.msk [vmem:[%s265 + $0x20] sm:$0xff] %vm1892, %v2099
        %2164 = vst.msk [vmem:[%s265 + $0x28] sm:$0xff] %vm1892, %v2100
        %2165 = vst.msk [vmem:[%s265 + $0x30] sm:$0xff] %vm1892, %v2101
        %2166 = vst.msk [vmem:[%s265 + $0x38] sm:$0xff] %vm1892, %v2102
        %2167 = vst.msk [vmem:[%s265 + $0x40] sm:$0xff] %vm1892, %v2103
        %2168 = vst.msk [vmem:[%s265 + $0x48] sm:$0xff] %vm1892, %v2104
        %2169 = vst.msk [vmem:[%s265 + $0x50] sm:$0xff] %vm1892, %v2105
        %2170 = vst.msk [vmem:[%s265 + $0x58] sm:$0xff] %vm1892, %v2106
        %2171 = vst.msk [vmem:[%s265 + $0x60] sm:$0xff] %vm1892, %v2107
        %2172 = vst.msk [vmem:[%s265 + $0x68] sm:$0xff] %vm1892, %v2108
        %2173 = vst.msk [vmem:[%s265 + $0x70] sm:$0xff] %vm1892, %v2109
        %2174 = vst.msk [vmem:[%s265 + $0x78] sm:$0xff] %vm1892, %v2110
        %2175 = vst.msk [vmem:[%s265 + $0x80] sm:$0xff] %vm1892, %v2111
        %2176 = vst.msk [vmem:[%s265 + $0x88] sm:$0xff] %vm1892, %v2112
        %2177 = vst.msk [vmem:[%s265 + $0x90] sm:$0xff] %vm1892, %v2113
        %2178 = vst.msk [vmem:[%s265 + $0x98] sm:$0xff] %vm1892, %v2114
        %2179 = vst.msk [vmem:[%s265 + $0xa0] sm:$0xff] %vm1892, %v2115
        %2180 = vst.msk [vmem:[%s265 + $0xa8] sm:$0xff] %vm1892, %v2116
        %2181 = vst.msk [vmem:[%s265 + $0xb0] sm:$0xff] %vm1892, %v2117
        %2182 = vst.msk [vmem:[%s265 + $0xb8] sm:$0xff] %vm1892, %v2118
        %2183 = vst.msk [vmem:[%s265 + $0xc0] sm:$0xff] %vm1892, %v2119
        %2184 = vst.msk [vmem:[%s265 + $0xc8] sm:$0xff] %vm1892, %v2120
        %2185 = vst.msk [vmem:[%s265 + $0xd0] sm:$0xff] %vm1892, %v2121
        %2186 = vst.msk [vmem:[%s265 + $0xd8] sm:$0xff] %vm1892, %v2122
        %2187 = vst.msk [vmem:[%s265 + $0xe0] sm:$0xff] %vm1892, %v2123
        %2188 = vst.msk [vmem:[%s265 + $0xe8] sm:$0xff] %vm1892, %v2124
        %2189 = vst.msk [vmem:[%s265 + $0xf0] sm:$0xff] %vm1892, %v2125
        %2190 = vst.msk [vmem:[%s265 + $0xf8] sm:$0xff] %vm1892, %v2126
        %2191 = vst.msk [vmem:[%s265 + $0x100] sm:$0xff] %vm1892, %v2127
        %2192 = vst.msk [vmem:[%s265 + $0x108] sm:$0xff] %vm1892, %v2128
        %2193 = vst.msk [vmem:[%s265 + $0x110] sm:$0xff] %vm1892, %v2129
        %2194 = vst.msk [vmem:[%s265 + $0x118] sm:$0xff] %vm1892, %v2130
        %2195 = vst.msk [vmem:[%s265 + $0x120] sm:$0xff] %vm1892, %v2131
        %2196 = vst.msk [vmem:[%s265 + $0x128] sm:$0xff] %vm1892, %v2132
        %2197 = vst.msk [vmem:[%s265 + $0x130] sm:$0xff] %vm1892, %v2133
        %2198 = vst.msk [vmem:[%s265 + $0x138] sm:$0xff] %vm1892, %v2134
        %2199 = vst.msk [vmem:[%s265 + $0x140] sm:$0xff] %vm1892, %v2135
        %2200 = vst.msk [vmem:[%s265 + $0x148] sm:$0xff] %vm1892, %v2136
        %2201 = vst.msk [vmem:[%s265 + $0x150] sm:$0xff] %vm1892, %v2137
        %2202 = vst.msk [vmem:[%s265 + $0x158] sm:$0xff] %vm1892, %v2138
        %2203 = vst.msk [vmem:[%s265 + $0x160] sm:$0xff] %vm1892, %v2139
        %2204 = vst.msk [vmem:[%s265 + $0x168] sm:$0xff] %vm1892, %v2140
        %2205 = vst.msk [vmem:[%s265 + $0x170] sm:$0xff] %vm1892, %v2141
        %2206 = vst.msk [vmem:[%s265 + $0x178] sm:$0xff] %vm1892, %v2142
        %2207 = vst.msk [vmem:[%s265 + $0x180] sm:$0xff] %vm1892, %v2143
        %2208 = vst.msk [vmem:[%s265 + $0x188] sm:$0xff] %vm1892, %v2144
        %2209 = vst.msk [vmem:[%s265 + $0x190] sm:$0xff] %vm1892, %v2145
        %2210 = vst.msk [vmem:[%s265 + $0x198] sm:$0xff] %vm1892, %v2146
        %2211 = vst.msk [vmem:[%s265 + $0x1a0] sm:$0xff] %vm1892, %v2147
        %2212 = vst.msk [vmem:[%s265 + $0x1a8] sm:$0xff] %vm1892, %v2148
        %2213 = vst.msk [vmem:[%s265 + $0x1b0] sm:$0xff] %vm1892, %v2149
        %2214 = vst.msk [vmem:[%s265 + $0x1b8] sm:$0xff] %vm1892, %v2150
        %2215 = vst.msk [vmem:[%s265 + $0x1c0] sm:$0xff] %vm1892, %v2151
        %2216 = vst.msk [vmem:[%s265 + $0x1c8] sm:$0xff] %vm1892, %v2152
        %2217 = vst.msk [vmem:[%s265 + $0x1d0] sm:$0xff] %vm1892, %v2153
        %2218 = vst.msk [vmem:[%s265 + $0x1d8] sm:$0xff] %vm1892, %v2154
        %2219 = vst.msk [vmem:[%s265 + $0x1e0] sm:$0xff] %vm1892, %v2155
        %2220 = vst.msk [vmem:[%s265 + $0x1e8] sm:$0xff] %vm1892, %v2156
        %2221 = vst.msk [vmem:[%s265 + $0x1f0] sm:$0xff] %vm1892, %v2157
        %2222 = vst.msk [vmem:[%s265 + $0x1f8] sm:$0xff] %vm1892, %v2158
      $region40: #{simple_cnn_forward.10} parent=31 // pred_fallthru
        _
      %s2223 = smul.u32 64, %s19
      %p2224 = scmp.lt.s32.totalorder %s2223, 255
      %s2225 = scalar_select %p2224, %s2223, 255
      %p2226 = scmp.lt.s32.totalorder %s20, 0
      %s2227 = scalar_select %p2226, %s20, 0
      %s2228 = sadd.s32 %s2227, %s2225
      %s2229 = smul.addr %s2228, 8
      %s2230 = scalar_lea.vmem %s3, %s2229
      // Predicated region
      $region41: #{simple_cnn_forward.10} parent=31 // pred_check
        %p2231 = pneg %p135
      $region42: #{simple_cnn_forward.10} parent=31 // pred_check_branch
        %2233 = sbr.rel (%p2231) target = $region44
      $region43: #{simple_cnn_forward.10} parent=31 // pred_region
        %s2234 = smul.u32 64, %s19
      $region44: #{simple_cnn_forward.10} parent=31 // pred_fallthru
        _
    $region32: #{simple_cnn_forward.10} parent=5 // pred_fallthru
      _
    %p2235 = scmp.le.s32.totalorder 2, %s9
    // Predicated region
    $region45: #{simple_cnn_forward.10} parent=5 // pred_check
      %p2236 = pneg %p2235
    $region46: #{simple_cnn_forward.10} parent=5 // pred_check_branch
      %2238 = sbr.rel (%p2236) target = $region48
    $region47: #{simple_cnn_forward.10} parent=5 // pred_region
      %s2239 = ssub.s32 %s9, 2
      // Predicated region
      $region49: #{simple_cnn_forward.10} parent=47 // pred_check
        %p2240 = pneg %p141
      $region50: #{simple_cnn_forward.10} parent=47 // pred_check_branch
        %2242 = sbr.rel (%p2240) target = $region52
      $region51: #{simple_cnn_forward.10} parent=47 // pred_region
        %s2243 = smul.u32 64, %s22
        %p2244 = scmp.lt.s32.totalorder %s2243, 255
        %s2245 = scalar_select %p2244, %s2243, 255
        %p2246 = scmp.lt.s32.totalorder %s23, 0
        %s2247 = scalar_select %p2246, %s23, 0
        %s2248 = sadd.s32 %s2247, %s2245
        %s2249 = smul.addr %s2248, 8
        %s2250 = scalar_lea.vmem %s3, %s2249
      $region52: #{simple_cnn_forward.10} parent=47 // pred_fallthru
        _
    $region48: #{simple_cnn_forward.10} parent=5 // pred_fallthru
      _
  $region6: #{simple_cnn_forward.10} parent=0 // loop_footer
    %s13 = sadd.s32 1, %s9
  $region7: #{simple_cnn_forward.10} parent=0 // loop_footer_branch
    %8 = sbr.rel target = $region3
  $region8: #{simple_cnn_forward.10} parent=0 // loop_exit
    _

// kernel: simple_cnn_forward.13
$region0: #{simple_cnn_forward.13}
  #allocation0 [shape = 'u32[]', space=smem, size = 0x4, offset = 0x4, fixed_abs, tag = 'smem constant byte address 0x4 - core index']
  #allocation1 [shape = 'u32[144,128]{1,0:T(1,128)}', space=vmem, size = 0x12000, scoped, tag = 'internal scratch']
  %s0 = inlined_call_operand.vmem [shape: f32[16,2,8,256], index: 0, kind: input, shape index: {}]
  %s1 = inlined_call_operand.vmem [shape: bf16[16,8,128], index: 1, kind: output, shape index: {}]
  %s2 = sld [smem:[#allocation0]]
  $region37: #{simple_cnn_forward.13} parent=0
    _
  %s4 = ssub.s32 1, %s2
  %s5 = scalar_select 0, %s4, %s2
  loop: start=0, step=1, limit=4
  $region2: #{simple_cnn_forward.13} parent=0 // loop_pre_header
    _
  $region3: #{simple_cnn_forward.13} parent=0 // loop_header
    %s7 = sphi 0, %s11
    %p8 = scmp.ge.s32.totalorder %s7, 4
    %s17 = sphi 0, %s19
    %s20 = sphi 0, %s17
    %s21 = sphi 0, %s20
    %s37 = sphi 0, %s21
    %s43 = sphi 0, %s45
    %s46 = sphi 0, %s43
    %s47 = sphi 0, %s46
    %s63 = sphi 0, %s47
  $region4: #{simple_cnn_forward.13} parent=0 // loop_header_branch
    %10 = sbr.rel (%p8) target = $region8
  $region5: #{simple_cnn_forward.13} parent=0 // loop_body
    %s12 = ssub.s32 %s7, 1
    %s13 = ssub.s32 %s7, 2
    %s14 = sadd.s32 %s7, 1
    %s15 = ssub.s32 %s7, %s14
    %p16 = scmp.eq.s32.totalorder %s15, 0
    %s18 = sadd.s32 %s17, 1
    %s19 = scalar_select %p16, %s17, %s18
    %p22 = pneg %p16
    %p23 = scmp.eq.s32.totalorder %s7, 1
    %p24 = por %p22, %p23
    %p25 = scmp.ne.s32.totalorder %s17, %s20
    %p26 = scmp.eq.s32.totalorder %s7, 0
    %p27 = por %p25, %p26
    %p28 = scmp.ne.s32.totalorder %s17, %s20
    %p29 = scmp.eq.s32.totalorder %s12, 1
    %p30 = por %p28, %p29
    %p31 = scmp.ne.s32.totalorder %s20, %s21
    %p32 = scmp.eq.s32.totalorder %s12, 0
    %p33 = por %p31, %p32
    %p34 = scmp.ne.s32.totalorder %s20, %s21
    %p35 = scmp.eq.s32.totalorder %s13, 1
    %p36 = por %p34, %p35
    %p38 = scmp.ne.s32.totalorder %s21, %s37
    %p39 = scmp.eq.s32.totalorder %s13, 0
    %p40 = por %p38, %p39
    %s41 = ssub.s32 %s7, %s14
    %p42 = scmp.eq.s32.totalorder %s41, 0
    %s44 = sadd.s32 %s43, 1
    %s45 = scalar_select %p42, %s43, %s44
    %p48 = pneg %p42
    %p49 = scmp.eq.s32.totalorder %s7, 1
    %p50 = por %p48, %p49
    %p51 = scmp.ne.s32.totalorder %s43, %s46
    %p52 = scmp.eq.s32.totalorder %s7, 0
    %p53 = por %p51, %p52
    %p54 = scmp.ne.s32.totalorder %s43, %s46
    %p55 = scmp.eq.s32.totalorder %s12, 1
    %p56 = por %p54, %p55
    %p57 = scmp.ne.s32.totalorder %s46, %s47
    %p58 = scmp.eq.s32.totalorder %s12, 0
    %p59 = por %p57, %p58
    %p60 = scmp.ne.s32.totalorder %s46, %s47
    %p61 = scmp.eq.s32.totalorder %s13, 1
    %p62 = por %p60, %p61
    %p64 = scmp.ne.s32.totalorder %s47, %s63
    %p65 = scmp.eq.s32.totalorder %s13, 0
    %p66 = por %p64, %p65
    %p67 = scmp.le.s32.totalorder 1, %s7
    %p68 = scmp.lt.s32.totalorder %s7, 3
    %p69 = pnand %p67, %p68
    %p70 = pneg %p69
    // Predicated region
    $region9: #{simple_cnn_forward.13} parent=5 // pred_check
      _
    $region10: #{simple_cnn_forward.13} parent=5 // pred_check_branch
      %72 = sbr.rel (%p69) target = $region12
    $region11: #{simple_cnn_forward.13} parent=5 // pred_region
      %s73 = ssub.s32 %s7, 1
    $region12: #{simple_cnn_forward.13} parent=5 // pred_fallthru
      _
    %p74 = scmp.lt.s32.totalorder %s7, 2
    // Predicated region
    $region13: #{simple_cnn_forward.13} parent=5 // pred_check
      %p75 = pneg %p74
    $region14: #{simple_cnn_forward.13} parent=5 // pred_check_branch
      %77 = sbr.rel (%p75) target = $region16
    $region15: #{simple_cnn_forward.13} parent=5 // pred_region
      // Predicated region
      $region17: #{simple_cnn_forward.13} parent=15 // pred_check
        %p78 = pneg %p27
      $region18: #{simple_cnn_forward.13} parent=15 // pred_check_branch
        %80 = sbr.rel (%p78) target = $region20
      $region19: #{simple_cnn_forward.13} parent=15 // pred_region
        %s81 = smul.u32 8, %s7
        %p82 = scmp.lt.s32.totalorder %s81, 15
        %s83 = scalar_select %p82, %s81, 15
        %s84 = smul.addr %s83, 4
        %s85 = smul.addr %s84, 8
        %s86 = scalar_lea.vmem %s0, %s85
        %s87 = smul.u32 8, %s7
      $region20: #{simple_cnn_forward.13} parent=15 // pred_fallthru
        _
    $region16: #{simple_cnn_forward.13} parent=5 // pred_fallthru
      _
    %p88 = scmp.le.s32.totalorder 1, %s7
    %p89 = scmp.lt.s32.totalorder %s7, 3
    %p90 = pnand %p88, %p89
    %p91 = pneg %p90
    // Predicated region
    $region21: #{simple_cnn_forward.13} parent=5 // pred_check
      _
    $region22: #{simple_cnn_forward.13} parent=5 // pred_check_branch
      %93 = sbr.rel (%p90) target = $region24
    $region23: #{simple_cnn_forward.13} parent=5 // pred_region
      %s94 = ssub.s32 %s7, 1
      %s95 = smul.u32 8, %s12
      %p96 = scmp.lt.s32.totalorder %s95, 15
      %s97 = scalar_select %p96, %s95, 15
      %s98 = smul.addr %s97, 4
      %s99 = smul.addr %s98, 8
      %s100 = scalar_lea.vmem %s0, %s99
      %p101 = pneg %p33
      %p102 = pneg %p30
      %p103 = pneg %p59
      %p104 = pneg %p56
      %s105 = smul.u32 8, %s12
      %p106 = scmp.lt.s32.totalorder %s105, 15
      %s107 = scalar_select %p106, %s105, 15
      %s108 = smul.addr %s107, 4
      %s109 = scalar_lea.vmem %s1, %s108
      %s110 = smul.u32 8, %s12
      %p111 = scmp.lt.s32.totalorder %s110, 15
      %s112 = scalar_select %p111, %s110, 15
      %s113 = smul.addr %s112, 4
      %s114 = smul.addr %s113, 8
      %s115 = scalar_lea.vmem %s0, %s114
      %s116 = smul.u32 8, %s12
      %s117 = smul.u32 8, %s12
      %p118 = scmp.lt.s32.totalorder %s117, 15
      %s119 = scalar_select %p118, %s117, 15
      %s120 = smul.addr %s119, 4
      %s121 = scalar_lea.vmem %s1, %s120
      %s122 = smul.u32 8, %s12
      %v123 = vld [vmem:[%s115] sm:$0xff]
      %v124 = vld [vmem:[%s115 + $0x8] sm:$0xff]
      %v125 = vld [vmem:[%s115 + $0x10] sm:$0xff]
      %v126 = vld [vmem:[%s115 + $0x18] sm:$0xff]
      %v127 = vld [vmem:[%s115 + $0x20] sm:$0xff]
      %v128 = vld [vmem:[%s115 + $0x28] sm:$0xff]
      %v129 = vld [vmem:[%s115 + $0x30] sm:$0xff]
      %v130 = vld [vmem:[%s115 + $0x38] sm:$0xff]
      %v131 = vld [vmem:[%s115 + $0x40] sm:$0xff]
      %v132 = vld [vmem:[%s115 + $0x48] sm:$0xff]
      %v133 = vld [vmem:[%s115 + $0x50] sm:$0xff]
      %v134 = vld [vmem:[%s115 + $0x58] sm:$0xff]
      %v135 = vld [vmem:[%s115 + $0x60] sm:$0xff]
      %v136 = vld [vmem:[%s115 + $0x68] sm:$0xff]
      %v137 = vld [vmem:[%s115 + $0x70] sm:$0xff]
      %v138 = vld [vmem:[%s115 + $0x78] sm:$0xff]
      %v139 = vld [vmem:[%s115 + $0x80] sm:$0xff]
      %v140 = vld [vmem:[%s115 + $0x88] sm:$0xff]
      %v141 = vld [vmem:[%s115 + $0x90] sm:$0xff]
      %v142 = vld [vmem:[%s115 + $0x98] sm:$0xff]
      %v143 = vld [vmem:[%s115 + $0xa0] sm:$0xff]
      %v144 = vld [vmem:[%s115 + $0xa8] sm:$0xff]
      %v145 = vld [vmem:[%s115 + $0xb0] sm:$0xff]
      %v146 = vld [vmem:[%s115 + $0xb8] sm:$0xff]
      %v147 = vld [vmem:[%s115 + $0xc0] sm:$0xff]
      %v148 = vld [vmem:[%s115 + $0xc8] sm:$0xff]
      %v149 = vld [vmem:[%s115 + $0xd0] sm:$0xff]
      %v150 = vld [vmem:[%s115 + $0xd8] sm:$0xff]
      %v151 = vld [vmem:[%s115 + $0xe0] sm:$0xff]
      %v152 = vld [vmem:[%s115 + $0xe8] sm:$0xff]
      %v153 = vld [vmem:[%s115 + $0xf0] sm:$0xff]
      %v154 = vld [vmem:[%s115 + $0xf8] sm:$0xff]
      %v155 = vmax.f32 %v123, %v125
      %v156 = vmax.f32 %v124, %v126
      %v157 = vmax.f32 %v127, %v129
      %v158 = vmax.f32 %v128, %v130
      %v159 = vmax.f32 %v131, %v133
      %v160 = vmax.f32 %v132, %v134
      %v161 = vmax.f32 %v135, %v137
      %v162 = vmax.f32 %v136, %v138
      %v163 = vmax.f32 %v139, %v141
      %v164 = vmax.f32 %v140, %v142
      %v165 = vmax.f32 %v143, %v145
      %v166 = vmax.f32 %v144, %v146
      %v167 = vmax.f32 %v147, %v149
      %v168 = vmax.f32 %v148, %v150
      %v169 = vmax.f32 %v151, %v153
      %v170 = vmax.f32 %v152, %v154
      %v171 = vmax.f32 %v155, %v156
      %v172 = vmax.f32 %v157, %v158
      %v173 = vmax.f32 %v159, %v160
      %v174 = vmax.f32 %v161, %v162
      %v175 = vmax.f32 %v163, %v164
      %v176 = vmax.f32 %v165, %v166
      %v177 = vmax.f32 %v167, %v168
      %v178 = vmax.f32 %v169, %v170
      %v179 = vpack.c.bf16 %v171, %v171
      %v180 = vpack.c.bf16 %v172, %v172
      %v181 = vpack.c.bf16 %v173, %v173
      %v182 = vpack.c.bf16 %v174, %v174
      %v183 = vpack.c.bf16 %v175, %v175
      %v184 = vpack.c.bf16 %v176, %v176
      %v185 = vpack.c.bf16 %v177, %v177
      %v186 = vpack.c.bf16 %v178, %v178
      %187 = vst [vmem:[%s121] sm:$0xf] %v179
      %188 = vst [vmem:[%s121 + $0x4] sm:$0xf] %v180
      %189 = vst [vmem:[%s121 + $0x8] sm:$0xf] %v181
      %190 = vst [vmem:[%s121 + $0xc] sm:$0xf] %v182
      %191 = vst [vmem:[%s121 + $0x10] sm:$0xf] %v183
      %192 = vst [vmem:[%s121 + $0x14] sm:$0xf] %v184
      %193 = vst [vmem:[%s121 + $0x18] sm:$0xf] %v185
      %194 = vst [vmem:[%s121 + $0x1c] sm:$0xf] %v186
      %s195 = smul.u32 8, %s12
      %p196 = scmp.lt.s32.totalorder %s195, 15
      %s197 = scalar_select %p196, %s195, 15
      %s198 = smul.addr %s197, 4
      %s199 = scalar_lea.vmem %s1, %s198
      // Predicated region
      $region25: #{simple_cnn_forward.13} parent=23 // pred_check
        %p200 = pneg %p56
      $region26: #{simple_cnn_forward.13} parent=23 // pred_check_branch
        %202 = sbr.rel (%p200) target = $region28
      $region27: #{simple_cnn_forward.13} parent=23 // pred_region
        %s203 = smul.u32 8, %s12
      $region28: #{simple_cnn_forward.13} parent=23 // pred_fallthru
        _
    $region24: #{simple_cnn_forward.13} parent=5 // pred_fallthru
      _
    %p204 = scmp.le.s32.totalorder 2, %s7
    // Predicated region
    $region29: #{simple_cnn_forward.13} parent=5 // pred_check
      %p205 = pneg %p204
    $region30: #{simple_cnn_forward.13} parent=5 // pred_check_branch
      %207 = sbr.rel (%p205) target = $region32
    $region31: #{simple_cnn_forward.13} parent=5 // pred_region
      %s208 = ssub.s32 %s7, 2
      // Predicated region
      $region33: #{simple_cnn_forward.13} parent=31 // pred_check
        %p209 = pneg %p62
      $region34: #{simple_cnn_forward.13} parent=31 // pred_check_branch
        %211 = sbr.rel (%p209) target = $region36
      $region35: #{simple_cnn_forward.13} parent=31 // pred_region
        %s212 = smul.u32 8, %s13
        %p213 = scmp.lt.s32.totalorder %s212, 15
        %s214 = scalar_select %p213, %s212, 15
        %s215 = smul.addr %s214, 4
        %s216 = scalar_lea.vmem %s1, %s215
      $region36: #{simple_cnn_forward.13} parent=31 // pred_fallthru
        _
    $region32: #{simple_cnn_forward.13} parent=5 // pred_fallthru
      _
  $region6: #{simple_cnn_forward.13} parent=0 // loop_footer
    %s11 = sadd.s32 1, %s7
  $region7: #{simple_cnn_forward.13} parent=0 // loop_footer_branch
    %6 = sbr.rel target = $region3
  $region8: #{simple_cnn_forward.13} parent=0 // loop_exit
    _

// kernel: simple_cnn_forward.12
$region0: #{simple_cnn_forward.12}
  #allocation0 [shape = 'u32[]', space=smem, size = 0x4, offset = 0x4, fixed_abs, tag = 'smem constant byte address 0x4 - core index']
  #allocation1 [shape = 'u32[144,128]{1,0:T(1,128)}', space=vmem, size = 0x12000, scoped, tag = 'internal scratch']
  %s0 = inlined_call_operand.vmem [shape: bf16[512,576], index: 0, kind: input, shape index: {}]
  %s1 = inlined_call_operand.vmem [shape: bf16[576,128], index: 1, kind: input, shape index: {}]
  %s2 = inlined_call_operand.vmem [shape: f32[1,128], index: 2, kind: input, shape index: {}]
  %s3 = inlined_call_operand.vmem [shape: f32[512,128], index: 3, kind: output, shape index: {}]
  %s4 = sld [smem:[#allocation0]]
  $region30: #{simple_cnn_forward.12} parent=0
    _
  %s6 = ssub.s32 1, %s4
  %s7 = scalar_select 0, %s6, %s4
  // Predicated region
  $region2: #{simple_cnn_forward.12} parent=0 // pred_check
    _
  $region3: #{simple_cnn_forward.12} parent=0 // pred_check_branch
    %9 = sbr.rel (0) target = $region5
  $region4: #{simple_cnn_forward.12} parent=0 // pred_region
    _
  $region5: #{simple_cnn_forward.12} parent=0 // pred_fallthru
    _
  // Predicated region
  $region6: #{simple_cnn_forward.12} parent=0 // pred_check
    _
  $region7: #{simple_cnn_forward.12} parent=0 // pred_check_branch
    %11 = sbr.rel (0) target = $region9
  $region8: #{simple_cnn_forward.12} parent=0 // pred_region
    _
  $region9: #{simple_cnn_forward.12} parent=0 // pred_fallthru
    _
  // Predicated region
  $region10: #{simple_cnn_forward.12} parent=0 // pred_check
    _
  $region11: #{simple_cnn_forward.12} parent=0 // pred_check_branch
    %13 = sbr.rel (0) target = $region13
  $region12: #{simple_cnn_forward.12} parent=0 // pred_region
    _
  $region13: #{simple_cnn_forward.12} parent=0 // pred_fallthru
    _
  %p15 = scmp.eq.s32.totalorder 0, 0
  // Predicated region
  $region14: #{simple_cnn_forward.12} parent=0 // pred_check
    %p16 = pneg %p15
  $region15: #{simple_cnn_forward.12} parent=0 // pred_check_branch
    %18 = sbr.rel (%p16) target = $region17
  $region16: #{simple_cnn_forward.12} parent=0 // pred_region
    %19 = vst [vmem:[%s3] sm:$0xff] 0.0
    %20 = vst [vmem:[%s3 + $0x8] sm:$0xff] 0.0
    %21 = vst [vmem:[%s3 + $0x10] sm:$0xff] 0.0
    %22 = vst [vmem:[%s3 + $0x18] sm:$0xff] 0.0
    %23 = vst [vmem:[%s3 + $0x20] sm:$0xff] 0.0
    %24 = vst [vmem:[%s3 + $0x28] sm:$0xff] 0.0
    %25 = vst [vmem:[%s3 + $0x30] sm:$0xff] 0.0
    %26 = vst [vmem:[%s3 + $0x38] sm:$0xff] 0.0
    %27 = vst [vmem:[%s3 + $0x40] sm:$0xff] 0.0
    %28 = vst [vmem:[%s3 + $0x48] sm:$0xff] 0.0
    %29 = vst [vmem:[%s3 + $0x50] sm:$0xff] 0.0
    %30 = vst [vmem:[%s3 + $0x58] sm:$0xff] 0.0
    %31 = vst [vmem:[%s3 + $0x60] sm:$0xff] 0.0
    %32 = vst [vmem:[%s3 + $0x68] sm:$0xff] 0.0
    %33 = vst [vmem:[%s3 + $0x70] sm:$0xff] 0.0
    %34 = vst [vmem:[%s3 + $0x78] sm:$0xff] 0.0
    %35 = vst [vmem:[%s3 + $0x80] sm:$0xff] 0.0
    %36 = vst [vmem:[%s3 + $0x88] sm:$0xff] 0.0
    %37 = vst [vmem:[%s3 + $0x90] sm:$0xff] 0.0
    %38 = vst [vmem:[%s3 + $0x98] sm:$0xff] 0.0
    %39 = vst [vmem:[%s3 + $0xa0] sm:$0xff] 0.0
    %40 = vst [vmem:[%s3 + $0xa8] sm:$0xff] 0.0
    %41 = vst [vmem:[%s3 + $0xb0] sm:$0xff] 0.0
    %42 = vst [vmem:[%s3 + $0xb8] sm:$0xff] 0.0
    %43 = vst [vmem:[%s3 + $0xc0] sm:$0xff] 0.0
    %44 = vst [vmem:[%s3 + $0xc8] sm:$0xff] 0.0
    %45 = vst [vmem:[%s3 + $0xd0] sm:$0xff] 0.0
    %46 = vst [vmem:[%s3 + $0xd8] sm:$0xff] 0.0
    %47 = vst [vmem:[%s3 + $0xe0] sm:$0xff] 0.0
    %48 = vst [vmem:[%s3 + $0xe8] sm:$0xff] 0.0
    %49 = vst [vmem:[%s3 + $0xf0] sm:$0xff] 0.0
    %50 = vst [vmem:[%s3 + $0xf8] sm:$0xff] 0.0
    %51 = vst [vmem:[%s3 + $0x100] sm:$0xff] 0.0
    %52 = vst [vmem:[%s3 + $0x108] sm:$0xff] 0.0
    %53 = vst [vmem:[%s3 + $0x110] sm:$0xff] 0.0
    %54 = vst [vmem:[%s3 + $0x118] sm:$0xff] 0.0
    %55 = vst [vmem:[%s3 + $0x120] sm:$0xff] 0.0
    %56 = vst [vmem:[%s3 + $0x128] sm:$0xff] 0.0
    %57 = vst [vmem:[%s3 + $0x130] sm:$0xff] 0.0
    %58 = vst [vmem:[%s3 + $0x138] sm:$0xff] 0.0
    %59 = vst [vmem:[%s3 + $0x140] sm:$0xff] 0.0
    %60 = vst [vmem:[%s3 + $0x148] sm:$0xff] 0.0
    %61 = vst [vmem:[%s3 + $0x150] sm:$0xff] 0.0
    %62 = vst [vmem:[%s3 + $0x158] sm:$0xff] 0.0
    %63 = vst [vmem:[%s3 + $0x160] sm:$0xff] 0.0
    %64 = vst [vmem:[%s3 + $0x168] sm:$0xff] 0.0
    %65 = vst [vmem:[%s3 + $0x170] sm:$0xff] 0.0
    %66 = vst [vmem:[%s3 + $0x178] sm:$0xff] 0.0
    %67 = vst [vmem:[%s3 + $0x180] sm:$0xff] 0.0
    %68 = vst [vmem:[%s3 + $0x188] sm:$0xff] 0.0
    %69 = vst [vmem:[%s3 + $0x190] sm:$0xff] 0.0
    %70 = vst [vmem:[%s3 + $0x198] sm:$0xff] 0.0
    %71 = vst [vmem:[%s3 + $0x1a0] sm:$0xff] 0.0
    %72 = vst [vmem:[%s3 + $0x1a8] sm:$0xff] 0.0
    %73 = vst [vmem:[%s3 + $0x1b0] sm:$0xff] 0.0
    %74 = vst [vmem:[%s3 + $0x1b8] sm:$0xff] 0.0
    %75 = vst [vmem:[%s3 + $0x1c0] sm:$0xff] 0.0
    %76 = vst [vmem:[%s3 + $0x1c8] sm:$0xff] 0.0
    %77 = vst [vmem:[%s3 + $0x1d0] sm:$0xff] 0.0
    %78 = vst [vmem:[%s3 + $0x1d8] sm:$0xff] 0.0
    %79 = vst [vmem:[%s3 + $0x1e0] sm:$0xff] 0.0
    %80 = vst [vmem:[%s3 + $0x1e8] sm:$0xff] 0.0
    %81 = vst [vmem:[%s3 + $0x1f0] sm:$0xff] 0.0
    %82 = vst [vmem:[%s3 + $0x1f8] sm:$0xff] 0.0
  $region17: #{simple_cnn_forward.12} parent=0 // pred_fallthru
    _
  %v83 = vld [vmem:[%s3] sm:$0xff]
  %v84 = vld [vmem:[%s3 + $0x8] sm:$0xff]
  %v85 = vld [vmem:[%s3 + $0x10] sm:$0xff]
  %v86 = vld [vmem:[%s3 + $0x18] sm:$0xff]
  %v87 = vld [vmem:[%s3 + $0x20] sm:$0xff]
  %v88 = vld [vmem:[%s3 + $0x28] sm:$0xff]
  %v89 = vld [vmem:[%s3 + $0x30] sm:$0xff]
  %v90 = vld [vmem:[%s3 + $0x38] sm:$0xff]
  %v91 = vld [vmem:[%s3 + $0x40] sm:$0xff]
  %v92 = vld [vmem:[%s3 + $0x48] sm:$0xff]
  %v93 = vld [vmem:[%s3 + $0x50] sm:$0xff]
  %v94 = vld [vmem:[%s3 + $0x58] sm:$0xff]
  %v95 = vld [vmem:[%s3 + $0x60] sm:$0xff]
  %v96 = vld [vmem:[%s3 + $0x68] sm:$0xff]
  %v97 = vld [vmem:[%s3 + $0x70] sm:$0xff]
  %v98 = vld [vmem:[%s3 + $0x78] sm:$0xff]
  %v99 = vld [vmem:[%s3 + $0x80] sm:$0xff]
  %v100 = vld [vmem:[%s3 + $0x88] sm:$0xff]
  %v101 = vld [vmem:[%s3 + $0x90] sm:$0xff]
  %v102 = vld [vmem:[%s3 + $0x98] sm:$0xff]
  %v103 = vld [vmem:[%s3 + $0xa0] sm:$0xff]
  %v104 = vld [vmem:[%s3 + $0xa8] sm:$0xff]
  %v105 = vld [vmem:[%s3 + $0xb0] sm:$0xff]
  %v106 = vld [vmem:[%s3 + $0xb8] sm:$0xff]
  %v107 = vld [vmem:[%s3 + $0xc0] sm:$0xff]
  %v108 = vld [vmem:[%s3 + $0xc8] sm:$0xff]
  %v109 = vld [vmem:[%s3 + $0xd0] sm:$0xff]
  %v110 = vld [vmem:[%s3 + $0xd8] sm:$0xff]
  %v111 = vld [vmem:[%s3 + $0xe0] sm:$0xff]
  %v112 = vld [vmem:[%s3 + $0xe8] sm:$0xff]
  %v113 = vld [vmem:[%s3 + $0xf0] sm:$0xff]
  %v114 = vld [vmem:[%s3 + $0xf8] sm:$0xff]
  %v115 = vld [vmem:[%s3 + $0x100] sm:$0xff]
  %v116 = vld [vmem:[%s3 + $0x108] sm:$0xff]
  %v117 = vld [vmem:[%s3 + $0x110] sm:$0xff]
  %v118 = vld [vmem:[%s3 + $0x118] sm:$0xff]
  %v119 = vld [vmem:[%s3 + $0x120] sm:$0xff]
  %v120 = vld [vmem:[%s3 + $0x128] sm:$0xff]
  %v121 = vld [vmem:[%s3 + $0x130] sm:$0xff]
  %v122 = vld [vmem:[%s3 + $0x138] sm:$0xff]
  %v123 = vld [vmem:[%s3 + $0x140] sm:$0xff]
  %v124 = vld [vmem:[%s3 + $0x148] sm:$0xff]
  %v125 = vld [vmem:[%s3 + $0x150] sm:$0xff]
  %v126 = vld [vmem:[%s3 + $0x158] sm:$0xff]
  %v127 = vld [vmem:[%s3 + $0x160] sm:$0xff]
  %v128 = vld [vmem:[%s3 + $0x168] sm:$0xff]
  %v129 = vld [vmem:[%s3 + $0x170] sm:$0xff]
  %v130 = vld [vmem:[%s3 + $0x178] sm:$0xff]
  %v131 = vld [vmem:[%s3 + $0x180] sm:$0xff]
  %v132 = vld [vmem:[%s3 + $0x188] sm:$0xff]
  %v133 = vld [vmem:[%s3 + $0x190] sm:$0xff]
  %v134 = vld [vmem:[%s3 + $0x198] sm:$0xff]
  %v135 = vld [vmem:[%s3 + $0x1a0] sm:$0xff]
  %v136 = vld [vmem:[%s3 + $0x1a8] sm:$0xff]
  %v137 = vld [vmem:[%s3 + $0x1b0] sm:$0xff]
  %v138 = vld [vmem:[%s3 + $0x1b8] sm:$0xff]
  %v139 = vld [vmem:[%s3 + $0x1c0] sm:$0xff]
  %v140 = vld [vmem:[%s3 + $0x1c8] sm:$0xff]
  %v141 = vld [vmem:[%s3 + $0x1d0] sm:$0xff]
  %v142 = vld [vmem:[%s3 + $0x1d8] sm:$0xff]
  %v143 = vld [vmem:[%s3 + $0x1e0] sm:$0xff]
  %v144 = vld [vmem:[%s3 + $0x1e8] sm:$0xff]
  %v145 = vld [vmem:[%s3 + $0x1f0] sm:$0xff]
  %v146 = vld [vmem:[%s3 + $0x1f8] sm:$0xff]
  %v147 = vld [vmem:[%s0] sm:$0xff]
  %v148 = vld [vmem:[%s0 + $0x8] sm:$0xff]
  %v149 = vld [vmem:[%s0 + $0x10] sm:$0xf]
  %v150 = vld [vmem:[%s0 + $0x14] sm:$0xff]
  %v151 = vld [vmem:[%s0 + $0x1c] sm:$0xff]
  %v152 = vld [vmem:[%s0 + $0x24] sm:$0xf]
  %v153 = vld [vmem:[%s0 + $0x28] sm:$0xff]
  %v154 = vld [vmem:[%s0 + $0x30] sm:$0xff]
  %v155 = vld [vmem:[%s0 + $0x38] sm:$0xf]
  %v156 = vld [vmem:[%s0 + $0x3c] sm:$0xff]
  %v157 = vld [vmem:[%s0 + $0x44] sm:$0xff]
  %v158 = vld [vmem:[%s0 + $0x4c] sm:$0xf]
  %v159 = vld [vmem:[%s0 + $0x50] sm:$0xff]
  %v160 = vld [vmem:[%s0 + $0x58] sm:$0xff]
  %v161 = vld [vmem:[%s0 + $0x60] sm:$0xf]
  %v162 = vld [vmem:[%s0 + $0x64] sm:$0xff]
  %v163 = vld [vmem:[%s0 + $0x6c] sm:$0xff]
  %v164 = vld [vmem:[%s0 + $0x74] sm:$0xf]
  %v165 = vld [vmem:[%s0 + $0x78] sm:$0xff]
  %v166 = vld [vmem:[%s0 + $0x80] sm:$0xff]
  %v167 = vld [vmem:[%s0 + $0x88] sm:$0xf]
  %v168 = vld [vmem:[%s0 + $0x8c] sm:$0xff]
  %v169 = vld [vmem:[%s0 + $0x94] sm:$0xff]
  %v170 = vld [vmem:[%s0 + $0x9c] sm:$0xf]
  %v171 = vld [vmem:[%s0 + $0xa0] sm:$0xff]
  %v172 = vld [vmem:[%s0 + $0xa8] sm:$0xff]
  %v173 = vld [vmem:[%s0 + $0xb0] sm:$0xf]
  %v174 = vld [vmem:[%s0 + $0xb4] sm:$0xff]
  %v175 = vld [vmem:[%s0 + $0xbc] sm:$0xff]
  %v176 = vld [vmem:[%s0 + $0xc4] sm:$0xf]
  %v177 = vld [vmem:[%s0 + $0xc8] sm:$0xff]
  %v178 = vld [vmem:[%s0 + $0xd0] sm:$0xff]
  %v179 = vld [vmem:[%s0 + $0xd8] sm:$0xf]
  %v180 = vld [vmem:[%s0 + $0xdc] sm:$0xff]
  %v181 = vld [vmem:[%s0 + $0xe4] sm:$0xff]
  %v182 = vld [vmem:[%s0 + $0xec] sm:$0xf]
  %v183 = vld [vmem:[%s0 + $0xf0] sm:$0xff]
  %v184 = vld [vmem:[%s0 + $0xf8] sm:$0xff]
  %v185 = vld [vmem:[%s0 + $0x100] sm:$0xf]
  %v186 = vld [vmem:[%s0 + $0x104] sm:$0xff]
  %v187 = vld [vmem:[%s0 + $0x10c] sm:$0xff]
  %v188 = vld [vmem:[%s0 + $0x114] sm:$0xf]
  %v189 = vld [vmem:[%s0 + $0x118] sm:$0xff]
  %v190 = vld [vmem:[%s0 + $0x120] sm:$0xff]
  %v191 = vld [vmem:[%s0 + $0x128] sm:$0xf]
  %v192 = vld [vmem:[%s0 + $0x12c] sm:$0xff]
  %v193 = vld [vmem:[%s0 + $0x134] sm:$0xff]
  %v194 = vld [vmem:[%s0 + $0x13c] sm:$0xf]
  %v195 = vld [vmem:[%s0 + $0x140] sm:$0xff]
  %v196 = vld [vmem:[%s0 + $0x148] sm:$0xff]
  %v197 = vld [vmem:[%s0 + $0x150] sm:$0xf]
  %v198 = vld [vmem:[%s0 + $0x154] sm:$0xff]
  %v199 = vld [vmem:[%s0 + $0x15c] sm:$0xff]
  %v200 = vld [vmem:[%s0 + $0x164] sm:$0xf]
  %v201 = vld [vmem:[%s0 + $0x168] sm:$0xff]
  %v202 = vld [vmem:[%s0 + $0x170] sm:$0xff]
  %v203 = vld [vmem:[%s0 + $0x178] sm:$0xf]
  %v204 = vld [vmem:[%s0 + $0x17c] sm:$0xff]
  %v205 = vld [vmem:[%s0 + $0x184] sm:$0xff]
  %v206 = vld [vmem:[%s0 + $0x18c] sm:$0xf]
  %v207 = vld [vmem:[%s0 + $0x190] sm:$0xff]
  %v208 = vld [vmem:[%s0 + $0x198] sm:$0xff]
  %v209 = vld [vmem:[%s0 + $0x1a0] sm:$0xf]
  %v210 = vld [vmem:[%s0 + $0x1a4] sm:$0xff]
  %v211 = vld [vmem:[%s0 + $0x1ac] sm:$0xff]
  %v212 = vld [vmem:[%s0 + $0x1b4] sm:$0xf]
  %v213 = vld [vmem:[%s0 + $0x1b8] sm:$0xff]
  %v214 = vld [vmem:[%s0 + $0x1c0] sm:$0xff]
  %v215 = vld [vmem:[%s0 + $0x1c8] sm:$0xf]
  %v216 = vld [vmem:[%s0 + $0x1cc] sm:$0xff]
  %v217 = vld [vmem:[%s0 + $0x1d4] sm:$0xff]
  %v218 = vld [vmem:[%s0 + $0x1dc] sm:$0xf]
  %v219 = vld [vmem:[%s0 + $0x1e0] sm:$0xff]
  %v220 = vld [vmem:[%s0 + $0x1e8] sm:$0xff]
  %v221 = vld [vmem:[%s0 + $0x1f0] sm:$0xf]
  %v222 = vld [vmem:[%s0 + $0x1f4] sm:$0xff]
  %v223 = vld [vmem:[%s0 + $0x1fc] sm:$0xff]
  %v224 = vld [vmem:[%s0 + $0x204] sm:$0xf]
  %v225 = vld [vmem:[%s0 + $0x208] sm:$0xff]
  %v226 = vld [vmem:[%s0 + $0x210] sm:$0xff]
  %v227 = vld [vmem:[%s0 + $0x218] sm:$0xf]
  %v228 = vld [vmem:[%s0 + $0x21c] sm:$0xff]
  %v229 = vld [vmem:[%s0 + $0x224] sm:$0xff]
  %v230 = vld [vmem:[%s0 + $0x22c] sm:$0xf]
  %v231 = vld [vmem:[%s0 + $0x230] sm:$0xff]
  %v232 = vld [vmem:[%s0 + $0x238] sm:$0xff]
  %v233 = vld [vmem:[%s0 + $0x240] sm:$0xf]
  %v234 = vld [vmem:[%s0 + $0x244] sm:$0xff]
  %v235 = vld [vmem:[%s0 + $0x24c] sm:$0xff]
  %v236 = vld [vmem:[%s0 + $0x254] sm:$0xf]
  %v237 = vld [vmem:[%s0 + $0x258] sm:$0xff]
  %v238 = vld [vmem:[%s0 + $0x260] sm:$0xff]
  %v239 = vld [vmem:[%s0 + $0x268] sm:$0xf]
  %v240 = vld [vmem:[%s0 + $0x26c] sm:$0xff]
  %v241 = vld [vmem:[%s0 + $0x274] sm:$0xff]
  %v242 = vld [vmem:[%s0 + $0x27c] sm:$0xf]
  %v243 = vld [vmem:[%s0 + $0x280] sm:$0xff]
  %v244 = vld [vmem:[%s0 + $0x288] sm:$0xff]
  %v245 = vld [vmem:[%s0 + $0x290] sm:$0xf]
  %v246 = vld [vmem:[%s0 + $0x294] sm:$0xff]
  %v247 = vld [vmem:[%s0 + $0x29c] sm:$0xff]
  %v248 = vld [vmem:[%s0 + $0x2a4] sm:$0xf]
  %v249 = vld [vmem:[%s0 + $0x2a8] sm:$0xff]
  %v250 = vld [vmem:[%s0 + $0x2b0] sm:$0xff]
  %v251 = vld [vmem:[%s0 + $0x2b8] sm:$0xf]
  %v252 = vld [vmem:[%s0 + $0x2bc] sm:$0xff]
  %v253 = vld [vmem:[%s0 + $0x2c4] sm:$0xff]
  %v254 = vld [vmem:[%s0 + $0x2cc] sm:$0xf]
  %v255 = vld [vmem:[%s0 + $0x2d0] sm:$0xff]
  %v256 = vld [vmem:[%s0 + $0x2d8] sm:$0xff]
  %v257 = vld [vmem:[%s0 + $0x2e0] sm:$0xf]
  %v258 = vld [vmem:[%s0 + $0x2e4] sm:$0xff]
  %v259 = vld [vmem:[%s0 + $0x2ec] sm:$0xff]
  %v260 = vld [vmem:[%s0 + $0x2f4] sm:$0xf]
  %v261 = vld [vmem:[%s0 + $0x2f8] sm:$0xff]
  %v262 = vld [vmem:[%s0 + $0x300] sm:$0xff]
  %v263 = vld [vmem:[%s0 + $0x308] sm:$0xf]
  %v264 = vld [vmem:[%s0 + $0x30c] sm:$0xff]
  %v265 = vld [vmem:[%s0 + $0x314] sm:$0xff]
  %v266 = vld [vmem:[%s0 + $0x31c] sm:$0xf]
  %v267 = vld [vmem:[%s0 + $0x320] sm:$0xff]
  %v268 = vld [vmem:[%s0 + $0x328] sm:$0xff]
  %v269 = vld [vmem:[%s0 + $0x330] sm:$0xf]
  %v270 = vld [vmem:[%s0 + $0x334] sm:$0xff]
  %v271 = vld [vmem:[%s0 + $0x33c] sm:$0xff]
  %v272 = vld [vmem:[%s0 + $0x344] sm:$0xf]
  %v273 = vld [vmem:[%s0 + $0x348] sm:$0xff]
  %v274 = vld [vmem:[%s0 + $0x350] sm:$0xff]
  %v275 = vld [vmem:[%s0 + $0x358] sm:$0xf]
  %v276 = vld [vmem:[%s0 + $0x35c] sm:$0xff]
  %v277 = vld [vmem:[%s0 + $0x364] sm:$0xff]
  %v278 = vld [vmem:[%s0 + $0x36c] sm:$0xf]
  %v279 = vld [vmem:[%s0 + $0x370] sm:$0xff]
  %v280 = vld [vmem:[%s0 + $0x378] sm:$0xff]
  %v281 = vld [vmem:[%s0 + $0x380] sm:$0xf]
  %v282 = vld [vmem:[%s0 + $0x384] sm:$0xff]
  %v283 = vld [vmem:[%s0 + $0x38c] sm:$0xff]
  %v284 = vld [vmem:[%s0 + $0x394] sm:$0xf]
  %v285 = vld [vmem:[%s0 + $0x398] sm:$0xff]
  %v286 = vld [vmem:[%s0 + $0x3a0] sm:$0xff]
  %v287 = vld [vmem:[%s0 + $0x3a8] sm:$0xf]
  %v288 = vld [vmem:[%s0 + $0x3ac] sm:$0xff]
  %v289 = vld [vmem:[%s0 + $0x3b4] sm:$0xff]
  %v290 = vld [vmem:[%s0 + $0x3bc] sm:$0xf]
  %v291 = vld [vmem:[%s0 + $0x3c0] sm:$0xff]
  %v292 = vld [vmem:[%s0 + $0x3c8] sm:$0xff]
  %v293 = vld [vmem:[%s0 + $0x3d0] sm:$0xf]
  %v294 = vld [vmem:[%s0 + $0x3d4] sm:$0xff]
  %v295 = vld [vmem:[%s0 + $0x3dc] sm:$0xff]
  %v296 = vld [vmem:[%s0 + $0x3e4] sm:$0xf]
  %v297 = vld [vmem:[%s0 + $0x3e8] sm:$0xff]
  %v298 = vld [vmem:[%s0 + $0x3f0] sm:$0xff]
  %v299 = vld [vmem:[%s0 + $0x3f8] sm:$0xf]
  %v300 = vld [vmem:[%s0 + $0x3fc] sm:$0xff]
  %v301 = vld [vmem:[%s0 + $0x404] sm:$0xff]
  %v302 = vld [vmem:[%s0 + $0x40c] sm:$0xf]
  %v303 = vld [vmem:[%s0 + $0x410] sm:$0xff]
  %v304 = vld [vmem:[%s0 + $0x418] sm:$0xff]
  %v305 = vld [vmem:[%s0 + $0x420] sm:$0xf]
  %v306 = vld [vmem:[%s0 + $0x424] sm:$0xff]
  %v307 = vld [vmem:[%s0 + $0x42c] sm:$0xff]
  %v308 = vld [vmem:[%s0 + $0x434] sm:$0xf]
  %v309 = vld [vmem:[%s0 + $0x438] sm:$0xff]
  %v310 = vld [vmem:[%s0 + $0x440] sm:$0xff]
  %v311 = vld [vmem:[%s0 + $0x448] sm:$0xf]
  %v312 = vld [vmem:[%s0 + $0x44c] sm:$0xff]
  %v313 = vld [vmem:[%s0 + $0x454] sm:$0xff]
  %v314 = vld [vmem:[%s0 + $0x45c] sm:$0xf]
  %v315 = vld [vmem:[%s0 + $0x460] sm:$0xff]
  %v316 = vld [vmem:[%s0 + $0x468] sm:$0xff]
  %v317 = vld [vmem:[%s0 + $0x470] sm:$0xf]
  %v318 = vld [vmem:[%s0 + $0x474] sm:$0xff]
  %v319 = vld [vmem:[%s0 + $0x47c] sm:$0xff]
  %v320 = vld [vmem:[%s0 + $0x484] sm:$0xf]
  %v321 = vld [vmem:[%s0 + $0x488] sm:$0xff]
  %v322 = vld [vmem:[%s0 + $0x490] sm:$0xff]
  %v323 = vld [vmem:[%s0 + $0x498] sm:$0xf]
  %v324 = vld [vmem:[%s0 + $0x49c] sm:$0xff]
  %v325 = vld [vmem:[%s0 + $0x4a4] sm:$0xff]
  %v326 = vld [vmem:[%s0 + $0x4ac] sm:$0xf]
  %v327 = vld [vmem:[%s0 + $0x4b0] sm:$0xff]
  %v328 = vld [vmem:[%s0 + $0x4b8] sm:$0xff]
  %v329 = vld [vmem:[%s0 + $0x4c0] sm:$0xf]
  %v330 = vld [vmem:[%s0 + $0x4c4] sm:$0xff]
  %v331 = vld [vmem:[%s0 + $0x4cc] sm:$0xff]
  %v332 = vld [vmem:[%s0 + $0x4d4] sm:$0xf]
  %v333 = vld [vmem:[%s0 + $0x4d8] sm:$0xff]
  %v334 = vld [vmem:[%s0 + $0x4e0] sm:$0xff]
  %v335 = vld [vmem:[%s0 + $0x4e8] sm:$0xf]
  %v336 = vld [vmem:[%s0 + $0x4ec] sm:$0xff]
  %v337 = vld [vmem:[%s0 + $0x4f4] sm:$0xff]
  %v338 = vld [vmem:[%s0 + $0x4fc] sm:$0xf]
  %v339 = vld [vmem:[%s1] sm:$0xf]
  %v340 = vld [vmem:[%s1 + $0x4] sm:$0xf]
  %v341 = vld [vmem:[%s1 + $0x8] sm:$0xf]
  %v342 = vld [vmem:[%s1 + $0xc] sm:$0xf]
  %v343 = vld [vmem:[%s1 + $0x10] sm:$0xf]
  %v344 = vld [vmem:[%s1 + $0x14] sm:$0xf]
  %v345 = vld [vmem:[%s1 + $0x18] sm:$0xf]
  %v346 = vld [vmem:[%s1 + $0x1c] sm:$0xf]
  %v347 = vld [vmem:[%s1 + $0x20] sm:$0xf]
  %v348 = vld [vmem:[%s1 + $0x24] sm:$0xf]
  %v349 = vld [vmem:[%s1 + $0x28] sm:$0xf]
  %v350 = vld [vmem:[%s1 + $0x2c] sm:$0xf]
  %v351 = vld [vmem:[%s1 + $0x30] sm:$0xf]
  %v352 = vld [vmem:[%s1 + $0x34] sm:$0xf]
  %v353 = vld [vmem:[%s1 + $0x38] sm:$0xf]
  %v354 = vld [vmem:[%s1 + $0x3c] sm:$0xf]
  %v355 = vld [vmem:[%s1 + $0x40] sm:$0xf]
  %v356 = vld [vmem:[%s1 + $0x44] sm:$0xf]
  %v357 = vld [vmem:[%s1 + $0x48] sm:$0xf]
  %v358 = vld [vmem:[%s1 + $0x4c] sm:$0xf]
  %v359 = vld [vmem:[%s1 + $0x50] sm:$0xf]
  %v360 = vld [vmem:[%s1 + $0x54] sm:$0xf]
  %v361 = vld [vmem:[%s1 + $0x58] sm:$0xf]
  %v362 = vld [vmem:[%s1 + $0x5c] sm:$0xf]
  %v363 = vld [vmem:[%s1 + $0x60] sm:$0xf]
  %v364 = vld [vmem:[%s1 + $0x64] sm:$0xf]
  %v365 = vld [vmem:[%s1 + $0x68] sm:$0xf]
  %v366 = vld [vmem:[%s1 + $0x6c] sm:$0xf]
  %v367 = vld [vmem:[%s1 + $0x70] sm:$0xf]
  %v368 = vld [vmem:[%s1 + $0x74] sm:$0xf]
  %v369 = vld [vmem:[%s1 + $0x78] sm:$0xf]
  %v370 = vld [vmem:[%s1 + $0x7c] sm:$0xf]
  %v371 = vld [vmem:[%s1 + $0x80] sm:$0xf]
  %v372 = vld [vmem:[%s1 + $0x84] sm:$0xf]
  %v373 = vld [vmem:[%s1 + $0x88] sm:$0xf]
  %v374 = vld [vmem:[%s1 + $0x8c] sm:$0xf]
  %v375 = vld [vmem:[%s1 + $0x90] sm:$0xf]
  %v376 = vld [vmem:[%s1 + $0x94] sm:$0xf]
  %v377 = vld [vmem:[%s1 + $0x98] sm:$0xf]
  %v378 = vld [vmem:[%s1 + $0x9c] sm:$0xf]
  %v379 = vld [vmem:[%s1 + $0xa0] sm:$0xf]
  %v380 = vld [vmem:[%s1 + $0xa4] sm:$0xf]
  %v381 = vld [vmem:[%s1 + $0xa8] sm:$0xf]
  %v382 = vld [vmem:[%s1 + $0xac] sm:$0xf]
  %v383 = vld [vmem:[%s1 + $0xb0] sm:$0xf]
  %v384 = vld [vmem:[%s1 + $0xb4] sm:$0xf]
  %v385 = vld [vmem:[%s1 + $0xb8] sm:$0xf]
  %v386 = vld [vmem:[%s1 + $0xbc] sm:$0xf]
  %v387 = vld [vmem:[%s1 + $0xc0] sm:$0xf]
  %v388 = vld [vmem:[%s1 + $0xc4] sm:$0xf]
  %v389 = vld [vmem:[%s1 + $0xc8] sm:$0xf]
  %v390 = vld [vmem:[%s1 + $0xcc] sm:$0xf]
  %v391 = vld [vmem:[%s1 + $0xd0] sm:$0xf]
  %v392 = vld [vmem:[%s1 + $0xd4] sm:$0xf]
  %v393 = vld [vmem:[%s1 + $0xd8] sm:$0xf]
  %v394 = vld [vmem:[%s1 + $0xdc] sm:$0xf]
  %v395 = vld [vmem:[%s1 + $0xe0] sm:$0xf]
  %v396 = vld [vmem:[%s1 + $0xe4] sm:$0xf]
  %v397 = vld [vmem:[%s1 + $0xe8] sm:$0xf]
  %v398 = vld [vmem:[%s1 + $0xec] sm:$0xf]
  %v399 = vld [vmem:[%s1 + $0xf0] sm:$0xf]
  %v400 = vld [vmem:[%s1 + $0xf4] sm:$0xf]
  %v401 = vld [vmem:[%s1 + $0xf8] sm:$0xf]
  %v402 = vld [vmem:[%s1 + $0xfc] sm:$0xf]
  %v403 = vld [vmem:[%s1 + $0x100] sm:$0xf]
  %v404 = vld [vmem:[%s1 + $0x104] sm:$0xf]
  %v405 = vld [vmem:[%s1 + $0x108] sm:$0xf]
  %v406 = vld [vmem:[%s1 + $0x10c] sm:$0xf]
  %v407 = vld [vmem:[%s1 + $0x110] sm:$0xf]
  %v408 = vld [vmem:[%s1 + $0x114] sm:$0xf]
  %v409 = vld [vmem:[%s1 + $0x118] sm:$0xf]
  %v410 = vld [vmem:[%s1 + $0x11c] sm:$0xf]
  %v603 = vunpack.c.l.b16 %v147
  %v604 = vunpack.c.h.b16 %v147
  %v605 = vunpack.c.l.b16 %v148
  %v606 = vunpack.c.h.b16 %v148
  %v607 = vunpack.c.l.b16 %v149
  %v608 = vunpack.c.l.b16 %v150
  %v609 = vunpack.c.h.b16 %v150
  %v610 = vunpack.c.l.b16 %v151
  %v611 = vunpack.c.h.b16 %v151
  %v612 = vunpack.c.l.b16 %v152
  %v613 = vunpack.c.l.b16 %v153
  %v614 = vunpack.c.h.b16 %v153
  %v615 = vunpack.c.l.b16 %v154
  %v616 = vunpack.c.h.b16 %v154
  %v617 = vunpack.c.l.b16 %v155
  %v618 = vunpack.c.l.b16 %v156
  %v619 = vunpack.c.h.b16 %v156
  %v620 = vunpack.c.l.b16 %v157
  %v621 = vunpack.c.h.b16 %v157
  %v622 = vunpack.c.l.b16 %v158
  %v623 = vunpack.c.l.b16 %v159
  %v624 = vunpack.c.h.b16 %v159
  %v625 = vunpack.c.l.b16 %v160
  %v626 = vunpack.c.h.b16 %v160
  %v627 = vunpack.c.l.b16 %v161
  %v628 = vunpack.c.l.b16 %v162
  %v629 = vunpack.c.h.b16 %v162
  %v630 = vunpack.c.l.b16 %v163
  %v631 = vunpack.c.h.b16 %v163
  %v632 = vunpack.c.l.b16 %v164
  %v633 = vunpack.c.l.b16 %v165
  %v634 = vunpack.c.h.b16 %v165
  %v635 = vunpack.c.l.b16 %v166
  %v636 = vunpack.c.h.b16 %v166
  %v637 = vunpack.c.l.b16 %v167
  %v638 = vunpack.c.l.b16 %v168
  %v639 = vunpack.c.h.b16 %v168
  %v640 = vunpack.c.l.b16 %v169
  %v641 = vunpack.c.h.b16 %v169
  %v642 = vunpack.c.l.b16 %v170
  %v643 = vunpack.c.l.b16 %v171
  %v644 = vunpack.c.h.b16 %v171
  %v645 = vunpack.c.l.b16 %v172
  %v646 = vunpack.c.h.b16 %v172
  %v647 = vunpack.c.l.b16 %v173
  %v648 = vunpack.c.l.b16 %v174
  %v649 = vunpack.c.h.b16 %v174
  %v650 = vunpack.c.l.b16 %v175
  %v651 = vunpack.c.h.b16 %v175
  %v652 = vunpack.c.l.b16 %v176
  %v653 = vunpack.c.l.b16 %v177
  %v654 = vunpack.c.h.b16 %v177
  %v655 = vunpack.c.l.b16 %v178
  %v656 = vunpack.c.h.b16 %v178
  %v657 = vunpack.c.l.b16 %v179
  %v658 = vunpack.c.l.b16 %v180
  %v659 = vunpack.c.h.b16 %v180
  %v660 = vunpack.c.l.b16 %v181
  %v661 = vunpack.c.h.b16 %v181
  %v662 = vunpack.c.l.b16 %v182
  %v663 = vunpack.c.l.b16 %v183
  %v664 = vunpack.c.h.b16 %v183
  %v665 = vunpack.c.l.b16 %v184
  %v666 = vunpack.c.h.b16 %v184
  %v667 = vunpack.c.l.b16 %v185
  %v668 = vunpack.c.l.b16 %v186
  %v669 = vunpack.c.h.b16 %v186
  %v670 = vunpack.c.l.b16 %v187
  %v671 = vunpack.c.h.b16 %v187
  %v672 = vunpack.c.l.b16 %v188
  %v673 = vunpack.c.l.b16 %v189
  %v674 = vunpack.c.h.b16 %v189
  %v675 = vunpack.c.l.b16 %v190
  %v676 = vunpack.c.h.b16 %v190
  %v677 = vunpack.c.l.b16 %v191
  %v678 = vunpack.c.l.b16 %v192
  %v679 = vunpack.c.h.b16 %v192
  %v680 = vunpack.c.l.b16 %v193
  %v681 = vunpack.c.h.b16 %v193
  %v682 = vunpack.c.l.b16 %v194
  %v683 = vunpack.c.l.b16 %v195
  %v684 = vunpack.c.h.b16 %v195
  %v685 = vunpack.c.l.b16 %v196
  %v686 = vunpack.c.h.b16 %v196
  %v687 = vunpack.c.l.b16 %v197
  %v688 = vunpack.c.l.b16 %v198
  %v689 = vunpack.c.h.b16 %v198
  %v690 = vunpack.c.l.b16 %v199
  %v691 = vunpack.c.h.b16 %v199
  %v692 = vunpack.c.l.b16 %v200
  %v693 = vunpack.c.l.b16 %v201
  %v694 = vunpack.c.h.b16 %v201
  %v695 = vunpack.c.l.b16 %v202
  %v696 = vunpack.c.h.b16 %v202
  %v697 = vunpack.c.l.b16 %v203
  %v698 = vunpack.c.l.b16 %v204
  %v699 = vunpack.c.h.b16 %v204
  %v700 = vunpack.c.l.b16 %v205
  %v701 = vunpack.c.h.b16 %v205
  %v702 = vunpack.c.l.b16 %v206
  %v703 = vunpack.c.l.b16 %v207
  %v704 = vunpack.c.h.b16 %v207
  %v705 = vunpack.c.l.b16 %v208
  %v706 = vunpack.c.h.b16 %v208
  %v707 = vunpack.c.l.b16 %v209
  %v708 = vunpack.c.l.b16 %v210
  %v709 = vunpack.c.h.b16 %v210
  %v710 = vunpack.c.l.b16 %v211
  %v711 = vunpack.c.h.b16 %v211
  %v712 = vunpack.c.l.b16 %v212
  %v713 = vunpack.c.l.b16 %v213
  %v714 = vunpack.c.h.b16 %v213
  %v715 = vunpack.c.l.b16 %v214
  %v716 = vunpack.c.h.b16 %v214
  %v717 = vunpack.c.l.b16 %v215
  %v718 = vunpack.c.l.b16 %v216
  %v719 = vunpack.c.h.b16 %v216
  %v720 = vunpack.c.l.b16 %v217
  %v721 = vunpack.c.h.b16 %v217
  %v722 = vunpack.c.l.b16 %v218
  %v723 = vunpack.c.l.b16 %v219
  %v724 = vunpack.c.h.b16 %v219
  %v725 = vunpack.c.l.b16 %v220
  %v726 = vunpack.c.h.b16 %v220
  %v727 = vunpack.c.l.b16 %v221
  %v728 = vunpack.c.l.b16 %v222
  %v729 = vunpack.c.h.b16 %v222
  %v730 = vunpack.c.l.b16 %v223
  %v731 = vunpack.c.h.b16 %v223
  %v732 = vunpack.c.l.b16 %v224
  %v733 = vunpack.c.l.b16 %v225
  %v734 = vunpack.c.h.b16 %v225
  %v735 = vunpack.c.l.b16 %v226
  %v736 = vunpack.c.h.b16 %v226
  %v737 = vunpack.c.l.b16 %v227
  %v738 = vunpack.c.l.b16 %v228
  %v739 = vunpack.c.h.b16 %v228
  %v740 = vunpack.c.l.b16 %v229
  %v741 = vunpack.c.h.b16 %v229
  %v742 = vunpack.c.l.b16 %v230
  %v743 = vunpack.c.l.b16 %v231
  %v744 = vunpack.c.h.b16 %v231
  %v745 = vunpack.c.l.b16 %v232
  %v746 = vunpack.c.h.b16 %v232
  %v747 = vunpack.c.l.b16 %v233
  %v748 = vunpack.c.l.b16 %v234
  %v749 = vunpack.c.h.b16 %v234
  %v750 = vunpack.c.l.b16 %v235
  %v751 = vunpack.c.h.b16 %v235
  %v752 = vunpack.c.l.b16 %v236
  %v753 = vunpack.c.l.b16 %v237
  %v754 = vunpack.c.h.b16 %v237
  %v755 = vunpack.c.l.b16 %v238
  %v756 = vunpack.c.h.b16 %v238
  %v757 = vunpack.c.l.b16 %v239
  %v758 = vunpack.c.l.b16 %v240
  %v759 = vunpack.c.h.b16 %v240
  %v760 = vunpack.c.l.b16 %v241
  %v761 = vunpack.c.h.b16 %v241
  %v762 = vunpack.c.l.b16 %v242
  %v763 = vunpack.c.l.b16 %v243
  %v764 = vunpack.c.h.b16 %v243
  %v765 = vunpack.c.l.b16 %v244
  %v766 = vunpack.c.h.b16 %v244
  %v767 = vunpack.c.l.b16 %v245
  %v768 = vunpack.c.l.b16 %v246
  %v769 = vunpack.c.h.b16 %v246
  %v770 = vunpack.c.l.b16 %v247
  %v771 = vunpack.c.h.b16 %v247
  %v772 = vunpack.c.l.b16 %v248
  %v773 = vunpack.c.l.b16 %v249
  %v774 = vunpack.c.h.b16 %v249
  %v775 = vunpack.c.l.b16 %v250
  %v776 = vunpack.c.h.b16 %v250
  %v777 = vunpack.c.l.b16 %v251
  %v778 = vunpack.c.l.b16 %v252
  %v779 = vunpack.c.h.b16 %v252
  %v780 = vunpack.c.l.b16 %v253
  %v781 = vunpack.c.h.b16 %v253
  %v782 = vunpack.c.l.b16 %v254
  %v783 = vunpack.c.l.b16 %v255
  %v784 = vunpack.c.h.b16 %v255
  %v785 = vunpack.c.l.b16 %v256
  %v786 = vunpack.c.h.b16 %v256
  %v787 = vunpack.c.l.b16 %v257
  %v788 = vunpack.c.l.b16 %v258
  %v789 = vunpack.c.h.b16 %v258
  %v790 = vunpack.c.l.b16 %v259
  %v791 = vunpack.c.h.b16 %v259
  %v792 = vunpack.c.l.b16 %v260
  %v793 = vunpack.c.l.b16 %v261
  %v794 = vunpack.c.h.b16 %v261
  %v795 = vunpack.c.l.b16 %v262
  %v796 = vunpack.c.h.b16 %v262
  %v797 = vunpack.c.l.b16 %v263
  %v798 = vunpack.c.l.b16 %v264
  %v799 = vunpack.c.h.b16 %v264
  %v800 = vunpack.c.l.b16 %v265
  %v801 = vunpack.c.h.b16 %v265
  %v802 = vunpack.c.l.b16 %v266
  %v803 = vunpack.c.l.b16 %v267
  %v804 = vunpack.c.h.b16 %v267
  %v805 = vunpack.c.l.b16 %v268
  %v806 = vunpack.c.h.b16 %v268
  %v807 = vunpack.c.l.b16 %v269
  %v808 = vunpack.c.l.b16 %v270
  %v809 = vunpack.c.h.b16 %v270
  %v810 = vunpack.c.l.b16 %v271
  %v811 = vunpack.c.h.b16 %v271
  %v812 = vunpack.c.l.b16 %v272
  %v813 = vunpack.c.l.b16 %v273
  %v814 = vunpack.c.h.b16 %v273
  %v815 = vunpack.c.l.b16 %v274
  %v816 = vunpack.c.h.b16 %v274
  %v817 = vunpack.c.l.b16 %v275
  %v818 = vunpack.c.l.b16 %v276
  %v819 = vunpack.c.h.b16 %v276
  %v820 = vunpack.c.l.b16 %v277
  %v821 = vunpack.c.h.b16 %v277
  %v822 = vunpack.c.l.b16 %v278
  %v823 = vunpack.c.l.b16 %v279
  %v824 = vunpack.c.h.b16 %v279
  %v825 = vunpack.c.l.b16 %v280
  %v826 = vunpack.c.h.b16 %v280
  %v827 = vunpack.c.l.b16 %v281
  %v828 = vunpack.c.l.b16 %v282
  %v829 = vunpack.c.h.b16 %v282
  %v830 = vunpack.c.l.b16 %v283
  %v831 = vunpack.c.h.b16 %v283
  %v832 = vunpack.c.l.b16 %v284
  %v833 = vunpack.c.l.b16 %v285
  %v834 = vunpack.c.h.b16 %v285
  %v835 = vunpack.c.l.b16 %v286
  %v836 = vunpack.c.h.b16 %v286
  %v837 = vunpack.c.l.b16 %v287
  %v838 = vunpack.c.l.b16 %v288
  %v839 = vunpack.c.h.b16 %v288
  %v840 = vunpack.c.l.b16 %v289
  %v841 = vunpack.c.h.b16 %v289
  %v842 = vunpack.c.l.b16 %v290
  %v843 = vunpack.c.l.b16 %v291
  %v844 = vunpack.c.h.b16 %v291
  %v845 = vunpack.c.l.b16 %v292
  %v846 = vunpack.c.h.b16 %v292
  %v847 = vunpack.c.l.b16 %v293
  %v848 = vunpack.c.l.b16 %v294
  %v849 = vunpack.c.h.b16 %v294
  %v850 = vunpack.c.l.b16 %v295
  %v851 = vunpack.c.h.b16 %v295
  %v852 = vunpack.c.l.b16 %v296
  %v853 = vunpack.c.l.b16 %v297
  %v854 = vunpack.c.h.b16 %v297
  %v855 = vunpack.c.l.b16 %v298
  %v856 = vunpack.c.h.b16 %v298
  %v857 = vunpack.c.l.b16 %v299
  %v858 = vunpack.c.l.b16 %v300
  %v859 = vunpack.c.h.b16 %v300
  %v860 = vunpack.c.l.b16 %v301
  %v861 = vunpack.c.h.b16 %v301
  %v862 = vunpack.c.l.b16 %v302
  %v863 = vunpack.c.l.b16 %v303
  %v864 = vunpack.c.h.b16 %v303
  %v865 = vunpack.c.l.b16 %v304
  %v866 = vunpack.c.h.b16 %v304
  %v867 = vunpack.c.l.b16 %v305
  %v868 = vunpack.c.l.b16 %v306
  %v869 = vunpack.c.h.b16 %v306
  %v870 = vunpack.c.l.b16 %v307
  %v871 = vunpack.c.h.b16 %v307
  %v872 = vunpack.c.l.b16 %v308
  %v873 = vunpack.c.l.b16 %v309
  %v874 = vunpack.c.h.b16 %v309
  %v875 = vunpack.c.l.b16 %v310
  %v876 = vunpack.c.h.b16 %v310
  %v877 = vunpack.c.l.b16 %v311
  %v878 = vunpack.c.l.b16 %v312
  %v879 = vunpack.c.h.b16 %v312
  %v880 = vunpack.c.l.b16 %v313
  %v881 = vunpack.c.h.b16 %v313
  %v882 = vunpack.c.l.b16 %v314
  %v883 = vunpack.c.l.b16 %v315
  %v884 = vunpack.c.h.b16 %v315
  %v885 = vunpack.c.l.b16 %v316
  %v886 = vunpack.c.h.b16 %v316
  %v887 = vunpack.c.l.b16 %v317
  %v888 = vunpack.c.l.b16 %v318
  %v889 = vunpack.c.h.b16 %v318
  %v890 = vunpack.c.l.b16 %v319
  %v891 = vunpack.c.h.b16 %v319
  %v892 = vunpack.c.l.b16 %v320
  %v893 = vunpack.c.l.b16 %v321
  %v894 = vunpack.c.h.b16 %v321
  %v895 = vunpack.c.l.b16 %v322
  %v896 = vunpack.c.h.b16 %v322
  %v897 = vunpack.c.l.b16 %v323
  %v898 = vunpack.c.l.b16 %v324
  %v899 = vunpack.c.h.b16 %v324
  %v900 = vunpack.c.l.b16 %v325
  %v901 = vunpack.c.h.b16 %v325
  %v902 = vunpack.c.l.b16 %v326
  %v903 = vunpack.c.l.b16 %v327
  %v904 = vunpack.c.h.b16 %v327
  %v905 = vunpack.c.l.b16 %v328
  %v906 = vunpack.c.h.b16 %v328
  %v907 = vunpack.c.l.b16 %v329
  %v908 = vunpack.c.l.b16 %v330
  %v909 = vunpack.c.h.b16 %v330
  %v910 = vunpack.c.l.b16 %v331
  %v911 = vunpack.c.h.b16 %v331
  %v912 = vunpack.c.l.b16 %v332
  %v913 = vunpack.c.l.b16 %v333
  %v914 = vunpack.c.h.b16 %v333
  %v915 = vunpack.c.l.b16 %v334
  %v916 = vunpack.c.h.b16 %v334
  %v917 = vunpack.c.l.b16 %v335
  %v918 = vunpack.c.l.b16 %v336
  %v919 = vunpack.c.h.b16 %v336
  %v920 = vunpack.c.l.b16 %v337
  %v921 = vunpack.c.h.b16 %v337
  %v922 = vunpack.c.l.b16 %v338
  %v923 = vpack.c.b16 %v608, %v603
  %v924 = vpack.c.b16 %v609, %v604
  %v925 = vpack.c.b16 %v610, %v605
  %v926 = vpack.c.b16 %v611, %v606
  %v927 = vpack.c.b16 %v612, %v607
  %v928 = vpack.c.b16 %v618, %v613
  %v929 = vpack.c.b16 %v619, %v614
  %v930 = vpack.c.b16 %v620, %v615
  %v931 = vpack.c.b16 %v621, %v616
  %v932 = vpack.c.b16 %v622, %v617
  %v933 = vpack.c.b16 %v628, %v623
  %v934 = vpack.c.b16 %v629, %v624
  %v935 = vpack.c.b16 %v630, %v625
  %v936 = vpack.c.b16 %v631, %v626
  %v937 = vpack.c.b16 %v632, %v627
  %v938 = vpack.c.b16 %v638, %v633
  %v939 = vpack.c.b16 %v639, %v634
  %v940 = vpack.c.b16 %v640, %v635
  %v941 = vpack.c.b16 %v641, %v636
  %v942 = vpack.c.b16 %v642, %v637
  %v943 = vpack.c.b16 %v648, %v643
  %v944 = vpack.c.b16 %v649, %v644
  %v945 = vpack.c.b16 %v650, %v645
  %v946 = vpack.c.b16 %v651, %v646
  %v947 = vpack.c.b16 %v652, %v647
  %v948 = vpack.c.b16 %v658, %v653
  %v949 = vpack.c.b16 %v659, %v654
  %v950 = vpack.c.b16 %v660, %v655
  %v951 = vpack.c.b16 %v661, %v656
  %v952 = vpack.c.b16 %v662, %v657
  %v953 = vpack.c.b16 %v668, %v663
  %v954 = vpack.c.b16 %v669, %v664
  %v955 = vpack.c.b16 %v670, %v665
  %v956 = vpack.c.b16 %v671, %v666
  %v957 = vpack.c.b16 %v672, %v667
  %v958 = vpack.c.b16 %v678, %v673
  %v959 = vpack.c.b16 %v679, %v674
  %v960 = vpack.c.b16 %v680, %v675
  %v961 = vpack.c.b16 %v681, %v676
  %v962 = vpack.c.b16 %v682, %v677
  %v963 = vpack.c.b16 %v688, %v683
  %v964 = vpack.c.b16 %v689, %v684
  %v965 = vpack.c.b16 %v690, %v685
  %v966 = vpack.c.b16 %v691, %v686
  %v967 = vpack.c.b16 %v692, %v687
  %v968 = vpack.c.b16 %v698, %v693
  %v969 = vpack.c.b16 %v699, %v694
  %v970 = vpack.c.b16 %v700, %v695
  %v971 = vpack.c.b16 %v701, %v696
  %v972 = vpack.c.b16 %v702, %v697
  %v973 = vpack.c.b16 %v708, %v703
  %v974 = vpack.c.b16 %v709, %v704
  %v975 = vpack.c.b16 %v710, %v705
  %v976 = vpack.c.b16 %v711, %v706
  %v977 = vpack.c.b16 %v712, %v707
  %v978 = vpack.c.b16 %v718, %v713
  %v979 = vpack.c.b16 %v719, %v714
  %v980 = vpack.c.b16 %v720, %v715
  %v981 = vpack.c.b16 %v721, %v716
  %v982 = vpack.c.b16 %v722, %v717
  %v983 = vpack.c.b16 %v728, %v723
  %v984 = vpack.c.b16 %v729, %v724
  %v985 = vpack.c.b16 %v730, %v725
  %v986 = vpack.c.b16 %v731, %v726
  %v987 = vpack.c.b16 %v732, %v727
  %v988 = vpack.c.b16 %v738, %v733
  %v989 = vpack.c.b16 %v739, %v734
  %v990 = vpack.c.b16 %v740, %v735
  %v991 = vpack.c.b16 %v741, %v736
  %v992 = vpack.c.b16 %v742, %v737
  %v993 = vpack.c.b16 %v748, %v743
  %v994 = vpack.c.b16 %v749, %v744
  %v995 = vpack.c.b16 %v750, %v745
  %v996 = vpack.c.b16 %v751, %v746
  %v997 = vpack.c.b16 %v752, %v747
  %v998 = vpack.c.b16 %v758, %v753
  %v999 = vpack.c.b16 %v759, %v754
  %v1000 = vpack.c.b16 %v760, %v755
  %v1001 = vpack.c.b16 %v761, %v756
  %v1002 = vpack.c.b16 %v762, %v757
  %v1003 = vpack.c.b16 %v768, %v763
  %v1004 = vpack.c.b16 %v769, %v764
  %v1005 = vpack.c.b16 %v770, %v765
  %v1006 = vpack.c.b16 %v771, %v766
  %v1007 = vpack.c.b16 %v772, %v767
  %v1008 = vpack.c.b16 %v778, %v773
  %v1009 = vpack.c.b16 %v779, %v774
  %v1010 = vpack.c.b16 %v780, %v775
  %v1011 = vpack.c.b16 %v781, %v776
  %v1012 = vpack.c.b16 %v782, %v777
  %v1013 = vpack.c.b16 %v788, %v783
  %v1014 = vpack.c.b16 %v789, %v784
  %v1015 = vpack.c.b16 %v790, %v785
  %v1016 = vpack.c.b16 %v791, %v786
  %v1017 = vpack.c.b16 %v792, %v787
  %v1018 = vpack.c.b16 %v798, %v793
  %v1019 = vpack.c.b16 %v799, %v794
  %v1020 = vpack.c.b16 %v800, %v795
  %v1021 = vpack.c.b16 %v801, %v796
  %v1022 = vpack.c.b16 %v802, %v797
  %v1023 = vpack.c.b16 %v808, %v803
  %v1024 = vpack.c.b16 %v809, %v804
  %v1025 = vpack.c.b16 %v810, %v805
  %v1026 = vpack.c.b16 %v811, %v806
  %v1027 = vpack.c.b16 %v812, %v807
  %v1028 = vpack.c.b16 %v818, %v813
  %v1029 = vpack.c.b16 %v819, %v814
  %v1030 = vpack.c.b16 %v820, %v815
  %v1031 = vpack.c.b16 %v821, %v816
  %v1032 = vpack.c.b16 %v822, %v817
  %v1033 = vpack.c.b16 %v828, %v823
  %v1034 = vpack.c.b16 %v829, %v824
  %v1035 = vpack.c.b16 %v830, %v825
  %v1036 = vpack.c.b16 %v831, %v826
  %v1037 = vpack.c.b16 %v832, %v827
  %v1038 = vpack.c.b16 %v838, %v833
  %v1039 = vpack.c.b16 %v839, %v834
  %v1040 = vpack.c.b16 %v840, %v835
  %v1041 = vpack.c.b16 %v841, %v836
  %v1042 = vpack.c.b16 %v842, %v837
  %v1043 = vpack.c.b16 %v848, %v843
  %v1044 = vpack.c.b16 %v849, %v844
  %v1045 = vpack.c.b16 %v850, %v845
  %v1046 = vpack.c.b16 %v851, %v846
  %v1047 = vpack.c.b16 %v852, %v847
  %v1048 = vpack.c.b16 %v858, %v853
  %v1049 = vpack.c.b16 %v859, %v854
  %v1050 = vpack.c.b16 %v860, %v855
  %v1051 = vpack.c.b16 %v861, %v856
  %v1052 = vpack.c.b16 %v862, %v857
  %v1053 = vpack.c.b16 %v868, %v863
  %v1054 = vpack.c.b16 %v869, %v864
  %v1055 = vpack.c.b16 %v870, %v865
  %v1056 = vpack.c.b16 %v871, %v866
  %v1057 = vpack.c.b16 %v872, %v867
  %v1058 = vpack.c.b16 %v878, %v873
  %v1059 = vpack.c.b16 %v879, %v874
  %v1060 = vpack.c.b16 %v880, %v875
  %v1061 = vpack.c.b16 %v881, %v876
  %v1062 = vpack.c.b16 %v882, %v877
  %v1063 = vpack.c.b16 %v888, %v883
  %v1064 = vpack.c.b16 %v889, %v884
  %v1065 = vpack.c.b16 %v890, %v885
  %v1066 = vpack.c.b16 %v891, %v886
  %v1067 = vpack.c.b16 %v892, %v887
  %v1068 = vpack.c.b16 %v898, %v893
  %v1069 = vpack.c.b16 %v899, %v894
  %v1070 = vpack.c.b16 %v900, %v895
  %v1071 = vpack.c.b16 %v901, %v896
  %v1072 = vpack.c.b16 %v902, %v897
  %v1073 = vpack.c.b16 %v908, %v903
  %v1074 = vpack.c.b16 %v909, %v904
  %v1075 = vpack.c.b16 %v910, %v905
  %v1076 = vpack.c.b16 %v911, %v906
  %v1077 = vpack.c.b16 %v912, %v907
  %v1078 = vpack.c.b16 %v918, %v913
  %v1079 = vpack.c.b16 %v919, %v914
  %v1080 = vpack.c.b16 %v920, %v915
  %v1081 = vpack.c.b16 %v921, %v916
  %v1082 = vpack.c.b16 %v922, %v917
  %v1283 = vunpack.c.l.b16 %v339
  %v1284 = vunpack.c.l.b16 %v340
  %v1285 = vunpack.c.l.b16 %v341
  %v1286 = vunpack.c.l.b16 %v342
  %v1287 = vunpack.c.l.b16 %v343
  %v1288 = vunpack.c.l.b16 %v344
  %v1289 = vunpack.c.l.b16 %v345
  %v1290 = vunpack.c.l.b16 %v346
  %v1291 = vunpack.c.l.b16 %v347
  %v1292 = vunpack.c.l.b16 %v348
  %v1293 = vunpack.c.l.b16 %v349
  %v1294 = vunpack.c.l.b16 %v350
  %v1295 = vunpack.c.l.b16 %v351
  %v1296 = vunpack.c.l.b16 %v352
  %v1297 = vunpack.c.l.b16 %v353
  %v1298 = vunpack.c.l.b16 %v354
  %v1299 = vunpack.c.l.b16 %v355
  %v1300 = vunpack.c.l.b16 %v356
  %v1301 = vunpack.c.l.b16 %v357
  %v1302 = vunpack.c.l.b16 %v358
  %v1303 = vunpack.c.l.b16 %v359
  %v1304 = vunpack.c.l.b16 %v360
  %v1305 = vunpack.c.l.b16 %v361
  %v1306 = vunpack.c.l.b16 %v362
  %v1307 = vunpack.c.l.b16 %v363
  %v1308 = vunpack.c.l.b16 %v364
  %v1309 = vunpack.c.l.b16 %v365
  %v1310 = vunpack.c.l.b16 %v366
  %v1311 = vunpack.c.l.b16 %v367
  %v1312 = vunpack.c.l.b16 %v368
  %v1313 = vunpack.c.l.b16 %v369
  %v1314 = vunpack.c.l.b16 %v370
  %v1315 = vunpack.c.l.b16 %v371
  %v1316 = vunpack.c.l.b16 %v372
  %v1317 = vunpack.c.l.b16 %v373
  %v1318 = vunpack.c.l.b16 %v374
  %v1319 = vunpack.c.l.b16 %v375
  %v1320 = vunpack.c.l.b16 %v376
  %v1321 = vunpack.c.l.b16 %v377
  %v1322 = vunpack.c.l.b16 %v378
  %v1323 = vunpack.c.l.b16 %v379
  %v1324 = vunpack.c.l.b16 %v380
  %v1325 = vunpack.c.l.b16 %v381
  %v1326 = vunpack.c.l.b16 %v382
  %v1327 = vunpack.c.l.b16 %v383
  %v1328 = vunpack.c.l.b16 %v384
  %v1329 = vunpack.c.l.b16 %v385
  %v1330 = vunpack.c.l.b16 %v386
  %v1331 = vunpack.c.l.b16 %v387
  %v1332 = vunpack.c.l.b16 %v388
  %v1333 = vunpack.c.l.b16 %v389
  %v1334 = vunpack.c.l.b16 %v390
  %v1335 = vunpack.c.l.b16 %v391
  %v1336 = vunpack.c.l.b16 %v392
  %v1337 = vunpack.c.l.b16 %v393
  %v1338 = vunpack.c.l.b16 %v394
  %v1339 = vunpack.c.l.b16 %v395
  %v1340 = vunpack.c.l.b16 %v396
  %v1341 = vunpack.c.l.b16 %v397
  %v1342 = vunpack.c.l.b16 %v398
  %v1343 = vunpack.c.l.b16 %v399
  %v1344 = vunpack.c.l.b16 %v400
  %v1345 = vunpack.c.l.b16 %v401
  %v1346 = vunpack.c.l.b16 %v402
  %v1347 = vunpack.c.l.b16 %v403
  %v1348 = vunpack.c.l.b16 %v404
  %v1349 = vunpack.c.l.b16 %v405
  %v1350 = vunpack.c.l.b16 %v406
  %v1351 = vunpack.c.l.b16 %v407
  %v1352 = vunpack.c.l.b16 %v408
  %v1353 = vunpack.c.l.b16 %v409
  %v1354 = vunpack.c.l.b16 %v410
  %v1355 = vpack.c.b16 %v1284, %v1283
  %v1356 = vpack.c.b16 %v1286, %v1285
  %v1357 = vpack.c.b16 %v1288, %v1287
  %v1358 = vpack.c.b16 %v1290, %v1289
  %v1359 = vpack.c.b16 %v1292, %v1291
  %v1360 = vpack.c.b16 %v1294, %v1293
  %v1361 = vpack.c.b16 %v1296, %v1295
  %v1362 = vpack.c.b16 %v1298, %v1297
  %v1363 = vpack.c.b16 %v1300, %v1299
  %v1364 = vpack.c.b16 %v1302, %v1301
  %v1365 = vpack.c.b16 %v1304, %v1303
  %v1366 = vpack.c.b16 %v1306, %v1305
  %v1367 = vpack.c.b16 %v1308, %v1307
  %v1368 = vpack.c.b16 %v1310, %v1309
  %v1369 = vpack.c.b16 %v1312, %v1311
  %v1370 = vpack.c.b16 %v1314, %v1313
  %v1371 = vpack.c.b16 %v1316, %v1315
  %v1372 = vpack.c.b16 %v1318, %v1317
  %v1373 = vpack.c.b16 %v1320, %v1319
  %v1374 = vpack.c.b16 %v1322, %v1321
  %v1375 = vpack.c.b16 %v1324, %v1323
  %v1376 = vpack.c.b16 %v1326, %v1325
  %v1377 = vpack.c.b16 %v1328, %v1327
  %v1378 = vpack.c.b16 %v1330, %v1329
  %v1379 = vpack.c.b16 %v1332, %v1331
  %v1380 = vpack.c.b16 %v1334, %v1333
  %v1381 = vpack.c.b16 %v1336, %v1335
  %v1382 = vpack.c.b16 %v1338, %v1337
  %v1383 = vpack.c.b16 %v1340, %v1339
  %v1384 = vpack.c.b16 %v1342, %v1341
  %v1385 = vpack.c.b16 %v1344, %v1343
  %v1386 = vpack.c.b16 %v1346, %v1345
  %v1387 = vpack.c.b16 %v1348, %v1347
  %v1388 = vpack.c.b16 %v1350, %v1349
  %v1389 = vpack.c.b16 %v1352, %v1351
  %v1390 = vpack.c.b16 %v1354, %v1353
  %vm1427 = vcmask 523264
  %v1429 = vsel %vm1427, %v927, 0
  %v1432 = vsel %vm1427, %v932, 0
  %v1435 = vsel %vm1427, %v937, 0
  %v1438 = vsel %vm1427, %v942, 0
  %v1441 = vsel %vm1427, %v947, 0
  %v1444 = vsel %vm1427, %v952, 0
  %v1447 = vsel %vm1427, %v957, 0
  %v1450 = vsel %vm1427, %v962, 0
  %v1453 = vsel %vm1427, %v967, 0
  %v1456 = vsel %vm1427, %v972, 0
  %v1459 = vsel %vm1427, %v977, 0
  %v1462 = vsel %vm1427, %v982, 0
  %v1465 = vsel %vm1427, %v987, 0
  %v1468 = vsel %vm1427, %v992, 0
  %v1471 = vsel %vm1427, %v997, 0
  %v1474 = vsel %vm1427, %v1002, 0
  %v1477 = vsel %vm1427, %v1007, 0
  %v1480 = vsel %vm1427, %v1012, 0
  %v1483 = vsel %vm1427, %v1017, 0
  %v1486 = vsel %vm1427, %v1022, 0
  %v1489 = vsel %vm1427, %v1027, 0
  %v1492 = vsel %vm1427, %v1032, 0
  %v1495 = vsel %vm1427, %v1037, 0
  %v1498 = vsel %vm1427, %v1042, 0
  %v1501 = vsel %vm1427, %v1047, 0
  %v1504 = vsel %vm1427, %v1052, 0
  %v1507 = vsel %vm1427, %v1057, 0
  %v1510 = vsel %vm1427, %v1062, 0
  %v1513 = vsel %vm1427, %v1067, 0
  %v1516 = vsel %vm1427, %v1072, 0
  %v1519 = vsel %vm1427, %v1077, 0
  %v1522 = vsel %vm1427, %v1082, 0
  %1524 = vmatprep.subr.bf16.mxu0 0
  %1525 = vmatpush1.bf16.msra.mxu0 %v1355
  %1526 = vmatprep.subr.bf16.mxu0 0
  %1527 = vmatpush1.bf16.msra.mxu0 %v1356
  %1528 = vmatprep.subr.bf16.mxu0 0
  %1529 = vmatpush1.bf16.msra.mxu0 %v1357
  %1530 = vmatprep.subr.bf16.mxu0 0
  %1531 = vmatpush1.bf16.msra.mxu0 %v1358
  %1532 = vmatprep.subr.bf16.mxu0 0
  %1533 = vmatpush1.bf16.msra.mxu0 %v1359
  %1534 = vmatprep.subr.bf16.mxu0 0
  %1535 = vmatpush1.bf16.msra.mxu0 %v1360
  %1536 = vmatprep.subr.bf16.mxu0 0
  %1537 = vmatpush1.bf16.msra.mxu0 %v1361
  %1538 = vmatprep.subr.bf16.mxu0 0
  %1539 = vmatpush1.bf16.msra.mxu0 %v1362
  %1540 = vmatprep.subr.bf16.mxu0 0
  %1541 = vmatpush1.bf16.msra.mxu0 %v1363
  %1542 = vmatprep.subr.bf16.mxu0 0
  %1543 = vmatpush1.bf16.msra.mxu0 %v1364
  %1544 = vmatprep.subr.bf16.mxu0 0
  %1545 = vmatpush1.bf16.msra.mxu0 %v1365
  %1546 = vmatprep.subr.bf16.mxu0 0
  %1547 = vmatpush1.bf16.msra.mxu0 %v1366
  %1548 = vmatprep.subr.bf16.mxu0 0
  %1549 = vmatpush1.bf16.msra.mxu0 %v1367
  %1550 = vmatprep.subr.bf16.mxu0 0
  %1551 = vmatpush1.bf16.msra.mxu0 %v1368
  %1552 = vmatprep.subr.bf16.mxu0 0
  %1553 = vmatpush1.bf16.msra.mxu0 %v1369
  %1554 = vmatprep.subr.bf16.mxu0 0
  %1555 = vmatpush1.bf16.msra.mxu0 %v1370
  %1556 = vmatprep.mubr.bf16.mxu0 %v924
  %1557 = vmatmul.mubr.bf16.gmra.mrb[0].mxu0 %v923
  %v1558 = vpop.f32.mrb[0].mxu0
  %v1559 = vadd.f32 0.0, %v1558
  %v1560 = vpop.f32.mrb[0].mxu0
  %v1561 = vpop.f32.mrb[0].mxu0
  %v1562 = vadd.f32 0.0, %v1561
  %v1563 = vpop.f32.mrb[0].mxu0
  %1564 = vmatprep.mubr.bf16.mxu0 %v929
  %1565 = vmatmul.mubr.bf16.gmra.mrb[0].mxu0 %v928
  %v1566 = vpop.f32.mrb[0].mxu0
  %v1567 = vadd.f32 0.0, %v1566
  %v1568 = vpop.f32.mrb[0].mxu0
  %v1569 = vpop.f32.mrb[0].mxu0
  %v1570 = vadd.f32 0.0, %v1569
  %v1571 = vpop.f32.mrb[0].mxu0
  %1572 = vmatprep.mubr.bf16.mxu0 %v934
  %1573 = vmatmul.mubr.bf16.gmra.mrb[0].mxu0 %v933
  %v1574 = vpop.f32.mrb[0].mxu0
  %v1575 = vadd.f32 0.0, %v1574
  %v1576 = vpop.f32.mrb[0].mxu0
  %v1577 = vpop.f32.mrb[0].mxu0
  %v1578 = vadd.f32 0.0, %v1577
  %v1579 = vpop.f32.mrb[0].mxu0
  %1580 = vmatprep.mubr.bf16.mxu0 %v939
  %1581 = vmatmul.mubr.bf16.gmra.mrb[0].mxu0 %v938
  %v1582 = vpop.f32.mrb[0].mxu0
  %v1583 = vadd.f32 0.0, %v1582
  %v1584 = vpop.f32.mrb[0].mxu0
  %v1585 = vpop.f32.mrb[0].mxu0
  %v1586 = vadd.f32 0.0, %v1585
  %v1587 = vpop.f32.mrb[0].mxu0
  %1588 = vmatprep.mubr.bf16.mxu0 %v944
  %1589 = vmatmul.mubr.bf16.gmra.mrb[0].mxu0 %v943
  %v1590 = vpop.f32.mrb[0].mxu0
  %v1591 = vadd.f32 0.0, %v1590
  %v1592 = vpop.f32.mrb[0].mxu0
  %v1593 = vpop.f32.mrb[0].mxu0
  %v1594 = vadd.f32 0.0, %v1593
  %v1595 = vpop.f32.mrb[0].mxu0
  %1596 = vmatprep.mubr.bf16.mxu0 %v949
  %1597 = vmatmul.mubr.bf16.gmra.mrb[0].mxu0 %v948
  %v1598 = vpop.f32.mrb[0].mxu0
  %v1599 = vadd.f32 0.0, %v1598
  %v1600 = vpop.f32.mrb[0].mxu0
  %v1601 = vpop.f32.mrb[0].mxu0
  %v1602 = vadd.f32 0.0, %v1601
  %v1603 = vpop.f32.mrb[0].mxu0
  %1604 = vmatprep.mubr.bf16.mxu0 %v954
  %1605 = vmatmul.mubr.bf16.gmra.mrb[0].mxu0 %v953
  %v1606 = vpop.f32.mrb[0].mxu0
  %v1607 = vadd.f32 0.0, %v1606
  %v1608 = vpop.f32.mrb[0].mxu0
  %v1609 = vpop.f32.mrb[0].mxu0
  %v1610 = vadd.f32 0.0, %v1609
  %v1611 = vpop.f32.mrb[0].mxu0
  %1612 = vmatprep.mubr.bf16.mxu0 %v959
  %1613 = vmatmul.mubr.bf16.gmra.mrb[0].mxu0 %v958
  %v1614 = vpop.f32.mrb[0].mxu0
  %v1615 = vadd.f32 0.0, %v1614
  %v1616 = vpop.f32.mrb[0].mxu0
  %v1617 = vpop.f32.mrb[0].mxu0
  %v1618 = vadd.f32 0.0, %v1617
  %v1619 = vpop.f32.mrb[0].mxu0
  %1620 = vmatprep.mubr.bf16.mxu0 %v964
  %1621 = vmatmul.mubr.bf16.gmra.mrb[0].mxu0 %v963
  %v1622 = vpop.f32.mrb[0].mxu0
  %v1623 = vadd.f32 0.0, %v1622
  %v1624 = vpop.f32.mrb[0].mxu0
  %v1625 = vpop.f32.mrb[0].mxu0
  %v1626 = vadd.f32 0.0, %v1625
  %v1627 = vpop.f32.mrb[0].mxu0
  %1628 = vmatprep.mubr.bf16.mxu0 %v969
  %1629 = vmatmul.mubr.bf16.gmra.mrb[0].mxu0 %v968
  %v1630 = vpop.f32.mrb[0].mxu0
  %v1631 = vadd.f32 0.0, %v1630
  %v1632 = vpop.f32.mrb[0].mxu0
  %v1633 = vpop.f32.mrb[0].mxu0
  %v1634 = vadd.f32 0.0, %v1633
  %v1635 = vpop.f32.mrb[0].mxu0
  %1636 = vmatprep.mubr.bf16.mxu0 %v974
  %1637 = vmatmul.mubr.bf16.gmra.mrb[0].mxu0 %v973
  %v1638 = vpop.f32.mrb[0].mxu0
  %v1639 = vadd.f32 0.0, %v1638
  %v1640 = vpop.f32.mrb[0].mxu0
  %v1641 = vpop.f32.mrb[0].mxu0
  %v1642 = vadd.f32 0.0, %v1641
  %v1643 = vpop.f32.mrb[0].mxu0
  %1644 = vmatprep.mubr.bf16.mxu0 %v979
  %1645 = vmatmul.mubr.bf16.gmra.mrb[0].mxu0 %v978
  %v1646 = vpop.f32.mrb[0].mxu0
  %v1647 = vadd.f32 0.0, %v1646
  %v1648 = vpop.f32.mrb[0].mxu0
  %v1649 = vpop.f32.mrb[0].mxu0
  %v1650 = vadd.f32 0.0, %v1649
  %v1651 = vpop.f32.mrb[0].mxu0
  %1652 = vmatprep.mubr.bf16.mxu0 %v984
  %1653 = vmatmul.mubr.bf16.gmra.mrb[0].mxu0 %v983
  %v1654 = vpop.f32.mrb[0].mxu0
  %v1655 = vadd.f32 0.0, %v1654
  %v1656 = vpop.f32.mrb[0].mxu0
  %v1657 = vpop.f32.mrb[0].mxu0
  %v1658 = vadd.f32 0.0, %v1657
  %v1659 = vpop.f32.mrb[0].mxu0
  %1660 = vmatprep.mubr.bf16.mxu0 %v989
  %1661 = vmatmul.mubr.bf16.gmra.mrb[0].mxu0 %v988
  %v1662 = vpop.f32.mrb[0].mxu0
  %v1663 = vadd.f32 0.0, %v1662
  %v1664 = vpop.f32.mrb[0].mxu0
  %v1665 = vpop.f32.mrb[0].mxu0
  %v1666 = vadd.f32 0.0, %v1665
  %v1667 = vpop.f32.mrb[0].mxu0
  %1668 = vmatprep.mubr.bf16.mxu0 %v994
  %1669 = vmatmul.mubr.bf16.gmra.mrb[0].mxu0 %v993
  %v1670 = vpop.f32.mrb[0].mxu0
  %v1671 = vadd.f32 0.0, %v1670
  %v1672 = vpop.f32.mrb[0].mxu0
  %v1673 = vpop.f32.mrb[0].mxu0
  %v1674 = vadd.f32 0.0, %v1673
  %v1675 = vpop.f32.mrb[0].mxu0
  %1676 = vmatprep.mubr.bf16.mxu0 %v999
  %1677 = vmatmul.mubr.bf16.gmra.mrb[0].mxu0 %v998
  %v1678 = vpop.f32.mrb[0].mxu0
  %v1679 = vadd.f32 0.0, %v1678
  %v1680 = vpop.f32.mrb[0].mxu0
  %v1681 = vpop.f32.mrb[0].mxu0
  %v1682 = vadd.f32 0.0, %v1681
  %v1683 = vpop.f32.mrb[0].mxu0
  %1684 = vmatprep.mubr.bf16.mxu0 %v1004
  %1685 = vmatmul.mubr.bf16.gmra.mrb[0].mxu0 %v1003
  %v1686 = vpop.f32.mrb[0].mxu0
  %v1687 = vadd.f32 0.0, %v1686
  %v1688 = vpop.f32.mrb[0].mxu0
  %v1689 = vpop.f32.mrb[0].mxu0
  %v1690 = vadd.f32 0.0, %v1689
  %v1691 = vpop.f32.mrb[0].mxu0
  %1692 = vmatprep.mubr.bf16.mxu0 %v1009
  %1693 = vmatmul.mubr.bf16.gmra.mrb[0].mxu0 %v1008
  %v1694 = vpop.f32.mrb[0].mxu0
  %v1695 = vadd.f32 0.0, %v1694
  %v1696 = vpop.f32.mrb[0].mxu0
  %v1697 = vpop.f32.mrb[0].mxu0
  %v1698 = vadd.f32 0.0, %v1697
  %v1699 = vpop.f32.mrb[0].mxu0
  %1700 = vmatprep.mubr.bf16.mxu0 %v1014
  %1701 = vmatmul.mubr.bf16.gmra.mrb[0].mxu0 %v1013
  %v1702 = vpop.f32.mrb[0].mxu0
  %v1703 = vadd.f32 0.0, %v1702
  %v1704 = vpop.f32.mrb[0].mxu0
  %v1705 = vpop.f32.mrb[0].mxu0
  %v1706 = vadd.f32 0.0, %v1705
  %v1707 = vpop.f32.mrb[0].mxu0
  %1708 = vmatprep.mubr.bf16.mxu0 %v1019
  %1709 = vmatmul.mubr.bf16.gmra.mrb[0].mxu0 %v1018
  %v1710 = vpop.f32.mrb[0].mxu0
  %v1711 = vadd.f32 0.0, %v1710
  %v1712 = vpop.f32.mrb[0].mxu0
  %v1713 = vpop.f32.mrb[0].mxu0
  %v1714 = vadd.f32 0.0, %v1713
  %v1715 = vpop.f32.mrb[0].mxu0
  %1716 = vmatprep.mubr.bf16.mxu0 %v1024
  %1717 = vmatmul.mubr.bf16.gmra.mrb[0].mxu0 %v1023
  %v1718 = vpop.f32.mrb[0].mxu0
  %v1719 = vadd.f32 0.0, %v1718
  %v1720 = vpop.f32.mrb[0].mxu0
  %v1721 = vpop.f32.mrb[0].mxu0
  %v1722 = vadd.f32 0.0, %v1721
  %v1723 = vpop.f32.mrb[0].mxu0
  %1724 = vmatprep.mubr.bf16.mxu0 %v1029
  %1725 = vmatmul.mubr.bf16.gmra.mrb[0].mxu0 %v1028
  %v1726 = vpop.f32.mrb[0].mxu0
  %v1727 = vadd.f32 0.0, %v1726
  %v1728 = vpop.f32.mrb[0].mxu0
  %v1729 = vpop.f32.mrb[0].mxu0
  %v1730 = vadd.f32 0.0, %v1729
  %v1731 = vpop.f32.mrb[0].mxu0
  %1732 = vmatprep.mubr.bf16.mxu0 %v1034
  %1733 = vmatmul.mubr.bf16.gmra.mrb[0].mxu0 %v1033
  %v1734 = vpop.f32.mrb[0].mxu0
  %v1735 = vadd.f32 0.0, %v1734
  %v1736 = vpop.f32.mrb[0].mxu0
  %v1737 = vpop.f32.mrb[0].mxu0
  %v1738 = vadd.f32 0.0, %v1737
  %v1739 = vpop.f32.mrb[0].mxu0
  %1740 = vmatprep.mubr.bf16.mxu0 %v1039
  %1741 = vmatmul.mubr.bf16.gmra.mrb[0].mxu0 %v1038
  %v1742 = vpop.f32.mrb[0].mxu0
  %v1743 = vadd.f32 0.0, %v1742
  %v1744 = vpop.f32.mrb[0].mxu0
  %v1745 = vpop.f32.mrb[0].mxu0
  %v1746 = vadd.f32 0.0, %v1745
  %v1747 = vpop.f32.mrb[0].mxu0
  %1748 = vmatprep.mubr.bf16.mxu0 %v1044
  %1749 = vmatmul.mubr.bf16.gmra.mrb[0].mxu0 %v1043
  %v1750 = vpop.f32.mrb[0].mxu0
  %v1751 = vadd.f32 0.0, %v1750
  %v1752 = vpop.f32.mrb[0].mxu0
  %v1753 = vpop.f32.mrb[0].mxu0
  %v1754 = vadd.f32 0.0, %v1753
  %v1755 = vpop.f32.mrb[0].mxu0
  %1756 = vmatprep.mubr.bf16.mxu0 %v1049
  %1757 = vmatmul.mubr.bf16.gmra.mrb[0].mxu0 %v1048
  %v1758 = vpop.f32.mrb[0].mxu0
  %v1759 = vadd.f32 0.0, %v1758
  %v1760 = vpop.f32.mrb[0].mxu0
  %v1761 = vpop.f32.mrb[0].mxu0
  %v1762 = vadd.f32 0.0, %v1761
  %v1763 = vpop.f32.mrb[0].mxu0
  %1764 = vmatprep.mubr.bf16.mxu0 %v1054
  %1765 = vmatmul.mubr.bf16.gmra.mrb[0].mxu0 %v1053
  %v1766 = vpop.f32.mrb[0].mxu0
  %v1767 = vadd.f32 0.0, %v1766
  %v1768 = vpop.f32.mrb[0].mxu0
  %v1769 = vpop.f32.mrb[0].mxu0
  %v1770 = vadd.f32 0.0, %v1769
  %v1771 = vpop.f32.mrb[0].mxu0
  %1772 = vmatprep.mubr.bf16.mxu0 %v1059
  %1773 = vmatmul.mubr.bf16.gmra.mrb[0].mxu0 %v1058
  %v1774 = vpop.f32.mrb[0].mxu0
  %v1775 = vadd.f32 0.0, %v1774
  %v1776 = vpop.f32.mrb[0].mxu0
  %v1777 = vpop.f32.mrb[0].mxu0
  %v1778 = vadd.f32 0.0, %v1777
  %v1779 = vpop.f32.mrb[0].mxu0
  %1780 = vmatprep.mubr.bf16.mxu0 %v1064
  %1781 = vmatmul.mubr.bf16.gmra.mrb[0].mxu0 %v1063
  %v1782 = vpop.f32.mrb[0].mxu0
  %v1783 = vadd.f32 0.0, %v1782
  %v1784 = vpop.f32.mrb[0].mxu0
  %v1785 = vpop.f32.mrb[0].mxu0
  %v1786 = vadd.f32 0.0, %v1785
  %v1787 = vpop.f32.mrb[0].mxu0
  %1788 = vmatprep.mubr.bf16.mxu0 %v1069
  %1789 = vmatmul.mubr.bf16.gmra.mrb[0].mxu0 %v1068
  %v1790 = vpop.f32.mrb[0].mxu0
  %v1791 = vadd.f32 0.0, %v1790
  %v1792 = vpop.f32.mrb[0].mxu0
  %v1793 = vpop.f32.mrb[0].mxu0
  %v1794 = vadd.f32 0.0, %v1793
  %v1795 = vpop.f32.mrb[0].mxu0
  %1796 = vmatprep.mubr.bf16.mxu0 %v1074
  %1797 = vmatmul.mubr.bf16.gmra.mrb[0].mxu0 %v1073
  %v1798 = vpop.f32.mrb[0].mxu0
  %v1799 = vadd.f32 0.0, %v1798
  %v1800 = vpop.f32.mrb[0].mxu0
  %v1801 = vpop.f32.mrb[0].mxu0
  %v1802 = vadd.f32 0.0, %v1801
  %v1803 = vpop.f32.mrb[0].mxu0
  %1804 = vmatprep.mubr.bf16.mxu0 %v1079
  %1805 = vmatmul.mubr.bf16.gmra.mrb[0].mxu0 %v1078
  %v1806 = vpop.f32.mrb[0].mxu0
  %v1807 = vadd.f32 0.0, %v1806
  %v1808 = vpop.f32.mrb[0].mxu0
  %v1809 = vpop.f32.mrb[0].mxu0
  %v1810 = vadd.f32 0.0, %v1809
  %v1811 = vpop.f32.mrb[0].mxu0
  %1812 = vdwg.mxu0
  %1813 = vmatprep.subr.bf16.mxu0 0
  %1814 = vmatpush1.bf16.msra.mxu0 %v1371
  %1815 = vmatprep.subr.bf16.mxu0 0
  %1816 = vmatpush1.bf16.msra.mxu0 %v1372
  %1817 = vmatprep.subr.bf16.mxu0 0
  %1818 = vmatpush1.bf16.msra.mxu0 %v1373
  %1819 = vmatprep.subr.bf16.mxu0 0
  %1820 = vmatpush1.bf16.msra.mxu0 %v1374
  %1821 = vmatprep.subr.bf16.mxu0 0
  %1822 = vmatpush1.bf16.msra.mxu0 %v1375
  %1823 = vmatprep.subr.bf16.mxu0 0
  %1824 = vmatpush1.bf16.msra.mxu0 %v1376
  %1825 = vmatprep.subr.bf16.mxu0 0
  %1826 = vmatpush1.bf16.msra.mxu0 %v1377
  %1827 = vmatprep.subr.bf16.mxu0 0
  %1828 = vmatpush1.bf16.msra.mxu0 %v1378
  %1829 = vmatprep.subr.bf16.mxu0 0
  %1830 = vmatpush1.bf16.msra.mxu0 %v1379
  %1831 = vmatprep.subr.bf16.mxu0 0
  %1832 = vmatpush1.bf16.msra.mxu0 %v1380
  %1833 = vmatprep.subr.bf16.mxu0 0
  %1834 = vmatpush1.bf16.msra.mxu0 %v1381
  %1835 = vmatprep.subr.bf16.mxu0 0
  %1836 = vmatpush1.bf16.msra.mxu0 %v1382
  %1837 = vmatprep.subr.bf16.mxu0 0
  %1838 = vmatpush1.bf16.msra.mxu0 %v1383
  %1839 = vmatprep.subr.bf16.mxu0 0
  %1840 = vmatpush1.bf16.msra.mxu0 %v1384
  %1841 = vmatprep.subr.bf16.mxu0 0
  %1842 = vmatpush1.bf16.msra.mxu0 %v1385
  %1843 = vmatprep.subr.bf16.mxu0 0
  %1844 = vmatpush1.bf16.msra.mxu0 %v1386
  %1845 = vmatprep.mubr.bf16.mxu0 %v926
  %1846 = vmatmul.mubr.bf16.gmra.mrb[0].mxu0 %v925
  %v1847 = vpop.f32.mrb[0].mxu0
  %v1848 = vadd.f32 %v1559, %v1847
  %v1849 = vpop.f32.mrb[0].mxu0
  %v1850 = vpop.f32.mrb[0].mxu0
  %v1851 = vadd.f32 %v1562, %v1850
  %v1852 = vpop.f32.mrb[0].mxu0
  %1853 = vmatprep.mubr.bf16.mxu0 %v931
  %1854 = vmatmul.mubr.bf16.gmra.mrb[0].mxu0 %v930
  %v1855 = vpop.f32.mrb[0].mxu0
  %v1856 = vadd.f32 %v1567, %v1855
  %v1857 = vpop.f32.mrb[0].mxu0
  %v1858 = vpop.f32.mrb[0].mxu0
  %v1859 = vadd.f32 %v1570, %v1858
  %v1860 = vpop.f32.mrb[0].mxu0
  %1861 = vmatprep.mubr.bf16.mxu0 %v936
  %1862 = vmatmul.mubr.bf16.gmra.mrb[0].mxu0 %v935
  %v1863 = vpop.f32.mrb[0].mxu0
  %v1864 = vadd.f32 %v1575, %v1863
  %v1865 = vpop.f32.mrb[0].mxu0
  %v1866 = vpop.f32.mrb[0].mxu0
  %v1867 = vadd.f32 %v1578, %v1866
  %v1868 = vpop.f32.mrb[0].mxu0
  %1869 = vmatprep.mubr.bf16.mxu0 %v941
  %1870 = vmatmul.mubr.bf16.gmra.mrb[0].mxu0 %v940
  %v1871 = vpop.f32.mrb[0].mxu0
  %v1872 = vadd.f32 %v1583, %v1871
  %v1873 = vpop.f32.mrb[0].mxu0
  %v1874 = vpop.f32.mrb[0].mxu0
  %v1875 = vadd.f32 %v1586, %v1874
  %v1876 = vpop.f32.mrb[0].mxu0
  %1877 = vmatprep.mubr.bf16.mxu0 %v946
  %1878 = vmatmul.mubr.bf16.gmra.mrb[0].mxu0 %v945
  %v1879 = vpop.f32.mrb[0].mxu0
  %v1880 = vadd.f32 %v1591, %v1879
  %v1881 = vpop.f32.mrb[0].mxu0
  %v1882 = vpop.f32.mrb[0].mxu0
  %v1883 = vadd.f32 %v1594, %v1882
  %v1884 = vpop.f32.mrb[0].mxu0
  %1885 = vmatprep.mubr.bf16.mxu0 %v951
  %1886 = vmatmul.mubr.bf16.gmra.mrb[0].mxu0 %v950
  %v1887 = vpop.f32.mrb[0].mxu0
  %v1888 = vadd.f32 %v1599, %v1887
  %v1889 = vpop.f32.mrb[0].mxu0
  %v1890 = vpop.f32.mrb[0].mxu0
  %v1891 = vadd.f32 %v1602, %v1890
  %v1892 = vpop.f32.mrb[0].mxu0
  %1893 = vmatprep.mubr.bf16.mxu0 %v956
  %1894 = vmatmul.mubr.bf16.gmra.mrb[0].mxu0 %v955
  %v1895 = vpop.f32.mrb[0].mxu0
  %v1896 = vadd.f32 %v1607, %v1895
  %v1897 = vpop.f32.mrb[0].mxu0
  %v1898 = vpop.f32.mrb[0].mxu0
  %v1899 = vadd.f32 %v1610, %v1898
  %v1900 = vpop.f32.mrb[0].mxu0
  %1901 = vmatprep.mubr.bf16.mxu0 %v961
  %1902 = vmatmul.mubr.bf16.gmra.mrb[0].mxu0 %v960
  %v1903 = vpop.f32.mrb[0].mxu0
  %v1904 = vadd.f32 %v1615, %v1903
  %v1905 = vpop.f32.mrb[0].mxu0
  %v1906 = vpop.f32.mrb[0].mxu0
  %v1907 = vadd.f32 %v1618, %v1906
  %v1908 = vpop.f32.mrb[0].mxu0
  %1909 = vmatprep.mubr.bf16.mxu0 %v966
  %1910 = vmatmul.mubr.bf16.gmra.mrb[0].mxu0 %v965
  %v1911 = vpop.f32.mrb[0].mxu0
  %v1912 = vadd.f32 %v1623, %v1911
  %v1913 = vpop.f32.mrb[0].mxu0
  %v1914 = vpop.f32.mrb[0].mxu0
  %v1915 = vadd.f32 %v1626, %v1914
  %v1916 = vpop.f32.mrb[0].mxu0
  %1917 = vmatprep.mubr.bf16.mxu0 %v971
  %1918 = vmatmul.mubr.bf16.gmra.mrb[0].mxu0 %v970
  %v1919 = vpop.f32.mrb[0].mxu0
  %v1920 = vadd.f32 %v1631, %v1919
  %v1921 = vpop.f32.mrb[0].mxu0
  %v1922 = vpop.f32.mrb[0].mxu0
  %v1923 = vadd.f32 %v1634, %v1922
  %v1924 = vpop.f32.mrb[0].mxu0
  %1925 = vmatprep.mubr.bf16.mxu0 %v976
  %1926 = vmatmul.mubr.bf16.gmra.mrb[0].mxu0 %v975
  %v1927 = vpop.f32.mrb[0].mxu0
  %v1928 = vadd.f32 %v1639, %v1927
  %v1929 = vpop.f32.mrb[0].mxu0
  %v1930 = vpop.f32.mrb[0].mxu0
  %v1931 = vadd.f32 %v1642, %v1930
  %v1932 = vpop.f32.mrb[0].mxu0
  %1933 = vmatprep.mubr.bf16.mxu0 %v981
  %1934 = vmatmul.mubr.bf16.gmra.mrb[0].mxu0 %v980
  %v1935 = vpop.f32.mrb[0].mxu0
  %v1936 = vadd.f32 %v1647, %v1935
  %v1937 = vpop.f32.mrb[0].mxu0
  %v1938 = vpop.f32.mrb[0].mxu0
  %v1939 = vadd.f32 %v1650, %v1938
  %v1940 = vpop.f32.mrb[0].mxu0
  %1941 = vmatprep.mubr.bf16.mxu0 %v986
  %1942 = vmatmul.mubr.bf16.gmra.mrb[0].mxu0 %v985
  %v1943 = vpop.f32.mrb[0].mxu0
  %v1944 = vadd.f32 %v1655, %v1943
  %v1945 = vpop.f32.mrb[0].mxu0
  %v1946 = vpop.f32.mrb[0].mxu0
  %v1947 = vadd.f32 %v1658, %v1946
  %v1948 = vpop.f32.mrb[0].mxu0
  %1949 = vmatprep.mubr.bf16.mxu0 %v991
  %1950 = vmatmul.mubr.bf16.gmra.mrb[0].mxu0 %v990
  %v1951 = vpop.f32.mrb[0].mxu0
  %v1952 = vadd.f32 %v1663, %v1951
  %v1953 = vpop.f32.mrb[0].mxu0
  %v1954 = vpop.f32.mrb[0].mxu0
  %v1955 = vadd.f32 %v1666, %v1954
  %v1956 = vpop.f32.mrb[0].mxu0
  %1957 = vmatprep.mubr.bf16.mxu0 %v996
  %1958 = vmatmul.mubr.bf16.gmra.mrb[0].mxu0 %v995
  %v1959 = vpop.f32.mrb[0].mxu0
  %v1960 = vadd.f32 %v1671, %v1959
  %v1961 = vpop.f32.mrb[0].mxu0
  %v1962 = vpop.f32.mrb[0].mxu0
  %v1963 = vadd.f32 %v1674, %v1962
  %v1964 = vpop.f32.mrb[0].mxu0
  %1965 = vmatprep.mubr.bf16.mxu0 %v1001
  %1966 = vmatmul.mubr.bf16.gmra.mrb[0].mxu0 %v1000
  %v1967 = vpop.f32.mrb[0].mxu0
  %v1968 = vadd.f32 %v1679, %v1967
  %v1969 = vpop.f32.mrb[0].mxu0
  %v1970 = vpop.f32.mrb[0].mxu0
  %v1971 = vadd.f32 %v1682, %v1970
  %v1972 = vpop.f32.mrb[0].mxu0
  %1973 = vmatprep.mubr.bf16.mxu0 %v1006
  %1974 = vmatmul.mubr.bf16.gmra.mrb[0].mxu0 %v1005
  %v1975 = vpop.f32.mrb[0].mxu0
  %v1976 = vadd.f32 %v1687, %v1975
  %v1977 = vpop.f32.mrb[0].mxu0
  %v1978 = vpop.f32.mrb[0].mxu0
  %v1979 = vadd.f32 %v1690, %v1978
  %v1980 = vpop.f32.mrb[0].mxu0
  %1981 = vmatprep.mubr.bf16.mxu0 %v1011
  %1982 = vmatmul.mubr.bf16.gmra.mrb[0].mxu0 %v1010
  %v1983 = vpop.f32.mrb[0].mxu0
  %v1984 = vadd.f32 %v1695, %v1983
  %v1985 = vpop.f32.mrb[0].mxu0
  %v1986 = vpop.f32.mrb[0].mxu0
  %v1987 = vadd.f32 %v1698, %v1986
  %v1988 = vpop.f32.mrb[0].mxu0
  %1989 = vmatprep.mubr.bf16.mxu0 %v1016
  %1990 = vmatmul.mubr.bf16.gmra.mrb[0].mxu0 %v1015
  %v1991 = vpop.f32.mrb[0].mxu0
  %v1992 = vadd.f32 %v1703, %v1991
  %v1993 = vpop.f32.mrb[0].mxu0
  %v1994 = vpop.f32.mrb[0].mxu0
  %v1995 = vadd.f32 %v1706, %v1994
  %v1996 = vpop.f32.mrb[0].mxu0
  %1997 = vmatprep.mubr.bf16.mxu0 %v1021
  %1998 = vmatmul.mubr.bf16.gmra.mrb[0].mxu0 %v1020
  %v1999 = vpop.f32.mrb[0].mxu0
  %v2000 = vadd.f32 %v1711, %v1999
  %v2001 = vpop.f32.mrb[0].mxu0
  %v2002 = vpop.f32.mrb[0].mxu0
  %v2003 = vadd.f32 %v1714, %v2002
  %v2004 = vpop.f32.mrb[0].mxu0
  %2005 = vmatprep.mubr.bf16.mxu0 %v1026
  %2006 = vmatmul.mubr.bf16.gmra.mrb[0].mxu0 %v1025
  %v2007 = vpop.f32.mrb[0].mxu0
  %v2008 = vadd.f32 %v1719, %v2007
  %v2009 = vpop.f32.mrb[0].mxu0
  %v2010 = vpop.f32.mrb[0].mxu0
  %v2011 = vadd.f32 %v1722, %v2010
  %v2012 = vpop.f32.mrb[0].mxu0
  %2013 = vmatprep.mubr.bf16.mxu0 %v1031
  %2014 = vmatmul.mubr.bf16.gmra.mrb[0].mxu0 %v1030
  %v2015 = vpop.f32.mrb[0].mxu0
  %v2016 = vadd.f32 %v1727, %v2015
  %v2017 = vpop.f32.mrb[0].mxu0
  %v2018 = vpop.f32.mrb[0].mxu0
  %v2019 = vadd.f32 %v1730, %v2018
  %v2020 = vpop.f32.mrb[0].mxu0
  %2021 = vmatprep.mubr.bf16.mxu0 %v1036
  %2022 = vmatmul.mubr.bf16.gmra.mrb[0].mxu0 %v1035
  %v2023 = vpop.f32.mrb[0].mxu0
  %v2024 = vadd.f32 %v1735, %v2023
  %v2025 = vpop.f32.mrb[0].mxu0
  %v2026 = vpop.f32.mrb[0].mxu0
  %v2027 = vadd.f32 %v1738, %v2026
  %v2028 = vpop.f32.mrb[0].mxu0
  %2029 = vmatprep.mubr.bf16.mxu0 %v1041
  %2030 = vmatmul.mubr.bf16.gmra.mrb[0].mxu0 %v1040
  %v2031 = vpop.f32.mrb[0].mxu0
  %v2032 = vadd.f32 %v1743, %v2031
  %v2033 = vpop.f32.mrb[0].mxu0
  %v2034 = vpop.f32.mrb[0].mxu0
  %v2035 = vadd.f32 %v1746, %v2034
  %v2036 = vpop.f32.mrb[0].mxu0
  %2037 = vmatprep.mubr.bf16.mxu0 %v1046
  %2038 = vmatmul.mubr.bf16.gmra.mrb[0].mxu0 %v1045
  %v2039 = vpop.f32.mrb[0].mxu0
  %v2040 = vadd.f32 %v1751, %v2039
  %v2041 = vpop.f32.mrb[0].mxu0
  %v2042 = vpop.f32.mrb[0].mxu0
  %v2043 = vadd.f32 %v1754, %v2042
  %v2044 = vpop.f32.mrb[0].mxu0
  %2045 = vmatprep.mubr.bf16.mxu0 %v1051
  %2046 = vmatmul.mubr.bf16.gmra.mrb[0].mxu0 %v1050
  %v2047 = vpop.f32.mrb[0].mxu0
  %v2048 = vadd.f32 %v1759, %v2047
  %v2049 = vpop.f32.mrb[0].mxu0
  %v2050 = vpop.f32.mrb[0].mxu0
  %v2051 = vadd.f32 %v1762, %v2050
  %v2052 = vpop.f32.mrb[0].mxu0
  %2053 = vmatprep.mubr.bf16.mxu0 %v1056
  %2054 = vmatmul.mubr.bf16.gmra.mrb[0].mxu0 %v1055
  %v2055 = vpop.f32.mrb[0].mxu0
  %v2056 = vadd.f32 %v1767, %v2055
  %v2057 = vpop.f32.mrb[0].mxu0
  %v2058 = vpop.f32.mrb[0].mxu0
  %v2059 = vadd.f32 %v1770, %v2058
  %v2060 = vpop.f32.mrb[0].mxu0
  %2061 = vmatprep.mubr.bf16.mxu0 %v1061
  %2062 = vmatmul.mubr.bf16.gmra.mrb[0].mxu0 %v1060
  %v2063 = vpop.f32.mrb[0].mxu0
  %v2064 = vadd.f32 %v1775, %v2063
  %v2065 = vpop.f32.mrb[0].mxu0
  %v2066 = vpop.f32.mrb[0].mxu0
  %v2067 = vadd.f32 %v1778, %v2066
  %v2068 = vpop.f32.mrb[0].mxu0
  %2069 = vmatprep.mubr.bf16.mxu0 %v1066
  %2070 = vmatmul.mubr.bf16.gmra.mrb[0].mxu0 %v1065
  %v2071 = vpop.f32.mrb[0].mxu0
  %v2072 = vadd.f32 %v1783, %v2071
  %v2073 = vpop.f32.mrb[0].mxu0
  %v2074 = vpop.f32.mrb[0].mxu0
  %v2075 = vadd.f32 %v1786, %v2074
  %v2076 = vpop.f32.mrb[0].mxu0
  %2077 = vmatprep.mubr.bf16.mxu0 %v1071
  %2078 = vmatmul.mubr.bf16.gmra.mrb[0].mxu0 %v1070
  %v2079 = vpop.f32.mrb[0].mxu0
  %v2080 = vadd.f32 %v1791, %v2079
  %v2081 = vpop.f32.mrb[0].mxu0
  %v2082 = vpop.f32.mrb[0].mxu0
  %v2083 = vadd.f32 %v1794, %v2082
  %v2084 = vpop.f32.mrb[0].mxu0
  %2085 = vmatprep.mubr.bf16.mxu0 %v1076
  %2086 = vmatmul.mubr.bf16.gmra.mrb[0].mxu0 %v1075
  %v2087 = vpop.f32.mrb[0].mxu0
  %v2088 = vadd.f32 %v1799, %v2087
  %v2089 = vpop.f32.mrb[0].mxu0
  %v2090 = vpop.f32.mrb[0].mxu0
  %v2091 = vadd.f32 %v1802, %v2090
  %v2092 = vpop.f32.mrb[0].mxu0
  %2093 = vmatprep.mubr.bf16.mxu0 %v1081
  %2094 = vmatmul.mubr.bf16.gmra.mrb[0].mxu0 %v1080
  %v2095 = vpop.f32.mrb[0].mxu0
  %v2096 = vadd.f32 %v1807, %v2095
  %v2097 = vpop.f32.mrb[0].mxu0
  %v2098 = vpop.f32.mrb[0].mxu0
  %v2099 = vadd.f32 %v1810, %v2098
  %v2100 = vpop.f32.mrb[0].mxu0
  %2101 = vdwg.mxu0
  %2102 = vmatprep.subr.bf16.mxu0 0
  %2103 = vmatpush1.bf16.msra.mxu0 %v1387
  %2104 = vmatprep.subr.bf16.mxu0 0
  %2105 = vmatpush1.bf16.msra.mxu0 %v1388
  %2106 = vmatprep.subr.bf16.mxu0 0
  %2107 = vmatpush1.bf16.msra.mxu0 %v1389
  %2108 = vmatprep.subr.bf16.mxu0 0
  %2109 = vmatpush1.bf16.msra.mxu0 %v1390
  %2110 = vmatprep.subr.bf16.mxu0 0
  %2111 = vmatpush1.bf16.msra.mxu0 0
  %2112 = vmatprep.subr.bf16.mxu0 0
  %2113 = vmatpush1.bf16.msra.mxu0 0
  %2114 = vmatprep.subr.bf16.mxu0 0
  %2115 = vmatpush1.bf16.msra.mxu0 0
  %2116 = vmatprep.subr.bf16.mxu0 0
  %2117 = vmatpush1.bf16.msra.mxu0 0
  %2118 = vmatprep.subr.bf16.mxu0 0
  %2119 = vmatpush1.bf16.msra.mxu0 0
  %2120 = vmatprep.subr.bf16.mxu0 0
  %2121 = vmatpush1.bf16.msra.mxu0 0
  %2122 = vmatprep.subr.bf16.mxu0 0
  %2123 = vmatpush1.bf16.msra.mxu0 0
  %2124 = vmatprep.subr.bf16.mxu0 0
  %2125 = vmatpush1.bf16.msra.mxu0 0
  %2126 = vmatprep.subr.bf16.mxu0 0
  %2127 = vmatpush1.bf16.msra.mxu0 0
  %2128 = vmatprep.subr.bf16.mxu0 0
  %2129 = vmatpush1.bf16.msra.mxu0 0
  %2130 = vmatprep.subr.bf16.mxu0 0
  %2131 = vmatpush1.bf16.msra.mxu0 0
  %2132 = vmatprep.subr.bf16.mxu0 0
  %2133 = vmatpush1.bf16.msra.mxu0 0
  %2134 = vmatprep.mubr.bf16.mxu0 0
  %2135 = vmatmul.mubr.bf16.gmra.mrb[0].mxu0 %v1429
  %v2136 = vpop.f32.mrb[0].mxu0
  %v2137 = vadd.f32 %v1848, %v2136
  %v2138 = vpop.f32.mrb[0].mxu0
  %v2139 = vpop.f32.mrb[0].mxu0
  %v2140 = vadd.f32 %v1851, %v2139
  %v2141 = vpop.f32.mrb[0].mxu0
  %2142 = vmatprep.mubr.bf16.mxu0 0
  %2143 = vmatmul.mubr.bf16.gmra.mrb[0].mxu0 %v1432
  %v2144 = vpop.f32.mrb[0].mxu0
  %v2145 = vadd.f32 %v1856, %v2144
  %v2146 = vpop.f32.mrb[0].mxu0
  %v2147 = vpop.f32.mrb[0].mxu0
  %v2148 = vadd.f32 %v1859, %v2147
  %v2149 = vpop.f32.mrb[0].mxu0
  %2150 = vmatprep.mubr.bf16.mxu0 0
  %2151 = vmatmul.mubr.bf16.gmra.mrb[0].mxu0 %v1435
  %v2152 = vpop.f32.mrb[0].mxu0
  %v2153 = vadd.f32 %v1864, %v2152
  %v2154 = vpop.f32.mrb[0].mxu0
  %v2155 = vpop.f32.mrb[0].mxu0
  %v2156 = vadd.f32 %v1867, %v2155
  %v2157 = vpop.f32.mrb[0].mxu0
  %2158 = vmatprep.mubr.bf16.mxu0 0
  %2159 = vmatmul.mubr.bf16.gmra.mrb[0].mxu0 %v1438
  %v2160 = vpop.f32.mrb[0].mxu0
  %v2161 = vadd.f32 %v1872, %v2160
  %v2162 = vpop.f32.mrb[0].mxu0
  %v2163 = vpop.f32.mrb[0].mxu0
  %v2164 = vadd.f32 %v1875, %v2163
  %v2165 = vpop.f32.mrb[0].mxu0
  %2166 = vmatprep.mubr.bf16.mxu0 0
  %2167 = vmatmul.mubr.bf16.gmra.mrb[0].mxu0 %v1441
  %v2168 = vpop.f32.mrb[0].mxu0
  %v2169 = vadd.f32 %v1880, %v2168
  %v2170 = vpop.f32.mrb[0].mxu0
  %v2171 = vpop.f32.mrb[0].mxu0
  %v2172 = vadd.f32 %v1883, %v2171
  %v2173 = vpop.f32.mrb[0].mxu0
  %2174 = vmatprep.mubr.bf16.mxu0 0
  %2175 = vmatmul.mubr.bf16.gmra.mrb[0].mxu0 %v1444
  %v2176 = vpop.f32.mrb[0].mxu0
  %v2177 = vadd.f32 %v1888, %v2176
  %v2178 = vpop.f32.mrb[0].mxu0
  %v2179 = vpop.f32.mrb[0].mxu0
  %v2180 = vadd.f32 %v1891, %v2179
  %v2181 = vpop.f32.mrb[0].mxu0
  %2182 = vmatprep.mubr.bf16.mxu0 0
  %2183 = vmatmul.mubr.bf16.gmra.mrb[0].mxu0 %v1447
  %v2184 = vpop.f32.mrb[0].mxu0
  %v2185 = vadd.f32 %v1896, %v2184
  %v2186 = vpop.f32.mrb[0].mxu0
  %v2187 = vpop.f32.mrb[0].mxu0
  %v2188 = vadd.f32 %v1899, %v2187
  %v2189 = vpop.f32.mrb[0].mxu0
  %2190 = vmatprep.mubr.bf16.mxu0 0
  %2191 = vmatmul.mubr.bf16.gmra.mrb[0].mxu0 %v1450
  %v2192 = vpop.f32.mrb[0].mxu0
  %v2193 = vadd.f32 %v1904, %v2192
  %v2194 = vpop.f32.mrb[0].mxu0
  %v2195 = vpop.f32.mrb[0].mxu0
  %v2196 = vadd.f32 %v1907, %v2195
  %v2197 = vpop.f32.mrb[0].mxu0
  %2198 = vmatprep.mubr.bf16.mxu0 0
  %2199 = vmatmul.mubr.bf16.gmra.mrb[0].mxu0 %v1453
  %v2200 = vpop.f32.mrb[0].mxu0
  %v2201 = vadd.f32 %v1912, %v2200
  %v2202 = vpop.f32.mrb[0].mxu0
  %v2203 = vpop.f32.mrb[0].mxu0
  %v2204 = vadd.f32 %v1915, %v2203
  %v2205 = vpop.f32.mrb[0].mxu0
  %2206 = vmatprep.mubr.bf16.mxu0 0
  %2207 = vmatmul.mubr.bf16.gmra.mrb[0].mxu0 %v1456
  %v2208 = vpop.f32.mrb[0].mxu0
  %v2209 = vadd.f32 %v1920, %v2208
  %v2210 = vpop.f32.mrb[0].mxu0
  %v2211 = vpop.f32.mrb[0].mxu0
  %v2212 = vadd.f32 %v1923, %v2211
  %v2213 = vpop.f32.mrb[0].mxu0
  %2214 = vmatprep.mubr.bf16.mxu0 0
  %2215 = vmatmul.mubr.bf16.gmra.mrb[0].mxu0 %v1459
  %v2216 = vpop.f32.mrb[0].mxu0
  %v2217 = vadd.f32 %v1928, %v2216
  %v2218 = vpop.f32.mrb[0].mxu0
  %v2219 = vpop.f32.mrb[0].mxu0
  %v2220 = vadd.f32 %v1931, %v2219
  %v2221 = vpop.f32.mrb[0].mxu0
  %2222 = vmatprep.mubr.bf16.mxu0 0
  %2223 = vmatmul.mubr.bf16.gmra.mrb[0].mxu0 %v1462
  %v2224 = vpop.f32.mrb[0].mxu0
  %v2225 = vadd.f32 %v1936, %v2224
  %v2226 = vpop.f32.mrb[0].mxu0
  %v2227 = vpop.f32.mrb[0].mxu0
  %v2228 = vadd.f32 %v1939, %v2227
  %v2229 = vpop.f32.mrb[0].mxu0
  %2230 = vmatprep.mubr.bf16.mxu0 0
  %2231 = vmatmul.mubr.bf16.gmra.mrb[0].mxu0 %v1465
  %v2232 = vpop.f32.mrb[0].mxu0
  %v2233 = vadd.f32 %v1944, %v2232
  %v2234 = vpop.f32.mrb[0].mxu0
  %v2235 = vpop.f32.mrb[0].mxu0
  %v2236 = vadd.f32 %v1947, %v2235
  %v2237 = vpop.f32.mrb[0].mxu0
  %2238 = vmatprep.mubr.bf16.mxu0 0
  %2239 = vmatmul.mubr.bf16.gmra.mrb[0].mxu0 %v1468
  %v2240 = vpop.f32.mrb[0].mxu0
  %v2241 = vadd.f32 %v1952, %v2240
  %v2242 = vpop.f32.mrb[0].mxu0
  %v2243 = vpop.f32.mrb[0].mxu0
  %v2244 = vadd.f32 %v1955, %v2243
  %v2245 = vpop.f32.mrb[0].mxu0
  %2246 = vmatprep.mubr.bf16.mxu0 0
  %2247 = vmatmul.mubr.bf16.gmra.mrb[0].mxu0 %v1471
  %v2248 = vpop.f32.mrb[0].mxu0
  %v2249 = vadd.f32 %v1960, %v2248
  %v2250 = vpop.f32.mrb[0].mxu0
  %v2251 = vpop.f32.mrb[0].mxu0
  %v2252 = vadd.f32 %v1963, %v2251
  %v2253 = vpop.f32.mrb[0].mxu0
  %2254 = vmatprep.mubr.bf16.mxu0 0
  %2255 = vmatmul.mubr.bf16.gmra.mrb[0].mxu0 %v1474
  %v2256 = vpop.f32.mrb[0].mxu0
  %v2257 = vadd.f32 %v1968, %v2256
  %v2258 = vpop.f32.mrb[0].mxu0
  %v2259 = vpop.f32.mrb[0].mxu0
  %v2260 = vadd.f32 %v1971, %v2259
  %v2261 = vpop.f32.mrb[0].mxu0
  %2262 = vmatprep.mubr.bf16.mxu0 0
  %2263 = vmatmul.mubr.bf16.gmra.mrb[0].mxu0 %v1477
  %v2264 = vpop.f32.mrb[0].mxu0
  %v2265 = vadd.f32 %v1976, %v2264
  %v2266 = vpop.f32.mrb[0].mxu0
  %v2267 = vpop.f32.mrb[0].mxu0
  %v2268 = vadd.f32 %v1979, %v2267
  %v2269 = vpop.f32.mrb[0].mxu0
  %2270 = vmatprep.mubr.bf16.mxu0 0
  %2271 = vmatmul.mubr.bf16.gmra.mrb[0].mxu0 %v1480
  %v2272 = vpop.f32.mrb[0].mxu0
  %v2273 = vadd.f32 %v1984, %v2272
  %v2274 = vpop.f32.mrb[0].mxu0
  %v2275 = vpop.f32.mrb[0].mxu0
  %v2276 = vadd.f32 %v1987, %v2275
  %v2277 = vpop.f32.mrb[0].mxu0
  %2278 = vmatprep.mubr.bf16.mxu0 0
  %2279 = vmatmul.mubr.bf16.gmra.mrb[0].mxu0 %v1483
  %v2280 = vpop.f32.mrb[0].mxu0
  %v2281 = vadd.f32 %v1992, %v2280
  %v2282 = vpop.f32.mrb[0].mxu0
  %v2283 = vpop.f32.mrb[0].mxu0
  %v2284 = vadd.f32 %v1995, %v2283
  %v2285 = vpop.f32.mrb[0].mxu0
  %2286 = vmatprep.mubr.bf16.mxu0 0
  %2287 = vmatmul.mubr.bf16.gmra.mrb[0].mxu0 %v1486
  %v2288 = vpop.f32.mrb[0].mxu0
  %v2289 = vadd.f32 %v2000, %v2288
  %v2290 = vpop.f32.mrb[0].mxu0
  %v2291 = vpop.f32.mrb[0].mxu0
  %v2292 = vadd.f32 %v2003, %v2291
  %v2293 = vpop.f32.mrb[0].mxu0
  %2294 = vmatprep.mubr.bf16.mxu0 0
  %2295 = vmatmul.mubr.bf16.gmra.mrb[0].mxu0 %v1489
  %v2296 = vpop.f32.mrb[0].mxu0
  %v2297 = vadd.f32 %v2008, %v2296
  %v2298 = vpop.f32.mrb[0].mxu0
  %v2299 = vpop.f32.mrb[0].mxu0
  %v2300 = vadd.f32 %v2011, %v2299
  %v2301 = vpop.f32.mrb[0].mxu0
  %2302 = vmatprep.mubr.bf16.mxu0 0
  %2303 = vmatmul.mubr.bf16.gmra.mrb[0].mxu0 %v1492
  %v2304 = vpop.f32.mrb[0].mxu0
  %v2305 = vadd.f32 %v2016, %v2304
  %v2306 = vpop.f32.mrb[0].mxu0
  %v2307 = vpop.f32.mrb[0].mxu0
  %v2308 = vadd.f32 %v2019, %v2307
  %v2309 = vpop.f32.mrb[0].mxu0
  %2310 = vmatprep.mubr.bf16.mxu0 0
  %2311 = vmatmul.mubr.bf16.gmra.mrb[0].mxu0 %v1495
  %v2312 = vpop.f32.mrb[0].mxu0
  %v2313 = vadd.f32 %v2024, %v2312
  %v2314 = vpop.f32.mrb[0].mxu0
  %v2315 = vpop.f32.mrb[0].mxu0
  %v2316 = vadd.f32 %v2027, %v2315
  %v2317 = vpop.f32.mrb[0].mxu0
  %2318 = vmatprep.mubr.bf16.mxu0 0
  %2319 = vmatmul.mubr.bf16.gmra.mrb[0].mxu0 %v1498
  %v2320 = vpop.f32.mrb[0].mxu0
  %v2321 = vadd.f32 %v2032, %v2320
  %v2322 = vpop.f32.mrb[0].mxu0
  %v2323 = vpop.f32.mrb[0].mxu0
  %v2324 = vadd.f32 %v2035, %v2323
  %v2325 = vpop.f32.mrb[0].mxu0
  %2326 = vmatprep.mubr.bf16.mxu0 0
  %2327 = vmatmul.mubr.bf16.gmra.mrb[0].mxu0 %v1501
  %v2328 = vpop.f32.mrb[0].mxu0
  %v2329 = vadd.f32 %v2040, %v2328
  %v2330 = vpop.f32.mrb[0].mxu0
  %v2331 = vpop.f32.mrb[0].mxu0
  %v2332 = vadd.f32 %v2043, %v2331
  %v2333 = vpop.f32.mrb[0].mxu0
  %2334 = vmatprep.mubr.bf16.mxu0 0
  %2335 = vmatmul.mubr.bf16.gmra.mrb[0].mxu0 %v1504
  %v2336 = vpop.f32.mrb[0].mxu0
  %v2337 = vadd.f32 %v2048, %v2336
  %v2338 = vpop.f32.mrb[0].mxu0
  %v2339 = vpop.f32.mrb[0].mxu0
  %v2340 = vadd.f32 %v2051, %v2339
  %v2341 = vpop.f32.mrb[0].mxu0
  %2342 = vmatprep.mubr.bf16.mxu0 0
  %2343 = vmatmul.mubr.bf16.gmra.mrb[0].mxu0 %v1507
  %v2344 = vpop.f32.mrb[0].mxu0
  %v2345 = vadd.f32 %v2056, %v2344
  %v2346 = vpop.f32.mrb[0].mxu0
  %v2347 = vpop.f32.mrb[0].mxu0
  %v2348 = vadd.f32 %v2059, %v2347
  %v2349 = vpop.f32.mrb[0].mxu0
  %2350 = vmatprep.mubr.bf16.mxu0 0
  %2351 = vmatmul.mubr.bf16.gmra.mrb[0].mxu0 %v1510
  %v2352 = vpop.f32.mrb[0].mxu0
  %v2353 = vadd.f32 %v2064, %v2352
  %v2354 = vpop.f32.mrb[0].mxu0
  %v2355 = vpop.f32.mrb[0].mxu0
  %v2356 = vadd.f32 %v2067, %v2355
  %v2357 = vpop.f32.mrb[0].mxu0
  %2358 = vmatprep.mubr.bf16.mxu0 0
  %2359 = vmatmul.mubr.bf16.gmra.mrb[0].mxu0 %v1513
  %v2360 = vpop.f32.mrb[0].mxu0
  %v2361 = vadd.f32 %v2072, %v2360
  %v2362 = vpop.f32.mrb[0].mxu0
  %v2363 = vpop.f32.mrb[0].mxu0
  %v2364 = vadd.f32 %v2075, %v2363
  %v2365 = vpop.f32.mrb[0].mxu0
  %2366 = vmatprep.mubr.bf16.mxu0 0
  %2367 = vmatmul.mubr.bf16.gmra.mrb[0].mxu0 %v1516
  %v2368 = vpop.f32.mrb[0].mxu0
  %v2369 = vadd.f32 %v2080, %v2368
  %v2370 = vpop.f32.mrb[0].mxu0
  %v2371 = vpop.f32.mrb[0].mxu0
  %v2372 = vadd.f32 %v2083, %v2371
  %v2373 = vpop.f32.mrb[0].mxu0
  %2374 = vmatprep.mubr.bf16.mxu0 0
  %2375 = vmatmul.mubr.bf16.gmra.mrb[0].mxu0 %v1519
  %v2376 = vpop.f32.mrb[0].mxu0
  %v2377 = vadd.f32 %v2088, %v2376
  %v2378 = vpop.f32.mrb[0].mxu0
  %v2379 = vpop.f32.mrb[0].mxu0
  %v2380 = vadd.f32 %v2091, %v2379
  %v2381 = vpop.f32.mrb[0].mxu0
  %2382 = vmatprep.mubr.bf16.mxu0 0
  %2383 = vmatmul.mubr.bf16.gmra.mrb[0].mxu0 %v1522
  %v2384 = vpop.f32.mrb[0].mxu0
  %v2385 = vadd.f32 %v2096, %v2384
  %v2386 = vpop.f32.mrb[0].mxu0
  %v2387 = vpop.f32.mrb[0].mxu0
  %v2388 = vadd.f32 %v2099, %v2387
  %v2389 = vpop.f32.mrb[0].mxu0
  %2390 = vdwg.mxu0
  %v2391 = vadd.f32 %v83, %v2137
  %v2392 = vadd.f32 %v84, %v2140
  %v2393 = vadd.f32 %v85, %v2145
  %v2394 = vadd.f32 %v86, %v2148
  %v2395 = vadd.f32 %v87, %v2153
  %v2396 = vadd.f32 %v88, %v2156
  %v2397 = vadd.f32 %v89, %v2161
  %v2398 = vadd.f32 %v90, %v2164
  %v2399 = vadd.f32 %v91, %v2169
  %v2400 = vadd.f32 %v92, %v2172
  %v2401 = vadd.f32 %v93, %v2177
  %v2402 = vadd.f32 %v94, %v2180
  %v2403 = vadd.f32 %v95, %v2185
  %v2404 = vadd.f32 %v96, %v2188
  %v2405 = vadd.f32 %v97, %v2193
  %v2406 = vadd.f32 %v98, %v2196
  %v2407 = vadd.f32 %v99, %v2201
  %v2408 = vadd.f32 %v100, %v2204
  %v2409 = vadd.f32 %v101, %v2209
  %v2410 = vadd.f32 %v102, %v2212
  %v2411 = vadd.f32 %v103, %v2217
  %v2412 = vadd.f32 %v104, %v2220
  %v2413 = vadd.f32 %v105, %v2225
  %v2414 = vadd.f32 %v106, %v2228
  %v2415 = vadd.f32 %v107, %v2233
  %v2416 = vadd.f32 %v108, %v2236
  %v2417 = vadd.f32 %v109, %v2241
  %v2418 = vadd.f32 %v110, %v2244
  %v2419 = vadd.f32 %v111, %v2249
  %v2420 = vadd.f32 %v112, %v2252
  %v2421 = vadd.f32 %v113, %v2257
  %v2422 = vadd.f32 %v114, %v2260
  %v2423 = vadd.f32 %v115, %v2265
  %v2424 = vadd.f32 %v116, %v2268
  %v2425 = vadd.f32 %v117, %v2273
  %v2426 = vadd.f32 %v118, %v2276
  %v2427 = vadd.f32 %v119, %v2281
  %v2428 = vadd.f32 %v120, %v2284
  %v2429 = vadd.f32 %v121, %v2289
  %v2430 = vadd.f32 %v122, %v2292
  %v2431 = vadd.f32 %v123, %v2297
  %v2432 = vadd.f32 %v124, %v2300
  %v2433 = vadd.f32 %v125, %v2305
  %v2434 = vadd.f32 %v126, %v2308
  %v2435 = vadd.f32 %v127, %v2313
  %v2436 = vadd.f32 %v128, %v2316
  %v2437 = vadd.f32 %v129, %v2321
  %v2438 = vadd.f32 %v130, %v2324
  %v2439 = vadd.f32 %v131, %v2329
  %v2440 = vadd.f32 %v132, %v2332
  %v2441 = vadd.f32 %v133, %v2337
  %v2442 = vadd.f32 %v134, %v2340
  %v2443 = vadd.f32 %v135, %v2345
  %v2444 = vadd.f32 %v136, %v2348
  %v2445 = vadd.f32 %v137, %v2353
  %v2446 = vadd.f32 %v138, %v2356
  %v2447 = vadd.f32 %v139, %v2361
  %v2448 = vadd.f32 %v140, %v2364
  %v2449 = vadd.f32 %v141, %v2369
  %v2450 = vadd.f32 %v142, %v2372
  %v2451 = vadd.f32 %v143, %v2377
  %v2452 = vadd.f32 %v144, %v2380
  %v2453 = vadd.f32 %v145, %v2385
  %v2454 = vadd.f32 %v146, %v2388
  %2455 = vst [vmem:[%s3] sm:$0xff] %v2391
  %2456 = vst [vmem:[%s3 + $0x8] sm:$0xff] %v2392
  %2457 = vst [vmem:[%s3 + $0x10] sm:$0xff] %v2393
  %2458 = vst [vmem:[%s3 + $0x18] sm:$0xff] %v2394
  %2459 = vst [vmem:[%s3 + $0x20] sm:$0xff] %v2395
  %2460 = vst [vmem:[%s3 + $0x28] sm:$0xff] %v2396
  %2461 = vst [vmem:[%s3 + $0x30] sm:$0xff] %v2397
  %2462 = vst [vmem:[%s3 + $0x38] sm:$0xff] %v2398
  %2463 = vst [vmem:[%s3 + $0x40] sm:$0xff] %v2399
  %2464 = vst [vmem:[%s3 + $0x48] sm:$0xff] %v2400
  %2465 = vst [vmem:[%s3 + $0x50] sm:$0xff] %v2401
  %2466 = vst [vmem:[%s3 + $0x58] sm:$0xff] %v2402
  %2467 = vst [vmem:[%s3 + $0x60] sm:$0xff] %v2403
  %2468 = vst [vmem:[%s3 + $0x68] sm:$0xff] %v2404
  %2469 = vst [vmem:[%s3 + $0x70] sm:$0xff] %v2405
  %2470 = vst [vmem:[%s3 + $0x78] sm:$0xff] %v2406
  %2471 = vst [vmem:[%s3 + $0x80] sm:$0xff] %v2407
  %2472 = vst [vmem:[%s3 + $0x88] sm:$0xff] %v2408
  %2473 = vst [vmem:[%s3 + $0x90] sm:$0xff] %v2409
  %2474 = vst [vmem:[%s3 + $0x98] sm:$0xff] %v2410
  %2475 = vst [vmem:[%s3 + $0xa0] sm:$0xff] %v2411
  %2476 = vst [vmem:[%s3 + $0xa8] sm:$0xff] %v2412
  %2477 = vst [vmem:[%s3 + $0xb0] sm:$0xff] %v2413
  %2478 = vst [vmem:[%s3 + $0xb8] sm:$0xff] %v2414
  %2479 = vst [vmem:[%s3 + $0xc0] sm:$0xff] %v2415
  %2480 = vst [vmem:[%s3 + $0xc8] sm:$0xff] %v2416
  %2481 = vst [vmem:[%s3 + $0xd0] sm:$0xff] %v2417
  %2482 = vst [vmem:[%s3 + $0xd8] sm:$0xff] %v2418
  %2483 = vst [vmem:[%s3 + $0xe0] sm:$0xff] %v2419
  %2484 = vst [vmem:[%s3 + $0xe8] sm:$0xff] %v2420
  %2485 = vst [vmem:[%s3 + $0xf0] sm:$0xff] %v2421
  %2486 = vst [vmem:[%s3 + $0xf8] sm:$0xff] %v2422
  %2487 = vst [vmem:[%s3 + $0x100] sm:$0xff] %v2423
  %2488 = vst [vmem:[%s3 + $0x108] sm:$0xff] %v2424
  %2489 = vst [vmem:[%s3 + $0x110] sm:$0xff] %v2425
  %2490 = vst [vmem:[%s3 + $0x118] sm:$0xff] %v2426
  %2491 = vst [vmem:[%s3 + $0x120] sm:$0xff] %v2427
  %2492 = vst [vmem:[%s3 + $0x128] sm:$0xff] %v2428
  %2493 = vst [vmem:[%s3 + $0x130] sm:$0xff] %v2429
  %2494 = vst [vmem:[%s3 + $0x138] sm:$0xff] %v2430
  %2495 = vst [vmem:[%s3 + $0x140] sm:$0xff] %v2431
  %2496 = vst [vmem:[%s3 + $0x148] sm:$0xff] %v2432
  %2497 = vst [vmem:[%s3 + $0x150] sm:$0xff] %v2433
  %2498 = vst [vmem:[%s3 + $0x158] sm:$0xff] %v2434
  %2499 = vst [vmem:[%s3 + $0x160] sm:$0xff] %v2435
  %2500 = vst [vmem:[%s3 + $0x168] sm:$0xff] %v2436
  %2501 = vst [vmem:[%s3 + $0x170] sm:$0xff] %v2437
  %2502 = vst [vmem:[%s3 + $0x178] sm:$0xff] %v2438
  %2503 = vst [vmem:[%s3 + $0x180] sm:$0xff] %v2439
  %2504 = vst [vmem:[%s3 + $0x188] sm:$0xff] %v2440
  %2505 = vst [vmem:[%s3 + $0x190] sm:$0xff] %v2441
  %2506 = vst [vmem:[%s3 + $0x198] sm:$0xff] %v2442
  %2507 = vst [vmem:[%s3 + $0x1a0] sm:$0xff] %v2443
  %2508 = vst [vmem:[%s3 + $0x1a8] sm:$0xff] %v2444
  %2509 = vst [vmem:[%s3 + $0x1b0] sm:$0xff] %v2445
  %2510 = vst [vmem:[%s3 + $0x1b8] sm:$0xff] %v2446
  %2511 = vst [vmem:[%s3 + $0x1c0] sm:$0xff] %v2447
  %2512 = vst [vmem:[%s3 + $0x1c8] sm:$0xff] %v2448
  %2513 = vst [vmem:[%s3 + $0x1d0] sm:$0xff] %v2449
  %2514 = vst [vmem:[%s3 + $0x1d8] sm:$0xff] %v2450
  %2515 = vst [vmem:[%s3 + $0x1e0] sm:$0xff] %v2451
  %2516 = vst [vmem:[%s3 + $0x1e8] sm:$0xff] %v2452
  %2517 = vst [vmem:[%s3 + $0x1f0] sm:$0xff] %v2453
  %2518 = vst [vmem:[%s3 + $0x1f8] sm:$0xff] %v2454
  // Predicated region
  $region18: #{simple_cnn_forward.12} parent=0 // pred_check
    %p2519 = pneg %p15
  $region19: #{simple_cnn_forward.12} parent=0 // pred_check_branch
    %2521 = sbr.rel (%p2519) target = $region21
  $region20: #{simple_cnn_forward.12} parent=0 // pred_region
    %v2522 = vld [vmem:[%s3] sm:$0xff]
    %v2523 = vld [vmem:[%s3 + $0x8] sm:$0xff]
    %v2524 = vld [vmem:[%s3 + $0x10] sm:$0xff]
    %v2525 = vld [vmem:[%s3 + $0x18] sm:$0xff]
    %v2526 = vld [vmem:[%s3 + $0x20] sm:$0xff]
    %v2527 = vld [vmem:[%s3 + $0x28] sm:$0xff]
    %v2528 = vld [vmem:[%s3 + $0x30] sm:$0xff]
    %v2529 = vld [vmem:[%s3 + $0x38] sm:$0xff]
    %v2530 = vld [vmem:[%s3 + $0x40] sm:$0xff]
    %v2531 = vld [vmem:[%s3 + $0x48] sm:$0xff]
    %v2532 = vld [vmem:[%s3 + $0x50] sm:$0xff]
    %v2533 = vld [vmem:[%s3 + $0x58] sm:$0xff]
    %v2534 = vld [vmem:[%s3 + $0x60] sm:$0xff]
    %v2535 = vld [vmem:[%s3 + $0x68] sm:$0xff]
    %v2536 = vld [vmem:[%s3 + $0x70] sm:$0xff]
    %v2537 = vld [vmem:[%s3 + $0x78] sm:$0xff]
    %v2538 = vld [vmem:[%s3 + $0x80] sm:$0xff]
    %v2539 = vld [vmem:[%s3 + $0x88] sm:$0xff]
    %v2540 = vld [vmem:[%s3 + $0x90] sm:$0xff]
    %v2541 = vld [vmem:[%s3 + $0x98] sm:$0xff]
    %v2542 = vld [vmem:[%s3 + $0xa0] sm:$0xff]
    %v2543 = vld [vmem:[%s3 + $0xa8] sm:$0xff]
    %v2544 = vld [vmem:[%s3 + $0xb0] sm:$0xff]
    %v2545 = vld [vmem:[%s3 + $0xb8] sm:$0xff]
    %v2546 = vld [vmem:[%s3 + $0xc0] sm:$0xff]
    %v2547 = vld [vmem:[%s3 + $0xc8] sm:$0xff]
    %v2548 = vld [vmem:[%s3 + $0xd0] sm:$0xff]
    %v2549 = vld [vmem:[%s3 + $0xd8] sm:$0xff]
    %v2550 = vld [vmem:[%s3 + $0xe0] sm:$0xff]
    %v2551 = vld [vmem:[%s3 + $0xe8] sm:$0xff]
    %v2552 = vld [vmem:[%s3 + $0xf0] sm:$0xff]
    %v2553 = vld [vmem:[%s3 + $0xf8] sm:$0xff]
    %v2554 = vld [vmem:[%s3 + $0x100] sm:$0xff]
    %v2555 = vld [vmem:[%s3 + $0x108] sm:$0xff]
    %v2556 = vld [vmem:[%s3 + $0x110] sm:$0xff]
    %v2557 = vld [vmem:[%s3 + $0x118] sm:$0xff]
    %v2558 = vld [vmem:[%s3 + $0x120] sm:$0xff]
    %v2559 = vld [vmem:[%s3 + $0x128] sm:$0xff]
    %v2560 = vld [vmem:[%s3 + $0x130] sm:$0xff]
    %v2561 = vld [vmem:[%s3 + $0x138] sm:$0xff]
    %v2562 = vld [vmem:[%s3 + $0x140] sm:$0xff]
    %v2563 = vld [vmem:[%s3 + $0x148] sm:$0xff]
    %v2564 = vld [vmem:[%s3 + $0x150] sm:$0xff]
    %v2565 = vld [vmem:[%s3 + $0x158] sm:$0xff]
    %v2566 = vld [vmem:[%s3 + $0x160] sm:$0xff]
    %v2567 = vld [vmem:[%s3 + $0x168] sm:$0xff]
    %v2568 = vld [vmem:[%s3 + $0x170] sm:$0xff]
    %v2569 = vld [vmem:[%s3 + $0x178] sm:$0xff]
    %v2570 = vld [vmem:[%s3 + $0x180] sm:$0xff]
    %v2571 = vld [vmem:[%s3 + $0x188] sm:$0xff]
    %v2572 = vld [vmem:[%s3 + $0x190] sm:$0xff]
    %v2573 = vld [vmem:[%s3 + $0x198] sm:$0xff]
    %v2574 = vld [vmem:[%s3 + $0x1a0] sm:$0xff]
    %v2575 = vld [vmem:[%s3 + $0x1a8] sm:$0xff]
    %v2576 = vld [vmem:[%s3 + $0x1b0] sm:$0xff]
    %v2577 = vld [vmem:[%s3 + $0x1b8] sm:$0xff]
    %v2578 = vld [vmem:[%s3 + $0x1c0] sm:$0xff]
    %v2579 = vld [vmem:[%s3 + $0x1c8] sm:$0xff]
    %v2580 = vld [vmem:[%s3 + $0x1d0] sm:$0xff]
    %v2581 = vld [vmem:[%s3 + $0x1d8] sm:$0xff]
    %v2582 = vld [vmem:[%s3 + $0x1e0] sm:$0xff]
    %v2583 = vld [vmem:[%s3 + $0x1e8] sm:$0xff]
    %v2584 = vld [vmem:[%s3 + $0x1f0] sm:$0xff]
    %v2585 = vld [vmem:[%s3 + $0x1f8] sm:$0xff]
    %v2586 = vld [vmem:[%s2] sm:$0x1]
    %v2588 = vlaneseq
    %v2589 = vshrl.u32 %v2588, 7
    %v2590 = vsub.s32 0, %v2589
    %v2591 = vrot.slane %v2586, %v2590
    %v2593 = vadd.f32 %v2522, %v2591
    %v2594 = vadd.f32 %v2523, %v2591
    %v2595 = vadd.f32 %v2524, %v2591
    %v2596 = vadd.f32 %v2525, %v2591
    %v2597 = vadd.f32 %v2526, %v2591
    %v2598 = vadd.f32 %v2527, %v2591
    %v2599 = vadd.f32 %v2528, %v2591
    %v2600 = vadd.f32 %v2529, %v2591
    %v2601 = vadd.f32 %v2530, %v2591
    %v2602 = vadd.f32 %v2531, %v2591
    %v2603 = vadd.f32 %v2532, %v2591
    %v2604 = vadd.f32 %v2533, %v2591
    %v2605 = vadd.f32 %v2534, %v2591
    %v2606 = vadd.f32 %v2535, %v2591
    %v2607 = vadd.f32 %v2536, %v2591
    %v2608 = vadd.f32 %v2537, %v2591
    %v2609 = vadd.f32 %v2538, %v2591
    %v2610 = vadd.f32 %v2539, %v2591
    %v2611 = vadd.f32 %v2540, %v2591
    %v2612 = vadd.f32 %v2541, %v2591
    %v2613 = vadd.f32 %v2542, %v2591
    %v2614 = vadd.f32 %v2543, %v2591
    %v2615 = vadd.f32 %v2544, %v2591
    %v2616 = vadd.f32 %v2545, %v2591
    %v2617 = vadd.f32 %v2546, %v2591
    %v2618 = vadd.f32 %v2547, %v2591
    %v2619 = vadd.f32 %v2548, %v2591
    %v2620 = vadd.f32 %v2549, %v2591
    %v2621 = vadd.f32 %v2550, %v2591
    %v2622 = vadd.f32 %v2551, %v2591
    %v2623 = vadd.f32 %v2552, %v2591
    %v2624 = vadd.f32 %v2553, %v2591
    %v2625 = vadd.f32 %v2554, %v2591
    %v2626 = vadd.f32 %v2555, %v2591
    %v2627 = vadd.f32 %v2556, %v2591
    %v2628 = vadd.f32 %v2557, %v2591
    %v2629 = vadd.f32 %v2558, %v2591
    %v2630 = vadd.f32 %v2559, %v2591
    %v2631 = vadd.f32 %v2560, %v2591
    %v2632 = vadd.f32 %v2561, %v2591
    %v2633 = vadd.f32 %v2562, %v2591
    %v2634 = vadd.f32 %v2563, %v2591
    %v2635 = vadd.f32 %v2564, %v2591
    %v2636 = vadd.f32 %v2565, %v2591
    %v2637 = vadd.f32 %v2566, %v2591
    %v2638 = vadd.f32 %v2567, %v2591
    %v2639 = vadd.f32 %v2568, %v2591
    %v2640 = vadd.f32 %v2569, %v2591
    %v2641 = vadd.f32 %v2570, %v2591
    %v2642 = vadd.f32 %v2571, %v2591
    %v2643 = vadd.f32 %v2572, %v2591
    %v2644 = vadd.f32 %v2573, %v2591
    %v2645 = vadd.f32 %v2574, %v2591
    %v2646 = vadd.f32 %v2575, %v2591
    %v2647 = vadd.f32 %v2576, %v2591
    %v2648 = vadd.f32 %v2577, %v2591
    %v2649 = vadd.f32 %v2578, %v2591
    %v2650 = vadd.f32 %v2579, %v2591
    %v2651 = vadd.f32 %v2580, %v2591
    %v2652 = vadd.f32 %v2581, %v2591
    %v2653 = vadd.f32 %v2582, %v2591
    %v2654 = vadd.f32 %v2583, %v2591
    %v2655 = vadd.f32 %v2584, %v2591
    %v2656 = vadd.f32 %v2585, %v2591
    %v2657 = vmax.f32 %v2593, 0.0
    %v2658 = vmax.f32 %v2594, 0.0
    %v2659 = vmax.f32 %v2595, 0.0
    %v2660 = vmax.f32 %v2596, 0.0
    %v2661 = vmax.f32 %v2597, 0.0
    %v2662 = vmax.f32 %v2598, 0.0
    %v2663 = vmax.f32 %v2599, 0.0
    %v2664 = vmax.f32 %v2600, 0.0
    %v2665 = vmax.f32 %v2601, 0.0
    %v2666 = vmax.f32 %v2602, 0.0
    %v2667 = vmax.f32 %v2603, 0.0
    %v2668 = vmax.f32 %v2604, 0.0
    %v2669 = vmax.f32 %v2605, 0.0
    %v2670 = vmax.f32 %v2606, 0.0
    %v2671 = vmax.f32 %v2607, 0.0
    %v2672 = vmax.f32 %v2608, 0.0
    %v2673 = vmax.f32 %v2609, 0.0
    %v2674 = vmax.f32 %v2610, 0.0
    %v2675 = vmax.f32 %v2611, 0.0
    %v2676 = vmax.f32 %v2612, 0.0
    %v2677 = vmax.f32 %v2613, 0.0
    %v2678 = vmax.f32 %v2614, 0.0
    %v2679 = vmax.f32 %v2615, 0.0
    %v2680 = vmax.f32 %v2616, 0.0
    %v2681 = vmax.f32 %v2617, 0.0
    %v2682 = vmax.f32 %v2618, 0.0
    %v2683 = vmax.f32 %v2619, 0.0
    %v2684 = vmax.f32 %v2620, 0.0
    %v2685 = vmax.f32 %v2621, 0.0
    %v2686 = vmax.f32 %v2622, 0.0
    %v2687 = vmax.f32 %v2623, 0.0
    %v2688 = vmax.f32 %v2624, 0.0
    %v2689 = vmax.f32 %v2625, 0.0
    %v2690 = vmax.f32 %v2626, 0.0
    %v2691 = vmax.f32 %v2627, 0.0
    %v2692 = vmax.f32 %v2628, 0.0
    %v2693 = vmax.f32 %v2629, 0.0
    %v2694 = vmax.f32 %v2630, 0.0
    %v2695 = vmax.f32 %v2631, 0.0
    %v2696 = vmax.f32 %v2632, 0.0
    %v2697 = vmax.f32 %v2633, 0.0
    %v2698 = vmax.f32 %v2634, 0.0
    %v2699 = vmax.f32 %v2635, 0.0
    %v2700 = vmax.f32 %v2636, 0.0
    %v2701 = vmax.f32 %v2637, 0.0
    %v2702 = vmax.f32 %v2638, 0.0
    %v2703 = vmax.f32 %v2639, 0.0
    %v2704 = vmax.f32 %v2640, 0.0
    %v2705 = vmax.f32 %v2641, 0.0
    %v2706 = vmax.f32 %v2642, 0.0
    %v2707 = vmax.f32 %v2643, 0.0
    %v2708 = vmax.f32 %v2644, 0.0
    %v2709 = vmax.f32 %v2645, 0.0
    %v2710 = vmax.f32 %v2646, 0.0
    %v2711 = vmax.f32 %v2647, 0.0
    %v2712 = vmax.f32 %v2648, 0.0
    %v2713 = vmax.f32 %v2649, 0.0
    %v2714 = vmax.f32 %v2650, 0.0
    %v2715 = vmax.f32 %v2651, 0.0
    %v2716 = vmax.f32 %v2652, 0.0
    %v2717 = vmax.f32 %v2653, 0.0
    %v2718 = vmax.f32 %v2654, 0.0
    %v2719 = vmax.f32 %v2655, 0.0
    %v2720 = vmax.f32 %v2656, 0.0
    %2721 = vst [vmem:[%s3] sm:$0xff] %v2657
    %2722 = vst [vmem:[%s3 + $0x8] sm:$0xff] %v2658
    %2723 = vst [vmem:[%s3 + $0x10] sm:$0xff] %v2659
    %2724 = vst [vmem:[%s3 + $0x18] sm:$0xff] %v2660
    %2725 = vst [vmem:[%s3 + $0x20] sm:$0xff] %v2661
    %2726 = vst [vmem:[%s3 + $0x28] sm:$0xff] %v2662
    %2727 = vst [vmem:[%s3 + $0x30] sm:$0xff] %v2663
    %2728 = vst [vmem:[%s3 + $0x38] sm:$0xff] %v2664
    %2729 = vst [vmem:[%s3 + $0x40] sm:$0xff] %v2665
    %2730 = vst [vmem:[%s3 + $0x48] sm:$0xff] %v2666
    %2731 = vst [vmem:[%s3 + $0x50] sm:$0xff] %v2667
    %2732 = vst [vmem:[%s3 + $0x58] sm:$0xff] %v2668
    %2733 = vst [vmem:[%s3 + $0x60] sm:$0xff] %v2669
    %2734 = vst [vmem:[%s3 + $0x68] sm:$0xff] %v2670
    %2735 = vst [vmem:[%s3 + $0x70] sm:$0xff] %v2671
    %2736 = vst [vmem:[%s3 + $0x78] sm:$0xff] %v2672
    %2737 = vst [vmem:[%s3 + $0x80] sm:$0xff] %v2673
    %2738 = vst [vmem:[%s3 + $0x88] sm:$0xff] %v2674
    %2739 = vst [vmem:[%s3 + $0x90] sm:$0xff] %v2675
    %2740 = vst [vmem:[%s3 + $0x98] sm:$0xff] %v2676
    %2741 = vst [vmem:[%s3 + $0xa0] sm:$0xff] %v2677
    %2742 = vst [vmem:[%s3 + $0xa8] sm:$0xff] %v2678
    %2743 = vst [vmem:[%s3 + $0xb0] sm:$0xff] %v2679
    %2744 = vst [vmem:[%s3 + $0xb8] sm:$0xff] %v2680
    %2745 = vst [vmem:[%s3 + $0xc0] sm:$0xff] %v2681
    %2746 = vst [vmem:[%s3 + $0xc8] sm:$0xff] %v2682
    %2747 = vst [vmem:[%s3 + $0xd0] sm:$0xff] %v2683
    %2748 = vst [vmem:[%s3 + $0xd8] sm:$0xff] %v2684
    %2749 = vst [vmem:[%s3 + $0xe0] sm:$0xff] %v2685
    %2750 = vst [vmem:[%s3 + $0xe8] sm:$0xff] %v2686
    %2751 = vst [vmem:[%s3 + $0xf0] sm:$0xff] %v2687
    %2752 = vst [vmem:[%s3 + $0xf8] sm:$0xff] %v2688
    %2753 = vst [vmem:[%s3 + $0x100] sm:$0xff] %v2689
    %2754 = vst [vmem:[%s3 + $0x108] sm:$0xff] %v2690
    %2755 = vst [vmem:[%s3 + $0x110] sm:$0xff] %v2691
    %2756 = vst [vmem:[%s3 + $0x118] sm:$0xff] %v2692
    %2757 = vst [vmem:[%s3 + $0x120] sm:$0xff] %v2693
    %2758 = vst [vmem:[%s3 + $0x128] sm:$0xff] %v2694
    %2759 = vst [vmem:[%s3 + $0x130] sm:$0xff] %v2695
    %2760 = vst [vmem:[%s3 + $0x138] sm:$0xff] %v2696
    %2761 = vst [vmem:[%s3 + $0x140] sm:$0xff] %v2697
    %2762 = vst [vmem:[%s3 + $0x148] sm:$0xff] %v2698
    %2763 = vst [vmem:[%s3 + $0x150] sm:$0xff] %v2699
    %2764 = vst [vmem:[%s3 + $0x158] sm:$0xff] %v2700
    %2765 = vst [vmem:[%s3 + $0x160] sm:$0xff] %v2701
    %2766 = vst [vmem:[%s3 + $0x168] sm:$0xff] %v2702
    %2767 = vst [vmem:[%s3 + $0x170] sm:$0xff] %v2703
    %2768 = vst [vmem:[%s3 + $0x178] sm:$0xff] %v2704
    %2769 = vst [vmem:[%s3 + $0x180] sm:$0xff] %v2705
    %2770 = vst [vmem:[%s3 + $0x188] sm:$0xff] %v2706
    %2771 = vst [vmem:[%s3 + $0x190] sm:$0xff] %v2707
    %2772 = vst [vmem:[%s3 + $0x198] sm:$0xff] %v2708
    %2773 = vst [vmem:[%s3 + $0x1a0] sm:$0xff] %v2709
    %2774 = vst [vmem:[%s3 + $0x1a8] sm:$0xff] %v2710
    %2775 = vst [vmem:[%s3 + $0x1b0] sm:$0xff] %v2711
    %2776 = vst [vmem:[%s3 + $0x1b8] sm:$0xff] %v2712
    %2777 = vst [vmem:[%s3 + $0x1c0] sm:$0xff] %v2713
    %2778 = vst [vmem:[%s3 + $0x1c8] sm:$0xff] %v2714
    %2779 = vst [vmem:[%s3 + $0x1d0] sm:$0xff] %v2715
    %2780 = vst [vmem:[%s3 + $0x1d8] sm:$0xff] %v2716
    %2781 = vst [vmem:[%s3 + $0x1e0] sm:$0xff] %v2717
    %2782 = vst [vmem:[%s3 + $0x1e8] sm:$0xff] %v2718
    %2783 = vst [vmem:[%s3 + $0x1f0] sm:$0xff] %v2719
    %2784 = vst [vmem:[%s3 + $0x1f8] sm:$0xff] %v2720
  $region21: #{simple_cnn_forward.12} parent=0 // pred_fallthru
    _
  // Predicated region
  $region22: #{simple_cnn_forward.12} parent=0 // pred_check
    _
  $region23: #{simple_cnn_forward.12} parent=0 // pred_check_branch
    %2786 = sbr.rel (0) target = $region25
  $region24: #{simple_cnn_forward.12} parent=0 // pred_region
    _
  $region25: #{simple_cnn_forward.12} parent=0 // pred_fallthru
    _
  // Predicated region
  $region26: #{simple_cnn_forward.12} parent=0 // pred_check
    _
  $region27: #{simple_cnn_forward.12} parent=0 // pred_check_branch
    %2788 = sbr.rel (0) target = $region29
  $region28: #{simple_cnn_forward.12} parent=0 // pred_region
    _
  $region29: #{simple_cnn_forward.12} parent=0 // pred_fallthru
    _

// kernel: simple_cnn_forward.14
$region0: #{simple_cnn_forward.14}
  #allocation0 [shape = 'u32[]', space=smem, size = 0x4, offset = 0x4, fixed_abs, tag = 'smem constant byte address 0x4 - core index']
  #allocation1 [shape = 'u32[144,128]{1,0:T(1,128)}', space=vmem, size = 0x12000, scoped, tag = 'internal scratch']
  %s0 = inlined_call_operand.vmem [shape: bf16[2,8192], index: 0, kind: input, shape index: {}]
  %s1 = inlined_call_operand.vmem [shape: bf16[8192,512], index: 1, kind: input, shape index: {}]
  %s2 = inlined_call_operand.vmem [shape: f32[1,512], index: 2, kind: input, shape index: {}]
  %s3 = inlined_call_operand.vmem [shape: f32[2,512], index: 3, kind: output, shape index: {}]
  %s4 = sld [smem:[#allocation0]]
  $region91: #{simple_cnn_forward.14} parent=0
    _
  %s6 = ssub.s32 1, %s4
  %s7 = scalar_select 0, %s6, %s4
  $region1: #{simple_cnn_forward.14} parent=0
    #allocation2 [shape = 'u8[1048576]{0}', space=vmem, size = 0x100000, scoped, tag = 'input window, operand 1']
    loop: start=0, step=1, limit=18
    $region2: #{simple_cnn_forward.14} parent=1 // loop_pre_header
      _
    $region3: #{simple_cnn_forward.14} parent=1 // loop_header
      %s9 = sphi 0, %s13
      %p10 = scmp.ge.s32.totalorder %s9, 18
      %s16 = sphi 0, %s35
      %s17 = sphi 0, %s31
      %s18 = sphi 0, %s27
      %s19 = sphi 0, %s16
      %s20 = sphi 0, %s17
      %s21 = sphi 0, %s18
      %s22 = sphi 0, %s19
      %s23 = sphi 0, %s20
      %s24 = sphi 0, %s21
      %s40 = sphi 0, %s42
      %s43 = sphi 0, %s40
      %s44 = sphi 0, %s43
      %s60 = sphi 0, %s44
      %s68 = sphi 0, %s70
      %s71 = sphi 0, %s68
      %s72 = sphi 0, %s71
      %s88 = sphi 0, %s72
      %s94 = sphi 0, %s96
      %s97 = sphi 0, %s94
      %s98 = sphi 0, %s97
      %s114 = sphi 0, %s98
      %s122 = sphi 0, %s124
      %s125 = sphi 0, %s122
      %s126 = sphi 0, %s125
      %s142 = sphi 0, %s126
    $region4: #{simple_cnn_forward.14} parent=1 // loop_header_branch
      %12 = sbr.rel (%p10) target = $region8
    $region5: #{simple_cnn_forward.14} parent=1 // loop_body
      %s14 = ssub.s32 %s9, 1
      %s15 = ssub.s32 %s9, 2
      %s25 = sadd.s32 1, %s18
      %p26 = scmp.ge.s32.totalorder %s25, 8
      %s27 = scalar_select %p26, 0, %s25
      %s28 = sadd.s32 1, %s17
      %s29 = scalar_select %p26, %s28, %s17
      %p30 = scmp.ge.s32.totalorder %s29, 2
      %s31 = scalar_select %p30, 0, %s29
      %s32 = sadd.s32 1, %s16
      %s33 = scalar_select %p30, %s32, %s16
      %p34 = scmp.ge.s32.totalorder %s33, 1
      %s35 = scalar_select %p34, 0, %s33
      %s36 = ssub.s32 %s16, %s35
      %s37 = ssub.s32 %s18, %s27
      %s38 = sor.u32 %s36, %s37
      %p39 = scmp.eq.s32.totalorder %s38, 0
      %s41 = sadd.s32 %s40, 1
      %s42 = scalar_select %p39, %s40, %s41
      %p45 = pneg %p39
      %p46 = scmp.eq.s32.totalorder %s9, 15
      %p47 = por %p45, %p46
      %p48 = scmp.ne.s32.totalorder %s40, %s43
      %p49 = scmp.eq.s32.totalorder %s9, 0
      %p50 = por %p48, %p49
      %p51 = scmp.ne.s32.totalorder %s40, %s43
      %p52 = scmp.eq.s32.totalorder %s14, 15
      %p53 = por %p51, %p52
      %p54 = scmp.ne.s32.totalorder %s43, %s44
      %p55 = scmp.eq.s32.totalorder %s14, 0
      %p56 = por %p54, %p55
      %p57 = scmp.ne.s32.totalorder %s43, %s44
      %p58 = scmp.eq.s32.totalorder %s15, 15
      %p59 = por %p57, %p58
      %p61 = scmp.ne.s32.totalorder %s44, %s60
      %p62 = scmp.eq.s32.totalorder %s15, 0
      %p63 = por %p61, %p62
      %s64 = ssub.s32 %s18, %s27
      %s65 = ssub.s32 %s17, %s31
      %s66 = sor.u32 %s64, %s65
      %p67 = scmp.eq.s32.totalorder %s66, 0
      %s69 = sadd.s32 %s68, 1
      %s70 = scalar_select %p67, %s68, %s69
      %p73 = pneg %p67
      %p74 = scmp.eq.s32.totalorder %s9, 15
      %p75 = por %p73, %p74
      %p76 = scmp.ne.s32.totalorder %s68, %s71
      %p77 = scmp.eq.s32.totalorder %s9, 0
      %p78 = por %p76, %p77
      %p79 = scmp.ne.s32.totalorder %s68, %s71
      %p80 = scmp.eq.s32.totalorder %s14, 15
      %p81 = por %p79, %p80
      %p82 = scmp.ne.s32.totalorder %s71, %s72
      %p83 = scmp.eq.s32.totalorder %s14, 0
      %p84 = por %p82, %p83
      %p85 = scmp.ne.s32.totalorder %s71, %s72
      %p86 = scmp.eq.s32.totalorder %s15, 15
      %p87 = por %p85, %p86
      %p89 = scmp.ne.s32.totalorder %s72, %s88
      %p90 = scmp.eq.s32.totalorder %s15, 0
      %p91 = por %p89, %p90
      %s92 = ssub.s32 %s17, %s31
      %p93 = scmp.eq.s32.totalorder %s92, 0
      %s95 = sadd.s32 %s94, 1
      %s96 = scalar_select %p93, %s94, %s95
      %p99 = pneg %p93
      %p100 = scmp.eq.s32.totalorder %s9, 15
      %p101 = por %p99, %p100
      %p102 = scmp.ne.s32.totalorder %s94, %s97
      %p103 = scmp.eq.s32.totalorder %s9, 0
      %p104 = por %p102, %p103
      %p105 = scmp.ne.s32.totalorder %s94, %s97
      %p106 = scmp.eq.s32.totalorder %s14, 15
      %p107 = por %p105, %p106
      %p108 = scmp.ne.s32.totalorder %s97, %s98
      %p109 = scmp.eq.s32.totalorder %s14, 0
      %p110 = por %p108, %p109
      %p111 = scmp.ne.s32.totalorder %s97, %s98
      %p112 = scmp.eq.s32.totalorder %s15, 15
      %p113 = por %p111, %p112
      %p115 = scmp.ne.s32.totalorder %s98, %s114
      %p116 = scmp.eq.s32.totalorder %s15, 0
      %p117 = por %p115, %p116
      %s118 = ssub.s32 %s16, %s35
      %s119 = ssub.s32 %s17, %s31
      %s120 = sor.u32 %s118, %s119
      %p121 = scmp.eq.s32.totalorder %s120, 0
      %s123 = sadd.s32 %s122, 1
      %s124 = scalar_select %p121, %s122, %s123
      %p127 = pneg %p121
      %p128 = scmp.eq.s32.totalorder %s9, 15
      %p129 = por %p127, %p128
      %p130 = scmp.ne.s32.totalorder %s122, %s125
      %p131 = scmp.eq.s32.totalorder %s9, 0
      %p132 = por %p130, %p131
      %p133 = scmp.ne.s32.totalorder %s122, %s125
      %p134 = scmp.eq.s32.totalorder %s14, 15
      %p135 = por %p133, %p134
      %p136 = scmp.ne.s32.totalorder %s125, %s126
      %p137 = scmp.eq.s32.totalorder %s14, 0
      %p138 = por %p136, %p137
      %p139 = scmp.ne.s32.totalorder %s125, %s126
      %p140 = scmp.eq.s32.totalorder %s15, 15
      %p141 = por %p139, %p140
      %p143 = scmp.ne.s32.totalorder %s126, %s142
      %p144 = scmp.eq.s32.totalorder %s15, 0
      %p145 = por %p143, %p144
      %p146 = scmp.le.s32.totalorder 1, %s9
      %p147 = scmp.lt.s32.totalorder %s9, 17
      %p148 = pnand %p146, %p147
      %p149 = pneg %p148
      // Predicated region
      $region9: #{simple_cnn_forward.14} parent=5 // pred_check
        _
      $region10: #{simple_cnn_forward.14} parent=5 // pred_check_branch
        %151 = sbr.rel (%p148) target = $region12
      $region11: #{simple_cnn_forward.14} parent=5 // pred_region
        %s152 = ssub.s32 %s9, 1
      $region12: #{simple_cnn_forward.14} parent=5 // pred_fallthru
        _
      %p153 = scmp.lt.s32.totalorder %s9, 16
      // Predicated region
      $region13: #{simple_cnn_forward.14} parent=5 // pred_check
        %p154 = pneg %p153
      $region14: #{simple_cnn_forward.14} parent=5 // pred_check_branch
        %156 = sbr.rel (%p154) target = $region16
      $region15: #{simple_cnn_forward.14} parent=5 // pred_region
        // Predicated region
        $region17: #{simple_cnn_forward.14} parent=15 // pred_check
          %p157 = pneg %p50
        $region18: #{simple_cnn_forward.14} parent=15 // pred_check_branch
          %159 = sbr.rel (%p157) target = $region20
        $region19: #{simple_cnn_forward.14} parent=15 // pred_region
          %s160 = smul.u32 8, %s18
          %p161 = scmp.lt.s32.totalorder %s16, 0
          %s162 = scalar_select %p161, %s16, 0
          %p163 = scmp.lt.s32.totalorder %s160, 63
          %s164 = scalar_select %p163, %s160, 63
          %s165 = smul.addr %s162, 64
          %s166 = sadd.s32 %s164, %s165
          %s167 = scalar_lea.vmem %s0, %s166
          %s168 = smul.u32 8, %s18
        $region20: #{simple_cnn_forward.14} parent=15 // pred_fallthru
          _
        // Predicated region
        $region21: #{simple_cnn_forward.14} parent=15 // pred_check
          %p169 = pneg %p78
        $region22: #{simple_cnn_forward.14} parent=15 // pred_check_branch
          %171 = sbr.rel (%p169) target = $region24
        $region23: #{simple_cnn_forward.14} parent=15 // pred_region
          %s172 = sand.u32 %s68, 1
          %s173 = sand.u32 %s68, 1
          %s174 = smul.addr %s173, 1024
          %s175 = scalar_lea.vmem [#allocation2], %s174
          %s176 = smul.u32 128, %s18
          %s177 = smul.u32 2, %s17
          %s178 = smul.addr %s176, 4
          %s179 = sadd.s32 %s177, %s178
          %s180 = smul.addr %s179, 4
          %s181 = scalar_lea.vmem %s1, %s180
          // Predicated region
          $region25: #{simple_cnn_forward.14} parent=23 // pred_check
            _
          $region26: #{simple_cnn_forward.14} parent=23 // pred_check_branch
            %183 = sbr.rel (0) target = $region28
          $region27: #{simple_cnn_forward.14} parent=23 // pred_region
            // Predicated region
            $region29: #{simple_cnn_forward.14} parent=27 // pred_check
              _
            $region30: #{simple_cnn_forward.14} parent=27 // pred_check_branch
              %185 = sbr.rel (0) target = $region32
            $region31: #{simple_cnn_forward.14} parent=27 // pred_region
              // Predicated region
              $region44: #{simple_cnn_forward.14} parent=31 // pred_check
                _
              $region45: #{simple_cnn_forward.14} parent=31 // pred_check_branch
                %454 = sbr.rel (0) target = $region47
              $region46: #{simple_cnn_forward.14} parent=31 // pred_region
                loop: start=0, step=1, limit=1
                $region48: #{simple_cnn_forward.14} parent=46 // loop_pre_header
                  _
                $region49: #{simple_cnn_forward.14} parent=46 // loop_header
                  %s456 = sphi 0, %s460
                  %p457 = scmp.ge.s32.totalorder %s456, 1
                  %s461 = sphi %s181, %s181
                  %s462 = sphi %s175, %s175
                $region50: #{simple_cnn_forward.14} parent=46 // loop_header_branch
                  %459 = sbr.rel (%p457) target = $region54
                $region51: #{simple_cnn_forward.14} parent=46 // loop_body
                  %v463 = vld [vmem:[%s461] sm:$0xff]
                  %464 = vst [vmem:[%s462] sm:$0xff] %v463
                  %v465 = vld [vmem:[%s461 + $0x10] sm:$0xff]
                  %466 = vst [vmem:[%s462 + $0x8] sm:$0xff] %v465
                  %v467 = vld [vmem:[%s461 + $0x20] sm:$0xff]
                  %468 = vst [vmem:[%s462 + $0x10] sm:$0xff] %v467
                  %v469 = vld [vmem:[%s461 + $0x30] sm:$0xff]
                  %470 = vst [vmem:[%s462 + $0x18] sm:$0xff] %v469
                  %v471 = vld [vmem:[%s461 + $0x40] sm:$0xff]
                  %472 = vst [vmem:[%s462 + $0x20] sm:$0xff] %v471
                  %v473 = vld [vmem:[%s461 + $0x50] sm:$0xff]
                  %474 = vst [vmem:[%s462 + $0x28] sm:$0xff] %v473
                  %v475 = vld [vmem:[%s461 + $0x60] sm:$0xff]
                  %476 = vst [vmem:[%s462 + $0x30] sm:$0xff] %v475
                  %v477 = vld [vmem:[%s461 + $0x70] sm:$0xff]
                  %478 = vst [vmem:[%s462 + $0x38] sm:$0xff] %v477
                  %v479 = vld [vmem:[%s461 + $0x80] sm:$0xff]
                  %480 = vst [vmem:[%s462 + $0x40] sm:$0xff] %v479
                  %v481 = vld [vmem:[%s461 + $0x90] sm:$0xff]
                  %482 = vst [vmem:[%s462 + $0x48] sm:$0xff] %v481
                  %v483 = vld [vmem:[%s461 + $0xa0] sm:$0xff]
                  %484 = vst [vmem:[%s462 + $0x50] sm:$0xff] %v483
                  %v485 = vld [vmem:[%s461 + $0xb0] sm:$0xff]
                  %486 = vst [vmem:[%s462 + $0x58] sm:$0xff] %v485
                  %v487 = vld [vmem:[%s461 + $0xc0] sm:$0xff]
                  %488 = vst [vmem:[%s462 + $0x60] sm:$0xff] %v487
                  %v489 = vld [vmem:[%s461 + $0xd0] sm:$0xff]
                  %490 = vst [vmem:[%s462 + $0x68] sm:$0xff] %v489
                  %v491 = vld [vmem:[%s461 + $0xe0] sm:$0xff]
                  %492 = vst [vmem:[%s462 + $0x70] sm:$0xff] %v491
                  %v493 = vld [vmem:[%s461 + $0xf0] sm:$0xff]
                  %494 = vst [vmem:[%s462 + $0x78] sm:$0xff] %v493
                  %v495 = vld [vmem:[%s461 + $0x100] sm:$0xff]
                  %496 = vst [vmem:[%s462 + $0x80] sm:$0xff] %v495
                  %v497 = vld [vmem:[%s461 + $0x110] sm:$0xff]
                  %498 = vst [vmem:[%s462 + $0x88] sm:$0xff] %v497
                  %v499 = vld [vmem:[%s461 + $0x120] sm:$0xff]
                  %500 = vst [vmem:[%s462 + $0x90] sm:$0xff] %v499
                  %v501 = vld [vmem:[%s461 + $0x130] sm:$0xff]
                  %502 = vst [vmem:[%s462 + $0x98] sm:$0xff] %v501
                  %v503 = vld [vmem:[%s461 + $0x140] sm:$0xff]
                  %504 = vst [vmem:[%s462 + $0xa0] sm:$0xff] %v503
                  %v505 = vld [vmem:[%s461 + $0x150] sm:$0xff]
                  %506 = vst [vmem:[%s462 + $0xa8] sm:$0xff] %v505
                  %v507 = vld [vmem:[%s461 + $0x160] sm:$0xff]
                  %508 = vst [vmem:[%s462 + $0xb0] sm:$0xff] %v507
                  %v509 = vld [vmem:[%s461 + $0x170] sm:$0xff]
                  %510 = vst [vmem:[%s462 + $0xb8] sm:$0xff] %v509
                  %v511 = vld [vmem:[%s461 + $0x180] sm:$0xff]
                  %512 = vst [vmem:[%s462 + $0xc0] sm:$0xff] %v511
                  %v513 = vld [vmem:[%s461 + $0x190] sm:$0xff]
                  %514 = vst [vmem:[%s462 + $0xc8] sm:$0xff] %v513
                  %v515 = vld [vmem:[%s461 + $0x1a0] sm:$0xff]
                  %516 = vst [vmem:[%s462 + $0xd0] sm:$0xff] %v515
                  %v517 = vld [vmem:[%s461 + $0x1b0] sm:$0xff]
                  %518 = vst [vmem:[%s462 + $0xd8] sm:$0xff] %v517
                  %v519 = vld [vmem:[%s461 + $0x1c0] sm:$0xff]
                  %520 = vst [vmem:[%s462 + $0xe0] sm:$0xff] %v519
                  %v521 = vld [vmem:[%s461 + $0x1d0] sm:$0xff]
                  %522 = vst [vmem:[%s462 + $0xe8] sm:$0xff] %v521
                  %v523 = vld [vmem:[%s461 + $0x1e0] sm:$0xff]
                  %524 = vst [vmem:[%s462 + $0xf0] sm:$0xff] %v523
                  %v525 = vld [vmem:[%s461 + $0x1f0] sm:$0xff]
                  %526 = vst [vmem:[%s462 + $0xf8] sm:$0xff] %v525
                  %v527 = vld [vmem:[%s461 + $0x200] sm:$0xff]
                  %528 = vst [vmem:[%s462 + $0x100] sm:$0xff] %v527
                  %v529 = vld [vmem:[%s461 + $0x210] sm:$0xff]
                  %530 = vst [vmem:[%s462 + $0x108] sm:$0xff] %v529
                  %v531 = vld [vmem:[%s461 + $0x220] sm:$0xff]
                  %532 = vst [vmem:[%s462 + $0x110] sm:$0xff] %v531
                  %v533 = vld [vmem:[%s461 + $0x230] sm:$0xff]
                  %534 = vst [vmem:[%s462 + $0x118] sm:$0xff] %v533
                  %v535 = vld [vmem:[%s461 + $0x240] sm:$0xff]
                  %536 = vst [vmem:[%s462 + $0x120] sm:$0xff] %v535
                  %v537 = vld [vmem:[%s461 + $0x250] sm:$0xff]
                  %538 = vst [vmem:[%s462 + $0x128] sm:$0xff] %v537
                  %v539 = vld [vmem:[%s461 + $0x260] sm:$0xff]
                  %540 = vst [vmem:[%s462 + $0x130] sm:$0xff] %v539
                  %v541 = vld [vmem:[%s461 + $0x270] sm:$0xff]
                  %542 = vst [vmem:[%s462 + $0x138] sm:$0xff] %v541
                  %v543 = vld [vmem:[%s461 + $0x280] sm:$0xff]
                  %544 = vst [vmem:[%s462 + $0x140] sm:$0xff] %v543
                  %v545 = vld [vmem:[%s461 + $0x290] sm:$0xff]
                  %546 = vst [vmem:[%s462 + $0x148] sm:$0xff] %v545
                  %v547 = vld [vmem:[%s461 + $0x2a0] sm:$0xff]
                  %548 = vst [vmem:[%s462 + $0x150] sm:$0xff] %v547
                  %v549 = vld [vmem:[%s461 + $0x2b0] sm:$0xff]
                  %550 = vst [vmem:[%s462 + $0x158] sm:$0xff] %v549
                  %v551 = vld [vmem:[%s461 + $0x2c0] sm:$0xff]
                  %552 = vst [vmem:[%s462 + $0x160] sm:$0xff] %v551
                  %v553 = vld [vmem:[%s461 + $0x2d0] sm:$0xff]
                  %554 = vst [vmem:[%s462 + $0x168] sm:$0xff] %v553
                  %v555 = vld [vmem:[%s461 + $0x2e0] sm:$0xff]
                  %556 = vst [vmem:[%s462 + $0x170] sm:$0xff] %v555
                  %v557 = vld [vmem:[%s461 + $0x2f0] sm:$0xff]
                  %558 = vst [vmem:[%s462 + $0x178] sm:$0xff] %v557
                  %v559 = vld [vmem:[%s461 + $0x300] sm:$0xff]
                  %560 = vst [vmem:[%s462 + $0x180] sm:$0xff] %v559
                  %v561 = vld [vmem:[%s461 + $0x310] sm:$0xff]
                  %562 = vst [vmem:[%s462 + $0x188] sm:$0xff] %v561
                  %v563 = vld [vmem:[%s461 + $0x320] sm:$0xff]
                  %564 = vst [vmem:[%s462 + $0x190] sm:$0xff] %v563
                  %v565 = vld [vmem:[%s461 + $0x330] sm:$0xff]
                  %566 = vst [vmem:[%s462 + $0x198] sm:$0xff] %v565
                  %v567 = vld [vmem:[%s461 + $0x340] sm:$0xff]
                  %568 = vst [vmem:[%s462 + $0x1a0] sm:$0xff] %v567
                  %v569 = vld [vmem:[%s461 + $0x350] sm:$0xff]
                  %570 = vst [vmem:[%s462 + $0x1a8] sm:$0xff] %v569
                  %v571 = vld [vmem:[%s461 + $0x360] sm:$0xff]
                  %572 = vst [vmem:[%s462 + $0x1b0] sm:$0xff] %v571
                  %v573 = vld [vmem:[%s461 + $0x370] sm:$0xff]
                  %574 = vst [vmem:[%s462 + $0x1b8] sm:$0xff] %v573
                  %v575 = vld [vmem:[%s461 + $0x380] sm:$0xff]
                  %576 = vst [vmem:[%s462 + $0x1c0] sm:$0xff] %v575
                  %v577 = vld [vmem:[%s461 + $0x390] sm:$0xff]
                  %578 = vst [vmem:[%s462 + $0x1c8] sm:$0xff] %v577
                  %v579 = vld [vmem:[%s461 + $0x3a0] sm:$0xff]
                  %580 = vst [vmem:[%s462 + $0x1d0] sm:$0xff] %v579
                  %v581 = vld [vmem:[%s461 + $0x3b0] sm:$0xff]
                  %582 = vst [vmem:[%s462 + $0x1d8] sm:$0xff] %v581
                  %v583 = vld [vmem:[%s461 + $0x3c0] sm:$0xff]
                  %584 = vst [vmem:[%s462 + $0x1e0] sm:$0xff] %v583
                  %v585 = vld [vmem:[%s461 + $0x3d0] sm:$0xff]
                  %586 = vst [vmem:[%s462 + $0x1e8] sm:$0xff] %v585
                  %v587 = vld [vmem:[%s461 + $0x3e0] sm:$0xff]
                  %588 = vst [vmem:[%s462 + $0x1f0] sm:$0xff] %v587
                  %v589 = vld [vmem:[%s461 + $0x3f0] sm:$0xff]
                  %590 = vst [vmem:[%s462 + $0x1f8] sm:$0xff] %v589
                  %v591 = vld [vmem:[%s461 + $0x400] sm:$0xff]
                  %592 = vst [vmem:[%s462 + $0x200] sm:$0xff] %v591
                  %v593 = vld [vmem:[%s461 + $0x410] sm:$0xff]
                  %594 = vst [vmem:[%s462 + $0x208] sm:$0xff] %v593
                  %v595 = vld [vmem:[%s461 + $0x420] sm:$0xff]
                  %596 = vst [vmem:[%s462 + $0x210] sm:$0xff] %v595
                  %v597 = vld [vmem:[%s461 + $0x430] sm:$0xff]
                  %598 = vst [vmem:[%s462 + $0x218] sm:$0xff] %v597
                  %v599 = vld [vmem:[%s461 + $0x440] sm:$0xff]
                  %600 = vst [vmem:[%s462 + $0x220] sm:$0xff] %v599
                  %v601 = vld [vmem:[%s461 + $0x450] sm:$0xff]
                  %602 = vst [vmem:[%s462 + $0x228] sm:$0xff] %v601
                  %v603 = vld [vmem:[%s461 + $0x460] sm:$0xff]
                  %604 = vst [vmem:[%s462 + $0x230] sm:$0xff] %v603
                  %v605 = vld [vmem:[%s461 + $0x470] sm:$0xff]
                  %606 = vst [vmem:[%s462 + $0x238] sm:$0xff] %v605
                  %v607 = vld [vmem:[%s461 + $0x480] sm:$0xff]
                  %608 = vst [vmem:[%s462 + $0x240] sm:$0xff] %v607
                  %v609 = vld [vmem:[%s461 + $0x490] sm:$0xff]
                  %610 = vst [vmem:[%s462 + $0x248] sm:$0xff] %v609
                  %v611 = vld [vmem:[%s461 + $0x4a0] sm:$0xff]
                  %612 = vst [vmem:[%s462 + $0x250] sm:$0xff] %v611
                  %v613 = vld [vmem:[%s461 + $0x4b0] sm:$0xff]
                  %614 = vst [vmem:[%s462 + $0x258] sm:$0xff] %v613
                  %v615 = vld [vmem:[%s461 + $0x4c0] sm:$0xff]
                  %616 = vst [vmem:[%s462 + $0x260] sm:$0xff] %v615
                  %v617 = vld [vmem:[%s461 + $0x4d0] sm:$0xff]
                  %618 = vst [vmem:[%s462 + $0x268] sm:$0xff] %v617
                  %v619 = vld [vmem:[%s461 + $0x4e0] sm:$0xff]
                  %620 = vst [vmem:[%s462 + $0x270] sm:$0xff] %v619
                  %v621 = vld [vmem:[%s461 + $0x4f0] sm:$0xff]
                  %622 = vst [vmem:[%s462 + $0x278] sm:$0xff] %v621
                  %v623 = vld [vmem:[%s461 + $0x500] sm:$0xff]
                  %624 = vst [vmem:[%s462 + $0x280] sm:$0xff] %v623
                  %v625 = vld [vmem:[%s461 + $0x510] sm:$0xff]
                  %626 = vst [vmem:[%s462 + $0x288] sm:$0xff] %v625
                  %v627 = vld [vmem:[%s461 + $0x520] sm:$0xff]
                  %628 = vst [vmem:[%s462 + $0x290] sm:$0xff] %v627
                  %v629 = vld [vmem:[%s461 + $0x530] sm:$0xff]
                  %630 = vst [vmem:[%s462 + $0x298] sm:$0xff] %v629
                  %v631 = vld [vmem:[%s461 + $0x540] sm:$0xff]
                  %632 = vst [vmem:[%s462 + $0x2a0] sm:$0xff] %v631
                  %v633 = vld [vmem:[%s461 + $0x550] sm:$0xff]
                  %634 = vst [vmem:[%s462 + $0x2a8] sm:$0xff] %v633
                  %v635 = vld [vmem:[%s461 + $0x560] sm:$0xff]
                  %636 = vst [vmem:[%s462 + $0x2b0] sm:$0xff] %v635
                  %v637 = vld [vmem:[%s461 + $0x570] sm:$0xff]
                  %638 = vst [vmem:[%s462 + $0x2b8] sm:$0xff] %v637
                  %v639 = vld [vmem:[%s461 + $0x580] sm:$0xff]
                  %640 = vst [vmem:[%s462 + $0x2c0] sm:$0xff] %v639
                  %v641 = vld [vmem:[%s461 + $0x590] sm:$0xff]
                  %642 = vst [vmem:[%s462 + $0x2c8] sm:$0xff] %v641
                  %v643 = vld [vmem:[%s461 + $0x5a0] sm:$0xff]
                  %644 = vst [vmem:[%s462 + $0x2d0] sm:$0xff] %v643
                  %v645 = vld [vmem:[%s461 + $0x5b0] sm:$0xff]
                  %646 = vst [vmem:[%s462 + $0x2d8] sm:$0xff] %v645
                  %v647 = vld [vmem:[%s461 + $0x5c0] sm:$0xff]
                  %648 = vst [vmem:[%s462 + $0x2e0] sm:$0xff] %v647
                  %v649 = vld [vmem:[%s461 + $0x5d0] sm:$0xff]
                  %650 = vst [vmem:[%s462 + $0x2e8] sm:$0xff] %v649
                  %v651 = vld [vmem:[%s461 + $0x5e0] sm:$0xff]
                  %652 = vst [vmem:[%s462 + $0x2f0] sm:$0xff] %v651
                  %v653 = vld [vmem:[%s461 + $0x5f0] sm:$0xff]
                  %654 = vst [vmem:[%s462 + $0x2f8] sm:$0xff] %v653
                  %v655 = vld [vmem:[%s461 + $0x600] sm:$0xff]
                  %656 = vst [vmem:[%s462 + $0x300] sm:$0xff] %v655
                  %v657 = vld [vmem:[%s461 + $0x610] sm:$0xff]
                  %658 = vst [vmem:[%s462 + $0x308] sm:$0xff] %v657
                  %v659 = vld [vmem:[%s461 + $0x620] sm:$0xff]
                  %660 = vst [vmem:[%s462 + $0x310] sm:$0xff] %v659
                  %v661 = vld [vmem:[%s461 + $0x630] sm:$0xff]
                  %662 = vst [vmem:[%s462 + $0x318] sm:$0xff] %v661
                  %v663 = vld [vmem:[%s461 + $0x640] sm:$0xff]
                  %664 = vst [vmem:[%s462 + $0x320] sm:$0xff] %v663
                  %v665 = vld [vmem:[%s461 + $0x650] sm:$0xff]
                  %666 = vst [vmem:[%s462 + $0x328] sm:$0xff] %v665
                  %v667 = vld [vmem:[%s461 + $0x660] sm:$0xff]
                  %668 = vst [vmem:[%s462 + $0x330] sm:$0xff] %v667
                  %v669 = vld [vmem:[%s461 + $0x670] sm:$0xff]
                  %670 = vst [vmem:[%s462 + $0x338] sm:$0xff] %v669
                  %v671 = vld [vmem:[%s461 + $0x680] sm:$0xff]
                  %672 = vst [vmem:[%s462 + $0x340] sm:$0xff] %v671
                  %v673 = vld [vmem:[%s461 + $0x690] sm:$0xff]
                  %674 = vst [vmem:[%s462 + $0x348] sm:$0xff] %v673
                  %v675 = vld [vmem:[%s461 + $0x6a0] sm:$0xff]
                  %676 = vst [vmem:[%s462 + $0x350] sm:$0xff] %v675
                  %v677 = vld [vmem:[%s461 + $0x6b0] sm:$0xff]
                  %678 = vst [vmem:[%s462 + $0x358] sm:$0xff] %v677
                  %v679 = vld [vmem:[%s461 + $0x6c0] sm:$0xff]
                  %680 = vst [vmem:[%s462 + $0x360] sm:$0xff] %v679
                  %v681 = vld [vmem:[%s461 + $0x6d0] sm:$0xff]
                  %682 = vst [vmem:[%s462 + $0x368] sm:$0xff] %v681
                  %v683 = vld [vmem:[%s461 + $0x6e0] sm:$0xff]
                  %684 = vst [vmem:[%s462 + $0x370] sm:$0xff] %v683
                  %v685 = vld [vmem:[%s461 + $0x6f0] sm:$0xff]
                  %686 = vst [vmem:[%s462 + $0x378] sm:$0xff] %v685
                  %v687 = vld [vmem:[%s461 + $0x700] sm:$0xff]
                  %688 = vst [vmem:[%s462 + $0x380] sm:$0xff] %v687
                  %v689 = vld [vmem:[%s461 + $0x710] sm:$0xff]
                  %690 = vst [vmem:[%s462 + $0x388] sm:$0xff] %v689
                  %v691 = vld [vmem:[%s461 + $0x720] sm:$0xff]
                  %692 = vst [vmem:[%s462 + $0x390] sm:$0xff] %v691
                  %v693 = vld [vmem:[%s461 + $0x730] sm:$0xff]
                  %694 = vst [vmem:[%s462 + $0x398] sm:$0xff] %v693
                  %v695 = vld [vmem:[%s461 + $0x740] sm:$0xff]
                  %696 = vst [vmem:[%s462 + $0x3a0] sm:$0xff] %v695
                  %v697 = vld [vmem:[%s461 + $0x750] sm:$0xff]
                  %698 = vst [vmem:[%s462 + $0x3a8] sm:$0xff] %v697
                  %v699 = vld [vmem:[%s461 + $0x760] sm:$0xff]
                  %700 = vst [vmem:[%s462 + $0x3b0] sm:$0xff] %v699
                  %v701 = vld [vmem:[%s461 + $0x770] sm:$0xff]
                  %702 = vst [vmem:[%s462 + $0x3b8] sm:$0xff] %v701
                  %v703 = vld [vmem:[%s461 + $0x780] sm:$0xff]
                  %704 = vst [vmem:[%s462 + $0x3c0] sm:$0xff] %v703
                  %v705 = vld [vmem:[%s461 + $0x790] sm:$0xff]
                  %706 = vst [vmem:[%s462 + $0x3c8] sm:$0xff] %v705
                  %v707 = vld [vmem:[%s461 + $0x7a0] sm:$0xff]
                  %708 = vst [vmem:[%s462 + $0x3d0] sm:$0xff] %v707
                  %v709 = vld [vmem:[%s461 + $0x7b0] sm:$0xff]
                  %710 = vst [vmem:[%s462 + $0x3d8] sm:$0xff] %v709
                  %v711 = vld [vmem:[%s461 + $0x7c0] sm:$0xff]
                  %712 = vst [vmem:[%s462 + $0x3e0] sm:$0xff] %v711
                  %v713 = vld [vmem:[%s461 + $0x7d0] sm:$0xff]
                  %714 = vst [vmem:[%s462 + $0x3e8] sm:$0xff] %v713
                  %v715 = vld [vmem:[%s461 + $0x7e0] sm:$0xff]
                  %716 = vst [vmem:[%s462 + $0x3f0] sm:$0xff] %v715
                  %v717 = vld [vmem:[%s461 + $0x7f0] sm:$0xff]
                  %718 = vst [vmem:[%s462 + $0x3f8] sm:$0xff] %v717
                $region52: #{simple_cnn_forward.14} parent=46 // loop_footer
                  %s460 = sadd.s32 1, %s456
                $region53: #{simple_cnn_forward.14} parent=46 // loop_footer_branch
                  %455 = sbr.rel target = $region49
                $region54: #{simple_cnn_forward.14} parent=46 // loop_exit
                  _
              $region47: #{simple_cnn_forward.14} parent=31 // pred_fallthru
                _
              // Predicated region
              $region55: #{simple_cnn_forward.14} parent=31 // pred_check
                _
              $region56: #{simple_cnn_forward.14} parent=31 // pred_check_branch
                %720 = sbr.rel target = $region58
              $region57: #{simple_cnn_forward.14} parent=31 // pred_region
                _
              $region58: #{simple_cnn_forward.14} parent=31 // pred_fallthru
                _
            $region32: #{simple_cnn_forward.14} parent=27 // pred_fallthru
              _
            // Predicated region
            $region33: #{simple_cnn_forward.14} parent=27 // pred_check
              _
            $region34: #{simple_cnn_forward.14} parent=27 // pred_check_branch
              %187 = sbr.rel target = $region36
            $region35: #{simple_cnn_forward.14} parent=27 // pred_region
              loop: start=0, step=1, limit=1
              $region37: #{simple_cnn_forward.14} parent=35 // loop_pre_header
                _
              $region38: #{simple_cnn_forward.14} parent=35 // loop_header
                %s190 = sphi 0, %s194
                %p191 = scmp.ge.s32.totalorder %s190, 1
                %s195 = sphi %s181, %s181
                %s196 = sphi %s175, %s175
              $region39: #{simple_cnn_forward.14} parent=35 // loop_header_branch
                %193 = sbr.rel (%p191) target = $region43
              $region40: #{simple_cnn_forward.14} parent=35 // loop_body
                %v197 = vld [vmem:[%s195] sm:$0xff]
                %198 = vst [vmem:[%s196] sm:$0xff] %v197
                %v199 = vld [vmem:[%s195 + $0x10] sm:$0xff]
                %200 = vst [vmem:[%s196 + $0x8] sm:$0xff] %v199
                %v201 = vld [vmem:[%s195 + $0x20] sm:$0xff]
                %202 = vst [vmem:[%s196 + $0x10] sm:$0xff] %v201
                %v203 = vld [vmem:[%s195 + $0x30] sm:$0xff]
                %204 = vst [vmem:[%s196 + $0x18] sm:$0xff] %v203
                %v205 = vld [vmem:[%s195 + $0x40] sm:$0xff]
                %206 = vst [vmem:[%s196 + $0x20] sm:$0xff] %v205
                %v207 = vld [vmem:[%s195 + $0x50] sm:$0xff]
                %208 = vst [vmem:[%s196 + $0x28] sm:$0xff] %v207
                %v209 = vld [vmem:[%s195 + $0x60] sm:$0xff]
                %210 = vst [vmem:[%s196 + $0x30] sm:$0xff] %v209
                %v211 = vld [vmem:[%s195 + $0x70] sm:$0xff]
                %212 = vst [vmem:[%s196 + $0x38] sm:$0xff] %v211
                %v213 = vld [vmem:[%s195 + $0x80] sm:$0xff]
                %214 = vst [vmem:[%s196 + $0x40] sm:$0xff] %v213
                %v215 = vld [vmem:[%s195 + $0x90] sm:$0xff]
                %216 = vst [vmem:[%s196 + $0x48] sm:$0xff] %v215
                %v217 = vld [vmem:[%s195 + $0xa0] sm:$0xff]
                %218 = vst [vmem:[%s196 + $0x50] sm:$0xff] %v217
                %v219 = vld [vmem:[%s195 + $0xb0] sm:$0xff]
                %220 = vst [vmem:[%s196 + $0x58] sm:$0xff] %v219
                %v221 = vld [vmem:[%s195 + $0xc0] sm:$0xff]
                %222 = vst [vmem:[%s196 + $0x60] sm:$0xff] %v221
                %v223 = vld [vmem:[%s195 + $0xd0] sm:$0xff]
                %224 = vst [vmem:[%s196 + $0x68] sm:$0xff] %v223
                %v225 = vld [vmem:[%s195 + $0xe0] sm:$0xff]
                %226 = vst [vmem:[%s196 + $0x70] sm:$0xff] %v225
                %v227 = vld [vmem:[%s195 + $0xf0] sm:$0xff]
                %228 = vst [vmem:[%s196 + $0x78] sm:$0xff] %v227
                %v229 = vld [vmem:[%s195 + $0x100] sm:$0xff]
                %230 = vst [vmem:[%s196 + $0x80] sm:$0xff] %v229
                %v231 = vld [vmem:[%s195 + $0x110] sm:$0xff]
                %232 = vst [vmem:[%s196 + $0x88] sm:$0xff] %v231
                %v233 = vld [vmem:[%s195 + $0x120] sm:$0xff]
                %234 = vst [vmem:[%s196 + $0x90] sm:$0xff] %v233
                %v235 = vld [vmem:[%s195 + $0x130] sm:$0xff]
                %236 = vst [vmem:[%s196 + $0x98] sm:$0xff] %v235
                %v237 = vld [vmem:[%s195 + $0x140] sm:$0xff]
                %238 = vst [vmem:[%s196 + $0xa0] sm:$0xff] %v237
                %v239 = vld [vmem:[%s195 + $0x150] sm:$0xff]
                %240 = vst [vmem:[%s196 + $0xa8] sm:$0xff] %v239
                %v241 = vld [vmem:[%s195 + $0x160] sm:$0xff]
                %242 = vst [vmem:[%s196 + $0xb0] sm:$0xff] %v241
                %v243 = vld [vmem:[%s195 + $0x170] sm:$0xff]
                %244 = vst [vmem:[%s196 + $0xb8] sm:$0xff] %v243
                %v245 = vld [vmem:[%s195 + $0x180] sm:$0xff]
                %246 = vst [vmem:[%s196 + $0xc0] sm:$0xff] %v245
                %v247 = vld [vmem:[%s195 + $0x190] sm:$0xff]
                %248 = vst [vmem:[%s196 + $0xc8] sm:$0xff] %v247
                %v249 = vld [vmem:[%s195 + $0x1a0] sm:$0xff]
                %250 = vst [vmem:[%s196 + $0xd0] sm:$0xff] %v249
                %v251 = vld [vmem:[%s195 + $0x1b0] sm:$0xff]
                %252 = vst [vmem:[%s196 + $0xd8] sm:$0xff] %v251
                %v253 = vld [vmem:[%s195 + $0x1c0] sm:$0xff]
                %254 = vst [vmem:[%s196 + $0xe0] sm:$0xff] %v253
                %v255 = vld [vmem:[%s195 + $0x1d0] sm:$0xff]
                %256 = vst [vmem:[%s196 + $0xe8] sm:$0xff] %v255
                %v257 = vld [vmem:[%s195 + $0x1e0] sm:$0xff]
                %258 = vst [vmem:[%s196 + $0xf0] sm:$0xff] %v257
                %v259 = vld [vmem:[%s195 + $0x1f0] sm:$0xff]
                %260 = vst [vmem:[%s196 + $0xf8] sm:$0xff] %v259
                %v261 = vld [vmem:[%s195 + $0x200] sm:$0xff]
                %262 = vst [vmem:[%s196 + $0x100] sm:$0xff] %v261
                %v263 = vld [vmem:[%s195 + $0x210] sm:$0xff]
                %264 = vst [vmem:[%s196 + $0x108] sm:$0xff] %v263
                %v265 = vld [vmem:[%s195 + $0x220] sm:$0xff]
                %266 = vst [vmem:[%s196 + $0x110] sm:$0xff] %v265
                %v267 = vld [vmem:[%s195 + $0x230] sm:$0xff]
                %268 = vst [vmem:[%s196 + $0x118] sm:$0xff] %v267
                %v269 = vld [vmem:[%s195 + $0x240] sm:$0xff]
                %270 = vst [vmem:[%s196 + $0x120] sm:$0xff] %v269
                %v271 = vld [vmem:[%s195 + $0x250] sm:$0xff]
                %272 = vst [vmem:[%s196 + $0x128] sm:$0xff] %v271
                %v273 = vld [vmem:[%s195 + $0x260] sm:$0xff]
                %274 = vst [vmem:[%s196 + $0x130] sm:$0xff] %v273
                %v275 = vld [vmem:[%s195 + $0x270] sm:$0xff]
                %276 = vst [vmem:[%s196 + $0x138] sm:$0xff] %v275
                %v277 = vld [vmem:[%s195 + $0x280] sm:$0xff]
                %278 = vst [vmem:[%s196 + $0x140] sm:$0xff] %v277
                %v279 = vld [vmem:[%s195 + $0x290] sm:$0xff]
                %280 = vst [vmem:[%s196 + $0x148] sm:$0xff] %v279
                %v281 = vld [vmem:[%s195 + $0x2a0] sm:$0xff]
                %282 = vst [vmem:[%s196 + $0x150] sm:$0xff] %v281
                %v283 = vld [vmem:[%s195 + $0x2b0] sm:$0xff]
                %284 = vst [vmem:[%s196 + $0x158] sm:$0xff] %v283
                %v285 = vld [vmem:[%s195 + $0x2c0] sm:$0xff]
                %286 = vst [vmem:[%s196 + $0x160] sm:$0xff] %v285
                %v287 = vld [vmem:[%s195 + $0x2d0] sm:$0xff]
                %288 = vst [vmem:[%s196 + $0x168] sm:$0xff] %v287
                %v289 = vld [vmem:[%s195 + $0x2e0] sm:$0xff]
                %290 = vst [vmem:[%s196 + $0x170] sm:$0xff] %v289
                %v291 = vld [vmem:[%s195 + $0x2f0] sm:$0xff]
                %292 = vst [vmem:[%s196 + $0x178] sm:$0xff] %v291
                %v293 = vld [vmem:[%s195 + $0x300] sm:$0xff]
                %294 = vst [vmem:[%s196 + $0x180] sm:$0xff] %v293
                %v295 = vld [vmem:[%s195 + $0x310] sm:$0xff]
                %296 = vst [vmem:[%s196 + $0x188] sm:$0xff] %v295
                %v297 = vld [vmem:[%s195 + $0x320] sm:$0xff]
                %298 = vst [vmem:[%s196 + $0x190] sm:$0xff] %v297
                %v299 = vld [vmem:[%s195 + $0x330] sm:$0xff]
                %300 = vst [vmem:[%s196 + $0x198] sm:$0xff] %v299
                %v301 = vld [vmem:[%s195 + $0x340] sm:$0xff]
                %302 = vst [vmem:[%s196 + $0x1a0] sm:$0xff] %v301
                %v303 = vld [vmem:[%s195 + $0x350] sm:$0xff]
                %304 = vst [vmem:[%s196 + $0x1a8] sm:$0xff] %v303
                %v305 = vld [vmem:[%s195 + $0x360] sm:$0xff]
                %306 = vst [vmem:[%s196 + $0x1b0] sm:$0xff] %v305
                %v307 = vld [vmem:[%s195 + $0x370] sm:$0xff]
                %308 = vst [vmem:[%s196 + $0x1b8] sm:$0xff] %v307
                %v309 = vld [vmem:[%s195 + $0x380] sm:$0xff]
                %310 = vst [vmem:[%s196 + $0x1c0] sm:$0xff] %v309
                %v311 = vld [vmem:[%s195 + $0x390] sm:$0xff]
                %312 = vst [vmem:[%s196 + $0x1c8] sm:$0xff] %v311
                %v313 = vld [vmem:[%s195 + $0x3a0] sm:$0xff]
                %314 = vst [vmem:[%s196 + $0x1d0] sm:$0xff] %v313
                %v315 = vld [vmem:[%s195 + $0x3b0] sm:$0xff]
                %316 = vst [vmem:[%s196 + $0x1d8] sm:$0xff] %v315
                %v317 = vld [vmem:[%s195 + $0x3c0] sm:$0xff]
                %318 = vst [vmem:[%s196 + $0x1e0] sm:$0xff] %v317
                %v319 = vld [vmem:[%s195 + $0x3d0] sm:$0xff]
                %320 = vst [vmem:[%s196 + $0x1e8] sm:$0xff] %v319
                %v321 = vld [vmem:[%s195 + $0x3e0] sm:$0xff]
                %322 = vst [vmem:[%s196 + $0x1f0] sm:$0xff] %v321
                %v323 = vld [vmem:[%s195 + $0x3f0] sm:$0xff]
                %324 = vst [vmem:[%s196 + $0x1f8] sm:$0xff] %v323
                %v325 = vld [vmem:[%s195 + $0x400] sm:$0xff]
                %326 = vst [vmem:[%s196 + $0x200] sm:$0xff] %v325
                %v327 = vld [vmem:[%s195 + $0x410] sm:$0xff]
                %328 = vst [vmem:[%s196 + $0x208] sm:$0xff] %v327
                %v329 = vld [vmem:[%s195 + $0x420] sm:$0xff]
                %330 = vst [vmem:[%s196 + $0x210] sm:$0xff] %v329
                %v331 = vld [vmem:[%s195 + $0x430] sm:$0xff]
                %332 = vst [vmem:[%s196 + $0x218] sm:$0xff] %v331
                %v333 = vld [vmem:[%s195 + $0x440] sm:$0xff]
                %334 = vst [vmem:[%s196 + $0x220] sm:$0xff] %v333
                %v335 = vld [vmem:[%s195 + $0x450] sm:$0xff]
                %336 = vst [vmem:[%s196 + $0x228] sm:$0xff] %v335
                %v337 = vld [vmem:[%s195 + $0x460] sm:$0xff]
                %338 = vst [vmem:[%s196 + $0x230] sm:$0xff] %v337
                %v339 = vld [vmem:[%s195 + $0x470] sm:$0xff]
                %340 = vst [vmem:[%s196 + $0x238] sm:$0xff] %v339
                %v341 = vld [vmem:[%s195 + $0x480] sm:$0xff]
                %342 = vst [vmem:[%s196 + $0x240] sm:$0xff] %v341
                %v343 = vld [vmem:[%s195 + $0x490] sm:$0xff]
                %344 = vst [vmem:[%s196 + $0x248] sm:$0xff] %v343
                %v345 = vld [vmem:[%s195 + $0x4a0] sm:$0xff]
                %346 = vst [vmem:[%s196 + $0x250] sm:$0xff] %v345
                %v347 = vld [vmem:[%s195 + $0x4b0] sm:$0xff]
                %348 = vst [vmem:[%s196 + $0x258] sm:$0xff] %v347
                %v349 = vld [vmem:[%s195 + $0x4c0] sm:$0xff]
                %350 = vst [vmem:[%s196 + $0x260] sm:$0xff] %v349
                %v351 = vld [vmem:[%s195 + $0x4d0] sm:$0xff]
                %352 = vst [vmem:[%s196 + $0x268] sm:$0xff] %v351
                %v353 = vld [vmem:[%s195 + $0x4e0] sm:$0xff]
                %354 = vst [vmem:[%s196 + $0x270] sm:$0xff] %v353
                %v355 = vld [vmem:[%s195 + $0x4f0] sm:$0xff]
                %356 = vst [vmem:[%s196 + $0x278] sm:$0xff] %v355
                %v357 = vld [vmem:[%s195 + $0x500] sm:$0xff]
                %358 = vst [vmem:[%s196 + $0x280] sm:$0xff] %v357
                %v359 = vld [vmem:[%s195 + $0x510] sm:$0xff]
                %360 = vst [vmem:[%s196 + $0x288] sm:$0xff] %v359
                %v361 = vld [vmem:[%s195 + $0x520] sm:$0xff]
                %362 = vst [vmem:[%s196 + $0x290] sm:$0xff] %v361
                %v363 = vld [vmem:[%s195 + $0x530] sm:$0xff]
                %364 = vst [vmem:[%s196 + $0x298] sm:$0xff] %v363
                %v365 = vld [vmem:[%s195 + $0x540] sm:$0xff]
                %366 = vst [vmem:[%s196 + $0x2a0] sm:$0xff] %v365
                %v367 = vld [vmem:[%s195 + $0x550] sm:$0xff]
                %368 = vst [vmem:[%s196 + $0x2a8] sm:$0xff] %v367
                %v369 = vld [vmem:[%s195 + $0x560] sm:$0xff]
                %370 = vst [vmem:[%s196 + $0x2b0] sm:$0xff] %v369
                %v371 = vld [vmem:[%s195 + $0x570] sm:$0xff]
                %372 = vst [vmem:[%s196 + $0x2b8] sm:$0xff] %v371
                %v373 = vld [vmem:[%s195 + $0x580] sm:$0xff]
                %374 = vst [vmem:[%s196 + $0x2c0] sm:$0xff] %v373
                %v375 = vld [vmem:[%s195 + $0x590] sm:$0xff]
                %376 = vst [vmem:[%s196 + $0x2c8] sm:$0xff] %v375
                %v377 = vld [vmem:[%s195 + $0x5a0] sm:$0xff]
                %378 = vst [vmem:[%s196 + $0x2d0] sm:$0xff] %v377
                %v379 = vld [vmem:[%s195 + $0x5b0] sm:$0xff]
                %380 = vst [vmem:[%s196 + $0x2d8] sm:$0xff] %v379
                %v381 = vld [vmem:[%s195 + $0x5c0] sm:$0xff]
                %382 = vst [vmem:[%s196 + $0x2e0] sm:$0xff] %v381
                %v383 = vld [vmem:[%s195 + $0x5d0] sm:$0xff]
                %384 = vst [vmem:[%s196 + $0x2e8] sm:$0xff] %v383
                %v385 = vld [vmem:[%s195 + $0x5e0] sm:$0xff]
                %386 = vst [vmem:[%s196 + $0x2f0] sm:$0xff] %v385
                %v387 = vld [vmem:[%s195 + $0x5f0] sm:$0xff]
                %388 = vst [vmem:[%s196 + $0x2f8] sm:$0xff] %v387
                %v389 = vld [vmem:[%s195 + $0x600] sm:$0xff]
                %390 = vst [vmem:[%s196 + $0x300] sm:$0xff] %v389
                %v391 = vld [vmem:[%s195 + $0x610] sm:$0xff]
                %392 = vst [vmem:[%s196 + $0x308] sm:$0xff] %v391
                %v393 = vld [vmem:[%s195 + $0x620] sm:$0xff]
                %394 = vst [vmem:[%s196 + $0x310] sm:$0xff] %v393
                %v395 = vld [vmem:[%s195 + $0x630] sm:$0xff]
                %396 = vst [vmem:[%s196 + $0x318] sm:$0xff] %v395
                %v397 = vld [vmem:[%s195 + $0x640] sm:$0xff]
                %398 = vst [vmem:[%s196 + $0x320] sm:$0xff] %v397
                %v399 = vld [vmem:[%s195 + $0x650] sm:$0xff]
                %400 = vst [vmem:[%s196 + $0x328] sm:$0xff] %v399
                %v401 = vld [vmem:[%s195 + $0x660] sm:$0xff]
                %402 = vst [vmem:[%s196 + $0x330] sm:$0xff] %v401
                %v403 = vld [vmem:[%s195 + $0x670] sm:$0xff]
                %404 = vst [vmem:[%s196 + $0x338] sm:$0xff] %v403
                %v405 = vld [vmem:[%s195 + $0x680] sm:$0xff]
                %406 = vst [vmem:[%s196 + $0x340] sm:$0xff] %v405
                %v407 = vld [vmem:[%s195 + $0x690] sm:$0xff]
                %408 = vst [vmem:[%s196 + $0x348] sm:$0xff] %v407
                %v409 = vld [vmem:[%s195 + $0x6a0] sm:$0xff]
                %410 = vst [vmem:[%s196 + $0x350] sm:$0xff] %v409
                %v411 = vld [vmem:[%s195 + $0x6b0] sm:$0xff]
                %412 = vst [vmem:[%s196 + $0x358] sm:$0xff] %v411
                %v413 = vld [vmem:[%s195 + $0x6c0] sm:$0xff]
                %414 = vst [vmem:[%s196 + $0x360] sm:$0xff] %v413
                %v415 = vld [vmem:[%s195 + $0x6d0] sm:$0xff]
                %416 = vst [vmem:[%s196 + $0x368] sm:$0xff] %v415
                %v417 = vld [vmem:[%s195 + $0x6e0] sm:$0xff]
                %418 = vst [vmem:[%s196 + $0x370] sm:$0xff] %v417
                %v419 = vld [vmem:[%s195 + $0x6f0] sm:$0xff]
                %420 = vst [vmem:[%s196 + $0x378] sm:$0xff] %v419
                %v421 = vld [vmem:[%s195 + $0x700] sm:$0xff]
                %422 = vst [vmem:[%s196 + $0x380] sm:$0xff] %v421
                %v423 = vld [vmem:[%s195 + $0x710] sm:$0xff]
                %424 = vst [vmem:[%s196 + $0x388] sm:$0xff] %v423
                %v425 = vld [vmem:[%s195 + $0x720] sm:$0xff]
                %426 = vst [vmem:[%s196 + $0x390] sm:$0xff] %v425
                %v427 = vld [vmem:[%s195 + $0x730] sm:$0xff]
                %428 = vst [vmem:[%s196 + $0x398] sm:$0xff] %v427
                %v429 = vld [vmem:[%s195 + $0x740] sm:$0xff]
                %430 = vst [vmem:[%s196 + $0x3a0] sm:$0xff] %v429
                %v431 = vld [vmem:[%s195 + $0x750] sm:$0xff]
                %432 = vst [vmem:[%s196 + $0x3a8] sm:$0xff] %v431
                %v433 = vld [vmem:[%s195 + $0x760] sm:$0xff]
                %434 = vst [vmem:[%s196 + $0x3b0] sm:$0xff] %v433
                %v435 = vld [vmem:[%s195 + $0x770] sm:$0xff]
                %436 = vst [vmem:[%s196 + $0x3b8] sm:$0xff] %v435
                %v437 = vld [vmem:[%s195 + $0x780] sm:$0xff]
                %438 = vst [vmem:[%s196 + $0x3c0] sm:$0xff] %v437
                %v439 = vld [vmem:[%s195 + $0x790] sm:$0xff]
                %440 = vst [vmem:[%s196 + $0x3c8] sm:$0xff] %v439
                %v441 = vld [vmem:[%s195 + $0x7a0] sm:$0xff]
                %442 = vst [vmem:[%s196 + $0x3d0] sm:$0xff] %v441
                %v443 = vld [vmem:[%s195 + $0x7b0] sm:$0xff]
                %444 = vst [vmem:[%s196 + $0x3d8] sm:$0xff] %v443
                %v445 = vld [vmem:[%s195 + $0x7c0] sm:$0xff]
                %446 = vst [vmem:[%s196 + $0x3e0] sm:$0xff] %v445
                %v447 = vld [vmem:[%s195 + $0x7d0] sm:$0xff]
                %448 = vst [vmem:[%s196 + $0x3e8] sm:$0xff] %v447
                %v449 = vld [vmem:[%s195 + $0x7e0] sm:$0xff]
                %450 = vst [vmem:[%s196 + $0x3f0] sm:$0xff] %v449
                %v451 = vld [vmem:[%s195 + $0x7f0] sm:$0xff]
                %452 = vst [vmem:[%s196 + $0x3f8] sm:$0xff] %v451
              $region41: #{simple_cnn_forward.14} parent=35 // loop_footer
                %s194 = sadd.s32 1, %s190
              $region42: #{simple_cnn_forward.14} parent=35 // loop_footer_branch
                %189 = sbr.rel target = $region38
              $region43: #{simple_cnn_forward.14} parent=35 // loop_exit
                _
            $region36: #{simple_cnn_forward.14} parent=27 // pred_fallthru
              _
          $region28: #{simple_cnn_forward.14} parent=23 // pred_fallthru
            _
          %721 = vnop
        $region24: #{simple_cnn_forward.14} parent=15 // pred_fallthru
          _
        // Predicated region
        $region59: #{simple_cnn_forward.14} parent=15 // pred_check
          %p722 = pneg %p104
        $region60: #{simple_cnn_forward.14} parent=15 // pred_check_branch
          %724 = sbr.rel (%p722) target = $region62
        $region61: #{simple_cnn_forward.14} parent=15 // pred_region
          %s725 = smul.u32 2, %s17
          %p726 = scmp.lt.s32.totalorder %s725, 3
          %s727 = scalar_select %p726, %s725, 3
          %s728 = scalar_lea.vmem %s2, %s727
          %s729 = smul.u32 2, %s17
        $region62: #{simple_cnn_forward.14} parent=15 // pred_fallthru
          _
      $region16: #{simple_cnn_forward.14} parent=5 // pred_fallthru
        _
      %p730 = scmp.le.s32.totalorder 1, %s9
      %p731 = scmp.lt.s32.totalorder %s9, 17
      %p732 = pnand %p730, %p731
      %p733 = pneg %p732
      // Predicated region
      $region63: #{simple_cnn_forward.14} parent=5 // pred_check
        _
      $region64: #{simple_cnn_forward.14} parent=5 // pred_check_branch
        %735 = sbr.rel (%p732) target = $region66
      $region65: #{simple_cnn_forward.14} parent=5 // pred_region
        %s736 = ssub.s32 %s9, 1
        %s737 = sand.u32 %s71, 1
        %s738 = sand.u32 %s71, 1
        %s739 = smul.addr %s738, 1024
        %s740 = scalar_lea.vmem [#allocation2], %s739
        // Predicated region
        $region67: #{simple_cnn_forward.14} parent=65 // pred_check
          %p741 = pneg %p84
        $region68: #{simple_cnn_forward.14} parent=65 // pred_check_branch
          %743 = sbr.rel (%p741) target = $region70
        $region69: #{simple_cnn_forward.14} parent=65 // pred_region
          _
        $region70: #{simple_cnn_forward.14} parent=65 // pred_fallthru
          _
        %s744 = smul.u32 8, %s21
        %p745 = scmp.lt.s32.totalorder %s19, 0
        %s746 = scalar_select %p745, %s19, 0
        %p747 = scmp.lt.s32.totalorder %s744, 63
        %s748 = scalar_select %p747, %s744, 63
        %s749 = smul.addr %s746, 64
        %s750 = sadd.s32 %s748, %s749
        %s751 = scalar_lea.vmem %s0, %s750
        %p752 = pneg %p56
        %p753 = pneg %p53
        %s754 = sand.u32 %s71, 1
        %s755 = sand.u32 %s71, 1
        %s756 = smul.addr %s755, 1024
        %s757 = scalar_lea.vmem [#allocation2], %s756
        %p758 = pneg %p84
        %p759 = pneg %p81
        %s760 = smul.u32 2, %s20
        %p761 = scmp.lt.s32.totalorder %s760, 3
        %s762 = scalar_select %p761, %s760, 3
        %s763 = scalar_lea.vmem %s2, %s762
        %p764 = pneg %p110
        %p765 = pneg %p107
        %p766 = pneg %p138
        %p767 = pneg %p135
        %s768 = smul.u32 2, %s20
        %p769 = scmp.lt.s32.totalorder %s19, 0
        %s770 = scalar_select %p769, %s19, 0
        %p771 = scmp.lt.s32.totalorder %s768, 3
        %s772 = scalar_select %p771, %s768, 3
        %s773 = smul.addr %s770, 4
        %s774 = sadd.s32 %s772, %s773
        %s775 = smul.addr %s774, 2
        %s776 = scalar_lea.vmem %s3, %s775
        %s777 = smul.u32 8, %s21
        %p778 = scmp.lt.s32.totalorder %s19, 0
        %s779 = scalar_select %p778, %s19, 0
        %p780 = scmp.lt.s32.totalorder %s777, 63
        %s781 = scalar_select %p780, %s777, 63
        %s782 = smul.addr %s779, 64
        %s783 = sadd.s32 %s781, %s782
        %s784 = scalar_lea.vmem %s0, %s783
        %s785 = smul.u32 8, %s21
        %s786 = smul.u32 128, %s21
        %s787 = smul.u32 2, %s20
        %s788 = smul.u32 2, %s20
        %p789 = scmp.lt.s32.totalorder %s788, 3
        %s790 = scalar_select %p789, %s788, 3
        %s791 = scalar_lea.vmem %s2, %s790
        %s792 = smul.u32 2, %s20
        %s793 = smul.u32 2, %s20
        %p794 = scmp.lt.s32.totalorder %s19, 0
        %s795 = scalar_select %p794, %s19, 0
        %p796 = scmp.lt.s32.totalorder %s793, 3
        %s797 = scalar_select %p796, %s793, 3
        %s798 = smul.addr %s795, 4
        %s799 = sadd.s32 %s797, %s798
        %s800 = smul.addr %s799, 2
        %s801 = scalar_lea.vmem %s3, %s800
        %s802 = smul.u32 2, %s20
        %p803 = scmp.eq.s32.totalorder %s21, 0
        // Predicated region
        $region71: #{simple_cnn_forward.14} parent=65 // pred_check
          %p804 = pneg %p803
        $region72: #{simple_cnn_forward.14} parent=65 // pred_check_branch
          %806 = sbr.rel (%p804) target = $region74
        $region73: #{simple_cnn_forward.14} parent=65 // pred_region
          %807 = vst [vmem:[%s801] sm:$0xf] 0.0
        $region74: #{simple_cnn_forward.14} parent=65 // pred_fallthru
          _
        %v808 = vld [vmem:[%s801] sm:$0xf]
        %v809 = vld [vmem:[%s784] sm:$0xff]
        %v810 = vld [vmem:[%s740] sm:$0xff]
        %v811 = vld [vmem:[%s740 + $0x8] sm:$0xff]
        %v812 = vld [vmem:[%s740 + $0x10] sm:$0xff]
        %v813 = vld [vmem:[%s740 + $0x18] sm:$0xff]
        %v814 = vld [vmem:[%s740 + $0x20] sm:$0xff]
        %v815 = vld [vmem:[%s740 + $0x28] sm:$0xff]
        %v816 = vld [vmem:[%s740 + $0x30] sm:$0xff]
        %v817 = vld [vmem:[%s740 + $0x38] sm:$0xff]
        %v818 = vld [vmem:[%s740 + $0x40] sm:$0xff]
        %v819 = vld [vmem:[%s740 + $0x48] sm:$0xff]
        %v820 = vld [vmem:[%s740 + $0x50] sm:$0xff]
        %v821 = vld [vmem:[%s740 + $0x58] sm:$0xff]
        %v822 = vld [vmem:[%s740 + $0x60] sm:$0xff]
        %v823 = vld [vmem:[%s740 + $0x68] sm:$0xff]
        %v824 = vld [vmem:[%s740 + $0x70] sm:$0xff]
        %v825 = vld [vmem:[%s740 + $0x78] sm:$0xff]
        %v826 = vld [vmem:[%s740 + $0x80] sm:$0xff]
        %v827 = vld [vmem:[%s740 + $0x88] sm:$0xff]
        %v828 = vld [vmem:[%s740 + $0x90] sm:$0xff]
        %v829 = vld [vmem:[%s740 + $0x98] sm:$0xff]
        %v830 = vld [vmem:[%s740 + $0xa0] sm:$0xff]
        %v831 = vld [vmem:[%s740 + $0xa8] sm:$0xff]
        %v832 = vld [vmem:[%s740 + $0xb0] sm:$0xff]
        %v833 = vld [vmem:[%s740 + $0xb8] sm:$0xff]
        %v834 = vld [vmem:[%s740 + $0xc0] sm:$0xff]
        %v835 = vld [vmem:[%s740 + $0xc8] sm:$0xff]
        %v836 = vld [vmem:[%s740 + $0xd0] sm:$0xff]
        %v837 = vld [vmem:[%s740 + $0xd8] sm:$0xff]
        %v838 = vld [vmem:[%s740 + $0xe0] sm:$0xff]
        %v839 = vld [vmem:[%s740 + $0xe8] sm:$0xff]
        %v840 = vld [vmem:[%s740 + $0xf0] sm:$0xff]
        %v841 = vld [vmem:[%s740 + $0xf8] sm:$0xff]
        %v842 = vld [vmem:[%s740 + $0x100] sm:$0xff]
        %v843 = vld [vmem:[%s740 + $0x108] sm:$0xff]
        %v844 = vld [vmem:[%s740 + $0x110] sm:$0xff]
        %v845 = vld [vmem:[%s740 + $0x118] sm:$0xff]
        %v846 = vld [vmem:[%s740 + $0x120] sm:$0xff]
        %v847 = vld [vmem:[%s740 + $0x128] sm:$0xff]
        %v848 = vld [vmem:[%s740 + $0x130] sm:$0xff]
        %v849 = vld [vmem:[%s740 + $0x138] sm:$0xff]
        %v850 = vld [vmem:[%s740 + $0x140] sm:$0xff]
        %v851 = vld [vmem:[%s740 + $0x148] sm:$0xff]
        %v852 = vld [vmem:[%s740 + $0x150] sm:$0xff]
        %v853 = vld [vmem:[%s740 + $0x158] sm:$0xff]
        %v854 = vld [vmem:[%s740 + $0x160] sm:$0xff]
        %v855 = vld [vmem:[%s740 + $0x168] sm:$0xff]
        %v856 = vld [vmem:[%s740 + $0x170] sm:$0xff]
        %v857 = vld [vmem:[%s740 + $0x178] sm:$0xff]
        %v858 = vld [vmem:[%s740 + $0x180] sm:$0xff]
        %v859 = vld [vmem:[%s740 + $0x188] sm:$0xff]
        %v860 = vld [vmem:[%s740 + $0x190] sm:$0xff]
        %v861 = vld [vmem:[%s740 + $0x198] sm:$0xff]
        %v862 = vld [vmem:[%s740 + $0x1a0] sm:$0xff]
        %v863 = vld [vmem:[%s740 + $0x1a8] sm:$0xff]
        %v864 = vld [vmem:[%s740 + $0x1b0] sm:$0xff]
        %v865 = vld [vmem:[%s740 + $0x1b8] sm:$0xff]
        %v866 = vld [vmem:[%s740 + $0x1c0] sm:$0xff]
        %v867 = vld [vmem:[%s740 + $0x1c8] sm:$0xff]
        %v868 = vld [vmem:[%s740 + $0x1d0] sm:$0xff]
        %v869 = vld [vmem:[%s740 + $0x1d8] sm:$0xff]
        %v870 = vld [vmem:[%s740 + $0x1e0] sm:$0xff]
        %v871 = vld [vmem:[%s740 + $0x1e8] sm:$0xff]
        %v872 = vld [vmem:[%s740 + $0x1f0] sm:$0xff]
        %v873 = vld [vmem:[%s740 + $0x1f8] sm:$0xff]
        %v874 = vld [vmem:[%s740 + $0x200] sm:$0xff]
        %v875 = vld [vmem:[%s740 + $0x208] sm:$0xff]
        %v876 = vld [vmem:[%s740 + $0x210] sm:$0xff]
        %v877 = vld [vmem:[%s740 + $0x218] sm:$0xff]
        %v878 = vld [vmem:[%s740 + $0x220] sm:$0xff]
        %v879 = vld [vmem:[%s740 + $0x228] sm:$0xff]
        %v880 = vld [vmem:[%s740 + $0x230] sm:$0xff]
        %v881 = vld [vmem:[%s740 + $0x238] sm:$0xff]
        %v882 = vld [vmem:[%s740 + $0x240] sm:$0xff]
        %v883 = vld [vmem:[%s740 + $0x248] sm:$0xff]
        %v884 = vld [vmem:[%s740 + $0x250] sm:$0xff]
        %v885 = vld [vmem:[%s740 + $0x258] sm:$0xff]
        %v886 = vld [vmem:[%s740 + $0x260] sm:$0xff]
        %v887 = vld [vmem:[%s740 + $0x268] sm:$0xff]
        %v888 = vld [vmem:[%s740 + $0x270] sm:$0xff]
        %v889 = vld [vmem:[%s740 + $0x278] sm:$0xff]
        %v890 = vld [vmem:[%s740 + $0x280] sm:$0xff]
        %v891 = vld [vmem:[%s740 + $0x288] sm:$0xff]
        %v892 = vld [vmem:[%s740 + $0x290] sm:$0xff]
        %v893 = vld [vmem:[%s740 + $0x298] sm:$0xff]
        %v894 = vld [vmem:[%s740 + $0x2a0] sm:$0xff]
        %v895 = vld [vmem:[%s740 + $0x2a8] sm:$0xff]
        %v896 = vld [vmem:[%s740 + $0x2b0] sm:$0xff]
        %v897 = vld [vmem:[%s740 + $0x2b8] sm:$0xff]
        %v898 = vld [vmem:[%s740 + $0x2c0] sm:$0xff]
        %v899 = vld [vmem:[%s740 + $0x2c8] sm:$0xff]
        %v900 = vld [vmem:[%s740 + $0x2d0] sm:$0xff]
        %v901 = vld [vmem:[%s740 + $0x2d8] sm:$0xff]
        %v902 = vld [vmem:[%s740 + $0x2e0] sm:$0xff]
        %v903 = vld [vmem:[%s740 + $0x2e8] sm:$0xff]
        %v904 = vld [vmem:[%s740 + $0x2f0] sm:$0xff]
        %v905 = vld [vmem:[%s740 + $0x2f8] sm:$0xff]
        %v906 = vld [vmem:[%s740 + $0x300] sm:$0xff]
        %v907 = vld [vmem:[%s740 + $0x308] sm:$0xff]
        %v908 = vld [vmem:[%s740 + $0x310] sm:$0xff]
        %v909 = vld [vmem:[%s740 + $0x318] sm:$0xff]
        %v910 = vld [vmem:[%s740 + $0x320] sm:$0xff]
        %v911 = vld [vmem:[%s740 + $0x328] sm:$0xff]
        %v912 = vld [vmem:[%s740 + $0x330] sm:$0xff]
        %v913 = vld [vmem:[%s740 + $0x338] sm:$0xff]
        %v914 = vld [vmem:[%s740 + $0x340] sm:$0xff]
        %v915 = vld [vmem:[%s740 + $0x348] sm:$0xff]
        %v916 = vld [vmem:[%s740 + $0x350] sm:$0xff]
        %v917 = vld [vmem:[%s740 + $0x358] sm:$0xff]
        %v918 = vld [vmem:[%s740 + $0x360] sm:$0xff]
        %v919 = vld [vmem:[%s740 + $0x368] sm:$0xff]
        %v920 = vld [vmem:[%s740 + $0x370] sm:$0xff]
        %v921 = vld [vmem:[%s740 + $0x378] sm:$0xff]
        %v922 = vld [vmem:[%s740 + $0x380] sm:$0xff]
        %v923 = vld [vmem:[%s740 + $0x388] sm:$0xff]
        %v924 = vld [vmem:[%s740 + $0x390] sm:$0xff]
        %v925 = vld [vmem:[%s740 + $0x398] sm:$0xff]
        %v926 = vld [vmem:[%s740 + $0x3a0] sm:$0xff]
        %v927 = vld [vmem:[%s740 + $0x3a8] sm:$0xff]
        %v928 = vld [vmem:[%s740 + $0x3b0] sm:$0xff]
        %v929 = vld [vmem:[%s740 + $0x3b8] sm:$0xff]
        %v930 = vld [vmem:[%s740 + $0x3c0] sm:$0xff]
        %v931 = vld [vmem:[%s740 + $0x3c8] sm:$0xff]
        %v932 = vld [vmem:[%s740 + $0x3d0] sm:$0xff]
        %v933 = vld [vmem:[%s740 + $0x3d8] sm:$0xff]
        %v934 = vld [vmem:[%s740 + $0x3e0] sm:$0xff]
        %v935 = vld [vmem:[%s740 + $0x3e8] sm:$0xff]
        %v936 = vld [vmem:[%s740 + $0x3f0] sm:$0xff]
        %v937 = vld [vmem:[%s740 + $0x3f8] sm:$0xff]
        %v939 = vcombine.high %v809, %v809
        %v941 = vunpack.c.l.s4 1966171168
        %v942 = vunpack.c.0.s8 %v941
        %v943 = vlaneseq
        %v944 = vshrl.u32 %v943, 7
        %v945 = vsub.s32 %v942, %v944
        %v946 = vrot.slane %v809, %v945
        %v948 = vunpack.c.l.s4 1966171168
        %v949 = vunpack.c.0.s8 %v948
        %v950 = vlaneseq
        %v951 = vshrl.u32 %v950, 7
        %v952 = vsub.s32 %v949, %v951
        %v953 = vrot.slane %v939, %v952
        %v954 = vcombine.high %v946, %v946
        %v955 = vcombine.high %v953, %v953
        %v957 = vunpack.c.l.s4 1966171168
        %v958 = vunpack.c.0.s8 %v957
        %v959 = vlaneseq
        %v960 = vshrl.u32 %v959, 7
        %v961 = vsub.s32 %v958, %v960
        %v962 = vrot.slane %v946, %v961
        %v964 = vunpack.c.l.s4 1966171168
        %v965 = vunpack.c.0.s8 %v964
        %v966 = vlaneseq
        %v967 = vshrl.u32 %v966, 7
        %v968 = vsub.s32 %v965, %v967
        %v969 = vrot.slane %v953, %v968
        %v971 = vunpack.c.l.s4 1966171168
        %v972 = vunpack.c.0.s8 %v971
        %v973 = vlaneseq
        %v974 = vshrl.u32 %v973, 7
        %v975 = vsub.s32 %v972, %v974
        %v976 = vrot.slane %v954, %v975
        %v978 = vunpack.c.l.s4 1966171168
        %v979 = vunpack.c.0.s8 %v978
        %v980 = vlaneseq
        %v981 = vshrl.u32 %v980, 7
        %v982 = vsub.s32 %v979, %v981
        %v983 = vrot.slane %v955, %v982
        %v984 = vcombine.high %v962, %v962
        %v985 = vcombine.high %v969, %v969
        %v986 = vcombine.high %v976, %v976
        %v987 = vcombine.high %v983, %v983
        %v1124 = vunpack.c.l.b16 %v810
        %v1125 = vunpack.c.h.b16 %v810
        %v1126 = vunpack.c.l.b16 %v811
        %v1127 = vunpack.c.h.b16 %v811
        %v1128 = vunpack.c.l.b16 %v812
        %v1129 = vunpack.c.h.b16 %v812
        %v1130 = vunpack.c.l.b16 %v813
        %v1131 = vunpack.c.h.b16 %v813
        %v1132 = vunpack.c.l.b16 %v814
        %v1133 = vunpack.c.h.b16 %v814
        %v1134 = vunpack.c.l.b16 %v815
        %v1135 = vunpack.c.h.b16 %v815
        %v1136 = vunpack.c.l.b16 %v816
        %v1137 = vunpack.c.h.b16 %v816
        %v1138 = vunpack.c.l.b16 %v817
        %v1139 = vunpack.c.h.b16 %v817
        %v1140 = vunpack.c.l.b16 %v818
        %v1141 = vunpack.c.h.b16 %v818
        %v1142 = vunpack.c.l.b16 %v819
        %v1143 = vunpack.c.h.b16 %v819
        %v1144 = vunpack.c.l.b16 %v820
        %v1145 = vunpack.c.h.b16 %v820
        %v1146 = vunpack.c.l.b16 %v821
        %v1147 = vunpack.c.h.b16 %v821
        %v1148 = vunpack.c.l.b16 %v822
        %v1149 = vunpack.c.h.b16 %v822
        %v1150 = vunpack.c.l.b16 %v823
        %v1151 = vunpack.c.h.b16 %v823
        %v1152 = vunpack.c.l.b16 %v824
        %v1153 = vunpack.c.h.b16 %v824
        %v1154 = vunpack.c.l.b16 %v825
        %v1155 = vunpack.c.h.b16 %v825
        %v1156 = vunpack.c.l.b16 %v826
        %v1157 = vunpack.c.h.b16 %v826
        %v1158 = vunpack.c.l.b16 %v827
        %v1159 = vunpack.c.h.b16 %v827
        %v1160 = vunpack.c.l.b16 %v828
        %v1161 = vunpack.c.h.b16 %v828
        %v1162 = vunpack.c.l.b16 %v829
        %v1163 = vunpack.c.h.b16 %v829
        %v1164 = vunpack.c.l.b16 %v830
        %v1165 = vunpack.c.h.b16 %v830
        %v1166 = vunpack.c.l.b16 %v831
        %v1167 = vunpack.c.h.b16 %v831
        %v1168 = vunpack.c.l.b16 %v832
        %v1169 = vunpack.c.h.b16 %v832
        %v1170 = vunpack.c.l.b16 %v833
        %v1171 = vunpack.c.h.b16 %v833
        %v1172 = vunpack.c.l.b16 %v834
        %v1173 = vunpack.c.h.b16 %v834
        %v1174 = vunpack.c.l.b16 %v835
        %v1175 = vunpack.c.h.b16 %v835
        %v1176 = vunpack.c.l.b16 %v836
        %v1177 = vunpack.c.h.b16 %v836
        %v1178 = vunpack.c.l.b16 %v837
        %v1179 = vunpack.c.h.b16 %v837
        %v1180 = vunpack.c.l.b16 %v838
        %v1181 = vunpack.c.h.b16 %v838
        %v1182 = vunpack.c.l.b16 %v839
        %v1183 = vunpack.c.h.b16 %v839
        %v1184 = vunpack.c.l.b16 %v840
        %v1185 = vunpack.c.h.b16 %v840
        %v1186 = vunpack.c.l.b16 %v841
        %v1187 = vunpack.c.h.b16 %v841
        %v1188 = vunpack.c.l.b16 %v842
        %v1189 = vunpack.c.h.b16 %v842
        %v1190 = vunpack.c.l.b16 %v843
        %v1191 = vunpack.c.h.b16 %v843
        %v1192 = vunpack.c.l.b16 %v844
        %v1193 = vunpack.c.h.b16 %v844
        %v1194 = vunpack.c.l.b16 %v845
        %v1195 = vunpack.c.h.b16 %v845
        %v1196 = vunpack.c.l.b16 %v846
        %v1197 = vunpack.c.h.b16 %v846
        %v1198 = vunpack.c.l.b16 %v847
        %v1199 = vunpack.c.h.b16 %v847
        %v1200 = vunpack.c.l.b16 %v848
        %v1201 = vunpack.c.h.b16 %v848
        %v1202 = vunpack.c.l.b16 %v849
        %v1203 = vunpack.c.h.b16 %v849
        %v1204 = vunpack.c.l.b16 %v850
        %v1205 = vunpack.c.h.b16 %v850
        %v1206 = vunpack.c.l.b16 %v851
        %v1207 = vunpack.c.h.b16 %v851
        %v1208 = vunpack.c.l.b16 %v852
        %v1209 = vunpack.c.h.b16 %v852
        %v1210 = vunpack.c.l.b16 %v853
        %v1211 = vunpack.c.h.b16 %v853
        %v1212 = vunpack.c.l.b16 %v854
        %v1213 = vunpack.c.h.b16 %v854
        %v1214 = vunpack.c.l.b16 %v855
        %v1215 = vunpack.c.h.b16 %v855
        %v1216 = vunpack.c.l.b16 %v856
        %v1217 = vunpack.c.h.b16 %v856
        %v1218 = vunpack.c.l.b16 %v857
        %v1219 = vunpack.c.h.b16 %v857
        %v1220 = vunpack.c.l.b16 %v858
        %v1221 = vunpack.c.h.b16 %v858
        %v1222 = vunpack.c.l.b16 %v859
        %v1223 = vunpack.c.h.b16 %v859
        %v1224 = vunpack.c.l.b16 %v860
        %v1225 = vunpack.c.h.b16 %v860
        %v1226 = vunpack.c.l.b16 %v861
        %v1227 = vunpack.c.h.b16 %v861
        %v1228 = vunpack.c.l.b16 %v862
        %v1229 = vunpack.c.h.b16 %v862
        %v1230 = vunpack.c.l.b16 %v863
        %v1231 = vunpack.c.h.b16 %v863
        %v1232 = vunpack.c.l.b16 %v864
        %v1233 = vunpack.c.h.b16 %v864
        %v1234 = vunpack.c.l.b16 %v865
        %v1235 = vunpack.c.h.b16 %v865
        %v1236 = vunpack.c.l.b16 %v866
        %v1237 = vunpack.c.h.b16 %v866
        %v1238 = vunpack.c.l.b16 %v867
        %v1239 = vunpack.c.h.b16 %v867
        %v1240 = vunpack.c.l.b16 %v868
        %v1241 = vunpack.c.h.b16 %v868
        %v1242 = vunpack.c.l.b16 %v869
        %v1243 = vunpack.c.h.b16 %v869
        %v1244 = vunpack.c.l.b16 %v870
        %v1245 = vunpack.c.h.b16 %v870
        %v1246 = vunpack.c.l.b16 %v871
        %v1247 = vunpack.c.h.b16 %v871
        %v1248 = vunpack.c.l.b16 %v872
        %v1249 = vunpack.c.h.b16 %v872
        %v1250 = vunpack.c.l.b16 %v873
        %v1251 = vunpack.c.h.b16 %v873
        %v1252 = vunpack.c.l.b16 %v874
        %v1253 = vunpack.c.h.b16 %v874
        %v1254 = vunpack.c.l.b16 %v875
        %v1255 = vunpack.c.h.b16 %v875
        %v1256 = vunpack.c.l.b16 %v876
        %v1257 = vunpack.c.h.b16 %v876
        %v1258 = vunpack.c.l.b16 %v877
        %v1259 = vunpack.c.h.b16 %v877
        %v1260 = vunpack.c.l.b16 %v878
        %v1261 = vunpack.c.h.b16 %v878
        %v1262 = vunpack.c.l.b16 %v879
        %v1263 = vunpack.c.h.b16 %v879
        %v1264 = vunpack.c.l.b16 %v880
        %v1265 = vunpack.c.h.b16 %v880
        %v1266 = vunpack.c.l.b16 %v881
        %v1267 = vunpack.c.h.b16 %v881
        %v1268 = vunpack.c.l.b16 %v882
        %v1269 = vunpack.c.h.b16 %v882
        %v1270 = vunpack.c.l.b16 %v883
        %v1271 = vunpack.c.h.b16 %v883
        %v1272 = vunpack.c.l.b16 %v884
        %v1273 = vunpack.c.h.b16 %v884
        %v1274 = vunpack.c.l.b16 %v885
        %v1275 = vunpack.c.h.b16 %v885
        %v1276 = vunpack.c.l.b16 %v886
        %v1277 = vunpack.c.h.b16 %v886
        %v1278 = vunpack.c.l.b16 %v887
        %v1279 = vunpack.c.h.b16 %v887
        %v1280 = vunpack.c.l.b16 %v888
        %v1281 = vunpack.c.h.b16 %v888
        %v1282 = vunpack.c.l.b16 %v889
        %v1283 = vunpack.c.h.b16 %v889
        %v1284 = vunpack.c.l.b16 %v890
        %v1285 = vunpack.c.h.b16 %v890
        %v1286 = vunpack.c.l.b16 %v891
        %v1287 = vunpack.c.h.b16 %v891
        %v1288 = vunpack.c.l.b16 %v892
        %v1289 = vunpack.c.h.b16 %v892
        %v1290 = vunpack.c.l.b16 %v893
        %v1291 = vunpack.c.h.b16 %v893
        %v1292 = vunpack.c.l.b16 %v894
        %v1293 = vunpack.c.h.b16 %v894
        %v1294 = vunpack.c.l.b16 %v895
        %v1295 = vunpack.c.h.b16 %v895
        %v1296 = vunpack.c.l.b16 %v896
        %v1297 = vunpack.c.h.b16 %v896
        %v1298 = vunpack.c.l.b16 %v897
        %v1299 = vunpack.c.h.b16 %v897
        %v1300 = vunpack.c.l.b16 %v898
        %v1301 = vunpack.c.h.b16 %v898
        %v1302 = vunpack.c.l.b16 %v899
        %v1303 = vunpack.c.h.b16 %v899
        %v1304 = vunpack.c.l.b16 %v900
        %v1305 = vunpack.c.h.b16 %v900
        %v1306 = vunpack.c.l.b16 %v901
        %v1307 = vunpack.c.h.b16 %v901
        %v1308 = vunpack.c.l.b16 %v902
        %v1309 = vunpack.c.h.b16 %v902
        %v1310 = vunpack.c.l.b16 %v903
        %v1311 = vunpack.c.h.b16 %v903
        %v1312 = vunpack.c.l.b16 %v904
        %v1313 = vunpack.c.h.b16 %v904
        %v1314 = vunpack.c.l.b16 %v905
        %v1315 = vunpack.c.h.b16 %v905
        %v1316 = vunpack.c.l.b16 %v906
        %v1317 = vunpack.c.h.b16 %v906
        %v1318 = vunpack.c.l.b16 %v907
        %v1319 = vunpack.c.h.b16 %v907
        %v1320 = vunpack.c.l.b16 %v908
        %v1321 = vunpack.c.h.b16 %v908
        %v1322 = vunpack.c.l.b16 %v909
        %v1323 = vunpack.c.h.b16 %v909
        %v1324 = vunpack.c.l.b16 %v910
        %v1325 = vunpack.c.h.b16 %v910
        %v1326 = vunpack.c.l.b16 %v911
        %v1327 = vunpack.c.h.b16 %v911
        %v1328 = vunpack.c.l.b16 %v912
        %v1329 = vunpack.c.h.b16 %v912
        %v1330 = vunpack.c.l.b16 %v913
        %v1331 = vunpack.c.h.b16 %v913
        %v1332 = vunpack.c.l.b16 %v914
        %v1333 = vunpack.c.h.b16 %v914
        %v1334 = vunpack.c.l.b16 %v915
        %v1335 = vunpack.c.h.b16 %v915
        %v1336 = vunpack.c.l.b16 %v916
        %v1337 = vunpack.c.h.b16 %v916
        %v1338 = vunpack.c.l.b16 %v917
        %v1339 = vunpack.c.h.b16 %v917
        %v1340 = vunpack.c.l.b16 %v918
        %v1341 = vunpack.c.h.b16 %v918
        %v1342 = vunpack.c.l.b16 %v919
        %v1343 = vunpack.c.h.b16 %v919
        %v1344 = vunpack.c.l.b16 %v920
        %v1345 = vunpack.c.h.b16 %v920
        %v1346 = vunpack.c.l.b16 %v921
        %v1347 = vunpack.c.h.b16 %v921
        %v1348 = vunpack.c.l.b16 %v922
        %v1349 = vunpack.c.h.b16 %v922
        %v1350 = vunpack.c.l.b16 %v923
        %v1351 = vunpack.c.h.b16 %v923
        %v1352 = vunpack.c.l.b16 %v924
        %v1353 = vunpack.c.h.b16 %v924
        %v1354 = vunpack.c.l.b16 %v925
        %v1355 = vunpack.c.h.b16 %v925
        %v1356 = vunpack.c.l.b16 %v926
        %v1357 = vunpack.c.h.b16 %v926
        %v1358 = vunpack.c.l.b16 %v927
        %v1359 = vunpack.c.h.b16 %v927
        %v1360 = vunpack.c.l.b16 %v928
        %v1361 = vunpack.c.h.b16 %v928
        %v1362 = vunpack.c.l.b16 %v929
        %v1363 = vunpack.c.h.b16 %v929
        %v1364 = vunpack.c.l.b16 %v930
        %v1365 = vunpack.c.h.b16 %v930
        %v1366 = vunpack.c.l.b16 %v931
        %v1367 = vunpack.c.h.b16 %v931
        %v1368 = vunpack.c.l.b16 %v932
        %v1369 = vunpack.c.h.b16 %v932
        %v1370 = vunpack.c.l.b16 %v933
        %v1371 = vunpack.c.h.b16 %v933
        %v1372 = vunpack.c.l.b16 %v934
        %v1373 = vunpack.c.h.b16 %v934
        %v1374 = vunpack.c.l.b16 %v935
        %v1375 = vunpack.c.h.b16 %v935
        %v1376 = vunpack.c.l.b16 %v936
        %v1377 = vunpack.c.h.b16 %v936
        %v1378 = vunpack.c.l.b16 %v937
        %v1379 = vunpack.c.h.b16 %v937
        %v1380 = vpack.c.b16 %v1126, %v1124
        %v1381 = vpack.c.b16 %v1127, %v1125
        %v1382 = vpack.c.b16 %v1130, %v1128
        %v1383 = vpack.c.b16 %v1131, %v1129
        %v1384 = vpack.c.b16 %v1134, %v1132
        %v1385 = vpack.c.b16 %v1135, %v1133
        %v1386 = vpack.c.b16 %v1138, %v1136
        %v1387 = vpack.c.b16 %v1139, %v1137
        %v1388 = vpack.c.b16 %v1142, %v1140
        %v1389 = vpack.c.b16 %v1143, %v1141
        %v1390 = vpack.c.b16 %v1146, %v1144
        %v1391 = vpack.c.b16 %v1147, %v1145
        %v1392 = vpack.c.b16 %v1150, %v1148
        %v1393 = vpack.c.b16 %v1151, %v1149
        %v1394 = vpack.c.b16 %v1154, %v1152
        %v1395 = vpack.c.b16 %v1155, %v1153
        %v1396 = vpack.c.b16 %v1158, %v1156
        %v1397 = vpack.c.b16 %v1159, %v1157
        %v1398 = vpack.c.b16 %v1162, %v1160
        %v1399 = vpack.c.b16 %v1163, %v1161
        %v1400 = vpack.c.b16 %v1166, %v1164
        %v1401 = vpack.c.b16 %v1167, %v1165
        %v1402 = vpack.c.b16 %v1170, %v1168
        %v1403 = vpack.c.b16 %v1171, %v1169
        %v1404 = vpack.c.b16 %v1174, %v1172
        %v1405 = vpack.c.b16 %v1175, %v1173
        %v1406 = vpack.c.b16 %v1178, %v1176
        %v1407 = vpack.c.b16 %v1179, %v1177
        %v1408 = vpack.c.b16 %v1182, %v1180
        %v1409 = vpack.c.b16 %v1183, %v1181
        %v1410 = vpack.c.b16 %v1186, %v1184
        %v1411 = vpack.c.b16 %v1187, %v1185
        %v1412 = vpack.c.b16 %v1190, %v1188
        %v1413 = vpack.c.b16 %v1191, %v1189
        %v1414 = vpack.c.b16 %v1194, %v1192
        %v1415 = vpack.c.b16 %v1195, %v1193
        %v1416 = vpack.c.b16 %v1198, %v1196
        %v1417 = vpack.c.b16 %v1199, %v1197
        %v1418 = vpack.c.b16 %v1202, %v1200
        %v1419 = vpack.c.b16 %v1203, %v1201
        %v1420 = vpack.c.b16 %v1206, %v1204
        %v1421 = vpack.c.b16 %v1207, %v1205
        %v1422 = vpack.c.b16 %v1210, %v1208
        %v1423 = vpack.c.b16 %v1211, %v1209
        %v1424 = vpack.c.b16 %v1214, %v1212
        %v1425 = vpack.c.b16 %v1215, %v1213
        %v1426 = vpack.c.b16 %v1218, %v1216
        %v1427 = vpack.c.b16 %v1219, %v1217
        %v1428 = vpack.c.b16 %v1222, %v1220
        %v1429 = vpack.c.b16 %v1223, %v1221
        %v1430 = vpack.c.b16 %v1226, %v1224
        %v1431 = vpack.c.b16 %v1227, %v1225
        %v1432 = vpack.c.b16 %v1230, %v1228
        %v1433 = vpack.c.b16 %v1231, %v1229
        %v1434 = vpack.c.b16 %v1234, %v1232
        %v1435 = vpack.c.b16 %v1235, %v1233
        %v1436 = vpack.c.b16 %v1238, %v1236
        %v1437 = vpack.c.b16 %v1239, %v1237
        %v1438 = vpack.c.b16 %v1242, %v1240
        %v1439 = vpack.c.b16 %v1243, %v1241
        %v1440 = vpack.c.b16 %v1246, %v1244
        %v1441 = vpack.c.b16 %v1247, %v1245
        %v1442 = vpack.c.b16 %v1250, %v1248
        %v1443 = vpack.c.b16 %v1251, %v1249
        %v1444 = vpack.c.b16 %v1254, %v1252
        %v1445 = vpack.c.b16 %v1255, %v1253
        %v1446 = vpack.c.b16 %v1258, %v1256
        %v1447 = vpack.c.b16 %v1259, %v1257
        %v1448 = vpack.c.b16 %v1262, %v1260
        %v1449 = vpack.c.b16 %v1263, %v1261
        %v1450 = vpack.c.b16 %v1266, %v1264
        %v1451 = vpack.c.b16 %v1267, %v1265
        %v1452 = vpack.c.b16 %v1270, %v1268
        %v1453 = vpack.c.b16 %v1271, %v1269
        %v1454 = vpack.c.b16 %v1274, %v1272
        %v1455 = vpack.c.b16 %v1275, %v1273
        %v1456 = vpack.c.b16 %v1278, %v1276
        %v1457 = vpack.c.b16 %v1279, %v1277
        %v1458 = vpack.c.b16 %v1282, %v1280
        %v1459 = vpack.c.b16 %v1283, %v1281
        %v1460 = vpack.c.b16 %v1286, %v1284
        %v1461 = vpack.c.b16 %v1287, %v1285
        %v1462 = vpack.c.b16 %v1290, %v1288
        %v1463 = vpack.c.b16 %v1291, %v1289
        %v1464 = vpack.c.b16 %v1294, %v1292
        %v1465 = vpack.c.b16 %v1295, %v1293
        %v1466 = vpack.c.b16 %v1298, %v1296
        %v1467 = vpack.c.b16 %v1299, %v1297
        %v1468 = vpack.c.b16 %v1302, %v1300
        %v1469 = vpack.c.b16 %v1303, %v1301
        %v1470 = vpack.c.b16 %v1306, %v1304
        %v1471 = vpack.c.b16 %v1307, %v1305
        %v1472 = vpack.c.b16 %v1310, %v1308
        %v1473 = vpack.c.b16 %v1311, %v1309
        %v1474 = vpack.c.b16 %v1314, %v1312
        %v1475 = vpack.c.b16 %v1315, %v1313
        %v1476 = vpack.c.b16 %v1318, %v1316
        %v1477 = vpack.c.b16 %v1319, %v1317
        %v1478 = vpack.c.b16 %v1322, %v1320
        %v1479 = vpack.c.b16 %v1323, %v1321
        %v1480 = vpack.c.b16 %v1326, %v1324
        %v1481 = vpack.c.b16 %v1327, %v1325
        %v1482 = vpack.c.b16 %v1330, %v1328
        %v1483 = vpack.c.b16 %v1331, %v1329
        %v1484 = vpack.c.b16 %v1334, %v1332
        %v1485 = vpack.c.b16 %v1335, %v1333
        %v1486 = vpack.c.b16 %v1338, %v1336
        %v1487 = vpack.c.b16 %v1339, %v1337
        %v1488 = vpack.c.b16 %v1342, %v1340
        %v1489 = vpack.c.b16 %v1343, %v1341
        %v1490 = vpack.c.b16 %v1346, %v1344
        %v1491 = vpack.c.b16 %v1347, %v1345
        %v1492 = vpack.c.b16 %v1350, %v1348
        %v1493 = vpack.c.b16 %v1351, %v1349
        %v1494 = vpack.c.b16 %v1354, %v1352
        %v1495 = vpack.c.b16 %v1355, %v1353
        %v1496 = vpack.c.b16 %v1358, %v1356
        %v1497 = vpack.c.b16 %v1359, %v1357
        %v1498 = vpack.c.b16 %v1362, %v1360
        %v1499 = vpack.c.b16 %v1363, %v1361
        %v1500 = vpack.c.b16 %v1366, %v1364
        %v1501 = vpack.c.b16 %v1367, %v1365
        %v1502 = vpack.c.b16 %v1370, %v1368
        %v1503 = vpack.c.b16 %v1371, %v1369
        %v1504 = vpack.c.b16 %v1374, %v1372
        %v1505 = vpack.c.b16 %v1375, %v1373
        %v1506 = vpack.c.b16 %v1378, %v1376
        %v1507 = vpack.c.b16 %v1379, %v1377
        %1636 = vmatprep.subr.bf16.mxu0 %v1381
        %1637 = vmatpush1.bf16.msra.mxu0 %v1380
        %1638 = vmatprep.subr.bf16.mxu0 %v1383
        %1639 = vmatpush1.bf16.msra.mxu0 %v1382
        %1640 = vmatprep.subr.bf16.mxu0 %v1385
        %1641 = vmatpush1.bf16.msra.mxu0 %v1384
        %1642 = vmatprep.subr.bf16.mxu0 %v1387
        %1643 = vmatpush1.bf16.msra.mxu0 %v1386
        %1644 = vmatprep.subr.bf16.mxu0 %v1389
        %1645 = vmatpush1.bf16.msra.mxu0 %v1388
        %1646 = vmatprep.subr.bf16.mxu0 %v1391
        %1647 = vmatpush1.bf16.msra.mxu0 %v1390
        %1648 = vmatprep.subr.bf16.mxu0 %v1393
        %1649 = vmatpush1.bf16.msra.mxu0 %v1392
        %1650 = vmatprep.subr.bf16.mxu0 %v1395
        %1651 = vmatpush1.bf16.msra.mxu0 %v1394
        %1652 = vmatprep.subr.bf16.mxu0 %v1397
        %1653 = vmatpush1.bf16.msra.mxu0 %v1396
        %1654 = vmatprep.subr.bf16.mxu0 %v1399
        %1655 = vmatpush1.bf16.msra.mxu0 %v1398
        %1656 = vmatprep.subr.bf16.mxu0 %v1401
        %1657 = vmatpush1.bf16.msra.mxu0 %v1400
        %1658 = vmatprep.subr.bf16.mxu0 %v1403
        %1659 = vmatpush1.bf16.msra.mxu0 %v1402
        %1660 = vmatprep.subr.bf16.mxu0 %v1405
        %1661 = vmatpush1.bf16.msra.mxu0 %v1404
        %1662 = vmatprep.subr.bf16.mxu0 %v1407
        %1663 = vmatpush1.bf16.msra.mxu0 %v1406
        %1664 = vmatprep.subr.bf16.mxu0 %v1409
        %1665 = vmatpush1.bf16.msra.mxu0 %v1408
        %1666 = vmatprep.subr.bf16.mxu0 %v1411
        %1667 = vmatpush1.bf16.msra.mxu0 %v1410
        %1668 = vmatprep.mubr.bf16.mxu0 %v976
        %1669 = vmatmul.mubr.bf16.gmra.mrb[0].mxu0 %v962
        %v1670 = vpop.f32.mrb[0].mxu0
        %v1671 = vadd.f32 0.0, %v1670
        %v1672 = vpop.f32.mrb[0].mxu0
        %v1673 = vadd.f32 0.0, %v1672
        %v1674 = vpop.f32.mrb[0].mxu0
        %v1675 = vpop.f32.mrb[0].mxu0
        %1676 = vdwg.mxu0
        %1677 = vmatprep.subr.bf16.mxu0 %v1413
        %1678 = vmatpush1.bf16.msra.mxu0 %v1412
        %1679 = vmatprep.subr.bf16.mxu0 %v1415
        %1680 = vmatpush1.bf16.msra.mxu0 %v1414
        %1681 = vmatprep.subr.bf16.mxu0 %v1417
        %1682 = vmatpush1.bf16.msra.mxu0 %v1416
        %1683 = vmatprep.subr.bf16.mxu0 %v1419
        %1684 = vmatpush1.bf16.msra.mxu0 %v1418
        %1685 = vmatprep.subr.bf16.mxu0 %v1421
        %1686 = vmatpush1.bf16.msra.mxu0 %v1420
        %1687 = vmatprep.subr.bf16.mxu0 %v1423
        %1688 = vmatpush1.bf16.msra.mxu0 %v1422
        %1689 = vmatprep.subr.bf16.mxu0 %v1425
        %1690 = vmatpush1.bf16.msra.mxu0 %v1424
        %1691 = vmatprep.subr.bf16.mxu0 %v1427
        %1692 = vmatpush1.bf16.msra.mxu0 %v1426
        %1693 = vmatprep.subr.bf16.mxu0 %v1429
        %1694 = vmatpush1.bf16.msra.mxu0 %v1428
        %1695 = vmatprep.subr.bf16.mxu0 %v1431
        %1696 = vmatpush1.bf16.msra.mxu0 %v1430
        %1697 = vmatprep.subr.bf16.mxu0 %v1433
        %1698 = vmatpush1.bf16.msra.mxu0 %v1432
        %1699 = vmatprep.subr.bf16.mxu0 %v1435
        %1700 = vmatpush1.bf16.msra.mxu0 %v1434
        %1701 = vmatprep.subr.bf16.mxu0 %v1437
        %1702 = vmatpush1.bf16.msra.mxu0 %v1436
        %1703 = vmatprep.subr.bf16.mxu0 %v1439
        %1704 = vmatpush1.bf16.msra.mxu0 %v1438
        %1705 = vmatprep.subr.bf16.mxu0 %v1441
        %1706 = vmatpush1.bf16.msra.mxu0 %v1440
        %1707 = vmatprep.subr.bf16.mxu0 %v1443
        %1708 = vmatpush1.bf16.msra.mxu0 %v1442
        %1709 = vmatprep.mubr.bf16.mxu0 %v986
        %1710 = vmatmul.mubr.bf16.gmra.mrb[0].mxu0 %v984
        %v1711 = vpop.f32.mrb[0].mxu0
        %v1712 = vadd.f32 %v1671, %v1711
        %v1713 = vpop.f32.mrb[0].mxu0
        %v1714 = vadd.f32 %v1673, %v1713
        %v1715 = vpop.f32.mrb[0].mxu0
        %v1716 = vpop.f32.mrb[0].mxu0
        %1717 = vdwg.mxu0
        %1718 = vmatprep.subr.bf16.mxu0 %v1445
        %1719 = vmatpush1.bf16.msra.mxu0 %v1444
        %1720 = vmatprep.subr.bf16.mxu0 %v1447
        %1721 = vmatpush1.bf16.msra.mxu0 %v1446
        %1722 = vmatprep.subr.bf16.mxu0 %v1449
        %1723 = vmatpush1.bf16.msra.mxu0 %v1448
        %1724 = vmatprep.subr.bf16.mxu0 %v1451
        %1725 = vmatpush1.bf16.msra.mxu0 %v1450
        %1726 = vmatprep.subr.bf16.mxu0 %v1453
        %1727 = vmatpush1.bf16.msra.mxu0 %v1452
        %1728 = vmatprep.subr.bf16.mxu0 %v1455
        %1729 = vmatpush1.bf16.msra.mxu0 %v1454
        %1730 = vmatprep.subr.bf16.mxu0 %v1457
        %1731 = vmatpush1.bf16.msra.mxu0 %v1456
        %1732 = vmatprep.subr.bf16.mxu0 %v1459
        %1733 = vmatpush1.bf16.msra.mxu0 %v1458
        %1734 = vmatprep.subr.bf16.mxu0 %v1461
        %1735 = vmatpush1.bf16.msra.mxu0 %v1460
        %1736 = vmatprep.subr.bf16.mxu0 %v1463
        %1737 = vmatpush1.bf16.msra.mxu0 %v1462
        %1738 = vmatprep.subr.bf16.mxu0 %v1465
        %1739 = vmatpush1.bf16.msra.mxu0 %v1464
        %1740 = vmatprep.subr.bf16.mxu0 %v1467
        %1741 = vmatpush1.bf16.msra.mxu0 %v1466
        %1742 = vmatprep.subr.bf16.mxu0 %v1469
        %1743 = vmatpush1.bf16.msra.mxu0 %v1468
        %1744 = vmatprep.subr.bf16.mxu0 %v1471
        %1745 = vmatpush1.bf16.msra.mxu0 %v1470
        %1746 = vmatprep.subr.bf16.mxu0 %v1473
        %1747 = vmatpush1.bf16.msra.mxu0 %v1472
        %1748 = vmatprep.subr.bf16.mxu0 %v1475
        %1749 = vmatpush1.bf16.msra.mxu0 %v1474
        %1750 = vmatprep.mubr.bf16.mxu0 %v983
        %1751 = vmatmul.mubr.bf16.gmra.mrb[0].mxu0 %v969
        %v1752 = vpop.f32.mrb[0].mxu0
        %v1753 = vadd.f32 %v1712, %v1752
        %v1754 = vpop.f32.mrb[0].mxu0
        %v1755 = vadd.f32 %v1714, %v1754
        %v1756 = vpop.f32.mrb[0].mxu0
        %v1757 = vpop.f32.mrb[0].mxu0
        %1758 = vdwg.mxu0
        %1759 = vmatprep.subr.bf16.mxu0 %v1477
        %1760 = vmatpush1.bf16.msra.mxu0 %v1476
        %1761 = vmatprep.subr.bf16.mxu0 %v1479
        %1762 = vmatpush1.bf16.msra.mxu0 %v1478
        %1763 = vmatprep.subr.bf16.mxu0 %v1481
        %1764 = vmatpush1.bf16.msra.mxu0 %v1480
        %1765 = vmatprep.subr.bf16.mxu0 %v1483
        %1766 = vmatpush1.bf16.msra.mxu0 %v1482
        %1767 = vmatprep.subr.bf16.mxu0 %v1485
        %1768 = vmatpush1.bf16.msra.mxu0 %v1484
        %1769 = vmatprep.subr.bf16.mxu0 %v1487
        %1770 = vmatpush1.bf16.msra.mxu0 %v1486
        %1771 = vmatprep.subr.bf16.mxu0 %v1489
        %1772 = vmatpush1.bf16.msra.mxu0 %v1488
        %1773 = vmatprep.subr.bf16.mxu0 %v1491
        %1774 = vmatpush1.bf16.msra.mxu0 %v1490
        %1775 = vmatprep.subr.bf16.mxu0 %v1493
        %1776 = vmatpush1.bf16.msra.mxu0 %v1492
        %1777 = vmatprep.subr.bf16.mxu0 %v1495
        %1778 = vmatpush1.bf16.msra.mxu0 %v1494
        %1779 = vmatprep.subr.bf16.mxu0 %v1497
        %1780 = vmatpush1.bf16.msra.mxu0 %v1496
        %1781 = vmatprep.subr.bf16.mxu0 %v1499
        %1782 = vmatpush1.bf16.msra.mxu0 %v1498
        %1783 = vmatprep.subr.bf16.mxu0 %v1501
        %1784 = vmatpush1.bf16.msra.mxu0 %v1500
        %1785 = vmatprep.subr.bf16.mxu0 %v1503
        %1786 = vmatpush1.bf16.msra.mxu0 %v1502
        %1787 = vmatprep.subr.bf16.mxu0 %v1505
        %1788 = vmatpush1.bf16.msra.mxu0 %v1504
        %1789 = vmatprep.subr.bf16.mxu0 %v1507
        %1790 = vmatpush1.bf16.msra.mxu0 %v1506
        %1791 = vmatprep.mubr.bf16.mxu0 %v987
        %1792 = vmatmul.mubr.bf16.gmra.mrb[0].mxu0 %v985
        %v1793 = vpop.f32.mrb[0].mxu0
        %v1794 = vadd.f32 %v1753, %v1793
        %v1795 = vpop.f32.mrb[0].mxu0
        %v1796 = vadd.f32 %v1755, %v1795
        %v1797 = vpop.f32.mrb[0].mxu0
        %v1798 = vpop.f32.mrb[0].mxu0
        %1799 = vdwg.mxu0
        %v1802 = vcombine.low %v1794, %v1796
        %v1804 = vunpack.c.l.s4 1983009808
        %v1805 = vunpack.c.0.s8 %v1804
        %v1806 = vlaneseq
        %v1807 = vshrl.u32 %v1806, 7
        %v1808 = vsub.s32 %v1805, %v1807
        %v1809 = vrot.slane %v1802, %v1808
        %v1811 = vadd.f32 %v808, %v1809
        %1812 = vst [vmem:[%s801] sm:$0xf] %v1811
        %p1813 = scmp.eq.s32.totalorder %s21, 7
        // Predicated region
        $region75: #{simple_cnn_forward.14} parent=65 // pred_check
          %p1814 = pneg %p1813
        $region76: #{simple_cnn_forward.14} parent=65 // pred_check_branch
          %1816 = sbr.rel (%p1814) target = $region78
        $region77: #{simple_cnn_forward.14} parent=65 // pred_region
          %v1817 = vld [vmem:[%s801] sm:$0xf]
          %v1818 = vld [vmem:[%s791] sm:$0x3]
          %v1820 = vlaneseq
          %v1821 = vshrl.u32 %v1820, 7
          %v1822 = vsub.s32 0, %v1821
          %v1823 = vrot.slane %v1818, %v1822
          %v1824 = vlaneseq
          %v1825 = vshrl.u32 %v1824, 7
          %v1826 = vsub.s32 1, %v1825
          %v1827 = vrot.slane %v1818, %v1826
          %v1828 = vcombine.low %v1823, %v1827
          %v1830 = vunpack.c.l.s4 1983009808
          %v1831 = vunpack.c.0.s8 %v1830
          %v1832 = vlaneseq
          %v1833 = vshrl.u32 %v1832, 7
          %v1834 = vsub.s32 %v1831, %v1833
          %v1835 = vrot.slane %v1828, %v1834
          %v1837 = vadd.f32 %v1817, %v1835
          %v1838 = vmax.f32 %v1837, 0.0
          %1839 = vst [vmem:[%s801] sm:$0xf] %v1838
        $region78: #{simple_cnn_forward.14} parent=65 // pred_fallthru
          _
        %s1840 = smul.u32 2, %s20
        %p1841 = scmp.lt.s32.totalorder %s19, 0
        %s1842 = scalar_select %p1841, %s19, 0
        %p1843 = scmp.lt.s32.totalorder %s1840, 3
        %s1844 = scalar_select %p1843, %s1840, 3
        %s1845 = smul.addr %s1842, 4
        %s1846 = sadd.s32 %s1844, %s1845
        %s1847 = smul.addr %s1846, 2
        %s1848 = scalar_lea.vmem %s3, %s1847
        // Predicated region
        $region79: #{simple_cnn_forward.14} parent=65 // pred_check
          %p1849 = pneg %p135
        $region80: #{simple_cnn_forward.14} parent=65 // pred_check_branch
          %1851 = sbr.rel (%p1849) target = $region82
        $region81: #{simple_cnn_forward.14} parent=65 // pred_region
          %s1852 = smul.u32 2, %s20
        $region82: #{simple_cnn_forward.14} parent=65 // pred_fallthru
          _
      $region66: #{simple_cnn_forward.14} parent=5 // pred_fallthru
        _
      %p1853 = scmp.le.s32.totalorder 2, %s9
      // Predicated region
      $region83: #{simple_cnn_forward.14} parent=5 // pred_check
        %p1854 = pneg %p1853
      $region84: #{simple_cnn_forward.14} parent=5 // pred_check_branch
        %1856 = sbr.rel (%p1854) target = $region86
      $region85: #{simple_cnn_forward.14} parent=5 // pred_region
        %s1857 = ssub.s32 %s9, 2
        // Predicated region
        $region87: #{simple_cnn_forward.14} parent=85 // pred_check
          %p1858 = pneg %p141
        $region88: #{simple_cnn_forward.14} parent=85 // pred_check_branch
          %1860 = sbr.rel (%p1858) target = $region90
        $region89: #{simple_cnn_forward.14} parent=85 // pred_region
          %s1861 = smul.u32 2, %s23
          %p1862 = scmp.lt.s32.totalorder %s22, 0
          %s1863 = scalar_select %p1862, %s22, 0
          %p1864 = scmp.lt.s32.totalorder %s1861, 3
          %s1865 = scalar_select %p1864, %s1861, 3
          %s1866 = smul.addr %s1863, 4
          %s1867 = sadd.s32 %s1865, %s1866
          %s1868 = smul.addr %s1867, 2
          %s1869 = scalar_lea.vmem %s3, %s1868
        $region90: #{simple_cnn_forward.14} parent=85 // pred_fallthru
          _
      $region86: #{simple_cnn_forward.14} parent=5 // pred_fallthru
        _
    $region6: #{simple_cnn_forward.14} parent=1 // loop_footer
      %s13 = sadd.s32 1, %s9
    $region7: #{simple_cnn_forward.14} parent=1 // loop_footer_branch
      %8 = sbr.rel target = $region3
    $region8: #{simple_cnn_forward.14} parent=1 // loop_exit
      _

// kernel: simple_cnn_forward.15
$region0: #{simple_cnn_forward.15}
  #allocation0 [shape = 'u32[]', space=smem, size = 0x4, offset = 0x4, fixed_abs, tag = 'smem constant byte address 0x4 - core index']
  #allocation1 [shape = 'u32[144,128]{1,0:T(1,128)}', space=vmem, size = 0x12000, scoped, tag = 'internal scratch']
  %s0 = inlined_call_operand.vmem [shape: bf16[2,512], index: 0, kind: input, shape index: {}]
  %s1 = inlined_call_operand.vmem [shape: bf16[512,3], index: 1, kind: input, shape index: {}]
  %s2 = inlined_call_operand.vmem [shape: f32[1,3], index: 2, kind: input, shape index: {}]
  %s3 = inlined_call_operand.hbm [shape: f32[2,3], index: 3, kind: output, shape index: {}]
  %s4 = sld [smem:[#allocation0]]
  $region30: #{simple_cnn_forward.15} parent=0
    _
  %s6 = ssub.s32 1, %s4
  %s7 = scalar_select 0, %s6, %s4
  $region1: #{simple_cnn_forward.15} parent=0
    #allocation2 [shape = 'u8[1024]{0}', space=vmem, size = 0x400, scoped, tag = 'output window, operand 0, single buffered']
    #allocation3 [shape = 's32[1]{0}', space=sflag, size = 0x4, scoped, tag = 'scoped memory for simple_cnn_forward.15']
    %8 = vsyncpa [#allocation3], 0
    // Predicated region
    $region2: #{simple_cnn_forward.15} parent=1 // pred_check
      _
    $region3: #{simple_cnn_forward.15} parent=1 // pred_check_branch
      %10 = sbr.rel (0) target = $region5
    $region4: #{simple_cnn_forward.15} parent=1 // pred_region
      _
    $region5: #{simple_cnn_forward.15} parent=1 // pred_fallthru
      _
    // Predicated region
    $region6: #{simple_cnn_forward.15} parent=1 // pred_check
      _
    $region7: #{simple_cnn_forward.15} parent=1 // pred_check_branch
      %12 = sbr.rel (0) target = $region9
    $region8: #{simple_cnn_forward.15} parent=1 // pred_region
      _
    $region9: #{simple_cnn_forward.15} parent=1 // pred_fallthru
      _
    // Predicated region
    $region10: #{simple_cnn_forward.15} parent=1 // pred_check
      _
    $region11: #{simple_cnn_forward.15} parent=1 // pred_check_branch
      %14 = sbr.rel (0) target = $region13
    $region12: #{simple_cnn_forward.15} parent=1 // pred_region
      _
    $region13: #{simple_cnn_forward.15} parent=1 // pred_fallthru
      _
    %p16 = scmp.eq.s32.totalorder 0, 0
    // Predicated region
    $region14: #{simple_cnn_forward.15} parent=1 // pred_check
      %p17 = pneg %p16
    $region15: #{simple_cnn_forward.15} parent=1 // pred_check_branch
      %19 = sbr.rel (%p17) target = $region17
    $region16: #{simple_cnn_forward.15} parent=1 // pred_region
      %vm20 = vcmask 17408
      %21 = vst.msk [vmem:[#allocation2] sm:$0x3] %vm20, 0.0
    $region17: #{simple_cnn_forward.15} parent=1 // pred_fallthru
      _
    %v22 = vld [vmem:[#allocation2] sm:$0x3]
    %v23 = vld [vmem:[%s0] sm:$0xf]
    %v24 = vld [vmem:[%s1] sm:$0xf]
    %v25 = vld [vmem:[%s1 + $0x4] sm:$0xf]
    %v26 = vld [vmem:[%s1 + $0x8] sm:$0xf]
    %v27 = vld [vmem:[%s1 + $0xc] sm:$0xf]
    %v28 = vld [vmem:[%s1 + $0x10] sm:$0xf]
    %v29 = vld [vmem:[%s1 + $0x14] sm:$0xf]
    %v30 = vld [vmem:[%s1 + $0x18] sm:$0xf]
    %v31 = vld [vmem:[%s1 + $0x1c] sm:$0xf]
    %v32 = vld [vmem:[%s1 + $0x20] sm:$0xf]
    %v33 = vld [vmem:[%s1 + $0x24] sm:$0xf]
    %v34 = vld [vmem:[%s1 + $0x28] sm:$0xf]
    %v35 = vld [vmem:[%s1 + $0x2c] sm:$0xf]
    %v36 = vld [vmem:[%s1 + $0x30] sm:$0xf]
    %v37 = vld [vmem:[%s1 + $0x34] sm:$0xf]
    %v38 = vld [vmem:[%s1 + $0x38] sm:$0xf]
    %v39 = vld [vmem:[%s1 + $0x3c] sm:$0xf]
    %v40 = vld [vmem:[%s1 + $0x40] sm:$0xf]
    %v41 = vld [vmem:[%s1 + $0x44] sm:$0xf]
    %v42 = vld [vmem:[%s1 + $0x48] sm:$0xf]
    %v43 = vld [vmem:[%s1 + $0x4c] sm:$0xf]
    %v44 = vld [vmem:[%s1 + $0x50] sm:$0xf]
    %v45 = vld [vmem:[%s1 + $0x54] sm:$0xf]
    %v46 = vld [vmem:[%s1 + $0x58] sm:$0xf]
    %v47 = vld [vmem:[%s1 + $0x5c] sm:$0xf]
    %v48 = vld [vmem:[%s1 + $0x60] sm:$0xf]
    %v49 = vld [vmem:[%s1 + $0x64] sm:$0xf]
    %v50 = vld [vmem:[%s1 + $0x68] sm:$0xf]
    %v51 = vld [vmem:[%s1 + $0x6c] sm:$0xf]
    %v52 = vld [vmem:[%s1 + $0x70] sm:$0xf]
    %v53 = vld [vmem:[%s1 + $0x74] sm:$0xf]
    %v54 = vld [vmem:[%s1 + $0x78] sm:$0xf]
    %v55 = vld [vmem:[%s1 + $0x7c] sm:$0xf]
    %v56 = vld [vmem:[%s1 + $0x80] sm:$0xf]
    %v57 = vld [vmem:[%s1 + $0x84] sm:$0xf]
    %v58 = vld [vmem:[%s1 + $0x88] sm:$0xf]
    %v59 = vld [vmem:[%s1 + $0x8c] sm:$0xf]
    %v60 = vld [vmem:[%s1 + $0x90] sm:$0xf]
    %v61 = vld [vmem:[%s1 + $0x94] sm:$0xf]
    %v62 = vld [vmem:[%s1 + $0x98] sm:$0xf]
    %v63 = vld [vmem:[%s1 + $0x9c] sm:$0xf]
    %v64 = vld [vmem:[%s1 + $0xa0] sm:$0xf]
    %v65 = vld [vmem:[%s1 + $0xa4] sm:$0xf]
    %v66 = vld [vmem:[%s1 + $0xa8] sm:$0xf]
    %v67 = vld [vmem:[%s1 + $0xac] sm:$0xf]
    %v68 = vld [vmem:[%s1 + $0xb0] sm:$0xf]
    %v69 = vld [vmem:[%s1 + $0xb4] sm:$0xf]
    %v70 = vld [vmem:[%s1 + $0xb8] sm:$0xf]
    %v71 = vld [vmem:[%s1 + $0xbc] sm:$0xf]
    %v72 = vld [vmem:[%s1 + $0xc0] sm:$0xf]
    %v73 = vld [vmem:[%s1 + $0xc4] sm:$0xf]
    %v74 = vld [vmem:[%s1 + $0xc8] sm:$0xf]
    %v75 = vld [vmem:[%s1 + $0xcc] sm:$0xf]
    %v76 = vld [vmem:[%s1 + $0xd0] sm:$0xf]
    %v77 = vld [vmem:[%s1 + $0xd4] sm:$0xf]
    %v78 = vld [vmem:[%s1 + $0xd8] sm:$0xf]
    %v79 = vld [vmem:[%s1 + $0xdc] sm:$0xf]
    %v80 = vld [vmem:[%s1 + $0xe0] sm:$0xf]
    %v81 = vld [vmem:[%s1 + $0xe4] sm:$0xf]
    %v82 = vld [vmem:[%s1 + $0xe8] sm:$0xf]
    %v83 = vld [vmem:[%s1 + $0xec] sm:$0xf]
    %v84 = vld [vmem:[%s1 + $0xf0] sm:$0xf]
    %v85 = vld [vmem:[%s1 + $0xf4] sm:$0xf]
    %v86 = vld [vmem:[%s1 + $0xf8] sm:$0xf]
    %v87 = vld [vmem:[%s1 + $0xfc] sm:$0xf]
    %v90 = vunpack.c.l.s4 1966171168
    %v91 = vunpack.c.0.s8 %v90
    %v92 = vlaneseq
    %v93 = vshrl.u32 %v92, 7
    %v94 = vsub.s32 %v91, %v93
    %v95 = vrot.slane %v23, %v94
    %v96 = vcombine.high %v95, %v95
    %v98 = vunpack.c.l.s4 1966171168
    %v99 = vunpack.c.0.s8 %v98
    %v100 = vlaneseq
    %v101 = vshrl.u32 %v100, 7
    %v102 = vsub.s32 %v99, %v101
    %v103 = vrot.slane %v95, %v102
    %v105 = vunpack.c.l.s4 1966171168
    %v106 = vunpack.c.0.s8 %v105
    %v107 = vlaneseq
    %v108 = vshrl.u32 %v107, 7
    %v109 = vsub.s32 %v106, %v108
    %v110 = vrot.slane %v96, %v109
    %v111 = vcombine.high %v103, %v103
    %v112 = vcombine.high %v110, %v110
    %v181 = vunpack.c.l.b16 %v24
    %v182 = vunpack.c.l.b16 %v25
    %v183 = vunpack.c.l.b16 %v26
    %v184 = vunpack.c.l.b16 %v27
    %v185 = vunpack.c.l.b16 %v28
    %v186 = vunpack.c.l.b16 %v29
    %v187 = vunpack.c.l.b16 %v30
    %v188 = vunpack.c.l.b16 %v31
    %v189 = vunpack.c.l.b16 %v32
    %v190 = vunpack.c.l.b16 %v33
    %v191 = vunpack.c.l.b16 %v34
    %v192 = vunpack.c.l.b16 %v35
    %v193 = vunpack.c.l.b16 %v36
    %v194 = vunpack.c.l.b16 %v37
    %v195 = vunpack.c.l.b16 %v38
    %v196 = vunpack.c.l.b16 %v39
    %v197 = vunpack.c.l.b16 %v40
    %v198 = vunpack.c.l.b16 %v41
    %v199 = vunpack.c.l.b16 %v42
    %v200 = vunpack.c.l.b16 %v43
    %v201 = vunpack.c.l.b16 %v44
    %v202 = vunpack.c.l.b16 %v45
    %v203 = vunpack.c.l.b16 %v46
    %v204 = vunpack.c.l.b16 %v47
    %v205 = vunpack.c.l.b16 %v48
    %v206 = vunpack.c.l.b16 %v49
    %v207 = vunpack.c.l.b16 %v50
    %v208 = vunpack.c.l.b16 %v51
    %v209 = vunpack.c.l.b16 %v52
    %v210 = vunpack.c.l.b16 %v53
    %v211 = vunpack.c.l.b16 %v54
    %v212 = vunpack.c.l.b16 %v55
    %v213 = vunpack.c.l.b16 %v56
    %v214 = vunpack.c.l.b16 %v57
    %v215 = vunpack.c.l.b16 %v58
    %v216 = vunpack.c.l.b16 %v59
    %v217 = vunpack.c.l.b16 %v60
    %v218 = vunpack.c.l.b16 %v61
    %v219 = vunpack.c.l.b16 %v62
    %v220 = vunpack.c.l.b16 %v63
    %v221 = vunpack.c.l.b16 %v64
    %v222 = vunpack.c.l.b16 %v65
    %v223 = vunpack.c.l.b16 %v66
    %v224 = vunpack.c.l.b16 %v67
    %v225 = vunpack.c.l.b16 %v68
    %v226 = vunpack.c.l.b16 %v69
    %v227 = vunpack.c.l.b16 %v70
    %v228 = vunpack.c.l.b16 %v71
    %v229 = vunpack.c.l.b16 %v72
    %v230 = vunpack.c.l.b16 %v73
    %v231 = vunpack.c.l.b16 %v74
    %v232 = vunpack.c.l.b16 %v75
    %v233 = vunpack.c.l.b16 %v76
    %v234 = vunpack.c.l.b16 %v77
    %v235 = vunpack.c.l.b16 %v78
    %v236 = vunpack.c.l.b16 %v79
    %v237 = vunpack.c.l.b16 %v80
    %v238 = vunpack.c.l.b16 %v81
    %v239 = vunpack.c.l.b16 %v82
    %v240 = vunpack.c.l.b16 %v83
    %v241 = vunpack.c.l.b16 %v84
    %v242 = vunpack.c.l.b16 %v85
    %v243 = vunpack.c.l.b16 %v86
    %v244 = vunpack.c.l.b16 %v87
    %v245 = vpack.c.b16 %v182, %v181
    %v246 = vpack.c.b16 %v184, %v183
    %v247 = vpack.c.b16 %v186, %v185
    %v248 = vpack.c.b16 %v188, %v187
    %v249 = vpack.c.b16 %v190, %v189
    %v250 = vpack.c.b16 %v192, %v191
    %v251 = vpack.c.b16 %v194, %v193
    %v252 = vpack.c.b16 %v196, %v195
    %v253 = vpack.c.b16 %v198, %v197
    %v254 = vpack.c.b16 %v200, %v199
    %v255 = vpack.c.b16 %v202, %v201
    %v256 = vpack.c.b16 %v204, %v203
    %v257 = vpack.c.b16 %v206, %v205
    %v258 = vpack.c.b16 %v208, %v207
    %v259 = vpack.c.b16 %v210, %v209
    %v260 = vpack.c.b16 %v212, %v211
    %v261 = vpack.c.b16 %v214, %v213
    %v262 = vpack.c.b16 %v216, %v215
    %v263 = vpack.c.b16 %v218, %v217
    %v264 = vpack.c.b16 %v220, %v219
    %v265 = vpack.c.b16 %v222, %v221
    %v266 = vpack.c.b16 %v224, %v223
    %v267 = vpack.c.b16 %v226, %v225
    %v268 = vpack.c.b16 %v228, %v227
    %v269 = vpack.c.b16 %v230, %v229
    %v270 = vpack.c.b16 %v232, %v231
    %v271 = vpack.c.b16 %v234, %v233
    %v272 = vpack.c.b16 %v236, %v235
    %v273 = vpack.c.b16 %v238, %v237
    %v274 = vpack.c.b16 %v240, %v239
    %v275 = vpack.c.b16 %v242, %v241
    %v276 = vpack.c.b16 %v244, %v243
    %309 = vmatprep.subr.bf16.mxu0 0
    %310 = vmatpush1.bf16.msra.mxu0 %v245
    %311 = vmatprep.subr.bf16.mxu0 0
    %312 = vmatpush1.bf16.msra.mxu0 %v246
    %313 = vmatprep.subr.bf16.mxu0 0
    %314 = vmatpush1.bf16.msra.mxu0 %v247
    %315 = vmatprep.subr.bf16.mxu0 0
    %316 = vmatpush1.bf16.msra.mxu0 %v248
    %317 = vmatprep.subr.bf16.mxu0 0
    %318 = vmatpush1.bf16.msra.mxu0 %v249
    %319 = vmatprep.subr.bf16.mxu0 0
    %320 = vmatpush1.bf16.msra.mxu0 %v250
    %321 = vmatprep.subr.bf16.mxu0 0
    %322 = vmatpush1.bf16.msra.mxu0 %v251
    %323 = vmatprep.subr.bf16.mxu0 0
    %324 = vmatpush1.bf16.msra.mxu0 %v252
    %325 = vmatprep.subr.bf16.mxu0 0
    %326 = vmatpush1.bf16.msra.mxu0 %v253
    %327 = vmatprep.subr.bf16.mxu0 0
    %328 = vmatpush1.bf16.msra.mxu0 %v254
    %329 = vmatprep.subr.bf16.mxu0 0
    %330 = vmatpush1.bf16.msra.mxu0 %v255
    %331 = vmatprep.subr.bf16.mxu0 0
    %332 = vmatpush1.bf16.msra.mxu0 %v256
    %333 = vmatprep.subr.bf16.mxu0 0
    %334 = vmatpush1.bf16.msra.mxu0 %v257
    %335 = vmatprep.subr.bf16.mxu0 0
    %336 = vmatpush1.bf16.msra.mxu0 %v258
    %337 = vmatprep.subr.bf16.mxu0 0
    %338 = vmatpush1.bf16.msra.mxu0 %v259
    %339 = vmatprep.subr.bf16.mxu0 0
    %340 = vmatpush1.bf16.msra.mxu0 %v260
    %341 = vmatprep.mubr.bf16.mxu0 %v110
    %342 = vmatmul.mubr.bf16.gmra.mrb[0].mxu0 %v103
    %v343 = vpop.f32.mrb[0].mxu0
    %v344 = vadd.f32 0.0, %v343
    %v345 = vpop.f32.mrb[0].mxu0
    %v346 = vpop.f32.mrb[0].mxu0
    %v347 = vpop.f32.mrb[0].mxu0
    %348 = vdwg.mxu0
    %349 = vmatprep.subr.bf16.mxu0 0
    %350 = vmatpush1.bf16.msra.mxu0 %v261
    %351 = vmatprep.subr.bf16.mxu0 0
    %352 = vmatpush1.bf16.msra.mxu0 %v262
    %353 = vmatprep.subr.bf16.mxu0 0
    %354 = vmatpush1.bf16.msra.mxu0 %v263
    %355 = vmatprep.subr.bf16.mxu0 0
    %356 = vmatpush1.bf16.msra.mxu0 %v264
    %357 = vmatprep.subr.bf16.mxu0 0
    %358 = vmatpush1.bf16.msra.mxu0 %v265
    %359 = vmatprep.subr.bf16.mxu0 0
    %360 = vmatpush1.bf16.msra.mxu0 %v266
    %361 = vmatprep.subr.bf16.mxu0 0
    %362 = vmatpush1.bf16.msra.mxu0 %v267
    %363 = vmatprep.subr.bf16.mxu0 0
    %364 = vmatpush1.bf16.msra.mxu0 %v268
    %365 = vmatprep.subr.bf16.mxu0 0
    %366 = vmatpush1.bf16.msra.mxu0 %v269
    %367 = vmatprep.subr.bf16.mxu0 0
    %368 = vmatpush1.bf16.msra.mxu0 %v270
    %369 = vmatprep.subr.bf16.mxu0 0
    %370 = vmatpush1.bf16.msra.mxu0 %v271
    %371 = vmatprep.subr.bf16.mxu0 0
    %372 = vmatpush1.bf16.msra.mxu0 %v272
    %373 = vmatprep.subr.bf16.mxu0 0
    %374 = vmatpush1.bf16.msra.mxu0 %v273
    %375 = vmatprep.subr.bf16.mxu0 0
    %376 = vmatpush1.bf16.msra.mxu0 %v274
    %377 = vmatprep.subr.bf16.mxu0 0
    %378 = vmatpush1.bf16.msra.mxu0 %v275
    %379 = vmatprep.subr.bf16.mxu0 0
    %380 = vmatpush1.bf16.msra.mxu0 %v276
    %381 = vmatprep.mubr.bf16.mxu0 %v112
    %382 = vmatmul.mubr.bf16.gmra.mrb[0].mxu0 %v111
    %v383 = vpop.f32.mrb[0].mxu0
    %v384 = vadd.f32 %v344, %v383
    %v385 = vpop.f32.mrb[0].mxu0
    %v386 = vpop.f32.mrb[0].mxu0
    %v387 = vpop.f32.mrb[0].mxu0
    %388 = vdwg.mxu0
    %v389 = vadd.f32 %v22, %v384
    %vm390 = vcmask 17408
    %391 = vst.msk [vmem:[#allocation2] sm:$0x3] %vm390, %v389
    // Predicated region
    $region18: #{simple_cnn_forward.15} parent=1 // pred_check
      %p392 = pneg %p16
    $region19: #{simple_cnn_forward.15} parent=1 // pred_check_branch
      %394 = sbr.rel (%p392) target = $region21
    $region20: #{simple_cnn_forward.15} parent=1 // pred_region
      %v395 = vld [vmem:[#allocation2] sm:$0x3]
      %v396 = vld [vmem:[%s2] sm:$0x1]
      %v398 = vlaneseq
      %v399 = vshrl.u32 %v398, 7
      %v400 = vsub.s32 0, %v399
      %v401 = vrot.slane %v396, %v400
      %v403 = vadd.f32 %v395, %v401
      %404 = vst.msk [vmem:[#allocation2] sm:$0x3] %vm390, %v403
    $region21: #{simple_cnn_forward.15} parent=1 // pred_fallthru
      _
    // Predicated region
    $region22: #{simple_cnn_forward.15} parent=1 // pred_check
      _
    $region23: #{simple_cnn_forward.15} parent=1 // pred_check_branch
      %406 = sbr.rel (0) target = $region25
    $region24: #{simple_cnn_forward.15} parent=1 // pred_region
      %s408 = ssub.s32 32, 32
      %409 = vsyncadd [#allocation3], %s408
      %s411 = sshll.u32 [#allocation2], 4
      %s412 = int_to_ptr.vmem [resolvable:$true] %s411
      %414 = dma.vmem_to_hbm [thread:$0]  %s412, 32, %s3, [#allocation3]
    $region25: #{simple_cnn_forward.15} parent=1 // pred_fallthru
      _
    // Predicated region
    $region26: #{simple_cnn_forward.15} parent=1 // pred_check
      _
    $region27: #{simple_cnn_forward.15} parent=1 // pred_check_branch
      %416 = sbr.rel (0) target = $region29
    $region28: #{simple_cnn_forward.15} parent=1 // pred_region
      %417 = dma.done [#allocation3], 32
    $region29: #{simple_cnn_forward.15} parent=1 // pred_fallthru
      _
    %418 = vsyncpa [#allocation3], 1

</llo_original>
